<compile_context>
chip_gen: v7x
topology: tpu7x:2x2x1
jax: 0.10.0
libtpu: 0.0.40
codegen_flags: <defaults>
</compile_context>

<pallas_src>
import jax
import jax.numpy as jnp
from jax.experimental import pallas as pl
from jax.experimental.pallas import tpu as pltpu


def _round_up(x, m):
    return (x + m - 1) // m * m


# Single-buffer kwargs for constant-index weight blocks (probe the API once;
# fall back to default double-buffering if unavailable).
try:
    _WEIGHT_SPEC_KW = dict(pipeline_mode=pl.Buffered(1))
    pl.BlockSpec((8, 128), lambda i: (0, 0), **_WEIGHT_SPEC_KW)  # API probe
except Exception:                                                # pragma: no cover
    _WEIGHT_SPEC_KW = {}


# ---------------------------------------------------------------------------
# Fused whole-network kernel: one grid program == one block of Bt samples
# ---------------------------------------------------------------------------
def _make_kernel(bt, c_in, s0, p6):
    # Per-sample row strides (halve at every MaxPool) and stacked row totals.
    s1, s2, s3, s4 = s0 // 2, s0 // 4, s0 // 8, s0 // 16
    t0, t1, t2, t3, t4 = bt * s0, bt * s1, bt * s2, bt * s3, bt * s4

    def kernel(x_ref,
               w1, b1, w2, b2, w3, b3, w4, b4, w5, b5, w6, b6,
               wf1, bf1, wf2, bf2, wf3, bf3,
               o_ref,
               s1o, s2i, s2o, s3i, s3m, s4o, s5i, s5m, s6o, sfc):

        def conv_taps(in_ref, rows, w_ref, b_ref):
            """Valid Conv1d(K=3, stride=1) on the stacked layout: one matmul
            per tap, taps read from the VMEM scratch ref at offsets 0/1/2."""
            acc = None
            for k in range(3):
                wk = w_ref[k]                                   # (C, O) bf16
                seg = in_ref[pl.ds(k, rows), :].astype(wk.dtype)
                term = jnp.dot(seg, wk, preferred_element_type=jnp.float32)
                acc = term if acc is None else acc + term
            return acc + b_ref[...]

        def pool2(ref, half_rows):
            """MaxPool1d(2): stride-2 sublane reads from the scratch ref."""
            return jnp.maximum(ref[pl.ds(0, half_rows, 2), :],
                               ref[pl.ds(1, half_rows, 2), :])

        # Stage 1: conv1 (+BN16 folded) -> ReLU -> MaxPool(2).
        # C_in == 1 -> keep on the VPU as broadcast FMAs (no padded MXU pass).
        acc = None
        for k in range(3):
            seg = x_ref[pl.ds(k, t0 - 2), :]                    # (t0-2, C_in) f32
            wk = w1[k]                                          # (C_in, 16)  f32
            term = seg * wk if c_in == 1 else jnp.dot(
                seg, wk, preferred_element_type=jnp.float32)
            acc = term if acc is None else acc + term
        s1o[pl.ds(0, t0 - 2), :] = acc + b1[...]
        s2i[...] = jnp.maximum(pool2(s1o, t1), 0.0)             # pooled1

        # Stage 2: conv2 (+BN32 folded) -> ReLU -> MaxPool(2).
        s2o[pl.ds(0, t1 - 2), :] = conv_taps(s2i, t1 - 2, w2, b2)
        s3i[...] = jnp.maximum(pool2(s2o, t2), 0.0)             # pooled2

        # Stage 3: conv3 -> conv4 -> MaxPool(2) -> ReLU
        #          (the following BatchNorm1d(64) is folded into conv5).
        s3m[pl.ds(0, t2 - 2), :] = conv_taps(s3i, t2 - 2, w3, b3)
        s4o[pl.ds(0, t2 - 2), :] = conv_taps(s3m, t2 - 2, w4, b4)
        s5i[...] = jnp.maximum(pool2(s4o, t3), 0.0)             # pooled3

        # Stage 4: conv5 (+BN64 pre-folded) -> conv6 -> MaxPool(2) -> ReLU.
        s5m[pl.ds(0, t3 - 2), :] = conv_taps(s5i, t3 - 2, w5, b5)
        s6o[pl.ds(0, t3 - 2), :] = conv_taps(s5m, t3 - 2, w6, b6)
        sfc[...] = jnp.maximum(pool2(s6o, t4), 0.0)             # pooled4

        # AdaptiveMaxPool1d(8) + Flatten + FC head.  torch Flatten over
        # (N, 128, 8) is channel-major (feature = c*8 + t); that permutation
        # is baked into wf1's row order (row = t*128 + c), so the pooled rows
        # are gathered with a per-sample stride and lane-concatenated into one
        # (Bt, 1024) tile feeding a single MXU matmul.
        blocks = []
        for t in range(8):
            lo = (t * p6) // 8
            hi = -(((-(t + 1)) * p6) // 8)                      # ceil
            blk = sfc[pl.ds(lo, bt, s4), :]                     # (Bt, 128)
            for j in range(lo + 1, hi):                         # identity if p6 == 8
                blk = jnp.maximum(blk, sfc[pl.ds(j, bt, s4), :])
            blocks.append(blk)
        a_flat = jnp.concatenate(blocks, axis=1)                # (Bt, 1024) f32

        wf1v = wf1[...]
        h = jnp.dot(a_flat.astype(wf1v.dtype), wf1v,
                    preferred_element_type=jnp.float32) + bf1[...]
        h = jnp.maximum(h, 0.0)
        # TODO(synk): Dropout(0.85) is identity in eval mode only.
        wf2v = wf2[...]
        h = jnp.dot(h.astype(wf2v.dtype), wf2v,
                    preferred_element_type=jnp.float32) + bf2[...]
        h = jnp.maximum(h, 0.0)
        out = jnp.dot(h, wf3[...], preferred_element_type=jnp.float32) + bf3[...]
        o_ref[0] = out.astype(o_ref.dtype)                      # (Bt, 3)

    return kernel


# ---------------------------------------------------------------------------
# Wrapper: one pallas_call for the whole forward pass
# ---------------------------------------------------------------------------
_BT_MAX = 8  # samples per grid program (per-block activation scratch ~ Bt*300 KiB)


@jax.jit
def model_cnn_ppg_forward(x, params):
    """x: (N, C_in, L) float32 (PyTorch NCL layout).  Returns (N, 3) float32."""
    n, c_in, l = x.shape

    # Static length bookkeeping (all valid convs, K=3, four MaxPool(2) stages).
    l1 = l - 2;  p1 = l1 // 2
    l2 = p1 - 2; p2 = l2 // 2
    l3 = p2 - 2; l4 = l3 - 2; p4 = l4 // 2
    l5 = p4 - 2; l6 = l5 - 2; p6 = l6 // 2
    assert p6 >= 1, "input length too short for Model_CNN_PPG"

    # Batch block size: amortize grid-step overhead / fill MXU rows, but keep
    # >= 2 grid steps whenever N >= 2 so the "parallel" axis can use both
    # TensorCores on v7x.
    bt = max(1, min(_BT_MAX, (n + 1) // 2))
    g = -(-n // bt)
    n_pad = g * bt

    # Per-sample row stride: multiple of 16 so it stays even through all four
    # pooling stages (sample offsets keep global even/odd parity).
    s0 = _round_up(l, 16)
    s1, s2, s3, s4 = s0 // 2, s0 // 4, s0 // 8, s0 // 16

    # (N, C_in, L) -> stacked (G*Bt*S0, C_in), time on sublanes.  For C_in==1
    # the NCL->NLC move is a pure relabel (reshape), no transpose.
    if c_in == 1:
        xt = x.reshape(n, l, 1).astype(jnp.float32)
    else:
        xt = jnp.transpose(x, (0, 2, 1)).astype(jnp.float32)
    xt = jnp.pad(xt, ((0, n_pad - n), (0, s0 - l), (0, 0)))
    xt = xt.reshape(g * bt * s0, c_in)

    weights = (params["w1"], params["b1"], params["w2"], params["b2"],
               params["w3"], params["b3"], params["w4"], params["b4"],
               params["w5"], params["b5"], params["w6"], params["b6"],
               params["fc1_w"], params["fc1_b"], params["fc2_w"],
               params["fc2_b"], params["fc3_w"], params["fc3_b"])

    scratch_defs = [
        ((bt * s0, 16), jnp.float32),    # conv1 out  (pool read)
        ((bt * s1, 16), jnp.float32),    # pooled1    (conv2 taps)
        ((bt * s1, 32), jnp.float32),    # conv2 out  (pool read)
        ((bt * s2, 32), jnp.float32),    # pooled2    (conv3 taps)
        ((bt * s2, 64), jnp.float32),    # conv3 out  (conv4 taps)
        ((bt * s2, 64), jnp.float32),    # conv4 out  (pool read)
        ((bt * s3, 64), jnp.float32),    # pooled3    (conv5 taps)
        ((bt * s3, 128), jnp.float32),   # conv5 out  (conv6 taps)
        ((bt * s3, 128), jnp.float32),   # conv6 out  (pool read)
        ((bt * s4, 128), jnp.float32),   # pooled4    (adaptive pool / FC gathers)
    ]
    scratch_shapes = [pltpu.VMEM(s, d) for s, d in scratch_defs]

    # vmem_limit derived from actual usage (weights + activation scratch +
    # double-buffered input) with headroom for compiler temporaries; clamped
    # to bounds that are safe on v5e/v6e/v7x.
    def _pad_bytes(shape, dtype):
        lead = 1
        for d in shape[:-2]:
            lead *= int(d)
        r = int(shape[-2]) if len(shape) >= 2 else 1
        c = int(shape[-1])
        return lead * _round_up(r, 16) * _round_up(c, 128) * jnp.dtype(dtype).itemsize

    usage = sum(_pad_bytes(w.shape, w.dtype) for w in weights)
    usage += sum(_pad_bytes(s, d) for s, d in scratch_defs)
    usage += 2 * _pad_bytes((bt * s0, c_in), jnp.float32)   # input (double-buffered)
    usage += 2 * _pad_bytes((bt, 3), jnp.float32)           # output
    vmem_limit = int(min(48 * 1024 * 1024,
                         max(24 * 1024 * 1024, 3 * usage + 8 * 1024 * 1024)))

    def _weight_spec(arr):
        zeros = (0,) * arr.ndim
        # Constant index_map -> DMA'd once; single-buffered (never re-fetched).
        return pl.BlockSpec(arr.shape, lambda grp, _z=zeros: _z, **_WEIGHT_SPEC_KW)

    grid_spec = pltpu.PrefetchScalarGridSpec(
        num_scalar_prefetch=0,
        grid=(g,),
        in_specs=[pl.BlockSpec((bt * s0, c_in), lambda grp: (grp, 0))]
                 + [_weight_spec(w) for w in weights],
        out_specs=pl.BlockSpec((1, bt, 3), lambda grp: (grp, 0, 0)),
        scratch_shapes=scratch_shapes,
    )

    out = pl.pallas_call(
        _make_kernel(bt, c_in, s0, p6),
        out_shape=jax.ShapeDtypeStruct((g, bt, 3), jnp.float32),
        grid_spec=grid_spec,
        compiler_params=pltpu.CompilerParams(
            dimension_semantics=("parallel",),       # batch blocks -> both TCs (v7x)
            vmem_limit_bytes=vmem_limit,
        ),
    )(xt, *weights)
    return out.reshape(n_pad, 3)[:n]


# ---------------------------------------------------------------------------
# BatchNorm1d (eval mode) folding helpers — exact for valid convolutions
# ---------------------------------------------------------------------------
def fold_bn_after_conv(w, b, gamma, beta, mean, var, eps=1e-5):
    """Conv -> BN (eval): scale per output channel."""
    scale = gamma / jnp.sqrt(var + eps)
    return w * scale[:, None, None], (b - mean) * scale + beta


def fold_bn_before_conv(w, b, gamma, beta, mean, var, eps=1e-5):
    """BN (eval) -> Conv: scale per input channel (exact for valid conv)."""
    scale = gamma / jnp.sqrt(var + eps)
    shift = beta - mean * scale
    w2 = w * scale[None, :, None]
    b2 = b + jnp.sum(w * shift[None, :, None], axis=(1, 2))
    return w2, b2


# ---------------------------------------------------------------------------
# Parameter construction (deterministic, synthetic) — all layout work done ONCE
# ---------------------------------------------------------------------------
def init_params(key, input_channel=1):
    def nxt():
        nonlocal key
        key, sub = jax.random.split(key)
        return sub

    def conv_w(o, c, k):
        return 0.1 * jax.random.normal(nxt(), (o, c, k), jnp.float32)

    def vec(m, scale=0.05):
        return scale * jax.random.normal(nxt(), (m,), jnp.float32)

    def bn(m):
        gamma = 1.0 + 0.1 * jax.random.normal(nxt(), (m,), jnp.float32)
        beta = 0.1 * jax.random.normal(nxt(), (m,), jnp.float32)
        mean = 0.1 * jax.random.normal(nxt(), (m,), jnp.float32)
        var = jax.random.uniform(nxt(), (m,), jnp.float32, 0.5, 1.5)
        return gamma, beta, mean, var

    def tap_major(w, dtype):                          # (O, C, K) -> (K, C, O)
        return jnp.transpose(w, (2, 1, 0)).astype(dtype)

    def row(b):                                       # (O,) -> (1, O), f32
        return b.reshape(1, -1)

    bf16 = jnp.bfloat16
    p = {}
    # conv1 (C_in->16) + BN(16): post-conv fold.  Kept f32 (VPU broadcast path).
    w1, b1 = fold_bn_after_conv(conv_w(16, input_channel, 3), vec(16), *bn(16))
    p["w1"], p["b1"] = tap_major(w1, jnp.float32), row(b1)
    # conv2 (16->32) + BN(32): post-conv fold.  bf16 matmul weights.
    w2, b2 = fold_bn_after_conv(conv_w(32, 16, 3), vec(32), *bn(32))
    p["w2"], p["b2"] = tap_major(w2, bf16), row(b2)
    # conv3 (32->64), conv4 (64->64).
    w3, b3 = conv_w(64, 32, 3), vec(64)
    p["w3"], p["b3"] = tap_major(w3, bf16), row(b3)
    w4, b4 = conv_w(64, 64, 3), vec(64)
    p["w4"], p["b4"] = tap_major(w4, bf16), row(b4)
    # BN(64) sits after the stage-3 MaxPool+ReLU and right before conv5 in the
    # reference module -> fold into conv5's input channels (exact, valid conv).
    w5, b5 = fold_bn_before_conv(conv_w(128, 64, 3), vec(128), *bn(64))
    p["w5"], p["b5"] = tap_major(w5, bf16), row(b5)
    # conv6 (128->128).
    w6, b6 = conv_w(128, 128, 3), vec(128)
    p["w6"], p["b6"] = tap_major(w6, bf16), row(b6)

    # FC head (PyTorch Linear layout (out, in)).  Flatten over (N, 128, 8) is
    # channel-major (feature = c*8 + t); the kernel's flattened tile uses row
    # order t*128 + c, so bake that permutation into fc1's rows once here.
    fc1_w = 0.02 * jax.random.normal(nxt(), (512, 1024), jnp.float32)
    fc1_b = vec(512)
    fc2_w = 0.02 * jax.random.normal(nxt(), (100, 512), jnp.float32)
    fc2_b = vec(100)
    fc3_w = 0.02 * jax.random.normal(nxt(), (3, 100), jnp.float32)
    fc3_b = vec(3)
    p["fc1_w"] = (jnp.transpose(fc1_w.reshape(512, 128, 8), (2, 1, 0))
                  .reshape(1024, 512).astype(bf16))   # row = t*128 + c
    p["fc1_b"] = row(fc1_b)
    p["fc2_w"] = fc2_w.T.astype(bf16)                 # (512, 100)
    p["fc2_b"] = row(fc2_b)
    p["fc3_w"] = fc3_w.T                              # (100, 3) f32
    p["fc3_b"] = row(fc3_b)
    return p


if __name__ == "__main__":
    key = jax.random.PRNGKey(0)
    k_param, k_x = jax.random.split(key)

    # Input: batch=8, channels=1, length=182
    # (182 -> conv/pool stack -> length 8 -> AdaptiveMaxPool1d(8) identity
    #  -> 128*8 = 1024 features for the FC head).  Batch 8 -> Bt=4, grid=2.
    x = jax.random.normal(k_x, (8, 1, 182), jnp.float32)
    params = init_params(k_param, input_channel=1)

    out = model_cnn_ppg_forward(x, params)
    out = jax.block_until_ready(out)
    assert out.shape == (8, 3), out.shape
    assert bool(jnp.all(jnp.isfinite(out)))
    print("KERNEL_OK")
</pallas_src>

<mosaic_0001>
module attributes {stable_mosaic.version = 11 : i64} {
  func.func @kernel(%arg0: i32, %arg1: memref<768x1xf32, #tpu.memory_space<vmem>>, %arg2: memref<3x1x16xf32, #tpu.memory_space<vmem>>, %arg3: memref<1x16xf32, #tpu.memory_space<vmem>>, %arg4: memref<3x16x32xbf16, #tpu.memory_space<vmem>>, %arg5: memref<1x32xf32, #tpu.memory_space<vmem>>, %arg6: memref<3x32x64xbf16, #tpu.memory_space<vmem>>, %arg7: memref<1x64xf32, #tpu.memory_space<vmem>>, %arg8: memref<3x64x64xbf16, #tpu.memory_space<vmem>>, %arg9: memref<1x64xf32, #tpu.memory_space<vmem>>, %arg10: memref<3x64x128xbf16, #tpu.memory_space<vmem>>, %arg11: memref<1x128xf32, #tpu.memory_space<vmem>>, %arg12: memref<3x128x128xbf16, #tpu.memory_space<vmem>>, %arg13: memref<1x128xf32, #tpu.memory_space<vmem>>, %arg14: memref<1024x512xbf16, #tpu.memory_space<vmem>>, %arg15: memref<1x512xf32, #tpu.memory_space<vmem>>, %arg16: memref<512x100xbf16, #tpu.memory_space<vmem>>, %arg17: memref<1x100xf32, #tpu.memory_space<vmem>>, %arg18: memref<100x3xf32, #tpu.memory_space<vmem>>, %arg19: memref<1x3xf32, #tpu.memory_space<vmem>>, %arg20: memref<1x4x3xf32, #tpu.memory_space<vmem>>, %arg21: memref<768x16xf32, #tpu.memory_space<vmem>>, %arg22: memref<384x16xf32, #tpu.memory_space<vmem>>, %arg23: memref<384x32xf32, #tpu.memory_space<vmem>>, %arg24: memref<192x32xf32, #tpu.memory_space<vmem>>, %arg25: memref<192x64xf32, #tpu.memory_space<vmem>>, %arg26: memref<192x64xf32, #tpu.memory_space<vmem>>, %arg27: memref<96x64xf32, #tpu.memory_space<vmem>>, %arg28: memref<96x128xf32, #tpu.memory_space<vmem>>, %arg29: memref<96x128xf32, #tpu.memory_space<vmem>>, %arg30: memref<48x128xf32, #tpu.memory_space<vmem>>) attributes {dimension_semantics = [#tpu.dimension_semantics<parallel>], iteration_bounds = array<i64: 2>, scalar_prefetch = 0 : i64, scratch_operands = 10 : i64, tpu.core_type = #tpu.core_type<tc>, window_params = [{transform_indices = @transform_0, window_bounds = array<i64: 768, 1>}, {pipeline_mode = #tpu.pipeline_mode<synchronous>, transform_indices = @transform_1, window_bounds = array<i64: 3, 1, 16>}, {pipeline_mode = #tpu.pipeline_mode<synchronous>, transform_indices = @transform_2, window_bounds = array<i64: 1, 16>}, {pipeline_mode = #tpu.pipeline_mode<synchronous>, transform_indices = @transform_3, window_bounds = array<i64: 3, 16, 32>}, {pipeline_mode = #tpu.pipeline_mode<synchronous>, transform_indices = @transform_4, window_bounds = array<i64: 1, 32>}, {pipeline_mode = #tpu.pipeline_mode<synchronous>, transform_indices = @transform_5, window_bounds = array<i64: 3, 32, 64>}, {pipeline_mode = #tpu.pipeline_mode<synchronous>, transform_indices = @transform_6, window_bounds = array<i64: 1, 64>}, {pipeline_mode = #tpu.pipeline_mode<synchronous>, transform_indices = @transform_7, window_bounds = array<i64: 3, 64, 64>}, {pipeline_mode = #tpu.pipeline_mode<synchronous>, transform_indices = @transform_8, window_bounds = array<i64: 1, 64>}, {pipeline_mode = #tpu.pipeline_mode<synchronous>, transform_indices = @transform_9, window_bounds = array<i64: 3, 64, 128>}, {pipeline_mode = #tpu.pipeline_mode<synchronous>, transform_indices = @transform_10, window_bounds = array<i64: 1, 128>}, {pipeline_mode = #tpu.pipeline_mode<synchronous>, transform_indices = @transform_11, window_bounds = array<i64: 3, 128, 128>}, {pipeline_mode = #tpu.pipeline_mode<synchronous>, transform_indices = @transform_12, window_bounds = array<i64: 1, 128>}, {pipeline_mode = #tpu.pipeline_mode<synchronous>, transform_indices = @transform_13, window_bounds = array<i64: 1024, 512>}, {pipeline_mode = #tpu.pipeline_mode<synchronous>, transform_indices = @transform_14, window_bounds = array<i64: 1, 512>}, {pipeline_mode = #tpu.pipeline_mode<synchronous>, transform_indices = @transform_15, window_bounds = array<i64: 512, 100>}, {pipeline_mode = #tpu.pipeline_mode<synchronous>, transform_indices = @transform_16, window_bounds = array<i64: 1, 100>}, {pipeline_mode = #tpu.pipeline_mode<synchronous>, transform_indices = @transform_17, window_bounds = array<i64: 100, 3>}, {pipeline_mode = #tpu.pipeline_mode<synchronous>, transform_indices = @transform_18, window_bounds = array<i64: 1, 3>}, {transform_indices = @transform_19, window_bounds = array<i64: 1, 4, 3>}]} {
    %c0 = arith.constant 0 : index
    %c0_0 = arith.constant 0 : index
    %0 = vector.load %arg1[%c0, %c0_0] : memref<768x1xf32, #tpu.memory_space<vmem>>, vector<766x1xf32>
    %c0_1 = arith.constant 0 : index
    %c0_2 = arith.constant 0 : index
    %c0_3 = arith.constant 0 : index
    %1 = vector.load %arg2[%c0_1, %c0_2, %c0_3] : memref<3x1x16xf32, #tpu.memory_space<vmem>>, vector<1x1x16xf32>
    %2 = vector.shape_cast %1 : vector<1x1x16xf32> to vector<1x16xf32>
    %3 = vector.broadcast %0 : vector<766x1xf32> to vector<766x16xf32>
    %4 = vector.broadcast %2 : vector<1x16xf32> to vector<766x16xf32>
    %5 = arith.mulf %3, %4 : vector<766x16xf32>
    %c1 = arith.constant 1 : index
    %c0_4 = arith.constant 0 : index
    %6 = vector.load %arg1[%c1, %c0_4] : memref<768x1xf32, #tpu.memory_space<vmem>>, vector<766x1xf32>
    %c1_5 = arith.constant 1 : index
    %c0_6 = arith.constant 0 : index
    %c0_7 = arith.constant 0 : index
    %7 = vector.load %arg2[%c1_5, %c0_6, %c0_7] : memref<3x1x16xf32, #tpu.memory_space<vmem>>, vector<1x1x16xf32>
    %8 = vector.shape_cast %7 : vector<1x1x16xf32> to vector<1x16xf32>
    %9 = vector.broadcast %6 : vector<766x1xf32> to vector<766x16xf32>
    %10 = vector.broadcast %8 : vector<1x16xf32> to vector<766x16xf32>
    %11 = arith.mulf %9, %10 : vector<766x16xf32>
    %12 = arith.addf %5, %11 : vector<766x16xf32>
    %c2 = arith.constant 2 : index
    %c0_8 = arith.constant 0 : index
    %13 = vector.load %arg1[%c2, %c0_8] : memref<768x1xf32, #tpu.memory_space<vmem>>, vector<766x1xf32>
    %c2_9 = arith.constant 2 : index
    %c0_10 = arith.constant 0 : index
    %c0_11 = arith.constant 0 : index
    %14 = vector.load %arg2[%c2_9, %c0_10, %c0_11] : memref<3x1x16xf32, #tpu.memory_space<vmem>>, vector<1x1x16xf32>
    %15 = vector.shape_cast %14 : vector<1x1x16xf32> to vector<1x16xf32>
    %16 = vector.broadcast %13 : vector<766x1xf32> to vector<766x16xf32>
    %17 = vector.broadcast %15 : vector<1x16xf32> to vector<766x16xf32>
    %18 = arith.mulf %16, %17 : vector<766x16xf32>
    %19 = arith.addf %12, %18 : vector<766x16xf32>
    %c0_12 = arith.constant 0 : index
    %c0_13 = arith.constant 0 : index
    %20 = vector.load %arg3[%c0_12, %c0_13] : memref<1x16xf32, #tpu.memory_space<vmem>>, vector<1x16xf32>
    %21 = vector.broadcast %20 : vector<1x16xf32> to vector<766x16xf32>
    %22 = arith.addf %19, %21 : vector<766x16xf32>
    %c0_14 = arith.constant 0 : index
    %c0_15 = arith.constant 0 : index
    %23 = vector.load %arg21[%c0_14, %c0_15] : memref<768x16xf32, #tpu.memory_space<vmem>>, vector<766x16xf32>
    tpu.vector_store %arg21[%c0_14, %c0_15], %22 {strides = array<i32>} : memref<768x16xf32, #tpu.memory_space<vmem>>, vector<766x16xf32>,
    %c0_16 = arith.constant 0 : index
    %c0_17 = arith.constant 0 : index
    %24 = tpu.strided_load %arg21[%c0_16, %c0_17] {strides = array<i32: 2, 1>} : memref<768x16xf32, #tpu.memory_space<vmem>>, vector<384x16xf32>
    %c1_18 = arith.constant 1 : index
    %c0_19 = arith.constant 0 : index
    %25 = tpu.strided_load %arg21[%c1_18, %c0_19] {strides = array<i32: 2, 1>} : memref<768x16xf32, #tpu.memory_space<vmem>>, vector<384x16xf32>
    %26 = arith.maximumf %24, %25 : vector<384x16xf32>
    %cst = arith.constant 0.000000e+00 : f32
    %27 = vector.broadcast %cst : f32 to vector<384x16xf32>
    %28 = arith.maximumf %26, %27 : vector<384x16xf32>
    %c0_20 = arith.constant 0 : index
    %c0_21 = arith.constant 0 : index
    %29 = vector.load %arg22[%c0_20, %c0_21] : memref<384x16xf32, #tpu.memory_space<vmem>>, vector<384x16xf32>
    tpu.vector_store %arg22[%c0_20, %c0_21], %28 {strides = array<i32>} : memref<384x16xf32, #tpu.memory_space<vmem>>, vector<384x16xf32>,
    %c0_22 = arith.constant 0 : index
    %c0_23 = arith.constant 0 : index
    %c0_24 = arith.constant 0 : index
    %30 = vector.load %arg4[%c0_22, %c0_23, %c0_24] : memref<3x16x32xbf16, #tpu.memory_space<vmem>>, vector<1x16x32xbf16>
    %31 = vector.shape_cast %30 : vector<1x16x32xbf16> to vector<16x32xbf16>
    %c0_25 = arith.constant 0 : index
    %c0_26 = arith.constant 0 : index
    %32 = vector.load %arg22[%c0_25, %c0_26] : memref<384x16xf32, #tpu.memory_space<vmem>>, vector<382x16xf32>
    %33 = arith.truncf %32 : vector<382x16xf32> to vector<382x16xbf16>
    %cst_27 = arith.constant dense<0.000000e+00> : vector<382x32xf32>
    %34 = tpu.matmul %33, %31, %cst_27 {dimension_numbers = #tpu.dot_dimension_numbers<[1], [0], [0], [1], [0, 0, 1, 1], [], []>} : vector<382x16xbf16>, vector<16x32xbf16>, vector<382x32xf32> -> vector<382x32xf32>
    %c1_28 = arith.constant 1 : index
    %c0_29 = arith.constant 0 : index
    %c0_30 = arith.constant 0 : index
    %35 = vector.load %arg4[%c1_28, %c0_29, %c0_30] : memref<3x16x32xbf16, #tpu.memory_space<vmem>>, vector<1x16x32xbf16>
    %36 = vector.shape_cast %35 : vector<1x16x32xbf16> to vector<16x32xbf16>
    %c1_31 = arith.constant 1 : index
    %c0_32 = arith.constant 0 : index
    %37 = vector.load %arg22[%c1_31, %c0_32] : memref<384x16xf32, #tpu.memory_space<vmem>>, vector<382x16xf32>
    %38 = arith.truncf %37 : vector<382x16xf32> to vector<382x16xbf16>
    %cst_33 = arith.constant dense<0.000000e+00> : vector<382x32xf32>
    %39 = tpu.matmul %38, %36, %cst_33 {dimension_numbers = #tpu.dot_dimension_numbers<[1], [0], [0], [1], [0, 0, 1, 1], [], []>} : vector<382x16xbf16>, vector<16x32xbf16>, vector<382x32xf32> -> vector<382x32xf32>
    %40 = arith.addf %34, %39 : vector<382x32xf32>
    %c2_34 = arith.constant 2 : index
    %c0_35 = arith.constant 0 : index
    %c0_36 = arith.constant 0 : index
    %41 = vector.load %arg4[%c2_34, %c0_35, %c0_36] : memref<3x16x32xbf16, #tpu.memory_space<vmem>>, vector<1x16x32xbf16>
    %42 = vector.shape_cast %41 : vector<1x16x32xbf16> to vector<16x32xbf16>
    %c2_37 = arith.constant 2 : index
    %c0_38 = arith.constant 0 : index
    %43 = vector.load %arg22[%c2_37, %c0_38] : memref<384x16xf32, #tpu.memory_space<vmem>>, vector<382x16xf32>
    %44 = arith.truncf %43 : vector<382x16xf32> to vector<382x16xbf16>
    %cst_39 = arith.constant dense<0.000000e+00> : vector<382x32xf32>
    %45 = tpu.matmul %44, %42, %cst_39 {dimension_numbers = #tpu.dot_dimension_numbers<[1], [0], [0], [1], [0, 0, 1, 1], [], []>} : vector<382x16xbf16>, vector<16x32xbf16>, vector<382x32xf32> -> vector<382x32xf32>
    %46 = arith.addf %40, %45 : vector<382x32xf32>
    %c0_40 = arith.constant 0 : index
    %c0_41 = arith.constant 0 : index
    %47 = vector.load %arg5[%c0_40, %c0_41] : memref<1x32xf32, #tpu.memory_space<vmem>>, vector<1x32xf32>
    %48 = vector.broadcast %47 : vector<1x32xf32> to vector<382x32xf32>
    %49 = arith.addf %46, %48 : vector<382x32xf32>
    %c0_42 = arith.constant 0 : index
    %c0_43 = arith.constant 0 : index
    %50 = vector.load %arg23[%c0_42, %c0_43] : memref<384x32xf32, #tpu.memory_space<vmem>>, vector<382x32xf32>
    tpu.vector_store %arg23[%c0_42, %c0_43], %49 {strides = array<i32>} : memref<384x32xf32, #tpu.memory_space<vmem>>, vector<382x32xf32>,
    %c0_44 = arith.constant 0 : index
    %c0_45 = arith.constant 0 : index
    %51 = tpu.strided_load %arg23[%c0_44, %c0_45] {strides = array<i32: 2, 1>} : memref<384x32xf32, #tpu.memory_space<vmem>>, vector<192x32xf32>
    %c1_46 = arith.constant 1 : index
    %c0_47 = arith.constant 0 : index
    %52 = tpu.strided_load %arg23[%c1_46, %c0_47] {strides = array<i32: 2, 1>} : memref<384x32xf32, #tpu.memory_space<vmem>>, vector<192x32xf32>
    %53 = arith.maximumf %51, %52 : vector<192x32xf32>
    %cst_48 = arith.constant 0.000000e+00 : f32
    %54 = vector.broadcast %cst_48 : f32 to vector<192x32xf32>
    %55 = arith.maximumf %53, %54 : vector<192x32xf32>
    %c0_49 = arith.constant 0 : index
    %c0_50 = arith.constant 0 : index
    %56 = vector.load %arg24[%c0_49, %c0_50] : memref<192x32xf32, #tpu.memory_space<vmem>>, vector<192x32xf32>
    tpu.vector_store %arg24[%c0_49, %c0_50], %55 {strides = array<i32>} : memref<192x32xf32, #tpu.memory_space<vmem>>, vector<192x32xf32>,
    %c0_51 = arith.constant 0 : index
    %c0_52 = arith.constant 0 : index
    %c0_53 = arith.constant 0 : index
    %57 = vector.load %arg6[%c0_51, %c0_52, %c0_53] : memref<3x32x64xbf16, #tpu.memory_space<vmem>>, vector<1x32x64xbf16>
    %58 = vector.shape_cast %57 : vector<1x32x64xbf16> to vector<32x64xbf16>
    %c0_54 = arith.constant 0 : index
    %c0_55 = arith.constant 0 : index
    %59 = vector.load %arg24[%c0_54, %c0_55] : memref<192x32xf32, #tpu.memory_space<vmem>>, vector<190x32xf32>
    %60 = arith.truncf %59 : vector<190x32xf32> to vector<190x32xbf16>
    %cst_56 = arith.constant dense<0.000000e+00> : vector<190x64xf32>
    %61 = tpu.matmul %60, %58, %cst_56 {dimension_numbers = #tpu.dot_dimension_numbers<[1], [0], [0], [1], [0, 0, 1, 1], [], []>} : vector<190x32xbf16>, vector<32x64xbf16>, vector<190x64xf32> -> vector<190x64xf32>
    %c1_57 = arith.constant 1 : index
    %c0_58 = arith.constant 0 : index
    %c0_59 = arith.constant 0 : index
    %62 = vector.load %arg6[%c1_57, %c0_58, %c0_59] : memref<3x32x64xbf16, #tpu.memory_space<vmem>>, vector<1x32x64xbf16>
    %63 = vector.shape_cast %62 : vector<1x32x64xbf16> to vector<32x64xbf16>
    %c1_60 = arith.constant 1 : index
    %c0_61 = arith.constant 0 : index
    %64 = vector.load %arg24[%c1_60, %c0_61] : memref<192x32xf32, #tpu.memory_space<vmem>>, vector<190x32xf32>
    %65 = arith.truncf %64 : vector<190x32xf32> to vector<190x32xbf16>
    %cst_62 = arith.constant dense<0.000000e+00> : vector<190x64xf32>
    %66 = tpu.matmul %65, %63, %cst_62 {dimension_numbers = #tpu.dot_dimension_numbers<[1], [0], [0], [1], [0, 0, 1, 1], [], []>} : vector<190x32xbf16>, vector<32x64xbf16>, vector<190x64xf32> -> vector<190x64xf32>
    %67 = arith.addf %61, %66 : vector<190x64xf32>
    %c2_63 = arith.constant 2 : index
    %c0_64 = arith.constant 0 : index
    %c0_65 = arith.constant 0 : index
    %68 = vector.load %arg6[%c2_63, %c0_64, %c0_65] : memref<3x32x64xbf16, #tpu.memory_space<vmem>>, vector<1x32x64xbf16>
    %69 = vector.shape_cast %68 : vector<1x32x64xbf16> to vector<32x64xbf16>
    %c2_66 = arith.constant 2 : index
    %c0_67 = arith.constant 0 : index
    %70 = vector.load %arg24[%c2_66, %c0_67] : memref<192x32xf32, #tpu.memory_space<vmem>>, vector<190x32xf32>
    %71 = arith.truncf %70 : vector<190x32xf32> to vector<190x32xbf16>
    %cst_68 = arith.constant dense<0.000000e+00> : vector<190x64xf32>
    %72 = tpu.matmul %71, %69, %cst_68 {dimension_numbers = #tpu.dot_dimension_numbers<[1], [0], [0], [1], [0, 0, 1, 1], [], []>} : vector<190x32xbf16>, vector<32x64xbf16>, vector<190x64xf32> -> vector<190x64xf32>
    %73 = arith.addf %67, %72 : vector<190x64xf32>
    %c0_69 = arith.constant 0 : index
    %c0_70 = arith.constant 0 : index
    %74 = vector.load %arg7[%c0_69, %c0_70] : memref<1x64xf32, #tpu.memory_space<vmem>>, vector<1x64xf32>
    %75 = vector.broadcast %74 : vector<1x64xf32> to vector<190x64xf32>
    %76 = arith.addf %73, %75 : vector<190x64xf32>
    %c0_71 = arith.constant 0 : index
    %c0_72 = arith.constant 0 : index
    %77 = vector.load %arg25[%c0_71, %c0_72] : memref<192x64xf32, #tpu.memory_space<vmem>>, vector<190x64xf32>
    tpu.vector_store %arg25[%c0_71, %c0_72], %76 {strides = array<i32>} : memref<192x64xf32, #tpu.memory_space<vmem>>, vector<190x64xf32>,
    %c0_73 = arith.constant 0 : index
    %c0_74 = arith.constant 0 : index
    %c0_75 = arith.constant 0 : index
    %78 = vector.load %arg8[%c0_73, %c0_74, %c0_75] : memref<3x64x64xbf16, #tpu.memory_space<vmem>>, vector<1x64x64xbf16>
    %79 = vector.shape_cast %78 : vector<1x64x64xbf16> to vector<64x64xbf16>
    %c0_76 = arith.constant 0 : index
    %c0_77 = arith.constant 0 : index
    %80 = vector.load %arg25[%c0_76, %c0_77] : memref<192x64xf32, #tpu.memory_space<vmem>>, vector<190x64xf32>
    %81 = arith.truncf %80 : vector<190x64xf32> to vector<190x64xbf16>
    %cst_78 = arith.constant dense<0.000000e+00> : vector<190x64xf32>
    %82 = tpu.matmul %81, %79, %cst_78 {dimension_numbers = #tpu.dot_dimension_numbers<[1], [0], [0], [1], [0, 0, 1, 1], [], []>} : vector<190x64xbf16>, vector<64x64xbf16>, vector<190x64xf32> -> vector<190x64xf32>
    %c1_79 = arith.constant 1 : index
    %c0_80 = arith.constant 0 : index
    %c0_81 = arith.constant 0 : index
    %83 = vector.load %arg8[%c1_79, %c0_80, %c0_81] : memref<3x64x64xbf16, #tpu.memory_space<vmem>>, vector<1x64x64xbf16>
    %84 = vector.shape_cast %83 : vector<1x64x64xbf16> to vector<64x64xbf16>
    %c1_82 = arith.constant 1 : index
    %c0_83 = arith.constant 0 : index
    %85 = vector.load %arg25[%c1_82, %c0_83] : memref<192x64xf32, #tpu.memory_space<vmem>>, vector<190x64xf32>
    %86 = arith.truncf %85 : vector<190x64xf32> to vector<190x64xbf16>
    %cst_84 = arith.constant dense<0.000000e+00> : vector<190x64xf32>
    %87 = tpu.matmul %86, %84, %cst_84 {dimension_numbers = #tpu.dot_dimension_numbers<[1], [0], [0], [1], [0, 0, 1, 1], [], []>} : vector<190x64xbf16>, vector<64x64xbf16>, vector<190x64xf32> -> vector<190x64xf32>
    %88 = arith.addf %82, %87 : vector<190x64xf32>
    %c2_85 = arith.constant 2 : index
    %c0_86 = arith.constant 0 : index
    %c0_87 = arith.constant 0 : index
    %89 = vector.load %arg8[%c2_85, %c0_86, %c0_87] : memref<3x64x64xbf16, #tpu.memory_space<vmem>>, vector<1x64x64xbf16>
    %90 = vector.shape_cast %89 : vector<1x64x64xbf16> to vector<64x64xbf16>
    %c2_88 = arith.constant 2 : index
    %c0_89 = arith.constant 0 : index
    %91 = vector.load %arg25[%c2_88, %c0_89] : memref<192x64xf32, #tpu.memory_space<vmem>>, vector<190x64xf32>
    %92 = arith.truncf %91 : vector<190x64xf32> to vector<190x64xbf16>
    %cst_90 = arith.constant dense<0.000000e+00> : vector<190x64xf32>
    %93 = tpu.matmul %92, %90, %cst_90 {dimension_numbers = #tpu.dot_dimension_numbers<[1], [0], [0], [1], [0, 0, 1, 1], [], []>} : vector<190x64xbf16>, vector<64x64xbf16>, vector<190x64xf32> -> vector<190x64xf32>
    %94 = arith.addf %88, %93 : vector<190x64xf32>
    %c0_91 = arith.constant 0 : index
    %c0_92 = arith.constant 0 : index
    %95 = vector.load %arg9[%c0_91, %c0_92] : memref<1x64xf32, #tpu.memory_space<vmem>>, vector<1x64xf32>
    %96 = vector.broadcast %95 : vector<1x64xf32> to vector<190x64xf32>
    %97 = arith.addf %94, %96 : vector<190x64xf32>
    %c0_93 = arith.constant 0 : index
    %c0_94 = arith.constant 0 : index
    %98 = vector.load %arg26[%c0_93, %c0_94] : memref<192x64xf32, #tpu.memory_space<vmem>>, vector<190x64xf32>
    tpu.vector_store %arg26[%c0_93, %c0_94], %97 {strides = array<i32>} : memref<192x64xf32, #tpu.memory_space<vmem>>, vector<190x64xf32>,
    %c0_95 = arith.constant 0 : index
    %c0_96 = arith.constant 0 : index
    %99 = tpu.strided_load %arg26[%c0_95, %c0_96] {strides = array<i32: 2, 1>} : memref<192x64xf32, #tpu.memory_space<vmem>>, vector<96x64xf32>
    %c1_97 = arith.constant 1 : index
    %c0_98 = arith.constant 0 : index
    %100 = tpu.strided_load %arg26[%c1_97, %c0_98] {strides = array<i32: 2, 1>} : memref<192x64xf32, #tpu.memory_space<vmem>>, vector<96x64xf32>
    %101 = arith.maximumf %99, %100 : vector<96x64xf32>
    %cst_99 = arith.constant 0.000000e+00 : f32
    %102 = vector.broadcast %cst_99 : f32 to vector<96x64xf32>
    %103 = arith.maximumf %101, %102 : vector<96x64xf32>
    %c0_100 = arith.constant 0 : index
    %c0_101 = arith.constant 0 : index
    %104 = vector.load %arg27[%c0_100, %c0_101] : memref<96x64xf32, #tpu.memory_space<vmem>>, vector<96x64xf32>
    tpu.vector_store %arg27[%c0_100, %c0_101], %103 {strides = array<i32>} : memref<96x64xf32, #tpu.memory_space<vmem>>, vector<96x64xf32>,
    %c0_102 = arith.constant 0 : index
    %c0_103 = arith.constant 0 : index
    %c0_104 = arith.constant 0 : index
    %105 = vector.load %arg10[%c0_102, %c0_103, %c0_104] : memref<3x64x128xbf16, #tpu.memory_space<vmem>>, vector<1x64x128xbf16>
    %106 = vector.shape_cast %105 : vector<1x64x128xbf16> to vector<64x128xbf16>
    %c0_105 = arith.constant 0 : index
    %c0_106 = arith.constant 0 : index
    %107 = vector.load %arg27[%c0_105, %c0_106] : memref<96x64xf32, #tpu.memory_space<vmem>>, vector<94x64xf32>
    %108 = arith.truncf %107 : vector<94x64xf32> to vector<94x64xbf16>
    %cst_107 = arith.constant dense<0.000000e+00> : vector<94x128xf32>
    %109 = tpu.matmul %108, %106, %cst_107 {dimension_numbers = #tpu.dot_dimension_numbers<[1], [0], [0], [1], [0, 0, 1, 1], [], []>} : vector<94x64xbf16>, vector<64x128xbf16>, vector<94x128xf32> -> vector<94x128xf32>
    %c1_108 = arith.constant 1 : index
    %c0_109 = arith.constant 0 : index
    %c0_110 = arith.constant 0 : index
    %110 = vector.load %arg10[%c1_108, %c0_109, %c0_110] : memref<3x64x128xbf16, #tpu.memory_space<vmem>>, vector<1x64x128xbf16>
    %111 = vector.shape_cast %110 : vector<1x64x128xbf16> to vector<64x128xbf16>
    %c1_111 = arith.constant 1 : index
    %c0_112 = arith.constant 0 : index
    %112 = vector.load %arg27[%c1_111, %c0_112] : memref<96x64xf32, #tpu.memory_space<vmem>>, vector<94x64xf32>
    %113 = arith.truncf %112 : vector<94x64xf32> to vector<94x64xbf16>
    %cst_113 = arith.constant dense<0.000000e+00> : vector<94x128xf32>
    %114 = tpu.matmul %113, %111, %cst_113 {dimension_numbers = #tpu.dot_dimension_numbers<[1], [0], [0], [1], [0, 0, 1, 1], [], []>} : vector<94x64xbf16>, vector<64x128xbf16>, vector<94x128xf32> -> vector<94x128xf32>
    %115 = arith.addf %109, %114 : vector<94x128xf32>
    %c2_114 = arith.constant 2 : index
    %c0_115 = arith.constant 0 : index
    %c0_116 = arith.constant 0 : index
    %116 = vector.load %arg10[%c2_114, %c0_115, %c0_116] : memref<3x64x128xbf16, #tpu.memory_space<vmem>>, vector<1x64x128xbf16>
    %117 = vector.shape_cast %116 : vector<1x64x128xbf16> to vector<64x128xbf16>
    %c2_117 = arith.constant 2 : index
    %c0_118 = arith.constant 0 : index
    %118 = vector.load %arg27[%c2_117, %c0_118] : memref<96x64xf32, #tpu.memory_space<vmem>>, vector<94x64xf32>
    %119 = arith.truncf %118 : vector<94x64xf32> to vector<94x64xbf16>
    %cst_119 = arith.constant dense<0.000000e+00> : vector<94x128xf32>
    %120 = tpu.matmul %119, %117, %cst_119 {dimension_numbers = #tpu.dot_dimension_numbers<[1], [0], [0], [1], [0, 0, 1, 1], [], []>} : vector<94x64xbf16>, vector<64x128xbf16>, vector<94x128xf32> -> vector<94x128xf32>
    %121 = arith.addf %115, %120 : vector<94x128xf32>
    %c0_120 = arith.constant 0 : index
    %c0_121 = arith.constant 0 : index
    %122 = vector.load %arg11[%c0_120, %c0_121] : memref<1x128xf32, #tpu.memory_space<vmem>>, vector<1x128xf32>
    %123 = vector.broadcast %122 : vector<1x128xf32> to vector<94x128xf32>
    %124 = arith.addf %121, %123 : vector<94x128xf32>
    %c0_122 = arith.constant 0 : index
    %c0_123 = arith.constant 0 : index
    %125 = vector.load %arg28[%c0_122, %c0_123] : memref<96x128xf32, #tpu.memory_space<vmem>>, vector<94x128xf32>
    tpu.vector_store %arg28[%c0_122, %c0_123], %124 {strides = array<i32>} : memref<96x128xf32, #tpu.memory_space<vmem>>, vector<94x128xf32>,
    %c0_124 = arith.constant 0 : index
    %c0_125 = arith.constant 0 : index
    %c0_126 = arith.constant 0 : index
    %126 = vector.load %arg12[%c0_124, %c0_125, %c0_126] : memref<3x128x128xbf16, #tpu.memory_space<vmem>>, vector<1x128x128xbf16>
    %127 = vector.shape_cast %126 : vector<1x128x128xbf16> to vector<128x128xbf16>
    %c0_127 = arith.constant 0 : index
    %c0_128 = arith.constant 0 : index
    %128 = vector.load %arg28[%c0_127, %c0_128] : memref<96x128xf32, #tpu.memory_space<vmem>>, vector<94x128xf32>
    %129 = arith.truncf %128 : vector<94x128xf32> to vector<94x128xbf16>
    %cst_129 = arith.constant dense<0.000000e+00> : vector<94x128xf32>
    %130 = tpu.matmul %129, %127, %cst_129 {dimension_numbers = #tpu.dot_dimension_numbers<[1], [0], [0], [1], [0, 0, 1, 1], [], []>} : vector<94x128xbf16>, vector<128x128xbf16>, vector<94x128xf32> -> vector<94x128xf32>
    %c1_130 = arith.constant 1 : index
    %c0_131 = arith.constant 0 : index
    %c0_132 = arith.constant 0 : index
    %131 = vector.load %arg12[%c1_130, %c0_131, %c0_132] : memref<3x128x128xbf16, #tpu.memory_space<vmem>>, vector<1x128x128xbf16>
    %132 = vector.shape_cast %131 : vector<1x128x128xbf16> to vector<128x128xbf16>
    %c1_133 = arith.constant 1 : index
    %c0_134 = arith.constant 0 : index
    %133 = vector.load %arg28[%c1_133, %c0_134] : memref<96x128xf32, #tpu.memory_space<vmem>>, vector<94x128xf32>
    %134 = arith.truncf %133 : vector<94x128xf32> to vector<94x128xbf16>
    %cst_135 = arith.constant dense<0.000000e+00> : vector<94x128xf32>
    %135 = tpu.matmul %134, %132, %cst_135 {dimension_numbers = #tpu.dot_dimension_numbers<[1], [0], [0], [1], [0, 0, 1, 1], [], []>} : vector<94x128xbf16>, vector<128x128xbf16>, vector<94x128xf32> -> vector<94x128xf32>
    %136 = arith.addf %130, %135 : vector<94x128xf32>
    %c2_136 = arith.constant 2 : index
    %c0_137 = arith.constant 0 : index
    %c0_138 = arith.constant 0 : index
    %137 = vector.load %arg12[%c2_136, %c0_137, %c0_138] : memref<3x128x128xbf16, #tpu.memory_space<vmem>>, vector<1x128x128xbf16>
    %138 = vector.shape_cast %137 : vector<1x128x128xbf16> to vector<128x128xbf16>
    %c2_139 = arith.constant 2 : index
    %c0_140 = arith.constant 0 : index
    %139 = vector.load %arg28[%c2_139, %c0_140] : memref<96x128xf32, #tpu.memory_space<vmem>>, vector<94x128xf32>
    %140 = arith.truncf %139 : vector<94x128xf32> to vector<94x128xbf16>
    %cst_141 = arith.constant dense<0.000000e+00> : vector<94x128xf32>
    %141 = tpu.matmul %140, %138, %cst_141 {dimension_numbers = #tpu.dot_dimension_numbers<[1], [0], [0], [1], [0, 0, 1, 1], [], []>} : vector<94x128xbf16>, vector<128x128xbf16>, vector<94x128xf32> -> vector<94x128xf32>
    %142 = arith.addf %136, %141 : vector<94x128xf32>
    %c0_142 = arith.constant 0 : index
    %c0_143 = arith.constant 0 : index
    %143 = vector.load %arg13[%c0_142, %c0_143] : memref<1x128xf32, #tpu.memory_space<vmem>>, vector<1x128xf32>
    %144 = vector.broadcast %143 : vector<1x128xf32> to vector<94x128xf32>
    %145 = arith.addf %142, %144 : vector<94x128xf32>
    %c0_144 = arith.constant 0 : index
    %c0_145 = arith.constant 0 : index
    %146 = vector.load %arg29[%c0_144, %c0_145] : memref<96x128xf32, #tpu.memory_space<vmem>>, vector<94x128xf32>
    tpu.vector_store %arg29[%c0_144, %c0_145], %145 {strides = array<i32>} : memref<96x128xf32, #tpu.memory_space<vmem>>, vector<94x128xf32>,
    %c0_146 = arith.constant 0 : index
    %c0_147 = arith.constant 0 : index
    %147 = tpu.strided_load %arg29[%c0_146, %c0_147] {strides = array<i32: 2, 1>} : memref<96x128xf32, #tpu.memory_space<vmem>>, vector<48x128xf32>
    %c1_148 = arith.constant 1 : index
    %c0_149 = arith.constant 0 : index
    %148 = tpu.strided_load %arg29[%c1_148, %c0_149] {strides = array<i32: 2, 1>} : memref<96x128xf32, #tpu.memory_space<vmem>>, vector<48x128xf32>
    %149 = arith.maximumf %147, %148 : vector<48x128xf32>
    %cst_150 = arith.constant 0.000000e+00 : f32
    %150 = vector.broadcast %cst_150 : f32 to vector<48x128xf32>
    %151 = arith.maximumf %149, %150 : vector<48x128xf32>
    %c0_151 = arith.constant 0 : index
    %c0_152 = arith.constant 0 : index
    %152 = vector.load %arg30[%c0_151, %c0_152] : memref<48x128xf32, #tpu.memory_space<vmem>>, vector<48x128xf32>
    tpu.vector_store %arg30[%c0_151, %c0_152], %151 {strides = array<i32>} : memref<48x128xf32, #tpu.memory_space<vmem>>, vector<48x128xf32>,
    %c0_153 = arith.constant 0 : index
    %c0_154 = arith.constant 0 : index
    %153 = tpu.strided_load %arg30[%c0_153, %c0_154] {strides = array<i32: 12, 1>} : memref<48x128xf32, #tpu.memory_space<vmem>>, vector<4x128xf32>
    %c1_155 = arith.constant 1 : index
    %c0_156 = arith.constant 0 : index
    %154 = tpu.strided_load %arg30[%c1_155, %c0_156] {strides = array<i32: 12, 1>} : memref<48x128xf32, #tpu.memory_space<vmem>>, vector<4x128xf32>
    %c2_157 = arith.constant 2 : index
    %c0_158 = arith.constant 0 : index
    %155 = tpu.strided_load %arg30[%c2_157, %c0_158] {strides = array<i32: 12, 1>} : memref<48x128xf32, #tpu.memory_space<vmem>>, vector<4x128xf32>
    %c3 = arith.constant 3 : index
    %c0_159 = arith.constant 0 : index
    %156 = tpu.strided_load %arg30[%c3, %c0_159] {strides = array<i32: 12, 1>} : memref<48x128xf32, #tpu.memory_space<vmem>>, vector<4x128xf32>
    %c4 = arith.constant 4 : index
    %c0_160 = arith.constant 0 : index
    %157 = tpu.strided_load %arg30[%c4, %c0_160] {strides = array<i32: 12, 1>} : memref<48x128xf32, #tpu.memory_space<vmem>>, vector<4x128xf32>
    %c5 = arith.constant 5 : index
    %c0_161 = arith.constant 0 : index
    %158 = tpu.strided_load %arg30[%c5, %c0_161] {strides = array<i32: 12, 1>} : memref<48x128xf32, #tpu.memory_space<vmem>>, vector<4x128xf32>
    %c6 = arith.constant 6 : index
    %c0_162 = arith.constant 0 : index
    %159 = tpu.strided_load %arg30[%c6, %c0_162] {strides = array<i32: 12, 1>} : memref<48x128xf32, #tpu.memory_space<vmem>>, vector<4x128xf32>
    %c7 = arith.constant 7 : index
    %c0_163 = arith.constant 0 : index
    %160 = tpu.strided_load %arg30[%c7, %c0_163] {strides = array<i32: 12, 1>} : memref<48x128xf32, #tpu.memory_space<vmem>>, vector<4x128xf32>
    %161 = tpu.concatenate %153, %154, %155, %156, %157, %158, %159, %160 in 1 : vector<4x128xf32>, vector<4x128xf32>, vector<4x128xf32>, vector<4x128xf32>, vector<4x128xf32>, vector<4x128xf32>, vector<4x128xf32>, vector<4x128xf32> -> vector<4x1024xf32>
    %c0_164 = arith.constant 0 : index
    %c0_165 = arith.constant 0 : index
    %162 = vector.load %arg14[%c0_164, %c0_165] : memref<1024x512xbf16, #tpu.memory_space<vmem>>, vector<1024x512xbf16>
    %163 = arith.truncf %161 : vector<4x1024xf32> to vector<4x1024xbf16>
    %cst_166 = arith.constant dense<0.000000e+00> : vector<4x512xf32>
    %164 = tpu.matmul %163, %162, %cst_166 {dimension_numbers = #tpu.dot_dimension_numbers<[1], [0], [0], [1], [0, 0, 1, 1], [], []>} : vector<4x1024xbf16>, vector<1024x512xbf16>, vector<4x512xf32> -> vector<4x512xf32>
    %c0_167 = arith.constant 0 : index
    %c0_168 = arith.constant 0 : index
    %165 = vector.load %arg15[%c0_167, %c0_168] : memref<1x512xf32, #tpu.memory_space<vmem>>, vector<1x512xf32>
    %166 = vector.broadcast %165 : vector<1x512xf32> to vector<4x512xf32>
    %167 = arith.addf %164, %166 : vector<4x512xf32>
    %cst_169 = arith.constant 0.000000e+00 : f32
    %168 = vector.broadcast %cst_169 : f32 to vector<4x512xf32>
    %169 = arith.maximumf %167, %168 : vector<4x512xf32>
    %c0_170 = arith.constant 0 : index
    %c0_171 = arith.constant 0 : index
    %170 = vector.load %arg16[%c0_170, %c0_171] : memref<512x100xbf16, #tpu.memory_space<vmem>>, vector<512x100xbf16>
    %171 = arith.truncf %169 : vector<4x512xf32> to vector<4x512xbf16>
    %cst_172 = arith.constant dense<0.000000e+00> : vector<4x100xf32>
    %172 = tpu.matmul %171, %170, %cst_172 {dimension_numbers = #tpu.dot_dimension_numbers<[1], [0], [0], [1], [0, 0, 1, 1], [], []>} : vector<4x512xbf16>, vector<512x100xbf16>, vector<4x100xf32> -> vector<4x100xf32>
    %c0_173 = arith.constant 0 : index
    %c0_174 = arith.constant 0 : index
    %173 = vector.load %arg17[%c0_173, %c0_174] : memref<1x100xf32, #tpu.memory_space<vmem>>, vector<1x100xf32>
    %174 = vector.broadcast %173 : vector<1x100xf32> to vector<4x100xf32>
    %175 = arith.addf %172, %174 : vector<4x100xf32>
    %cst_175 = arith.constant 0.000000e+00 : f32
    %176 = vector.broadcast %cst_175 : f32 to vector<4x100xf32>
    %177 = arith.maximumf %175, %176 : vector<4x100xf32>
    %c0_176 = arith.constant 0 : index
    %c0_177 = arith.constant 0 : index
    %178 = vector.load %arg18[%c0_176, %c0_177] : memref<100x3xf32, #tpu.memory_space<vmem>>, vector<100x3xf32>
    %cst_178 = arith.constant dense<0.000000e+00> : vector<4x3xf32>
    %179 = tpu.matmul %177, %178, %cst_178 {dimension_numbers = #tpu.dot_dimension_numbers<[1], [0], [0], [1], [0, 0, 1, 1], [], []>} : vector<4x100xf32>, vector<100x3xf32>, vector<4x3xf32> -> vector<4x3xf32>
    %c0_179 = arith.constant 0 : index
    %c0_180 = arith.constant 0 : index
    %180 = vector.load %arg19[%c0_179, %c0_180] : memref<1x3xf32, #tpu.memory_space<vmem>>, vector<1x3xf32>
    %181 = vector.broadcast %180 : vector<1x3xf32> to vector<4x3xf32>
    %182 = arith.addf %179, %181 : vector<4x3xf32>
    %c0_181 = arith.constant 0 : index
    %c0_182 = arith.constant 0 : index
    %c0_183 = arith.constant 0 : index
    %183 = vector.load %arg20[%c0_181, %c0_182, %c0_183] : memref<1x4x3xf32, #tpu.memory_space<vmem>>, vector<1x4x3xf32>
    %184 = vector.shape_cast %183 : vector<1x4x3xf32> to vector<4x3xf32>
    %185 = vector.shape_cast %182 : vector<4x3xf32> to vector<1x4x3xf32>
    tpu.vector_store %arg20[%c0_181, %c0_182, %c0_183], %185 {strides = array<i32>} : memref<1x4x3xf32, #tpu.memory_space<vmem>>, vector<1x4x3xf32>,
    return
  }
  func.func @transform_0(%arg0: i32) -> (i32, i32) {
    %c0_i32 = arith.constant 0 : i32
    %c0_i32_0 = arith.constant 0 : i32
    return %arg0, %c0_i32 : i32, i32
  }
  func.func @transform_1(%arg0: i32) -> (i32, i32, i32) {
    %c0_i32 = arith.constant 0 : i32
    %c0_i32_0 = arith.constant 0 : i32
    %c0_i32_1 = arith.constant 0 : i32
    %c0_i32_2 = arith.constant 0 : i32
    return %c0_i32, %c0_i32_0, %c0_i32_1 : i32, i32, i32
  }
  func.func @transform_2(%arg0: i32) -> (i32, i32) {
    %c0_i32 = arith.constant 0 : i32
    %c0_i32_0 = arith.constant 0 : i32
    %c0_i32_1 = arith.constant 0 : i32
    return %c0_i32, %c0_i32_0 : i32, i32
  }
  func.func @transform_3(%arg0: i32) -> (i32, i32, i32) {
    %c0_i32 = arith.constant 0 : i32
    %c0_i32_0 = arith.constant 0 : i32
    %c0_i32_1 = arith.constant 0 : i32
    %c0_i32_2 = arith.constant 0 : i32
    return %c0_i32, %c0_i32_0, %c0_i32_1 : i32, i32, i32
  }
  func.func @transform_4(%arg0: i32) -> (i32, i32) {
    %c0_i32 = arith.constant 0 : i32
    %c0_i32_0 = arith.constant 0 : i32
    %c0_i32_1 = arith.constant 0 : i32
    return %c0_i32, %c0_i32_0 : i32, i32
  }
  func.func @transform_5(%arg0: i32) -> (i32, i32, i32) {
    %c0_i32 = arith.constant 0 : i32
    %c0_i32_0 = arith.constant 0 : i32
    %c0_i32_1 = arith.constant 0 : i32
    %c0_i32_2 = arith.constant 0 : i32
    return %c0_i32, %c0_i32_0, %c0_i32_1 : i32, i32, i32
  }
  func.func @transform_6(%arg0: i32) -> (i32, i32) {
    %c0_i32 = arith.constant 0 : i32
    %c0_i32_0 = arith.constant 0 : i32
    %c0_i32_1 = arith.constant 0 : i32
    return %c0_i32, %c0_i32_0 : i32, i32
  }
  func.func @transform_7(%arg0: i32) -> (i32, i32, i32) {
    %c0_i32 = arith.constant 0 : i32
    %c0_i32_0 = arith.constant 0 : i32
    %c0_i32_1 = arith.constant 0 : i32
    %c0_i32_2 = arith.constant 0 : i32
    return %c0_i32, %c0_i32_0, %c0_i32_1 : i32, i32, i32
  }
  func.func @transform_8(%arg0: i32) -> (i32, i32) {
    %c0_i32 = arith.constant 0 : i32
    %c0_i32_0 = arith.constant 0 : i32
    %c0_i32_1 = arith.constant 0 : i32
    return %c0_i32, %c0_i32_0 : i32, i32
  }
  func.func @transform_9(%arg0: i32) -> (i32, i32, i32) {
    %c0_i32 = arith.constant 0 : i32
    %c0_i32_0 = arith.constant 0 : i32
    %c0_i32_1 = arith.constant 0 : i32
    %c0_i32_2 = arith.constant 0 : i32
    return %c0_i32, %c0_i32_0, %c0_i32_1 : i32, i32, i32
  }
  func.func @transform_10(%arg0: i32) -> (i32, i32) {
    %c0_i32 = arith.constant 0 : i32
    %c0_i32_0 = arith.constant 0 : i32
    %c0_i32_1 = arith.constant 0 : i32
    return %c0_i32, %c0_i32_0 : i32, i32
  }
  func.func @transform_11(%arg0: i32) -> (i32, i32, i32) {
    %c0_i32 = arith.constant 0 : i32
    %c0_i32_0 = arith.constant 0 : i32
    %c0_i32_1 = arith.constant 0 : i32
    %c0_i32_2 = arith.constant 0 : i32
    return %c0_i32, %c0_i32_0, %c0_i32_1 : i32, i32, i32
  }
  func.func @transform_12(%arg0: i32) -> (i32, i32) {
    %c0_i32 = arith.constant 0 : i32
    %c0_i32_0 = arith.constant 0 : i32
    %c0_i32_1 = arith.constant 0 : i32
    return %c0_i32, %c0_i32_0 : i32, i32
  }
  func.func @transform_13(%arg0: i32) -> (i32, i32) {
    %c0_i32 = arith.constant 0 : i32
    %c0_i32_0 = arith.constant 0 : i32
    %c0_i32_1 = arith.constant 0 : i32
    return %c0_i32, %c0_i32_0 : i32, i32
  }
  func.func @transform_14(%arg0: i32) -> (i32, i32) {
    %c0_i32 = arith.constant 0 : i32
    %c0_i32_0 = arith.constant 0 : i32
    %c0_i32_1 = arith.constant 0 : i32
    return %c0_i32, %c0_i32_0 : i32, i32
  }
  func.func @transform_15(%arg0: i32) -> (i32, i32) {
    %c0_i32 = arith.constant 0 : i32
    %c0_i32_0 = arith.constant 0 : i32
    %c0_i32_1 = arith.constant 0 : i32
    return %c0_i32, %c0_i32_0 : i32, i32
  }
  func.func @transform_16(%arg0: i32) -> (i32, i32) {
    %c0_i32 = arith.constant 0 : i32
    %c0_i32_0 = arith.constant 0 : i32
    %c0_i32_1 = arith.constant 0 : i32
    return %c0_i32, %c0_i32_0 : i32, i32
  }
  func.func @transform_17(%arg0: i32) -> (i32, i32) {
    %c0_i32 = arith.constant 0 : i32
    %c0_i32_0 = arith.constant 0 : i32
    %c0_i32_1 = arith.constant 0 : i32
    return %c0_i32, %c0_i32_0 : i32, i32
  }
  func.func @transform_18(%arg0: i32) -> (i32, i32) {
    %c0_i32 = arith.constant 0 : i32
    %c0_i32_0 = arith.constant 0 : i32
    %c0_i32_1 = arith.constant 0 : i32
    return %c0_i32, %c0_i32_0 : i32, i32
  }
  func.func @transform_19(%arg0: i32) -> (i32, i32, i32) {
    %c0_i32 = arith.constant 0 : i32
    %c0_i32_0 = arith.constant 0 : i32
    %c0_i32_1 = arith.constant 0 : i32
    return %arg0, %c0_i32, %c0_i32_0 : i32, i32, i32
  }
}

</mosaic_0001>

<llo_original>
// kernel: model_cnn_ppg_forward.1
$region0: #{model_cnn_ppg_forward.1}
  #allocation0 [shape = 'u32[]', space=smem, size = 0x4, offset = 0x4, fixed_abs, tag = 'smem constant byte address 0x4 - core index']
  #allocation1 [shape = 'u32[144,128]{1,0:T(1,128)}', space=vmem, size = 0x12000, scoped, tag = 'internal scratch']
  #allocation2 [shape = 'f32[768,16]{1,0:T(8,128)}', space=vmem, size = 0x60000, scoped, tag = 'scratch operand']
  #allocation3 [shape = 'f32[384,16]{1,0:T(8,128)}', space=vmem, size = 0x30000, scoped, tag = 'scratch operand']
  #allocation4 [shape = 'f32[384,32]{1,0:T(8,128)}', space=vmem, size = 0x30000, scoped, tag = 'scratch operand']
  #allocation5 [shape = 'f32[192,32]{1,0:T(8,128)}', space=vmem, size = 0x18000, scoped, tag = 'scratch operand']
  #allocation6 [shape = 'f32[192,64]{1,0:T(8,128)}', space=vmem, size = 0x18000, scoped, tag = 'scratch operand']
  #allocation7 [shape = 'f32[192,64]{1,0:T(8,128)}', space=vmem, size = 0x18000, scoped, tag = 'scratch operand']
  #allocation8 [shape = 'f32[96,64]{1,0:T(8,128)}', space=vmem, size = 0xc000, scoped, tag = 'scratch operand']
  #allocation9 [shape = 'f32[96,128]{1,0:T(8,128)}', space=vmem, size = 0xc000, scoped, tag = 'scratch operand']
  #allocation10 [shape = 'f32[96,128]{1,0:T(8,128)}', space=vmem, size = 0xc000, scoped, tag = 'scratch operand']
  #allocation11 [shape = 'f32[48,128]{1,0:T(8,128)}', space=vmem, size = 0x6000, scoped, tag = 'scratch operand']
  %s0 = inlined_call_operand.vmem [shape: f32[1536,1], index: 0, kind: input, shape index: {}]
  %s1 = inlined_call_operand.hbm [shape: f32[3,1,16], index: 1, kind: input, shape index: {}]
  %s2 = inlined_call_operand.vmem [shape: f32[1,16], index: 2, kind: input, shape index: {}]
  %s3 = inlined_call_operand.vmem [shape: bf16[3,16,32], index: 3, kind: input, shape index: {}]
  %s4 = inlined_call_operand.vmem [shape: f32[1,32], index: 4, kind: input, shape index: {}]
  %s5 = inlined_call_operand.hbm [shape: bf16[3,32,64], index: 5, kind: input, shape index: {}]
  %s6 = inlined_call_operand.vmem [shape: f32[1,64], index: 6, kind: input, shape index: {}]
  %s7 = inlined_call_operand.vmem [shape: bf16[3,64,64], index: 7, kind: input, shape index: {}]
  %s8 = inlined_call_operand.vmem [shape: f32[1,64], index: 8, kind: input, shape index: {}]
  %s9 = inlined_call_operand.hbm [shape: bf16[3,64,128], index: 9, kind: input, shape index: {}]
  %s10 = inlined_call_operand.vmem [shape: f32[1,128], index: 10, kind: input, shape index: {}]
  %s11 = inlined_call_operand.hbm [shape: bf16[3,128,128], index: 11, kind: input, shape index: {}]
  %s12 = inlined_call_operand.hbm [shape: f32[1,128], index: 12, kind: input, shape index: {}]
  %s13 = inlined_call_operand.vmem [shape: bf16[1024,512], index: 13, kind: input, shape index: {}]
  %s14 = inlined_call_operand.vmem [shape: f32[1,512], index: 14, kind: input, shape index: {}]
  %s15 = inlined_call_operand.vmem [shape: bf16[512,100], index: 15, kind: input, shape index: {}]
  %s16 = inlined_call_operand.hbm [shape: f32[1,100], index: 16, kind: input, shape index: {}]
  %s17 = inlined_call_operand.vmem [shape: f32[100,3], index: 17, kind: input, shape index: {}]
  %s18 = inlined_call_operand.hbm [shape: f32[1,3], index: 18, kind: input, shape index: {}]
  %s19 = inlined_call_operand.vmem [shape: f32[2,4,3], index: 19, kind: output, shape index: {}]
  %s20 = sld [smem:[#allocation0]]
  $region137: #{model_cnn_ppg_forward.1} parent=0
    _
  %s22 = ssub.s32 1, %s20
  %s23 = scalar_select 0, %s22, %s20
  $region1: #{model_cnn_ppg_forward.1} parent=0
    #allocation12 [shape = 'u8[1536]{0}', space=vmem, size = 0x800, scoped, tag = 'input window, operand 1, single buffered']
    #allocation13 [shape = 's32[2]{0}', space=sflag, size = 0x8, scoped, tag = 'scoped memory for model_cnn_ppg_forward.1']
    #allocation14 [shape = 'u8[24576]{0}', space=vmem, size = 0x6000, scoped, tag = 'input window, operand 5, single buffered']
    #allocation15 [shape = 's32[1]{0}', space=sflag, size = 0x4, scoped, tag = 'scoped memory for model_cnn_ppg_forward.1']
    #allocation16 [shape = 'u8[49152]{0}', space=vmem, size = 0xc000, scoped, tag = 'input window, operand 9, single buffered']
    #allocation17 [shape = 'u8[98304]{0}', space=vmem, size = 0x18000, scoped, tag = 'input window, operand 11, single buffered']
    #allocation18 [shape = 's32[1]{0}', space=sflag, size = 0x4, scoped, tag = 'scoped memory for model_cnn_ppg_forward.1']
    #allocation19 [shape = 'u8[512]{0}', space=vmem, size = 0x400, scoped, tag = 'input window, operand 12, single buffered']
    #allocation20 [shape = 'u8[512]{0}', space=vmem, size = 0x400, scoped, tag = 'input window, operand 16, single buffered']
    #allocation21 [shape = 's32[1]{0}', space=sflag, size = 0x4, scoped, tag = 'scoped memory for model_cnn_ppg_forward.1']
    #allocation22 [shape = 'u8[512]{0}', space=vmem, size = 0x400, scoped, tag = 'input window, operand 18, single buffered']
    %24 = vsyncpa [#allocation13], 0
    %25 = vsyncpa [#allocation15], 0
    %26 = vsyncpa [#allocation18], 0
    %27 = vsyncpa [#allocation21], 0
    loop: start=0, step=1, limit=4
    $region2: #{model_cnn_ppg_forward.1} parent=1 // loop_pre_header
      _
    $region3: #{model_cnn_ppg_forward.1} parent=1 // loop_header
      %s29 = sphi 0, %s33
      %p30 = scmp.ge.s32.totalorder %s29, 4
      %s39 = sphi 0, %s41
      %s42 = sphi 0, %s39
      %s43 = sphi 0, %s42
      %s59 = sphi 0, %s43
      %s63 = sphi 0, %s63
      %s65 = sphi 0, %s63
      %s66 = sphi 0, %s65
      %s80 = sphi 0, %s66
      %s84 = sphi 0, %s84
      %s86 = sphi 0, %s84
      %s87 = sphi 0, %s86
      %s101 = sphi 0, %s87
      %s105 = sphi 0, %s105
      %s107 = sphi 0, %s105
      %s108 = sphi 0, %s107
      %s122 = sphi 0, %s108
      %s126 = sphi 0, %s126
      %s128 = sphi 0, %s126
      %s129 = sphi 0, %s128
      %s143 = sphi 0, %s129
      %s147 = sphi 0, %s147
      %s149 = sphi 0, %s147
      %s150 = sphi 0, %s149
      %s164 = sphi 0, %s150
      %s168 = sphi 0, %s168
      %s170 = sphi 0, %s168
      %s171 = sphi 0, %s170
      %s185 = sphi 0, %s171
      %s189 = sphi 0, %s189
      %s191 = sphi 0, %s189
      %s192 = sphi 0, %s191
      %s206 = sphi 0, %s192
      %s210 = sphi 0, %s210
      %s212 = sphi 0, %s210
      %s213 = sphi 0, %s212
      %s227 = sphi 0, %s213
      %s231 = sphi 0, %s231
      %s233 = sphi 0, %s231
      %s234 = sphi 0, %s233
      %s248 = sphi 0, %s234
      %s252 = sphi 0, %s252
      %s254 = sphi 0, %s252
      %s255 = sphi 0, %s254
      %s269 = sphi 0, %s255
      %s273 = sphi 0, %s273
      %s275 = sphi 0, %s273
      %s276 = sphi 0, %s275
      %s290 = sphi 0, %s276
      %s294 = sphi 0, %s294
      %s296 = sphi 0, %s294
      %s297 = sphi 0, %s296
      %s311 = sphi 0, %s297
      %s315 = sphi 0, %s315
      %s317 = sphi 0, %s315
      %s318 = sphi 0, %s317
      %s332 = sphi 0, %s318
      %s336 = sphi 0, %s336
      %s338 = sphi 0, %s336
      %s339 = sphi 0, %s338
      %s353 = sphi 0, %s339
      %s357 = sphi 0, %s357
      %s359 = sphi 0, %s357
      %s360 = sphi 0, %s359
      %s374 = sphi 0, %s360
      %s378 = sphi 0, %s378
      %s380 = sphi 0, %s378
      %s381 = sphi 0, %s380
      %s395 = sphi 0, %s381
      %s399 = sphi 0, %s399
      %s401 = sphi 0, %s399
      %s402 = sphi 0, %s401
      %s416 = sphi 0, %s402
      %s420 = sphi 0, %s420
      %s422 = sphi 0, %s420
      %s423 = sphi 0, %s422
      %s437 = sphi 0, %s423
      %s443 = sphi 0, %s445
      %s446 = sphi 0, %s443
      %s447 = sphi 0, %s446
      %s463 = sphi 0, %s447
    $region4: #{model_cnn_ppg_forward.1} parent=1 // loop_header_branch
      %32 = sbr.rel (%p30) target = $region8
    $region5: #{model_cnn_ppg_forward.1} parent=1 // loop_body
      %s34 = ssub.s32 %s29, 1
      %s35 = ssub.s32 %s29, 2
      %s36 = sadd.s32 %s29, 1
      %s37 = ssub.s32 %s29, %s36
      %p38 = scmp.eq.s32.totalorder %s37, 0
      %s40 = sadd.s32 %s39, 1
      %s41 = scalar_select %p38, %s39, %s40
      %p44 = pneg %p38
      %p45 = scmp.eq.s32.totalorder %s29, 1
      %p46 = por %p44, %p45
      %p47 = scmp.ne.s32.totalorder %s39, %s42
      %p48 = scmp.eq.s32.totalorder %s29, 0
      %p49 = por %p47, %p48
      %p50 = scmp.ne.s32.totalorder %s39, %s42
      %p51 = scmp.eq.s32.totalorder %s34, 1
      %p52 = por %p50, %p51
      %p53 = scmp.ne.s32.totalorder %s42, %s43
      %p54 = scmp.eq.s32.totalorder %s34, 0
      %p55 = por %p53, %p54
      %p56 = scmp.ne.s32.totalorder %s42, %s43
      %p57 = scmp.eq.s32.totalorder %s35, 1
      %p58 = por %p56, %p57
      %p60 = scmp.ne.s32.totalorder %s43, %s59
      %p61 = scmp.eq.s32.totalorder %s35, 0
      %p62 = por %p60, %p61
      %s64 = sadd.s32 %s63, 1
      %p67 = scmp.eq.s32.totalorder %s29, 1
      %p68 = scmp.ne.s32.totalorder %s63, %s65
      %p69 = scmp.eq.s32.totalorder %s29, 0
      %p70 = por %p68, %p69
      %p71 = scmp.ne.s32.totalorder %s63, %s65
      %p72 = scmp.eq.s32.totalorder %s34, 1
      %p73 = por %p71, %p72
      %p74 = scmp.ne.s32.totalorder %s65, %s66
      %p75 = scmp.eq.s32.totalorder %s34, 0
      %p76 = por %p74, %p75
      %p77 = scmp.ne.s32.totalorder %s65, %s66
      %p78 = scmp.eq.s32.totalorder %s35, 1
      %p79 = por %p77, %p78
      %p81 = scmp.ne.s32.totalorder %s66, %s80
      %p82 = scmp.eq.s32.totalorder %s35, 0
      %p83 = por %p81, %p82
      %s85 = sadd.s32 %s84, 1
      %p88 = scmp.eq.s32.totalorder %s29, 1
      %p89 = scmp.ne.s32.totalorder %s84, %s86
      %p90 = scmp.eq.s32.totalorder %s29, 0
      %p91 = por %p89, %p90
      %p92 = scmp.ne.s32.totalorder %s84, %s86
      %p93 = scmp.eq.s32.totalorder %s34, 1
      %p94 = por %p92, %p93
      %p95 = scmp.ne.s32.totalorder %s86, %s87
      %p96 = scmp.eq.s32.totalorder %s34, 0
      %p97 = por %p95, %p96
      %p98 = scmp.ne.s32.totalorder %s86, %s87
      %p99 = scmp.eq.s32.totalorder %s35, 1
      %p100 = por %p98, %p99
      %p102 = scmp.ne.s32.totalorder %s87, %s101
      %p103 = scmp.eq.s32.totalorder %s35, 0
      %p104 = por %p102, %p103
      %s106 = sadd.s32 %s105, 1
      %p109 = scmp.eq.s32.totalorder %s29, 1
      %p110 = scmp.ne.s32.totalorder %s105, %s107
      %p111 = scmp.eq.s32.totalorder %s29, 0
      %p112 = por %p110, %p111
      %p113 = scmp.ne.s32.totalorder %s105, %s107
      %p114 = scmp.eq.s32.totalorder %s34, 1
      %p115 = por %p113, %p114
      %p116 = scmp.ne.s32.totalorder %s107, %s108
      %p117 = scmp.eq.s32.totalorder %s34, 0
      %p118 = por %p116, %p117
      %p119 = scmp.ne.s32.totalorder %s107, %s108
      %p120 = scmp.eq.s32.totalorder %s35, 1
      %p121 = por %p119, %p120
      %p123 = scmp.ne.s32.totalorder %s108, %s122
      %p124 = scmp.eq.s32.totalorder %s35, 0
      %p125 = por %p123, %p124
      %s127 = sadd.s32 %s126, 1
      %p130 = scmp.eq.s32.totalorder %s29, 1
      %p131 = scmp.ne.s32.totalorder %s126, %s128
      %p132 = scmp.eq.s32.totalorder %s29, 0
      %p133 = por %p131, %p132
      %p134 = scmp.ne.s32.totalorder %s126, %s128
      %p135 = scmp.eq.s32.totalorder %s34, 1
      %p136 = por %p134, %p135
      %p137 = scmp.ne.s32.totalorder %s128, %s129
      %p138 = scmp.eq.s32.totalorder %s34, 0
      %p139 = por %p137, %p138
      %p140 = scmp.ne.s32.totalorder %s128, %s129
      %p141 = scmp.eq.s32.totalorder %s35, 1
      %p142 = por %p140, %p141
      %p144 = scmp.ne.s32.totalorder %s129, %s143
      %p145 = scmp.eq.s32.totalorder %s35, 0
      %p146 = por %p144, %p145
      %s148 = sadd.s32 %s147, 1
      %p151 = scmp.eq.s32.totalorder %s29, 1
      %p152 = scmp.ne.s32.totalorder %s147, %s149
      %p153 = scmp.eq.s32.totalorder %s29, 0
      %p154 = por %p152, %p153
      %p155 = scmp.ne.s32.totalorder %s147, %s149
      %p156 = scmp.eq.s32.totalorder %s34, 1
      %p157 = por %p155, %p156
      %p158 = scmp.ne.s32.totalorder %s149, %s150
      %p159 = scmp.eq.s32.totalorder %s34, 0
      %p160 = por %p158, %p159
      %p161 = scmp.ne.s32.totalorder %s149, %s150
      %p162 = scmp.eq.s32.totalorder %s35, 1
      %p163 = por %p161, %p162
      %p165 = scmp.ne.s32.totalorder %s150, %s164
      %p166 = scmp.eq.s32.totalorder %s35, 0
      %p167 = por %p165, %p166
      %s169 = sadd.s32 %s168, 1
      %p172 = scmp.eq.s32.totalorder %s29, 1
      %p173 = scmp.ne.s32.totalorder %s168, %s170
      %p174 = scmp.eq.s32.totalorder %s29, 0
      %p175 = por %p173, %p174
      %p176 = scmp.ne.s32.totalorder %s168, %s170
      %p177 = scmp.eq.s32.totalorder %s34, 1
      %p178 = por %p176, %p177
      %p179 = scmp.ne.s32.totalorder %s170, %s171
      %p180 = scmp.eq.s32.totalorder %s34, 0
      %p181 = por %p179, %p180
      %p182 = scmp.ne.s32.totalorder %s170, %s171
      %p183 = scmp.eq.s32.totalorder %s35, 1
      %p184 = por %p182, %p183
      %p186 = scmp.ne.s32.totalorder %s171, %s185
      %p187 = scmp.eq.s32.totalorder %s35, 0
      %p188 = por %p186, %p187
      %s190 = sadd.s32 %s189, 1
      %p193 = scmp.eq.s32.totalorder %s29, 1
      %p194 = scmp.ne.s32.totalorder %s189, %s191
      %p195 = scmp.eq.s32.totalorder %s29, 0
      %p196 = por %p194, %p195
      %p197 = scmp.ne.s32.totalorder %s189, %s191
      %p198 = scmp.eq.s32.totalorder %s34, 1
      %p199 = por %p197, %p198
      %p200 = scmp.ne.s32.totalorder %s191, %s192
      %p201 = scmp.eq.s32.totalorder %s34, 0
      %p202 = por %p200, %p201
      %p203 = scmp.ne.s32.totalorder %s191, %s192
      %p204 = scmp.eq.s32.totalorder %s35, 1
      %p205 = por %p203, %p204
      %p207 = scmp.ne.s32.totalorder %s192, %s206
      %p208 = scmp.eq.s32.totalorder %s35, 0
      %p209 = por %p207, %p208
      %s211 = sadd.s32 %s210, 1
      %p214 = scmp.eq.s32.totalorder %s29, 1
      %p215 = scmp.ne.s32.totalorder %s210, %s212
      %p216 = scmp.eq.s32.totalorder %s29, 0
      %p217 = por %p215, %p216
      %p218 = scmp.ne.s32.totalorder %s210, %s212
      %p219 = scmp.eq.s32.totalorder %s34, 1
      %p220 = por %p218, %p219
      %p221 = scmp.ne.s32.totalorder %s212, %s213
      %p222 = scmp.eq.s32.totalorder %s34, 0
      %p223 = por %p221, %p222
      %p224 = scmp.ne.s32.totalorder %s212, %s213
      %p225 = scmp.eq.s32.totalorder %s35, 1
      %p226 = por %p224, %p225
      %p228 = scmp.ne.s32.totalorder %s213, %s227
      %p229 = scmp.eq.s32.totalorder %s35, 0
      %p230 = por %p228, %p229
      %s232 = sadd.s32 %s231, 1
      %p235 = scmp.eq.s32.totalorder %s29, 1
      %p236 = scmp.ne.s32.totalorder %s231, %s233
      %p237 = scmp.eq.s32.totalorder %s29, 0
      %p238 = por %p236, %p237
      %p239 = scmp.ne.s32.totalorder %s231, %s233
      %p240 = scmp.eq.s32.totalorder %s34, 1
      %p241 = por %p239, %p240
      %p242 = scmp.ne.s32.totalorder %s233, %s234
      %p243 = scmp.eq.s32.totalorder %s34, 0
      %p244 = por %p242, %p243
      %p245 = scmp.ne.s32.totalorder %s233, %s234
      %p246 = scmp.eq.s32.totalorder %s35, 1
      %p247 = por %p245, %p246
      %p249 = scmp.ne.s32.totalorder %s234, %s248
      %p250 = scmp.eq.s32.totalorder %s35, 0
      %p251 = por %p249, %p250
      %s253 = sadd.s32 %s252, 1
      %p256 = scmp.eq.s32.totalorder %s29, 1
      %p257 = scmp.ne.s32.totalorder %s252, %s254
      %p258 = scmp.eq.s32.totalorder %s29, 0
      %p259 = por %p257, %p258
      %p260 = scmp.ne.s32.totalorder %s252, %s254
      %p261 = scmp.eq.s32.totalorder %s34, 1
      %p262 = por %p260, %p261
      %p263 = scmp.ne.s32.totalorder %s254, %s255
      %p264 = scmp.eq.s32.totalorder %s34, 0
      %p265 = por %p263, %p264
      %p266 = scmp.ne.s32.totalorder %s254, %s255
      %p267 = scmp.eq.s32.totalorder %s35, 1
      %p268 = por %p266, %p267
      %p270 = scmp.ne.s32.totalorder %s255, %s269
      %p271 = scmp.eq.s32.totalorder %s35, 0
      %p272 = por %p270, %p271
      %s274 = sadd.s32 %s273, 1
      %p277 = scmp.eq.s32.totalorder %s29, 1
      %p278 = scmp.ne.s32.totalorder %s273, %s275
      %p279 = scmp.eq.s32.totalorder %s29, 0
      %p280 = por %p278, %p279
      %p281 = scmp.ne.s32.totalorder %s273, %s275
      %p282 = scmp.eq.s32.totalorder %s34, 1
      %p283 = por %p281, %p282
      %p284 = scmp.ne.s32.totalorder %s275, %s276
      %p285 = scmp.eq.s32.totalorder %s34, 0
      %p286 = por %p284, %p285
      %p287 = scmp.ne.s32.totalorder %s275, %s276
      %p288 = scmp.eq.s32.totalorder %s35, 1
      %p289 = por %p287, %p288
      %p291 = scmp.ne.s32.totalorder %s276, %s290
      %p292 = scmp.eq.s32.totalorder %s35, 0
      %p293 = por %p291, %p292
      %s295 = sadd.s32 %s294, 1
      %p298 = scmp.eq.s32.totalorder %s29, 1
      %p299 = scmp.ne.s32.totalorder %s294, %s296
      %p300 = scmp.eq.s32.totalorder %s29, 0
      %p301 = por %p299, %p300
      %p302 = scmp.ne.s32.totalorder %s294, %s296
      %p303 = scmp.eq.s32.totalorder %s34, 1
      %p304 = por %p302, %p303
      %p305 = scmp.ne.s32.totalorder %s296, %s297
      %p306 = scmp.eq.s32.totalorder %s34, 0
      %p307 = por %p305, %p306
      %p308 = scmp.ne.s32.totalorder %s296, %s297
      %p309 = scmp.eq.s32.totalorder %s35, 1
      %p310 = por %p308, %p309
      %p312 = scmp.ne.s32.totalorder %s297, %s311
      %p313 = scmp.eq.s32.totalorder %s35, 0
      %p314 = por %p312, %p313
      %s316 = sadd.s32 %s315, 1
      %p319 = scmp.eq.s32.totalorder %s29, 1
      %p320 = scmp.ne.s32.totalorder %s315, %s317
      %p321 = scmp.eq.s32.totalorder %s29, 0
      %p322 = por %p320, %p321
      %p323 = scmp.ne.s32.totalorder %s315, %s317
      %p324 = scmp.eq.s32.totalorder %s34, 1
      %p325 = por %p323, %p324
      %p326 = scmp.ne.s32.totalorder %s317, %s318
      %p327 = scmp.eq.s32.totalorder %s34, 0
      %p328 = por %p326, %p327
      %p329 = scmp.ne.s32.totalorder %s317, %s318
      %p330 = scmp.eq.s32.totalorder %s35, 1
      %p331 = por %p329, %p330
      %p333 = scmp.ne.s32.totalorder %s318, %s332
      %p334 = scmp.eq.s32.totalorder %s35, 0
      %p335 = por %p333, %p334
      %s337 = sadd.s32 %s336, 1
      %p340 = scmp.eq.s32.totalorder %s29, 1
      %p341 = scmp.ne.s32.totalorder %s336, %s338
      %p342 = scmp.eq.s32.totalorder %s29, 0
      %p343 = por %p341, %p342
      %p344 = scmp.ne.s32.totalorder %s336, %s338
      %p345 = scmp.eq.s32.totalorder %s34, 1
      %p346 = por %p344, %p345
      %p347 = scmp.ne.s32.totalorder %s338, %s339
      %p348 = scmp.eq.s32.totalorder %s34, 0
      %p349 = por %p347, %p348
      %p350 = scmp.ne.s32.totalorder %s338, %s339
      %p351 = scmp.eq.s32.totalorder %s35, 1
      %p352 = por %p350, %p351
      %p354 = scmp.ne.s32.totalorder %s339, %s353
      %p355 = scmp.eq.s32.totalorder %s35, 0
      %p356 = por %p354, %p355
      %s358 = sadd.s32 %s357, 1
      %p361 = scmp.eq.s32.totalorder %s29, 1
      %p362 = scmp.ne.s32.totalorder %s357, %s359
      %p363 = scmp.eq.s32.totalorder %s29, 0
      %p364 = por %p362, %p363
      %p365 = scmp.ne.s32.totalorder %s357, %s359
      %p366 = scmp.eq.s32.totalorder %s34, 1
      %p367 = por %p365, %p366
      %p368 = scmp.ne.s32.totalorder %s359, %s360
      %p369 = scmp.eq.s32.totalorder %s34, 0
      %p370 = por %p368, %p369
      %p371 = scmp.ne.s32.totalorder %s359, %s360
      %p372 = scmp.eq.s32.totalorder %s35, 1
      %p373 = por %p371, %p372
      %p375 = scmp.ne.s32.totalorder %s360, %s374
      %p376 = scmp.eq.s32.totalorder %s35, 0
      %p377 = por %p375, %p376
      %s379 = sadd.s32 %s378, 1
      %p382 = scmp.eq.s32.totalorder %s29, 1
      %p383 = scmp.ne.s32.totalorder %s378, %s380
      %p384 = scmp.eq.s32.totalorder %s29, 0
      %p385 = por %p383, %p384
      %p386 = scmp.ne.s32.totalorder %s378, %s380
      %p387 = scmp.eq.s32.totalorder %s34, 1
      %p388 = por %p386, %p387
      %p389 = scmp.ne.s32.totalorder %s380, %s381
      %p390 = scmp.eq.s32.totalorder %s34, 0
      %p391 = por %p389, %p390
      %p392 = scmp.ne.s32.totalorder %s380, %s381
      %p393 = scmp.eq.s32.totalorder %s35, 1
      %p394 = por %p392, %p393
      %p396 = scmp.ne.s32.totalorder %s381, %s395
      %p397 = scmp.eq.s32.totalorder %s35, 0
      %p398 = por %p396, %p397
      %s400 = sadd.s32 %s399, 1
      %p403 = scmp.eq.s32.totalorder %s29, 1
      %p404 = scmp.ne.s32.totalorder %s399, %s401
      %p405 = scmp.eq.s32.totalorder %s29, 0
      %p406 = por %p404, %p405
      %p407 = scmp.ne.s32.totalorder %s399, %s401
      %p408 = scmp.eq.s32.totalorder %s34, 1
      %p409 = por %p407, %p408
      %p410 = scmp.ne.s32.totalorder %s401, %s402
      %p411 = scmp.eq.s32.totalorder %s34, 0
      %p412 = por %p410, %p411
      %p413 = scmp.ne.s32.totalorder %s401, %s402
      %p414 = scmp.eq.s32.totalorder %s35, 1
      %p415 = por %p413, %p414
      %p417 = scmp.ne.s32.totalorder %s402, %s416
      %p418 = scmp.eq.s32.totalorder %s35, 0
      %p419 = por %p417, %p418
      %s421 = sadd.s32 %s420, 1
      %p424 = scmp.eq.s32.totalorder %s29, 1
      %p425 = scmp.ne.s32.totalorder %s420, %s422
      %p426 = scmp.eq.s32.totalorder %s29, 0
      %p427 = por %p425, %p426
      %p428 = scmp.ne.s32.totalorder %s420, %s422
      %p429 = scmp.eq.s32.totalorder %s34, 1
      %p430 = por %p428, %p429
      %p431 = scmp.ne.s32.totalorder %s422, %s423
      %p432 = scmp.eq.s32.totalorder %s34, 0
      %p433 = por %p431, %p432
      %p434 = scmp.ne.s32.totalorder %s422, %s423
      %p435 = scmp.eq.s32.totalorder %s35, 1
      %p436 = por %p434, %p435
      %p438 = scmp.ne.s32.totalorder %s423, %s437
      %p439 = scmp.eq.s32.totalorder %s35, 0
      %p440 = por %p438, %p439
      %s441 = ssub.s32 %s29, %s36
      %p442 = scmp.eq.s32.totalorder %s441, 0
      %s444 = sadd.s32 %s443, 1
      %s445 = scalar_select %p442, %s443, %s444
      %p448 = pneg %p442
      %p449 = scmp.eq.s32.totalorder %s29, 1
      %p450 = por %p448, %p449
      %p451 = scmp.ne.s32.totalorder %s443, %s446
      %p452 = scmp.eq.s32.totalorder %s29, 0
      %p453 = por %p451, %p452
      %p454 = scmp.ne.s32.totalorder %s443, %s446
      %p455 = scmp.eq.s32.totalorder %s34, 1
      %p456 = por %p454, %p455
      %p457 = scmp.ne.s32.totalorder %s446, %s447
      %p458 = scmp.eq.s32.totalorder %s34, 0
      %p459 = por %p457, %p458
      %p460 = scmp.ne.s32.totalorder %s446, %s447
      %p461 = scmp.eq.s32.totalorder %s35, 1
      %p462 = por %p460, %p461
      %p464 = scmp.ne.s32.totalorder %s447, %s463
      %p465 = scmp.eq.s32.totalorder %s35, 0
      %p466 = por %p464, %p465
      %p467 = scmp.le.s32.totalorder 1, %s29
      %p468 = scmp.lt.s32.totalorder %s29, 3
      %p469 = pnand %p467, %p468
      %p470 = pneg %p469
      // Predicated region
      $region9: #{model_cnn_ppg_forward.1} parent=5 // pred_check
        _
      $region10: #{model_cnn_ppg_forward.1} parent=5 // pred_check_branch
        %472 = sbr.rel (%p469) target = $region12
      $region11: #{model_cnn_ppg_forward.1} parent=5 // pred_region
        %s473 = ssub.s32 %s29, 1
        // Predicated region
        $region13: #{model_cnn_ppg_forward.1} parent=11 // pred_check
          %p474 = pneg %p76
        $region14: #{model_cnn_ppg_forward.1} parent=11 // pred_check_branch
          %476 = sbr.rel (%p474) target = $region16
        $region15: #{model_cnn_ppg_forward.1} parent=11 // pred_region
          %s478 = ssub.s32 48, 48
          %479 = vsyncadd [#allocation13], %s478
          %s480 = sshll.u32 [#allocation12], 4
          %s481 = int_to_ptr.vmem [resolvable:$true] %s480
          %486 = dma.hbm_to_vmem [thread:$0]  %s1, 48, %s481, [#allocation13], 16, 16, 1
        $region16: #{model_cnn_ppg_forward.1} parent=11 // pred_fallthru
          _
        // Predicated region
        $region17: #{model_cnn_ppg_forward.1} parent=11 // pred_check
          %p487 = pneg %p97
        $region18: #{model_cnn_ppg_forward.1} parent=11 // pred_check_branch
          %489 = sbr.rel (%p487) target = $region20
        $region19: #{model_cnn_ppg_forward.1} parent=11 // pred_region
          _
        $region20: #{model_cnn_ppg_forward.1} parent=11 // pred_fallthru
          _
        // Predicated region
        $region21: #{model_cnn_ppg_forward.1} parent=11 // pred_check
          %p490 = pneg %p118
        $region22: #{model_cnn_ppg_forward.1} parent=11 // pred_check_branch
          %492 = sbr.rel (%p490) target = $region24
        $region23: #{model_cnn_ppg_forward.1} parent=11 // pred_region
          _
        $region24: #{model_cnn_ppg_forward.1} parent=11 // pred_fallthru
          _
        // Predicated region
        $region25: #{model_cnn_ppg_forward.1} parent=11 // pred_check
          %p493 = pneg %p139
        $region26: #{model_cnn_ppg_forward.1} parent=11 // pred_check_branch
          %495 = sbr.rel (%p493) target = $region28
        $region27: #{model_cnn_ppg_forward.1} parent=11 // pred_region
          _
        $region28: #{model_cnn_ppg_forward.1} parent=11 // pred_fallthru
          _
        // Predicated region
        $region29: #{model_cnn_ppg_forward.1} parent=11 // pred_check
          %p496 = pneg %p160
        $region30: #{model_cnn_ppg_forward.1} parent=11 // pred_check_branch
          %498 = sbr.rel (%p496) target = $region32
        $region31: #{model_cnn_ppg_forward.1} parent=11 // pred_region
          %s500 = ssub.s32 768, 768
          %501 = vsyncadd [#allocation15], %s500
          %s502 = sshll.u32 [#allocation14], 4
          %s503 = int_to_ptr.vmem [resolvable:$true] %s502
          %508 = dma.hbm_to_vmem [thread:$0]  %s5, 768, %s503, [#allocation15], 64, 64, 4
        $region32: #{model_cnn_ppg_forward.1} parent=11 // pred_fallthru
          _
        // Predicated region
        $region33: #{model_cnn_ppg_forward.1} parent=11 // pred_check
          %p509 = pneg %p181
        $region34: #{model_cnn_ppg_forward.1} parent=11 // pred_check_branch
          %511 = sbr.rel (%p509) target = $region36
        $region35: #{model_cnn_ppg_forward.1} parent=11 // pred_region
          _
        $region36: #{model_cnn_ppg_forward.1} parent=11 // pred_fallthru
          _
        // Predicated region
        $region37: #{model_cnn_ppg_forward.1} parent=11 // pred_check
          %p512 = pneg %p202
        $region38: #{model_cnn_ppg_forward.1} parent=11 // pred_check_branch
          %514 = sbr.rel (%p512) target = $region40
        $region39: #{model_cnn_ppg_forward.1} parent=11 // pred_region
          _
        $region40: #{model_cnn_ppg_forward.1} parent=11 // pred_fallthru
          _
        // Predicated region
        $region41: #{model_cnn_ppg_forward.1} parent=11 // pred_check
          %p515 = pneg %p223
        $region42: #{model_cnn_ppg_forward.1} parent=11 // pred_check_branch
          %517 = sbr.rel (%p515) target = $region44
        $region43: #{model_cnn_ppg_forward.1} parent=11 // pred_region
          _
        $region44: #{model_cnn_ppg_forward.1} parent=11 // pred_fallthru
          _
        // Predicated region
        $region45: #{model_cnn_ppg_forward.1} parent=11 // pred_check
          %p518 = pneg %p244
        $region46: #{model_cnn_ppg_forward.1} parent=11 // pred_check_branch
          %520 = sbr.rel (%p518) target = $region48
        $region47: #{model_cnn_ppg_forward.1} parent=11 // pred_region
          %s522 = ssub.s32 1536, 1536
          %523 = vsyncadd [#allocation15], %s522
          %s524 = sshll.u32 [#allocation16], 4
          %s525 = int_to_ptr.vmem [resolvable:$true] %s524
          %530 = dma.hbm_to_vmem [thread:$0]  %s9, 1536, %s525, [#allocation15], 64, 64, 4
        $region48: #{model_cnn_ppg_forward.1} parent=11 // pred_fallthru
          _
        // Predicated region
        $region49: #{model_cnn_ppg_forward.1} parent=11 // pred_check
          %p531 = pneg %p265
        $region50: #{model_cnn_ppg_forward.1} parent=11 // pred_check_branch
          %533 = sbr.rel (%p531) target = $region52
        $region51: #{model_cnn_ppg_forward.1} parent=11 // pred_region
          _
        $region52: #{model_cnn_ppg_forward.1} parent=11 // pred_fallthru
          _
        // Predicated region
        $region53: #{model_cnn_ppg_forward.1} parent=11 // pred_check
          %p534 = pneg %p286
        $region54: #{model_cnn_ppg_forward.1} parent=11 // pred_check_branch
          %536 = sbr.rel (%p534) target = $region56
        $region55: #{model_cnn_ppg_forward.1} parent=11 // pred_region
          %s538 = ssub.s32 3072, 3072
          %539 = vsyncadd [#allocation18], %s538
          %s540 = sshll.u32 [#allocation17], 4
          %s541 = int_to_ptr.vmem [resolvable:$true] %s540
          %546 = dma.hbm_to_vmem [thread:$0]  %s11, 3072, %s541, [#allocation18], 64, 64, 4
        $region56: #{model_cnn_ppg_forward.1} parent=11 // pred_fallthru
          _
        // Predicated region
        $region57: #{model_cnn_ppg_forward.1} parent=11 // pred_check
          %p547 = pneg %p307
        $region58: #{model_cnn_ppg_forward.1} parent=11 // pred_check_branch
          %549 = sbr.rel (%p547) target = $region60
        $region59: #{model_cnn_ppg_forward.1} parent=11 // pred_region
          %s551 = ssub.s32 16, 16
          %552 = vsyncadd [#allocation18], %s551
          %s554 = sshll.u32 [#allocation19], 4
          %s555 = int_to_ptr.vmem [resolvable:$true] %s554
          %557 = dma.hbm_to_vmem [thread:$0]  %s12, 16, %s555, [#allocation18]
        $region60: #{model_cnn_ppg_forward.1} parent=11 // pred_fallthru
          _
        // Predicated region
        $region61: #{model_cnn_ppg_forward.1} parent=11 // pred_check
          %p558 = pneg %p328
        $region62: #{model_cnn_ppg_forward.1} parent=11 // pred_check_branch
          %560 = sbr.rel (%p558) target = $region64
        $region63: #{model_cnn_ppg_forward.1} parent=11 // pred_region
          _
        $region64: #{model_cnn_ppg_forward.1} parent=11 // pred_fallthru
          _
        // Predicated region
        $region65: #{model_cnn_ppg_forward.1} parent=11 // pred_check
          %p561 = pneg %p349
        $region66: #{model_cnn_ppg_forward.1} parent=11 // pred_check_branch
          %563 = sbr.rel (%p561) target = $region68
        $region67: #{model_cnn_ppg_forward.1} parent=11 // pred_region
          _
        $region68: #{model_cnn_ppg_forward.1} parent=11 // pred_fallthru
          _
        // Predicated region
        $region69: #{model_cnn_ppg_forward.1} parent=11 // pred_check
          %p564 = pneg %p370
        $region70: #{model_cnn_ppg_forward.1} parent=11 // pred_check_branch
          %566 = sbr.rel (%p564) target = $region72
        $region71: #{model_cnn_ppg_forward.1} parent=11 // pred_region
          _
        $region72: #{model_cnn_ppg_forward.1} parent=11 // pred_fallthru
          _
        // Predicated region
        $region73: #{model_cnn_ppg_forward.1} parent=11 // pred_check
          %p567 = pneg %p391
        $region74: #{model_cnn_ppg_forward.1} parent=11 // pred_check_branch
          %569 = sbr.rel (%p567) target = $region76
        $region75: #{model_cnn_ppg_forward.1} parent=11 // pred_region
          %s571 = ssub.s32 16, 16
          %572 = vsyncadd [#allocation21], %s571
          %s574 = sshll.u32 [#allocation20], 4
          %s575 = int_to_ptr.vmem [resolvable:$true] %s574
          %577 = dma.hbm_to_vmem [thread:$0]  %s16, 16, %s575, [#allocation21]
        $region76: #{model_cnn_ppg_forward.1} parent=11 // pred_fallthru
          _
        // Predicated region
        $region77: #{model_cnn_ppg_forward.1} parent=11 // pred_check
          %p578 = pneg %p412
        $region78: #{model_cnn_ppg_forward.1} parent=11 // pred_check_branch
          %580 = sbr.rel (%p578) target = $region80
        $region79: #{model_cnn_ppg_forward.1} parent=11 // pred_region
          _
        $region80: #{model_cnn_ppg_forward.1} parent=11 // pred_fallthru
          _
        // Predicated region
        $region81: #{model_cnn_ppg_forward.1} parent=11 // pred_check
          %p581 = pneg %p433
        $region82: #{model_cnn_ppg_forward.1} parent=11 // pred_check_branch
          %583 = sbr.rel (%p581) target = $region84
        $region83: #{model_cnn_ppg_forward.1} parent=11 // pred_region
          %s585 = ssub.s32 16, 16
          %586 = vsyncadd [#allocation21], %s585
          %s588 = sshll.u32 [#allocation22], 4
          %s589 = int_to_ptr.vmem [resolvable:$true] %s588
          %591 = dma.hbm_to_vmem [thread:$0]  %s18, 16, %s589, [#allocation21]
        $region84: #{model_cnn_ppg_forward.1} parent=11 // pred_fallthru
          _
      $region12: #{model_cnn_ppg_forward.1} parent=5 // pred_fallthru
        _
      %p592 = scmp.lt.s32.totalorder %s29, 2
      // Predicated region
      $region85: #{model_cnn_ppg_forward.1} parent=5 // pred_check
        %p593 = pneg %p592
      $region86: #{model_cnn_ppg_forward.1} parent=5 // pred_check_branch
        %595 = sbr.rel (%p593) target = $region88
      $region87: #{model_cnn_ppg_forward.1} parent=5 // pred_region
        // Predicated region
        $region89: #{model_cnn_ppg_forward.1} parent=87 // pred_check
          %p596 = pneg %p49
        $region90: #{model_cnn_ppg_forward.1} parent=87 // pred_check_branch
          %598 = sbr.rel (%p596) target = $region92
        $region91: #{model_cnn_ppg_forward.1} parent=87 // pred_region
          %s599 = smul.u32 96, %s29
          %p600 = scmp.lt.s32.totalorder %s599, 191
          %s601 = scalar_select %p600, %s599, 191
          %s602 = smul.addr %s601, 8
          %s603 = scalar_lea.vmem %s0, %s602
          %s604 = smul.u32 96, %s29
        $region92: #{model_cnn_ppg_forward.1} parent=87 // pred_fallthru
          _
      $region88: #{model_cnn_ppg_forward.1} parent=5 // pred_fallthru
        _
      %p605 = scmp.le.s32.totalorder 1, %s29
      %p606 = scmp.lt.s32.totalorder %s29, 3
      %p607 = pnand %p605, %p606
      %p608 = pneg %p607
      // Predicated region
      $region93: #{model_cnn_ppg_forward.1} parent=5 // pred_check
        _
      $region94: #{model_cnn_ppg_forward.1} parent=5 // pred_check_branch
        %610 = sbr.rel (%p607) target = $region96
      $region95: #{model_cnn_ppg_forward.1} parent=5 // pred_region
        %s611 = ssub.s32 %s29, 1
        // Predicated region
        $region97: #{model_cnn_ppg_forward.1} parent=95 // pred_check
          %p612 = pneg %p76
        $region98: #{model_cnn_ppg_forward.1} parent=95 // pred_check_branch
          %614 = sbr.rel (%p612) target = $region100
        $region99: #{model_cnn_ppg_forward.1} parent=95 // pred_region
          %615 = dma.done [#allocation13], 48
        $region100: #{model_cnn_ppg_forward.1} parent=95 // pred_fallthru
          _
        // Predicated region
        $region101: #{model_cnn_ppg_forward.1} parent=95 // pred_check
          %p616 = pneg %p160
        $region102: #{model_cnn_ppg_forward.1} parent=95 // pred_check_branch
          %618 = sbr.rel (%p616) target = $region104
        $region103: #{model_cnn_ppg_forward.1} parent=95 // pred_region
          %619 = dma.done [#allocation15], 768
        $region104: #{model_cnn_ppg_forward.1} parent=95 // pred_fallthru
          _
        // Predicated region
        $region105: #{model_cnn_ppg_forward.1} parent=95 // pred_check
          %p620 = pneg %p244
        $region106: #{model_cnn_ppg_forward.1} parent=95 // pred_check_branch
          %622 = sbr.rel (%p620) target = $region108
        $region107: #{model_cnn_ppg_forward.1} parent=95 // pred_region
          %623 = dma.done [#allocation15], 1536
        $region108: #{model_cnn_ppg_forward.1} parent=95 // pred_fallthru
          _
        // Predicated region
        $region109: #{model_cnn_ppg_forward.1} parent=95 // pred_check
          %p624 = pneg %p286
        $region110: #{model_cnn_ppg_forward.1} parent=95 // pred_check_branch
          %626 = sbr.rel (%p624) target = $region112
        $region111: #{model_cnn_ppg_forward.1} parent=95 // pred_region
          %627 = dma.done [#allocation18], 3072
        $region112: #{model_cnn_ppg_forward.1} parent=95 // pred_fallthru
          _
        // Predicated region
        $region113: #{model_cnn_ppg_forward.1} parent=95 // pred_check
          %p628 = pneg %p307
        $region114: #{model_cnn_ppg_forward.1} parent=95 // pred_check_branch
          %630 = sbr.rel (%p628) target = $region116
        $region115: #{model_cnn_ppg_forward.1} parent=95 // pred_region
          %631 = dma.done [#allocation18], 16
        $region116: #{model_cnn_ppg_forward.1} parent=95 // pred_fallthru
          _
        // Predicated region
        $region117: #{model_cnn_ppg_forward.1} parent=95 // pred_check
          %p632 = pneg %p391
        $region118: #{model_cnn_ppg_forward.1} parent=95 // pred_check_branch
          %634 = sbr.rel (%p632) target = $region120
        $region119: #{model_cnn_ppg_forward.1} parent=95 // pred_region
          %635 = dma.done [#allocation21], 16
        $region120: #{model_cnn_ppg_forward.1} parent=95 // pred_fallthru
          _
        // Predicated region
        $region121: #{model_cnn_ppg_forward.1} parent=95 // pred_check
          %p636 = pneg %p433
        $region122: #{model_cnn_ppg_forward.1} parent=95 // pred_check_branch
          %638 = sbr.rel (%p636) target = $region124
        $region123: #{model_cnn_ppg_forward.1} parent=95 // pred_region
          %639 = dma.done [#allocation21], 16
        $region124: #{model_cnn_ppg_forward.1} parent=95 // pred_fallthru
          _
        %s640 = smul.u32 96, %s34
        %p641 = scmp.lt.s32.totalorder %s640, 191
        %s642 = scalar_select %p641, %s640, 191
        %s643 = smul.addr %s642, 8
        %s644 = scalar_lea.vmem %s0, %s643
        %p645 = pneg %p55
        %p646 = pneg %p52
        %p647 = pneg %p76
        %p648 = pneg %p73
        %p649 = pneg %p97
        %p650 = pneg %p94
        %p651 = pneg %p118
        %p652 = pneg %p115
        %p653 = pneg %p139
        %p654 = pneg %p136
        %p655 = pneg %p160
        %p656 = pneg %p157
        %p657 = pneg %p181
        %p658 = pneg %p178
        %p659 = pneg %p202
        %p660 = pneg %p199
        %p661 = pneg %p223
        %p662 = pneg %p220
        %p663 = pneg %p244
        %p664 = pneg %p241
        %p665 = pneg %p265
        %p666 = pneg %p262
        %p667 = pneg %p286
        %p668 = pneg %p283
        %p669 = pneg %p307
        %p670 = pneg %p304
        %p671 = pneg %p328
        %p672 = pneg %p325
        %p673 = pneg %p349
        %p674 = pneg %p346
        %p675 = pneg %p370
        %p676 = pneg %p367
        %p677 = pneg %p391
        %p678 = pneg %p388
        %p679 = pneg %p412
        %p680 = pneg %p409
        %p681 = pneg %p433
        %p682 = pneg %p430
        %p683 = pneg %p459
        %p684 = pneg %p456
        %p685 = scmp.lt.s32.totalorder %s34, 1
        %s686 = scalar_select %p685, %s34, 1
        %s687 = smul.addr %s686, 4
        %s688 = scalar_lea.vmem %s19, %s687
        %s689 = smul.u32 96, %s34
        %p690 = scmp.lt.s32.totalorder %s689, 191
        %s691 = scalar_select %p690, %s689, 191
        %s692 = smul.addr %s691, 8
        %s693 = scalar_lea.vmem %s0, %s692
        %s694 = smul.u32 96, %s34
        %p695 = scmp.lt.s32.totalorder %s34, 1
        %s696 = scalar_select %p695, %s34, 1
        %s697 = smul.addr %s696, 4
        %s698 = scalar_lea.vmem %s19, %s697
        %v700 = vld [vmem:[%s693] sm:$0xff]
        %v701 = vld [vmem:[%s693 + $0x8] sm:$0xff]
        %v702 = vld [vmem:[%s693 + $0x10] sm:$0xff]
        %v703 = vld [vmem:[%s693 + $0x18] sm:$0xff]
        %v704 = vld [vmem:[%s693 + $0x20] sm:$0xff]
        %v705 = vld [vmem:[%s693 + $0x28] sm:$0xff]
        %v706 = vld [vmem:[%s693 + $0x30] sm:$0xff]
        %v707 = vld [vmem:[%s693 + $0x38] sm:$0xff]
        %v708 = vld [vmem:[%s693 + $0x40] sm:$0xff]
        %v709 = vld [vmem:[%s693 + $0x48] sm:$0xff]
        %v710 = vld [vmem:[%s693 + $0x50] sm:$0xff]
        %v711 = vld [vmem:[%s693 + $0x58] sm:$0xff]
        %v712 = vld [vmem:[%s693 + $0x60] sm:$0xff]
        %v713 = vld [vmem:[%s693 + $0x68] sm:$0xff]
        %v714 = vld [vmem:[%s693 + $0x70] sm:$0xff]
        %v715 = vld [vmem:[%s693 + $0x78] sm:$0xff]
        %v716 = vld [vmem:[%s693 + $0x80] sm:$0xff]
        %v717 = vld [vmem:[%s693 + $0x88] sm:$0xff]
        %v718 = vld [vmem:[%s693 + $0x90] sm:$0xff]
        %v719 = vld [vmem:[%s693 + $0x98] sm:$0xff]
        %v720 = vld [vmem:[%s693 + $0xa0] sm:$0xff]
        %v721 = vld [vmem:[%s693 + $0xa8] sm:$0xff]
        %v722 = vld [vmem:[%s693 + $0xb0] sm:$0xff]
        %v723 = vld [vmem:[%s693 + $0xb8] sm:$0xff]
        %v724 = vld [vmem:[%s693 + $0xc0] sm:$0xff]
        %v725 = vld [vmem:[%s693 + $0xc8] sm:$0xff]
        %v726 = vld [vmem:[%s693 + $0xd0] sm:$0xff]
        %v727 = vld [vmem:[%s693 + $0xd8] sm:$0xff]
        %v728 = vld [vmem:[%s693 + $0xe0] sm:$0xff]
        %v729 = vld [vmem:[%s693 + $0xe8] sm:$0xff]
        %v730 = vld [vmem:[%s693 + $0xf0] sm:$0xff]
        %v731 = vld [vmem:[%s693 + $0xf8] sm:$0xff]
        %v732 = vld [vmem:[%s693 + $0x100] sm:$0xff]
        %v733 = vld [vmem:[%s693 + $0x108] sm:$0xff]
        %v734 = vld [vmem:[%s693 + $0x110] sm:$0xff]
        %v735 = vld [vmem:[%s693 + $0x118] sm:$0xff]
        %v736 = vld [vmem:[%s693 + $0x120] sm:$0xff]
        %v737 = vld [vmem:[%s693 + $0x128] sm:$0xff]
        %v738 = vld [vmem:[%s693 + $0x130] sm:$0xff]
        %v739 = vld [vmem:[%s693 + $0x138] sm:$0xff]
        %v740 = vld [vmem:[%s693 + $0x140] sm:$0xff]
        %v741 = vld [vmem:[%s693 + $0x148] sm:$0xff]
        %v742 = vld [vmem:[%s693 + $0x150] sm:$0xff]
        %v743 = vld [vmem:[%s693 + $0x158] sm:$0xff]
        %v744 = vld [vmem:[%s693 + $0x160] sm:$0xff]
        %v745 = vld [vmem:[%s693 + $0x168] sm:$0xff]
        %v746 = vld [vmem:[%s693 + $0x170] sm:$0xff]
        %v747 = vld [vmem:[%s693 + $0x178] sm:$0xff]
        %v748 = vld [vmem:[%s693 + $0x180] sm:$0xff]
        %v749 = vld [vmem:[%s693 + $0x188] sm:$0xff]
        %v750 = vld [vmem:[%s693 + $0x190] sm:$0xff]
        %v751 = vld [vmem:[%s693 + $0x198] sm:$0xff]
        %v752 = vld [vmem:[%s693 + $0x1a0] sm:$0xff]
        %v753 = vld [vmem:[%s693 + $0x1a8] sm:$0xff]
        %v754 = vld [vmem:[%s693 + $0x1b0] sm:$0xff]
        %v755 = vld [vmem:[%s693 + $0x1b8] sm:$0xff]
        %v756 = vld [vmem:[%s693 + $0x1c0] sm:$0xff]
        %v757 = vld [vmem:[%s693 + $0x1c8] sm:$0xff]
        %v758 = vld [vmem:[%s693 + $0x1d0] sm:$0xff]
        %v759 = vld [vmem:[%s693 + $0x1d8] sm:$0xff]
        %v760 = vld [vmem:[%s693 + $0x1e0] sm:$0xff]
        %v761 = vld [vmem:[%s693 + $0x1e8] sm:$0xff]
        %v762 = vld [vmem:[%s693 + $0x1f0] sm:$0xff]
        %v763 = vld [vmem:[%s693 + $0x1f8] sm:$0xff]
        %v764 = vld [vmem:[%s693 + $0x200] sm:$0xff]
        %v765 = vld [vmem:[%s693 + $0x208] sm:$0xff]
        %v766 = vld [vmem:[%s693 + $0x210] sm:$0xff]
        %v767 = vld [vmem:[%s693 + $0x218] sm:$0xff]
        %v768 = vld [vmem:[%s693 + $0x220] sm:$0xff]
        %v769 = vld [vmem:[%s693 + $0x228] sm:$0xff]
        %v770 = vld [vmem:[%s693 + $0x230] sm:$0xff]
        %v771 = vld [vmem:[%s693 + $0x238] sm:$0xff]
        %v772 = vld [vmem:[%s693 + $0x240] sm:$0xff]
        %v773 = vld [vmem:[%s693 + $0x248] sm:$0xff]
        %v774 = vld [vmem:[%s693 + $0x250] sm:$0xff]
        %v775 = vld [vmem:[%s693 + $0x258] sm:$0xff]
        %v776 = vld [vmem:[%s693 + $0x260] sm:$0xff]
        %v777 = vld [vmem:[%s693 + $0x268] sm:$0xff]
        %v778 = vld [vmem:[%s693 + $0x270] sm:$0xff]
        %v779 = vld [vmem:[%s693 + $0x278] sm:$0xff]
        %v780 = vld [vmem:[%s693 + $0x280] sm:$0xff]
        %v781 = vld [vmem:[%s693 + $0x288] sm:$0xff]
        %v782 = vld [vmem:[%s693 + $0x290] sm:$0xff]
        %v783 = vld [vmem:[%s693 + $0x298] sm:$0xff]
        %v784 = vld [vmem:[%s693 + $0x2a0] sm:$0xff]
        %v785 = vld [vmem:[%s693 + $0x2a8] sm:$0xff]
        %v786 = vld [vmem:[%s693 + $0x2b0] sm:$0xff]
        %v787 = vld [vmem:[%s693 + $0x2b8] sm:$0xff]
        %v788 = vld [vmem:[%s693 + $0x2c0] sm:$0xff]
        %v789 = vld [vmem:[%s693 + $0x2c8] sm:$0xff]
        %v790 = vld [vmem:[%s693 + $0x2d0] sm:$0xff]
        %v791 = vld [vmem:[%s693 + $0x2d8] sm:$0xff]
        %v792 = vld [vmem:[%s693 + $0x2e0] sm:$0xff]
        %v793 = vld [vmem:[%s693 + $0x2e8] sm:$0xff]
        %v794 = vld [vmem:[%s693 + $0x2f0] sm:$0xff]
        %v795 = vld [vmem:[%s693 + $0x2f8] sm:$0x3f]
        %v796 = vld [vmem:[#allocation12] sm:$0x1]
        %798 = vset.pattern.permute.xlu0 0
        %799 = vperm.xlu0 %798, %v700
        %v800 = vpop.permute.xlu0 %799
        %803 = vset.pattern.permute.xlu0 0
        %804 = vperm.xlu0 %803, %v701
        %v805 = vpop.permute.xlu0 %804
        %808 = vset.pattern.permute.xlu0 0
        %809 = vperm.xlu0 %808, %v702
        %v810 = vpop.permute.xlu0 %809
        %813 = vset.pattern.permute.xlu0 0
        %814 = vperm.xlu0 %813, %v703
        %v815 = vpop.permute.xlu0 %814
        %818 = vset.pattern.permute.xlu0 0
        %819 = vperm.xlu0 %818, %v704
        %v820 = vpop.permute.xlu0 %819
        %823 = vset.pattern.permute.xlu0 0
        %824 = vperm.xlu0 %823, %v705
        %v825 = vpop.permute.xlu0 %824
        %828 = vset.pattern.permute.xlu0 0
        %829 = vperm.xlu0 %828, %v706
        %v830 = vpop.permute.xlu0 %829
        %833 = vset.pattern.permute.xlu0 0
        %834 = vperm.xlu0 %833, %v707
        %v835 = vpop.permute.xlu0 %834
        %838 = vset.pattern.permute.xlu0 0
        %839 = vperm.xlu0 %838, %v708
        %v840 = vpop.permute.xlu0 %839
        %843 = vset.pattern.permute.xlu0 0
        %844 = vperm.xlu0 %843, %v709
        %v845 = vpop.permute.xlu0 %844
        %848 = vset.pattern.permute.xlu0 0
        %849 = vperm.xlu0 %848, %v710
        %v850 = vpop.permute.xlu0 %849
        %853 = vset.pattern.permute.xlu0 0
        %854 = vperm.xlu0 %853, %v711
        %v855 = vpop.permute.xlu0 %854
        %858 = vset.pattern.permute.xlu0 0
        %859 = vperm.xlu0 %858, %v712
        %v860 = vpop.permute.xlu0 %859
        %863 = vset.pattern.permute.xlu0 0
        %864 = vperm.xlu0 %863, %v713
        %v865 = vpop.permute.xlu0 %864
        %868 = vset.pattern.permute.xlu0 0
        %869 = vperm.xlu0 %868, %v714
        %v870 = vpop.permute.xlu0 %869
        %873 = vset.pattern.permute.xlu0 0
        %874 = vperm.xlu0 %873, %v715
        %v875 = vpop.permute.xlu0 %874
        %878 = vset.pattern.permute.xlu0 0
        %879 = vperm.xlu0 %878, %v716
        %v880 = vpop.permute.xlu0 %879
        %883 = vset.pattern.permute.xlu0 0
        %884 = vperm.xlu0 %883, %v717
        %v885 = vpop.permute.xlu0 %884
        %888 = vset.pattern.permute.xlu0 0
        %889 = vperm.xlu0 %888, %v718
        %v890 = vpop.permute.xlu0 %889
        %893 = vset.pattern.permute.xlu0 0
        %894 = vperm.xlu0 %893, %v719
        %v895 = vpop.permute.xlu0 %894
        %898 = vset.pattern.permute.xlu0 0
        %899 = vperm.xlu0 %898, %v720
        %v900 = vpop.permute.xlu0 %899
        %903 = vset.pattern.permute.xlu0 0
        %904 = vperm.xlu0 %903, %v721
        %v905 = vpop.permute.xlu0 %904
        %908 = vset.pattern.permute.xlu0 0
        %909 = vperm.xlu0 %908, %v722
        %v910 = vpop.permute.xlu0 %909
        %913 = vset.pattern.permute.xlu0 0
        %914 = vperm.xlu0 %913, %v723
        %v915 = vpop.permute.xlu0 %914
        %918 = vset.pattern.permute.xlu0 0
        %919 = vperm.xlu0 %918, %v724
        %v920 = vpop.permute.xlu0 %919
        %923 = vset.pattern.permute.xlu0 0
        %924 = vperm.xlu0 %923, %v725
        %v925 = vpop.permute.xlu0 %924
        %928 = vset.pattern.permute.xlu0 0
        %929 = vperm.xlu0 %928, %v726
        %v930 = vpop.permute.xlu0 %929
        %933 = vset.pattern.permute.xlu0 0
        %934 = vperm.xlu0 %933, %v727
        %v935 = vpop.permute.xlu0 %934
        %938 = vset.pattern.permute.xlu0 0
        %939 = vperm.xlu0 %938, %v728
        %v940 = vpop.permute.xlu0 %939
        %943 = vset.pattern.permute.xlu0 0
        %944 = vperm.xlu0 %943, %v729
        %v945 = vpop.permute.xlu0 %944
        %948 = vset.pattern.permute.xlu0 0
        %949 = vperm.xlu0 %948, %v730
        %v950 = vpop.permute.xlu0 %949
        %953 = vset.pattern.permute.xlu0 0
        %954 = vperm.xlu0 %953, %v731
        %v955 = vpop.permute.xlu0 %954
        %958 = vset.pattern.permute.xlu0 0
        %959 = vperm.xlu0 %958, %v732
        %v960 = vpop.permute.xlu0 %959
        %963 = vset.pattern.permute.xlu0 0
        %964 = vperm.xlu0 %963, %v733
        %v965 = vpop.permute.xlu0 %964
        %968 = vset.pattern.permute.xlu0 0
        %969 = vperm.xlu0 %968, %v734
        %v970 = vpop.permute.xlu0 %969
        %973 = vset.pattern.permute.xlu0 0
        %974 = vperm.xlu0 %973, %v735
        %v975 = vpop.permute.xlu0 %974
        %978 = vset.pattern.permute.xlu0 0
        %979 = vperm.xlu0 %978, %v736
        %v980 = vpop.permute.xlu0 %979
        %983 = vset.pattern.permute.xlu0 0
        %984 = vperm.xlu0 %983, %v737
        %v985 = vpop.permute.xlu0 %984
        %988 = vset.pattern.permute.xlu0 0
        %989 = vperm.xlu0 %988, %v738
        %v990 = vpop.permute.xlu0 %989
        %993 = vset.pattern.permute.xlu0 0
        %994 = vperm.xlu0 %993, %v739
        %v995 = vpop.permute.xlu0 %994
        %998 = vset.pattern.permute.xlu0 0
        %999 = vperm.xlu0 %998, %v740
        %v1000 = vpop.permute.xlu0 %999
        %1003 = vset.pattern.permute.xlu0 0
        %1004 = vperm.xlu0 %1003, %v741
        %v1005 = vpop.permute.xlu0 %1004
        %1008 = vset.pattern.permute.xlu0 0
        %1009 = vperm.xlu0 %1008, %v742
        %v1010 = vpop.permute.xlu0 %1009
        %1013 = vset.pattern.permute.xlu0 0
        %1014 = vperm.xlu0 %1013, %v743
        %v1015 = vpop.permute.xlu0 %1014
        %1018 = vset.pattern.permute.xlu0 0
        %1019 = vperm.xlu0 %1018, %v744
        %v1020 = vpop.permute.xlu0 %1019
        %1023 = vset.pattern.permute.xlu0 0
        %1024 = vperm.xlu0 %1023, %v745
        %v1025 = vpop.permute.xlu0 %1024
        %1028 = vset.pattern.permute.xlu0 0
        %1029 = vperm.xlu0 %1028, %v746
        %v1030 = vpop.permute.xlu0 %1029
        %1033 = vset.pattern.permute.xlu0 0
        %1034 = vperm.xlu0 %1033, %v747
        %v1035 = vpop.permute.xlu0 %1034
        %1038 = vset.pattern.permute.xlu0 0
        %1039 = vperm.xlu0 %1038, %v748
        %v1040 = vpop.permute.xlu0 %1039
        %1043 = vset.pattern.permute.xlu0 0
        %1044 = vperm.xlu0 %1043, %v749
        %v1045 = vpop.permute.xlu0 %1044
        %1048 = vset.pattern.permute.xlu0 0
        %1049 = vperm.xlu0 %1048, %v750
        %v1050 = vpop.permute.xlu0 %1049
        %1053 = vset.pattern.permute.xlu0 0
        %1054 = vperm.xlu0 %1053, %v751
        %v1055 = vpop.permute.xlu0 %1054
        %1058 = vset.pattern.permute.xlu0 0
        %1059 = vperm.xlu0 %1058, %v752
        %v1060 = vpop.permute.xlu0 %1059
        %1063 = vset.pattern.permute.xlu0 0
        %1064 = vperm.xlu0 %1063, %v753
        %v1065 = vpop.permute.xlu0 %1064
        %1068 = vset.pattern.permute.xlu0 0
        %1069 = vperm.xlu0 %1068, %v754
        %v1070 = vpop.permute.xlu0 %1069
        %1073 = vset.pattern.permute.xlu0 0
        %1074 = vperm.xlu0 %1073, %v755
        %v1075 = vpop.permute.xlu0 %1074
        %1078 = vset.pattern.permute.xlu0 0
        %1079 = vperm.xlu0 %1078, %v756
        %v1080 = vpop.permute.xlu0 %1079
        %1083 = vset.pattern.permute.xlu0 0
        %1084 = vperm.xlu0 %1083, %v757
        %v1085 = vpop.permute.xlu0 %1084
        %1088 = vset.pattern.permute.xlu0 0
        %1089 = vperm.xlu0 %1088, %v758
        %v1090 = vpop.permute.xlu0 %1089
        %1093 = vset.pattern.permute.xlu0 0
        %1094 = vperm.xlu0 %1093, %v759
        %v1095 = vpop.permute.xlu0 %1094
        %1098 = vset.pattern.permute.xlu0 0
        %1099 = vperm.xlu0 %1098, %v760
        %v1100 = vpop.permute.xlu0 %1099
        %1103 = vset.pattern.permute.xlu0 0
        %1104 = vperm.xlu0 %1103, %v761
        %v1105 = vpop.permute.xlu0 %1104
        %1108 = vset.pattern.permute.xlu0 0
        %1109 = vperm.xlu0 %1108, %v762
        %v1110 = vpop.permute.xlu0 %1109
        %1113 = vset.pattern.permute.xlu0 0
        %1114 = vperm.xlu0 %1113, %v763
        %v1115 = vpop.permute.xlu0 %1114
        %1118 = vset.pattern.permute.xlu0 0
        %1119 = vperm.xlu0 %1118, %v764
        %v1120 = vpop.permute.xlu0 %1119
        %1123 = vset.pattern.permute.xlu0 0
        %1124 = vperm.xlu0 %1123, %v765
        %v1125 = vpop.permute.xlu0 %1124
        %1128 = vset.pattern.permute.xlu0 0
        %1129 = vperm.xlu0 %1128, %v766
        %v1130 = vpop.permute.xlu0 %1129
        %1133 = vset.pattern.permute.xlu0 0
        %1134 = vperm.xlu0 %1133, %v767
        %v1135 = vpop.permute.xlu0 %1134
        %1138 = vset.pattern.permute.xlu0 0
        %1139 = vperm.xlu0 %1138, %v768
        %v1140 = vpop.permute.xlu0 %1139
        %1143 = vset.pattern.permute.xlu0 0
        %1144 = vperm.xlu0 %1143, %v769
        %v1145 = vpop.permute.xlu0 %1144
        %1148 = vset.pattern.permute.xlu0 0
        %1149 = vperm.xlu0 %1148, %v770
        %v1150 = vpop.permute.xlu0 %1149
        %1153 = vset.pattern.permute.xlu0 0
        %1154 = vperm.xlu0 %1153, %v771
        %v1155 = vpop.permute.xlu0 %1154
        %1158 = vset.pattern.permute.xlu0 0
        %1159 = vperm.xlu0 %1158, %v772
        %v1160 = vpop.permute.xlu0 %1159
        %1163 = vset.pattern.permute.xlu0 0
        %1164 = vperm.xlu0 %1163, %v773
        %v1165 = vpop.permute.xlu0 %1164
        %1168 = vset.pattern.permute.xlu0 0
        %1169 = vperm.xlu0 %1168, %v774
        %v1170 = vpop.permute.xlu0 %1169
        %1173 = vset.pattern.permute.xlu0 0
        %1174 = vperm.xlu0 %1173, %v775
        %v1175 = vpop.permute.xlu0 %1174
        %1178 = vset.pattern.permute.xlu0 0
        %1179 = vperm.xlu0 %1178, %v776
        %v1180 = vpop.permute.xlu0 %1179
        %1183 = vset.pattern.permute.xlu0 0
        %1184 = vperm.xlu0 %1183, %v777
        %v1185 = vpop.permute.xlu0 %1184
        %1188 = vset.pattern.permute.xlu0 0
        %1189 = vperm.xlu0 %1188, %v778
        %v1190 = vpop.permute.xlu0 %1189
        %1193 = vset.pattern.permute.xlu0 0
        %1194 = vperm.xlu0 %1193, %v779
        %v1195 = vpop.permute.xlu0 %1194
        %1198 = vset.pattern.permute.xlu0 0
        %1199 = vperm.xlu0 %1198, %v780
        %v1200 = vpop.permute.xlu0 %1199
        %1203 = vset.pattern.permute.xlu0 0
        %1204 = vperm.xlu0 %1203, %v781
        %v1205 = vpop.permute.xlu0 %1204
        %1208 = vset.pattern.permute.xlu0 0
        %1209 = vperm.xlu0 %1208, %v782
        %v1210 = vpop.permute.xlu0 %1209
        %1213 = vset.pattern.permute.xlu0 0
        %1214 = vperm.xlu0 %1213, %v783
        %v1215 = vpop.permute.xlu0 %1214
        %1218 = vset.pattern.permute.xlu0 0
        %1219 = vperm.xlu0 %1218, %v784
        %v1220 = vpop.permute.xlu0 %1219
        %1223 = vset.pattern.permute.xlu0 0
        %1224 = vperm.xlu0 %1223, %v785
        %v1225 = vpop.permute.xlu0 %1224
        %1228 = vset.pattern.permute.xlu0 0
        %1229 = vperm.xlu0 %1228, %v786
        %v1230 = vpop.permute.xlu0 %1229
        %1233 = vset.pattern.permute.xlu0 0
        %1234 = vperm.xlu0 %1233, %v787
        %v1235 = vpop.permute.xlu0 %1234
        %1238 = vset.pattern.permute.xlu0 0
        %1239 = vperm.xlu0 %1238, %v788
        %v1240 = vpop.permute.xlu0 %1239
        %1243 = vset.pattern.permute.xlu0 0
        %1244 = vperm.xlu0 %1243, %v789
        %v1245 = vpop.permute.xlu0 %1244
        %1248 = vset.pattern.permute.xlu0 0
        %1249 = vperm.xlu0 %1248, %v790
        %v1250 = vpop.permute.xlu0 %1249
        %1253 = vset.pattern.permute.xlu0 0
        %1254 = vperm.xlu0 %1253, %v791
        %v1255 = vpop.permute.xlu0 %1254
        %1258 = vset.pattern.permute.xlu0 0
        %1259 = vperm.xlu0 %1258, %v792
        %v1260 = vpop.permute.xlu0 %1259
        %1263 = vset.pattern.permute.xlu0 0
        %1264 = vperm.xlu0 %1263, %v793
        %v1265 = vpop.permute.xlu0 %1264
        %1268 = vset.pattern.permute.xlu0 0
        %1269 = vperm.xlu0 %1268, %v794
        %v1270 = vpop.permute.xlu0 %1269
        %1273 = vset.pattern.permute.xlu0 0
        %1274 = vperm.xlu0 %1273, %v795
        %v1275 = vpop.permute.xlu0 %1274
        %v1278 = vlaneseq
        %v1279 = vshrl.u32 %v1278, 7
        %v1280 = vsub.s32 0, %v1279
        %v1281 = vrot.slane %v796, %v1280
        %v1283 = vmul.f32 %v800, %v1281
        %v1284 = vmul.f32 %v805, %v1281
        %v1285 = vmul.f32 %v810, %v1281
        %v1286 = vmul.f32 %v815, %v1281
        %v1287 = vmul.f32 %v820, %v1281
        %v1288 = vmul.f32 %v825, %v1281
        %v1289 = vmul.f32 %v830, %v1281
        %v1290 = vmul.f32 %v835, %v1281
        %v1291 = vmul.f32 %v840, %v1281
        %v1292 = vmul.f32 %v845, %v1281
        %v1293 = vmul.f32 %v850, %v1281
        %v1294 = vmul.f32 %v855, %v1281
        %v1295 = vmul.f32 %v860, %v1281
        %v1296 = vmul.f32 %v865, %v1281
        %v1297 = vmul.f32 %v870, %v1281
        %v1298 = vmul.f32 %v875, %v1281
        %v1299 = vmul.f32 %v880, %v1281
        %v1300 = vmul.f32 %v885, %v1281
        %v1301 = vmul.f32 %v890, %v1281
        %v1302 = vmul.f32 %v895, %v1281
        %v1303 = vmul.f32 %v900, %v1281
        %v1304 = vmul.f32 %v905, %v1281
        %v1305 = vmul.f32 %v910, %v1281
        %v1306 = vmul.f32 %v915, %v1281
        %v1307 = vmul.f32 %v920, %v1281
        %v1308 = vmul.f32 %v925, %v1281
        %v1309 = vmul.f32 %v930, %v1281
        %v1310 = vmul.f32 %v935, %v1281
        %v1311 = vmul.f32 %v940, %v1281
        %v1312 = vmul.f32 %v945, %v1281
        %v1313 = vmul.f32 %v950, %v1281
        %v1314 = vmul.f32 %v955, %v1281
        %v1315 = vmul.f32 %v960, %v1281
        %v1316 = vmul.f32 %v965, %v1281
        %v1317 = vmul.f32 %v970, %v1281
        %v1318 = vmul.f32 %v975, %v1281
        %v1319 = vmul.f32 %v980, %v1281
        %v1320 = vmul.f32 %v985, %v1281
        %v1321 = vmul.f32 %v990, %v1281
        %v1322 = vmul.f32 %v995, %v1281
        %v1323 = vmul.f32 %v1000, %v1281
        %v1324 = vmul.f32 %v1005, %v1281
        %v1325 = vmul.f32 %v1010, %v1281
        %v1326 = vmul.f32 %v1015, %v1281
        %v1327 = vmul.f32 %v1020, %v1281
        %v1328 = vmul.f32 %v1025, %v1281
        %v1329 = vmul.f32 %v1030, %v1281
        %v1330 = vmul.f32 %v1035, %v1281
        %v1331 = vmul.f32 %v1040, %v1281
        %v1332 = vmul.f32 %v1045, %v1281
        %v1333 = vmul.f32 %v1050, %v1281
        %v1334 = vmul.f32 %v1055, %v1281
        %v1335 = vmul.f32 %v1060, %v1281
        %v1336 = vmul.f32 %v1065, %v1281
        %v1337 = vmul.f32 %v1070, %v1281
        %v1338 = vmul.f32 %v1075, %v1281
        %v1339 = vmul.f32 %v1080, %v1281
        %v1340 = vmul.f32 %v1085, %v1281
        %v1341 = vmul.f32 %v1090, %v1281
        %v1342 = vmul.f32 %v1095, %v1281
        %v1343 = vmul.f32 %v1100, %v1281
        %v1344 = vmul.f32 %v1105, %v1281
        %v1345 = vmul.f32 %v1110, %v1281
        %v1346 = vmul.f32 %v1115, %v1281
        %v1347 = vmul.f32 %v1120, %v1281
        %v1348 = vmul.f32 %v1125, %v1281
        %v1349 = vmul.f32 %v1130, %v1281
        %v1350 = vmul.f32 %v1135, %v1281
        %v1351 = vmul.f32 %v1140, %v1281
        %v1352 = vmul.f32 %v1145, %v1281
        %v1353 = vmul.f32 %v1150, %v1281
        %v1354 = vmul.f32 %v1155, %v1281
        %v1355 = vmul.f32 %v1160, %v1281
        %v1356 = vmul.f32 %v1165, %v1281
        %v1357 = vmul.f32 %v1170, %v1281
        %v1358 = vmul.f32 %v1175, %v1281
        %v1359 = vmul.f32 %v1180, %v1281
        %v1360 = vmul.f32 %v1185, %v1281
        %v1361 = vmul.f32 %v1190, %v1281
        %v1362 = vmul.f32 %v1195, %v1281
        %v1363 = vmul.f32 %v1200, %v1281
        %v1364 = vmul.f32 %v1205, %v1281
        %v1365 = vmul.f32 %v1210, %v1281
        %v1366 = vmul.f32 %v1215, %v1281
        %v1367 = vmul.f32 %v1220, %v1281
        %v1368 = vmul.f32 %v1225, %v1281
        %v1369 = vmul.f32 %v1230, %v1281
        %v1370 = vmul.f32 %v1235, %v1281
        %v1371 = vmul.f32 %v1240, %v1281
        %v1372 = vmul.f32 %v1245, %v1281
        %v1373 = vmul.f32 %v1250, %v1281
        %v1374 = vmul.f32 %v1255, %v1281
        %v1375 = vmul.f32 %v1260, %v1281
        %v1376 = vmul.f32 %v1265, %v1281
        %v1377 = vmul.f32 %v1270, %v1281
        %v1378 = vmul.f32 %v1275, %v1281
        %v1379 = vld [vmem:[%s693 + $0x1] sm:$0xff]
        %v1380 = vld [vmem:[%s693 + $0x9] sm:$0xff]
        %v1381 = vld [vmem:[%s693 + $0x11] sm:$0xff]
        %v1382 = vld [vmem:[%s693 + $0x19] sm:$0xff]
        %v1383 = vld [vmem:[%s693 + $0x21] sm:$0xff]
        %v1384 = vld [vmem:[%s693 + $0x29] sm:$0xff]
        %v1385 = vld [vmem:[%s693 + $0x31] sm:$0xff]
        %v1386 = vld [vmem:[%s693 + $0x39] sm:$0xff]
        %v1387 = vld [vmem:[%s693 + $0x41] sm:$0xff]
        %v1388 = vld [vmem:[%s693 + $0x49] sm:$0xff]
        %v1389 = vld [vmem:[%s693 + $0x51] sm:$0xff]
        %v1390 = vld [vmem:[%s693 + $0x59] sm:$0xff]
        %v1391 = vld [vmem:[%s693 + $0x61] sm:$0xff]
        %v1392 = vld [vmem:[%s693 + $0x69] sm:$0xff]
        %v1393 = vld [vmem:[%s693 + $0x71] sm:$0xff]
        %v1394 = vld [vmem:[%s693 + $0x79] sm:$0xff]
        %v1395 = vld [vmem:[%s693 + $0x81] sm:$0xff]
        %v1396 = vld [vmem:[%s693 + $0x89] sm:$0xff]
        %v1397 = vld [vmem:[%s693 + $0x91] sm:$0xff]
        %v1398 = vld [vmem:[%s693 + $0x99] sm:$0xff]
        %v1399 = vld [vmem:[%s693 + $0xa1] sm:$0xff]
        %v1400 = vld [vmem:[%s693 + $0xa9] sm:$0xff]
        %v1401 = vld [vmem:[%s693 + $0xb1] sm:$0xff]
        %v1402 = vld [vmem:[%s693 + $0xb9] sm:$0xff]
        %v1403 = vld [vmem:[%s693 + $0xc1] sm:$0xff]
        %v1404 = vld [vmem:[%s693 + $0xc9] sm:$0xff]
        %v1405 = vld [vmem:[%s693 + $0xd1] sm:$0xff]
        %v1406 = vld [vmem:[%s693 + $0xd9] sm:$0xff]
        %v1407 = vld [vmem:[%s693 + $0xe1] sm:$0xff]
        %v1408 = vld [vmem:[%s693 + $0xe9] sm:$0xff]
        %v1409 = vld [vmem:[%s693 + $0xf1] sm:$0xff]
        %v1410 = vld [vmem:[%s693 + $0xf9] sm:$0xff]
        %v1411 = vld [vmem:[%s693 + $0x101] sm:$0xff]
        %v1412 = vld [vmem:[%s693 + $0x109] sm:$0xff]
        %v1413 = vld [vmem:[%s693 + $0x111] sm:$0xff]
        %v1414 = vld [vmem:[%s693 + $0x119] sm:$0xff]
        %v1415 = vld [vmem:[%s693 + $0x121] sm:$0xff]
        %v1416 = vld [vmem:[%s693 + $0x129] sm:$0xff]
        %v1417 = vld [vmem:[%s693 + $0x131] sm:$0xff]
        %v1418 = vld [vmem:[%s693 + $0x139] sm:$0xff]
        %v1419 = vld [vmem:[%s693 + $0x141] sm:$0xff]
        %v1420 = vld [vmem:[%s693 + $0x149] sm:$0xff]
        %v1421 = vld [vmem:[%s693 + $0x151] sm:$0xff]
        %v1422 = vld [vmem:[%s693 + $0x159] sm:$0xff]
        %v1423 = vld [vmem:[%s693 + $0x161] sm:$0xff]
        %v1424 = vld [vmem:[%s693 + $0x169] sm:$0xff]
        %v1425 = vld [vmem:[%s693 + $0x171] sm:$0xff]
        %v1426 = vld [vmem:[%s693 + $0x179] sm:$0xff]
        %v1427 = vld [vmem:[%s693 + $0x181] sm:$0xff]
        %v1428 = vld [vmem:[%s693 + $0x189] sm:$0xff]
        %v1429 = vld [vmem:[%s693 + $0x191] sm:$0xff]
        %v1430 = vld [vmem:[%s693 + $0x199] sm:$0xff]
        %v1431 = vld [vmem:[%s693 + $0x1a1] sm:$0xff]
        %v1432 = vld [vmem:[%s693 + $0x1a9] sm:$0xff]
        %v1433 = vld [vmem:[%s693 + $0x1b1] sm:$0xff]
        %v1434 = vld [vmem:[%s693 + $0x1b9] sm:$0xff]
        %v1435 = vld [vmem:[%s693 + $0x1c1] sm:$0xff]
        %v1436 = vld [vmem:[%s693 + $0x1c9] sm:$0xff]
        %v1437 = vld [vmem:[%s693 + $0x1d1] sm:$0xff]
        %v1438 = vld [vmem:[%s693 + $0x1d9] sm:$0xff]
        %v1439 = vld [vmem:[%s693 + $0x1e1] sm:$0xff]
        %v1440 = vld [vmem:[%s693 + $0x1e9] sm:$0xff]
        %v1441 = vld [vmem:[%s693 + $0x1f1] sm:$0xff]
        %v1442 = vld [vmem:[%s693 + $0x1f9] sm:$0xff]
        %v1443 = vld [vmem:[%s693 + $0x201] sm:$0xff]
        %v1444 = vld [vmem:[%s693 + $0x209] sm:$0xff]
        %v1445 = vld [vmem:[%s693 + $0x211] sm:$0xff]
        %v1446 = vld [vmem:[%s693 + $0x219] sm:$0xff]
        %v1447 = vld [vmem:[%s693 + $0x221] sm:$0xff]
        %v1448 = vld [vmem:[%s693 + $0x229] sm:$0xff]
        %v1449 = vld [vmem:[%s693 + $0x231] sm:$0xff]
        %v1450 = vld [vmem:[%s693 + $0x239] sm:$0xff]
        %v1451 = vld [vmem:[%s693 + $0x241] sm:$0xff]
        %v1452 = vld [vmem:[%s693 + $0x249] sm:$0xff]
        %v1453 = vld [vmem:[%s693 + $0x251] sm:$0xff]
        %v1454 = vld [vmem:[%s693 + $0x259] sm:$0xff]
        %v1455 = vld [vmem:[%s693 + $0x261] sm:$0xff]
        %v1456 = vld [vmem:[%s693 + $0x269] sm:$0xff]
        %v1457 = vld [vmem:[%s693 + $0x271] sm:$0xff]
        %v1458 = vld [vmem:[%s693 + $0x279] sm:$0xff]
        %v1459 = vld [vmem:[%s693 + $0x281] sm:$0xff]
        %v1460 = vld [vmem:[%s693 + $0x289] sm:$0xff]
        %v1461 = vld [vmem:[%s693 + $0x291] sm:$0xff]
        %v1462 = vld [vmem:[%s693 + $0x299] sm:$0xff]
        %v1463 = vld [vmem:[%s693 + $0x2a1] sm:$0xff]
        %v1464 = vld [vmem:[%s693 + $0x2a9] sm:$0xff]
        %v1465 = vld [vmem:[%s693 + $0x2b1] sm:$0xff]
        %v1466 = vld [vmem:[%s693 + $0x2b9] sm:$0xff]
        %v1467 = vld [vmem:[%s693 + $0x2c1] sm:$0xff]
        %v1468 = vld [vmem:[%s693 + $0x2c9] sm:$0xff]
        %v1469 = vld [vmem:[%s693 + $0x2d1] sm:$0xff]
        %v1470 = vld [vmem:[%s693 + $0x2d9] sm:$0xff]
        %v1471 = vld [vmem:[%s693 + $0x2e1] sm:$0xff]
        %v1472 = vld [vmem:[%s693 + $0x2e9] sm:$0xff]
        %v1473 = vld [vmem:[%s693 + $0x2f1] sm:$0xff]
        %v1474 = vld [vmem:[%s693 + $0x2f9] sm:$0x3f]
        %s1475 = scalar_lea.vmem [#allocation12], 1
        %v1476 = vld [vmem:[%s1475] sm:$0x1]
        %1478 = vset.pattern.permute.xlu0 0
        %1479 = vperm.xlu0 %1478, %v1379
        %v1480 = vpop.permute.xlu0 %1479
        %1483 = vset.pattern.permute.xlu0 0
        %1484 = vperm.xlu0 %1483, %v1380
        %v1485 = vpop.permute.xlu0 %1484
        %1488 = vset.pattern.permute.xlu0 0
        %1489 = vperm.xlu0 %1488, %v1381
        %v1490 = vpop.permute.xlu0 %1489
        %1493 = vset.pattern.permute.xlu0 0
        %1494 = vperm.xlu0 %1493, %v1382
        %v1495 = vpop.permute.xlu0 %1494
        %1498 = vset.pattern.permute.xlu0 0
        %1499 = vperm.xlu0 %1498, %v1383
        %v1500 = vpop.permute.xlu0 %1499
        %1503 = vset.pattern.permute.xlu0 0
        %1504 = vperm.xlu0 %1503, %v1384
        %v1505 = vpop.permute.xlu0 %1504
        %1508 = vset.pattern.permute.xlu0 0
        %1509 = vperm.xlu0 %1508, %v1385
        %v1510 = vpop.permute.xlu0 %1509
        %1513 = vset.pattern.permute.xlu0 0
        %1514 = vperm.xlu0 %1513, %v1386
        %v1515 = vpop.permute.xlu0 %1514
        %1518 = vset.pattern.permute.xlu0 0
        %1519 = vperm.xlu0 %1518, %v1387
        %v1520 = vpop.permute.xlu0 %1519
        %1523 = vset.pattern.permute.xlu0 0
        %1524 = vperm.xlu0 %1523, %v1388
        %v1525 = vpop.permute.xlu0 %1524
        %1528 = vset.pattern.permute.xlu0 0
        %1529 = vperm.xlu0 %1528, %v1389
        %v1530 = vpop.permute.xlu0 %1529
        %1533 = vset.pattern.permute.xlu0 0
        %1534 = vperm.xlu0 %1533, %v1390
        %v1535 = vpop.permute.xlu0 %1534
        %1538 = vset.pattern.permute.xlu0 0
        %1539 = vperm.xlu0 %1538, %v1391
        %v1540 = vpop.permute.xlu0 %1539
        %1543 = vset.pattern.permute.xlu0 0
        %1544 = vperm.xlu0 %1543, %v1392
        %v1545 = vpop.permute.xlu0 %1544
        %1548 = vset.pattern.permute.xlu0 0
        %1549 = vperm.xlu0 %1548, %v1393
        %v1550 = vpop.permute.xlu0 %1549
        %1553 = vset.pattern.permute.xlu0 0
        %1554 = vperm.xlu0 %1553, %v1394
        %v1555 = vpop.permute.xlu0 %1554
        %1558 = vset.pattern.permute.xlu0 0
        %1559 = vperm.xlu0 %1558, %v1395
        %v1560 = vpop.permute.xlu0 %1559
        %1563 = vset.pattern.permute.xlu0 0
        %1564 = vperm.xlu0 %1563, %v1396
        %v1565 = vpop.permute.xlu0 %1564
        %1568 = vset.pattern.permute.xlu0 0
        %1569 = vperm.xlu0 %1568, %v1397
        %v1570 = vpop.permute.xlu0 %1569
        %1573 = vset.pattern.permute.xlu0 0
        %1574 = vperm.xlu0 %1573, %v1398
        %v1575 = vpop.permute.xlu0 %1574
        %1578 = vset.pattern.permute.xlu0 0
        %1579 = vperm.xlu0 %1578, %v1399
        %v1580 = vpop.permute.xlu0 %1579
        %1583 = vset.pattern.permute.xlu0 0
        %1584 = vperm.xlu0 %1583, %v1400
        %v1585 = vpop.permute.xlu0 %1584
        %1588 = vset.pattern.permute.xlu0 0
        %1589 = vperm.xlu0 %1588, %v1401
        %v1590 = vpop.permute.xlu0 %1589
        %1593 = vset.pattern.permute.xlu0 0
        %1594 = vperm.xlu0 %1593, %v1402
        %v1595 = vpop.permute.xlu0 %1594
        %1598 = vset.pattern.permute.xlu0 0
        %1599 = vperm.xlu0 %1598, %v1403
        %v1600 = vpop.permute.xlu0 %1599
        %1603 = vset.pattern.permute.xlu0 0
        %1604 = vperm.xlu0 %1603, %v1404
        %v1605 = vpop.permute.xlu0 %1604
        %1608 = vset.pattern.permute.xlu0 0
        %1609 = vperm.xlu0 %1608, %v1405
        %v1610 = vpop.permute.xlu0 %1609
        %1613 = vset.pattern.permute.xlu0 0
        %1614 = vperm.xlu0 %1613, %v1406
        %v1615 = vpop.permute.xlu0 %1614
        %1618 = vset.pattern.permute.xlu0 0
        %1619 = vperm.xlu0 %1618, %v1407
        %v1620 = vpop.permute.xlu0 %1619
        %1623 = vset.pattern.permute.xlu0 0
        %1624 = vperm.xlu0 %1623, %v1408
        %v1625 = vpop.permute.xlu0 %1624
        %1628 = vset.pattern.permute.xlu0 0
        %1629 = vperm.xlu0 %1628, %v1409
        %v1630 = vpop.permute.xlu0 %1629
        %1633 = vset.pattern.permute.xlu0 0
        %1634 = vperm.xlu0 %1633, %v1410
        %v1635 = vpop.permute.xlu0 %1634
        %1638 = vset.pattern.permute.xlu0 0
        %1639 = vperm.xlu0 %1638, %v1411
        %v1640 = vpop.permute.xlu0 %1639
        %1643 = vset.pattern.permute.xlu0 0
        %1644 = vperm.xlu0 %1643, %v1412
        %v1645 = vpop.permute.xlu0 %1644
        %1648 = vset.pattern.permute.xlu0 0
        %1649 = vperm.xlu0 %1648, %v1413
        %v1650 = vpop.permute.xlu0 %1649
        %1653 = vset.pattern.permute.xlu0 0
        %1654 = vperm.xlu0 %1653, %v1414
        %v1655 = vpop.permute.xlu0 %1654
        %1658 = vset.pattern.permute.xlu0 0
        %1659 = vperm.xlu0 %1658, %v1415
        %v1660 = vpop.permute.xlu0 %1659
        %1663 = vset.pattern.permute.xlu0 0
        %1664 = vperm.xlu0 %1663, %v1416
        %v1665 = vpop.permute.xlu0 %1664
        %1668 = vset.pattern.permute.xlu0 0
        %1669 = vperm.xlu0 %1668, %v1417
        %v1670 = vpop.permute.xlu0 %1669
        %1673 = vset.pattern.permute.xlu0 0
        %1674 = vperm.xlu0 %1673, %v1418
        %v1675 = vpop.permute.xlu0 %1674
        %1678 = vset.pattern.permute.xlu0 0
        %1679 = vperm.xlu0 %1678, %v1419
        %v1680 = vpop.permute.xlu0 %1679
        %1683 = vset.pattern.permute.xlu0 0
        %1684 = vperm.xlu0 %1683, %v1420
        %v1685 = vpop.permute.xlu0 %1684
        %1688 = vset.pattern.permute.xlu0 0
        %1689 = vperm.xlu0 %1688, %v1421
        %v1690 = vpop.permute.xlu0 %1689
        %1693 = vset.pattern.permute.xlu0 0
        %1694 = vperm.xlu0 %1693, %v1422
        %v1695 = vpop.permute.xlu0 %1694
        %1698 = vset.pattern.permute.xlu0 0
        %1699 = vperm.xlu0 %1698, %v1423
        %v1700 = vpop.permute.xlu0 %1699
        %1703 = vset.pattern.permute.xlu0 0
        %1704 = vperm.xlu0 %1703, %v1424
        %v1705 = vpop.permute.xlu0 %1704
        %1708 = vset.pattern.permute.xlu0 0
        %1709 = vperm.xlu0 %1708, %v1425
        %v1710 = vpop.permute.xlu0 %1709
        %1713 = vset.pattern.permute.xlu0 0
        %1714 = vperm.xlu0 %1713, %v1426
        %v1715 = vpop.permute.xlu0 %1714
        %1718 = vset.pattern.permute.xlu0 0
        %1719 = vperm.xlu0 %1718, %v1427
        %v1720 = vpop.permute.xlu0 %1719
        %1723 = vset.pattern.permute.xlu0 0
        %1724 = vperm.xlu0 %1723, %v1428
        %v1725 = vpop.permute.xlu0 %1724
        %1728 = vset.pattern.permute.xlu0 0
        %1729 = vperm.xlu0 %1728, %v1429
        %v1730 = vpop.permute.xlu0 %1729
        %1733 = vset.pattern.permute.xlu0 0
        %1734 = vperm.xlu0 %1733, %v1430
        %v1735 = vpop.permute.xlu0 %1734
        %1738 = vset.pattern.permute.xlu0 0
        %1739 = vperm.xlu0 %1738, %v1431
        %v1740 = vpop.permute.xlu0 %1739
        %1743 = vset.pattern.permute.xlu0 0
        %1744 = vperm.xlu0 %1743, %v1432
        %v1745 = vpop.permute.xlu0 %1744
        %1748 = vset.pattern.permute.xlu0 0
        %1749 = vperm.xlu0 %1748, %v1433
        %v1750 = vpop.permute.xlu0 %1749
        %1753 = vset.pattern.permute.xlu0 0
        %1754 = vperm.xlu0 %1753, %v1434
        %v1755 = vpop.permute.xlu0 %1754
        %1758 = vset.pattern.permute.xlu0 0
        %1759 = vperm.xlu0 %1758, %v1435
        %v1760 = vpop.permute.xlu0 %1759
        %1763 = vset.pattern.permute.xlu0 0
        %1764 = vperm.xlu0 %1763, %v1436
        %v1765 = vpop.permute.xlu0 %1764
        %1768 = vset.pattern.permute.xlu0 0
        %1769 = vperm.xlu0 %1768, %v1437
        %v1770 = vpop.permute.xlu0 %1769
        %1773 = vset.pattern.permute.xlu0 0
        %1774 = vperm.xlu0 %1773, %v1438
        %v1775 = vpop.permute.xlu0 %1774
        %1778 = vset.pattern.permute.xlu0 0
        %1779 = vperm.xlu0 %1778, %v1439
        %v1780 = vpop.permute.xlu0 %1779
        %1783 = vset.pattern.permute.xlu0 0
        %1784 = vperm.xlu0 %1783, %v1440
        %v1785 = vpop.permute.xlu0 %1784
        %1788 = vset.pattern.permute.xlu0 0
        %1789 = vperm.xlu0 %1788, %v1441
        %v1790 = vpop.permute.xlu0 %1789
        %1793 = vset.pattern.permute.xlu0 0
        %1794 = vperm.xlu0 %1793, %v1442
        %v1795 = vpop.permute.xlu0 %1794
        %1798 = vset.pattern.permute.xlu0 0
        %1799 = vperm.xlu0 %1798, %v1443
        %v1800 = vpop.permute.xlu0 %1799
        %1803 = vset.pattern.permute.xlu0 0
        %1804 = vperm.xlu0 %1803, %v1444
        %v1805 = vpop.permute.xlu0 %1804
        %1808 = vset.pattern.permute.xlu0 0
        %1809 = vperm.xlu0 %1808, %v1445
        %v1810 = vpop.permute.xlu0 %1809
        %1813 = vset.pattern.permute.xlu0 0
        %1814 = vperm.xlu0 %1813, %v1446
        %v1815 = vpop.permute.xlu0 %1814
        %1818 = vset.pattern.permute.xlu0 0
        %1819 = vperm.xlu0 %1818, %v1447
        %v1820 = vpop.permute.xlu0 %1819
        %1823 = vset.pattern.permute.xlu0 0
        %1824 = vperm.xlu0 %1823, %v1448
        %v1825 = vpop.permute.xlu0 %1824
        %1828 = vset.pattern.permute.xlu0 0
        %1829 = vperm.xlu0 %1828, %v1449
        %v1830 = vpop.permute.xlu0 %1829
        %1833 = vset.pattern.permute.xlu0 0
        %1834 = vperm.xlu0 %1833, %v1450
        %v1835 = vpop.permute.xlu0 %1834
        %1838 = vset.pattern.permute.xlu0 0
        %1839 = vperm.xlu0 %1838, %v1451
        %v1840 = vpop.permute.xlu0 %1839
        %1843 = vset.pattern.permute.xlu0 0
        %1844 = vperm.xlu0 %1843, %v1452
        %v1845 = vpop.permute.xlu0 %1844
        %1848 = vset.pattern.permute.xlu0 0
        %1849 = vperm.xlu0 %1848, %v1453
        %v1850 = vpop.permute.xlu0 %1849
        %1853 = vset.pattern.permute.xlu0 0
        %1854 = vperm.xlu0 %1853, %v1454
        %v1855 = vpop.permute.xlu0 %1854
        %1858 = vset.pattern.permute.xlu0 0
        %1859 = vperm.xlu0 %1858, %v1455
        %v1860 = vpop.permute.xlu0 %1859
        %1863 = vset.pattern.permute.xlu0 0
        %1864 = vperm.xlu0 %1863, %v1456
        %v1865 = vpop.permute.xlu0 %1864
        %1868 = vset.pattern.permute.xlu0 0
        %1869 = vperm.xlu0 %1868, %v1457
        %v1870 = vpop.permute.xlu0 %1869
        %1873 = vset.pattern.permute.xlu0 0
        %1874 = vperm.xlu0 %1873, %v1458
        %v1875 = vpop.permute.xlu0 %1874
        %1878 = vset.pattern.permute.xlu0 0
        %1879 = vperm.xlu0 %1878, %v1459
        %v1880 = vpop.permute.xlu0 %1879
        %1883 = vset.pattern.permute.xlu0 0
        %1884 = vperm.xlu0 %1883, %v1460
        %v1885 = vpop.permute.xlu0 %1884
        %1888 = vset.pattern.permute.xlu0 0
        %1889 = vperm.xlu0 %1888, %v1461
        %v1890 = vpop.permute.xlu0 %1889
        %1893 = vset.pattern.permute.xlu0 0
        %1894 = vperm.xlu0 %1893, %v1462
        %v1895 = vpop.permute.xlu0 %1894
        %1898 = vset.pattern.permute.xlu0 0
        %1899 = vperm.xlu0 %1898, %v1463
        %v1900 = vpop.permute.xlu0 %1899
        %1903 = vset.pattern.permute.xlu0 0
        %1904 = vperm.xlu0 %1903, %v1464
        %v1905 = vpop.permute.xlu0 %1904
        %1908 = vset.pattern.permute.xlu0 0
        %1909 = vperm.xlu0 %1908, %v1465
        %v1910 = vpop.permute.xlu0 %1909
        %1913 = vset.pattern.permute.xlu0 0
        %1914 = vperm.xlu0 %1913, %v1466
        %v1915 = vpop.permute.xlu0 %1914
        %1918 = vset.pattern.permute.xlu0 0
        %1919 = vperm.xlu0 %1918, %v1467
        %v1920 = vpop.permute.xlu0 %1919
        %1923 = vset.pattern.permute.xlu0 0
        %1924 = vperm.xlu0 %1923, %v1468
        %v1925 = vpop.permute.xlu0 %1924
        %1928 = vset.pattern.permute.xlu0 0
        %1929 = vperm.xlu0 %1928, %v1469
        %v1930 = vpop.permute.xlu0 %1929
        %1933 = vset.pattern.permute.xlu0 0
        %1934 = vperm.xlu0 %1933, %v1470
        %v1935 = vpop.permute.xlu0 %1934
        %1938 = vset.pattern.permute.xlu0 0
        %1939 = vperm.xlu0 %1938, %v1471
        %v1940 = vpop.permute.xlu0 %1939
        %1943 = vset.pattern.permute.xlu0 0
        %1944 = vperm.xlu0 %1943, %v1472
        %v1945 = vpop.permute.xlu0 %1944
        %1948 = vset.pattern.permute.xlu0 0
        %1949 = vperm.xlu0 %1948, %v1473
        %v1950 = vpop.permute.xlu0 %1949
        %1953 = vset.pattern.permute.xlu0 0
        %1954 = vperm.xlu0 %1953, %v1474
        %v1955 = vpop.permute.xlu0 %1954
        %v1958 = vlaneseq
        %v1959 = vshrl.u32 %v1958, 7
        %v1960 = vsub.s32 0, %v1959
        %v1961 = vrot.slane %v1476, %v1960
        %v1963 = vmul.f32 %v1480, %v1961
        %v1964 = vmul.f32 %v1485, %v1961
        %v1965 = vmul.f32 %v1490, %v1961
        %v1966 = vmul.f32 %v1495, %v1961
        %v1967 = vmul.f32 %v1500, %v1961
        %v1968 = vmul.f32 %v1505, %v1961
        %v1969 = vmul.f32 %v1510, %v1961
        %v1970 = vmul.f32 %v1515, %v1961
        %v1971 = vmul.f32 %v1520, %v1961
        %v1972 = vmul.f32 %v1525, %v1961
        %v1973 = vmul.f32 %v1530, %v1961
        %v1974 = vmul.f32 %v1535, %v1961
        %v1975 = vmul.f32 %v1540, %v1961
        %v1976 = vmul.f32 %v1545, %v1961
        %v1977 = vmul.f32 %v1550, %v1961
        %v1978 = vmul.f32 %v1555, %v1961
        %v1979 = vmul.f32 %v1560, %v1961
        %v1980 = vmul.f32 %v1565, %v1961
        %v1981 = vmul.f32 %v1570, %v1961
        %v1982 = vmul.f32 %v1575, %v1961
        %v1983 = vmul.f32 %v1580, %v1961
        %v1984 = vmul.f32 %v1585, %v1961
        %v1985 = vmul.f32 %v1590, %v1961
        %v1986 = vmul.f32 %v1595, %v1961
        %v1987 = vmul.f32 %v1600, %v1961
        %v1988 = vmul.f32 %v1605, %v1961
        %v1989 = vmul.f32 %v1610, %v1961
        %v1990 = vmul.f32 %v1615, %v1961
        %v1991 = vmul.f32 %v1620, %v1961
        %v1992 = vmul.f32 %v1625, %v1961
        %v1993 = vmul.f32 %v1630, %v1961
        %v1994 = vmul.f32 %v1635, %v1961
        %v1995 = vmul.f32 %v1640, %v1961
        %v1996 = vmul.f32 %v1645, %v1961
        %v1997 = vmul.f32 %v1650, %v1961
        %v1998 = vmul.f32 %v1655, %v1961
        %v1999 = vmul.f32 %v1660, %v1961
        %v2000 = vmul.f32 %v1665, %v1961
        %v2001 = vmul.f32 %v1670, %v1961
        %v2002 = vmul.f32 %v1675, %v1961
        %v2003 = vmul.f32 %v1680, %v1961
        %v2004 = vmul.f32 %v1685, %v1961
        %v2005 = vmul.f32 %v1690, %v1961
        %v2006 = vmul.f32 %v1695, %v1961
        %v2007 = vmul.f32 %v1700, %v1961
        %v2008 = vmul.f32 %v1705, %v1961
        %v2009 = vmul.f32 %v1710, %v1961
        %v2010 = vmul.f32 %v1715, %v1961
        %v2011 = vmul.f32 %v1720, %v1961
        %v2012 = vmul.f32 %v1725, %v1961
        %v2013 = vmul.f32 %v1730, %v1961
        %v2014 = vmul.f32 %v1735, %v1961
        %v2015 = vmul.f32 %v1740, %v1961
        %v2016 = vmul.f32 %v1745, %v1961
        %v2017 = vmul.f32 %v1750, %v1961
        %v2018 = vmul.f32 %v1755, %v1961
        %v2019 = vmul.f32 %v1760, %v1961
        %v2020 = vmul.f32 %v1765, %v1961
        %v2021 = vmul.f32 %v1770, %v1961
        %v2022 = vmul.f32 %v1775, %v1961
        %v2023 = vmul.f32 %v1780, %v1961
        %v2024 = vmul.f32 %v1785, %v1961
        %v2025 = vmul.f32 %v1790, %v1961
        %v2026 = vmul.f32 %v1795, %v1961
        %v2027 = vmul.f32 %v1800, %v1961
        %v2028 = vmul.f32 %v1805, %v1961
        %v2029 = vmul.f32 %v1810, %v1961
        %v2030 = vmul.f32 %v1815, %v1961
        %v2031 = vmul.f32 %v1820, %v1961
        %v2032 = vmul.f32 %v1825, %v1961
        %v2033 = vmul.f32 %v1830, %v1961
        %v2034 = vmul.f32 %v1835, %v1961
        %v2035 = vmul.f32 %v1840, %v1961
        %v2036 = vmul.f32 %v1845, %v1961
        %v2037 = vmul.f32 %v1850, %v1961
        %v2038 = vmul.f32 %v1855, %v1961
        %v2039 = vmul.f32 %v1860, %v1961
        %v2040 = vmul.f32 %v1865, %v1961
        %v2041 = vmul.f32 %v1870, %v1961
        %v2042 = vmul.f32 %v1875, %v1961
        %v2043 = vmul.f32 %v1880, %v1961
        %v2044 = vmul.f32 %v1885, %v1961
        %v2045 = vmul.f32 %v1890, %v1961
        %v2046 = vmul.f32 %v1895, %v1961
        %v2047 = vmul.f32 %v1900, %v1961
        %v2048 = vmul.f32 %v1905, %v1961
        %v2049 = vmul.f32 %v1910, %v1961
        %v2050 = vmul.f32 %v1915, %v1961
        %v2051 = vmul.f32 %v1920, %v1961
        %v2052 = vmul.f32 %v1925, %v1961
        %v2053 = vmul.f32 %v1930, %v1961
        %v2054 = vmul.f32 %v1935, %v1961
        %v2055 = vmul.f32 %v1940, %v1961
        %v2056 = vmul.f32 %v1945, %v1961
        %v2057 = vmul.f32 %v1950, %v1961
        %v2058 = vmul.f32 %v1955, %v1961
        %v2059 = vadd.f32 %v1283, %v1963
        %v2060 = vadd.f32 %v1284, %v1964
        %v2061 = vadd.f32 %v1285, %v1965
        %v2062 = vadd.f32 %v1286, %v1966
        %v2063 = vadd.f32 %v1287, %v1967
        %v2064 = vadd.f32 %v1288, %v1968
        %v2065 = vadd.f32 %v1289, %v1969
        %v2066 = vadd.f32 %v1290, %v1970
        %v2067 = vadd.f32 %v1291, %v1971
        %v2068 = vadd.f32 %v1292, %v1972
        %v2069 = vadd.f32 %v1293, %v1973
        %v2070 = vadd.f32 %v1294, %v1974
        %v2071 = vadd.f32 %v1295, %v1975
        %v2072 = vadd.f32 %v1296, %v1976
        %v2073 = vadd.f32 %v1297, %v1977
        %v2074 = vadd.f32 %v1298, %v1978
        %v2075 = vadd.f32 %v1299, %v1979
        %v2076 = vadd.f32 %v1300, %v1980
        %v2077 = vadd.f32 %v1301, %v1981
        %v2078 = vadd.f32 %v1302, %v1982
        %v2079 = vadd.f32 %v1303, %v1983
        %v2080 = vadd.f32 %v1304, %v1984
        %v2081 = vadd.f32 %v1305, %v1985
        %v2082 = vadd.f32 %v1306, %v1986
        %v2083 = vadd.f32 %v1307, %v1987
        %v2084 = vadd.f32 %v1308, %v1988
        %v2085 = vadd.f32 %v1309, %v1989
        %v2086 = vadd.f32 %v1310, %v1990
        %v2087 = vadd.f32 %v1311, %v1991
        %v2088 = vadd.f32 %v1312, %v1992
        %v2089 = vadd.f32 %v1313, %v1993
        %v2090 = vadd.f32 %v1314, %v1994
        %v2091 = vadd.f32 %v1315, %v1995
        %v2092 = vadd.f32 %v1316, %v1996
        %v2093 = vadd.f32 %v1317, %v1997
        %v2094 = vadd.f32 %v1318, %v1998
        %v2095 = vadd.f32 %v1319, %v1999
        %v2096 = vadd.f32 %v1320, %v2000
        %v2097 = vadd.f32 %v1321, %v2001
        %v2098 = vadd.f32 %v1322, %v2002
        %v2099 = vadd.f32 %v1323, %v2003
        %v2100 = vadd.f32 %v1324, %v2004
        %v2101 = vadd.f32 %v1325, %v2005
        %v2102 = vadd.f32 %v1326, %v2006
        %v2103 = vadd.f32 %v1327, %v2007
        %v2104 = vadd.f32 %v1328, %v2008
        %v2105 = vadd.f32 %v1329, %v2009
        %v2106 = vadd.f32 %v1330, %v2010
        %v2107 = vadd.f32 %v1331, %v2011
        %v2108 = vadd.f32 %v1332, %v2012
        %v2109 = vadd.f32 %v1333, %v2013
        %v2110 = vadd.f32 %v1334, %v2014
        %v2111 = vadd.f32 %v1335, %v2015
        %v2112 = vadd.f32 %v1336, %v2016
        %v2113 = vadd.f32 %v1337, %v2017
        %v2114 = vadd.f32 %v1338, %v2018
        %v2115 = vadd.f32 %v1339, %v2019
        %v2116 = vadd.f32 %v1340, %v2020
        %v2117 = vadd.f32 %v1341, %v2021
        %v2118 = vadd.f32 %v1342, %v2022
        %v2119 = vadd.f32 %v1343, %v2023
        %v2120 = vadd.f32 %v1344, %v2024
        %v2121 = vadd.f32 %v1345, %v2025
        %v2122 = vadd.f32 %v1346, %v2026
        %v2123 = vadd.f32 %v1347, %v2027
        %v2124 = vadd.f32 %v1348, %v2028
        %v2125 = vadd.f32 %v1349, %v2029
        %v2126 = vadd.f32 %v1350, %v2030
        %v2127 = vadd.f32 %v1351, %v2031
        %v2128 = vadd.f32 %v1352, %v2032
        %v2129 = vadd.f32 %v1353, %v2033
        %v2130 = vadd.f32 %v1354, %v2034
        %v2131 = vadd.f32 %v1355, %v2035
        %v2132 = vadd.f32 %v1356, %v2036
        %v2133 = vadd.f32 %v1357, %v2037
        %v2134 = vadd.f32 %v1358, %v2038
        %v2135 = vadd.f32 %v1359, %v2039
        %v2136 = vadd.f32 %v1360, %v2040
        %v2137 = vadd.f32 %v1361, %v2041
        %v2138 = vadd.f32 %v1362, %v2042
        %v2139 = vadd.f32 %v1363, %v2043
        %v2140 = vadd.f32 %v1364, %v2044
        %v2141 = vadd.f32 %v1365, %v2045
        %v2142 = vadd.f32 %v1366, %v2046
        %v2143 = vadd.f32 %v1367, %v2047
        %v2144 = vadd.f32 %v1368, %v2048
        %v2145 = vadd.f32 %v1369, %v2049
        %v2146 = vadd.f32 %v1370, %v2050
        %v2147 = vadd.f32 %v1371, %v2051
        %v2148 = vadd.f32 %v1372, %v2052
        %v2149 = vadd.f32 %v1373, %v2053
        %v2150 = vadd.f32 %v1374, %v2054
        %v2151 = vadd.f32 %v1375, %v2055
        %v2152 = vadd.f32 %v1376, %v2056
        %v2153 = vadd.f32 %v1377, %v2057
        %v2154 = vadd.f32 %v1378, %v2058
        %v2155 = vld [vmem:[%s693 + $0x2] sm:$0xff]
        %v2156 = vld [vmem:[%s693 + $0xa] sm:$0xff]
        %v2157 = vld [vmem:[%s693 + $0x12] sm:$0xff]
        %v2158 = vld [vmem:[%s693 + $0x1a] sm:$0xff]
        %v2159 = vld [vmem:[%s693 + $0x22] sm:$0xff]
        %v2160 = vld [vmem:[%s693 + $0x2a] sm:$0xff]
        %v2161 = vld [vmem:[%s693 + $0x32] sm:$0xff]
        %v2162 = vld [vmem:[%s693 + $0x3a] sm:$0xff]
        %v2163 = vld [vmem:[%s693 + $0x42] sm:$0xff]
        %v2164 = vld [vmem:[%s693 + $0x4a] sm:$0xff]
        %v2165 = vld [vmem:[%s693 + $0x52] sm:$0xff]
        %v2166 = vld [vmem:[%s693 + $0x5a] sm:$0xff]
        %v2167 = vld [vmem:[%s693 + $0x62] sm:$0xff]
        %v2168 = vld [vmem:[%s693 + $0x6a] sm:$0xff]
        %v2169 = vld [vmem:[%s693 + $0x72] sm:$0xff]
        %v2170 = vld [vmem:[%s693 + $0x7a] sm:$0xff]
        %v2171 = vld [vmem:[%s693 + $0x82] sm:$0xff]
        %v2172 = vld [vmem:[%s693 + $0x8a] sm:$0xff]
        %v2173 = vld [vmem:[%s693 + $0x92] sm:$0xff]
        %v2174 = vld [vmem:[%s693 + $0x9a] sm:$0xff]
        %v2175 = vld [vmem:[%s693 + $0xa2] sm:$0xff]
        %v2176 = vld [vmem:[%s693 + $0xaa] sm:$0xff]
        %v2177 = vld [vmem:[%s693 + $0xb2] sm:$0xff]
        %v2178 = vld [vmem:[%s693 + $0xba] sm:$0xff]
        %v2179 = vld [vmem:[%s693 + $0xc2] sm:$0xff]
        %v2180 = vld [vmem:[%s693 + $0xca] sm:$0xff]
        %v2181 = vld [vmem:[%s693 + $0xd2] sm:$0xff]
        %v2182 = vld [vmem:[%s693 + $0xda] sm:$0xff]
        %v2183 = vld [vmem:[%s693 + $0xe2] sm:$0xff]
        %v2184 = vld [vmem:[%s693 + $0xea] sm:$0xff]
        %v2185 = vld [vmem:[%s693 + $0xf2] sm:$0xff]
        %v2186 = vld [vmem:[%s693 + $0xfa] sm:$0xff]
        %v2187 = vld [vmem:[%s693 + $0x102] sm:$0xff]
        %v2188 = vld [vmem:[%s693 + $0x10a] sm:$0xff]
        %v2189 = vld [vmem:[%s693 + $0x112] sm:$0xff]
        %v2190 = vld [vmem:[%s693 + $0x11a] sm:$0xff]
        %v2191 = vld [vmem:[%s693 + $0x122] sm:$0xff]
        %v2192 = vld [vmem:[%s693 + $0x12a] sm:$0xff]
        %v2193 = vld [vmem:[%s693 + $0x132] sm:$0xff]
        %v2194 = vld [vmem:[%s693 + $0x13a] sm:$0xff]
        %v2195 = vld [vmem:[%s693 + $0x142] sm:$0xff]
        %v2196 = vld [vmem:[%s693 + $0x14a] sm:$0xff]
        %v2197 = vld [vmem:[%s693 + $0x152] sm:$0xff]
        %v2198 = vld [vmem:[%s693 + $0x15a] sm:$0xff]
        %v2199 = vld [vmem:[%s693 + $0x162] sm:$0xff]
        %v2200 = vld [vmem:[%s693 + $0x16a] sm:$0xff]
        %v2201 = vld [vmem:[%s693 + $0x172] sm:$0xff]
        %v2202 = vld [vmem:[%s693 + $0x17a] sm:$0xff]
        %v2203 = vld [vmem:[%s693 + $0x182] sm:$0xff]
        %v2204 = vld [vmem:[%s693 + $0x18a] sm:$0xff]
        %v2205 = vld [vmem:[%s693 + $0x192] sm:$0xff]
        %v2206 = vld [vmem:[%s693 + $0x19a] sm:$0xff]
        %v2207 = vld [vmem:[%s693 + $0x1a2] sm:$0xff]
        %v2208 = vld [vmem:[%s693 + $0x1aa] sm:$0xff]
        %v2209 = vld [vmem:[%s693 + $0x1b2] sm:$0xff]
        %v2210 = vld [vmem:[%s693 + $0x1ba] sm:$0xff]
        %v2211 = vld [vmem:[%s693 + $0x1c2] sm:$0xff]
        %v2212 = vld [vmem:[%s693 + $0x1ca] sm:$0xff]
        %v2213 = vld [vmem:[%s693 + $0x1d2] sm:$0xff]
        %v2214 = vld [vmem:[%s693 + $0x1da] sm:$0xff]
        %v2215 = vld [vmem:[%s693 + $0x1e2] sm:$0xff]
        %v2216 = vld [vmem:[%s693 + $0x1ea] sm:$0xff]
        %v2217 = vld [vmem:[%s693 + $0x1f2] sm:$0xff]
        %v2218 = vld [vmem:[%s693 + $0x1fa] sm:$0xff]
        %v2219 = vld [vmem:[%s693 + $0x202] sm:$0xff]
        %v2220 = vld [vmem:[%s693 + $0x20a] sm:$0xff]
        %v2221 = vld [vmem:[%s693 + $0x212] sm:$0xff]
        %v2222 = vld [vmem:[%s693 + $0x21a] sm:$0xff]
        %v2223 = vld [vmem:[%s693 + $0x222] sm:$0xff]
        %v2224 = vld [vmem:[%s693 + $0x22a] sm:$0xff]
        %v2225 = vld [vmem:[%s693 + $0x232] sm:$0xff]
        %v2226 = vld [vmem:[%s693 + $0x23a] sm:$0xff]
        %v2227 = vld [vmem:[%s693 + $0x242] sm:$0xff]
        %v2228 = vld [vmem:[%s693 + $0x24a] sm:$0xff]
        %v2229 = vld [vmem:[%s693 + $0x252] sm:$0xff]
        %v2230 = vld [vmem:[%s693 + $0x25a] sm:$0xff]
        %v2231 = vld [vmem:[%s693 + $0x262] sm:$0xff]
        %v2232 = vld [vmem:[%s693 + $0x26a] sm:$0xff]
        %v2233 = vld [vmem:[%s693 + $0x272] sm:$0xff]
        %v2234 = vld [vmem:[%s693 + $0x27a] sm:$0xff]
        %v2235 = vld [vmem:[%s693 + $0x282] sm:$0xff]
        %v2236 = vld [vmem:[%s693 + $0x28a] sm:$0xff]
        %v2237 = vld [vmem:[%s693 + $0x292] sm:$0xff]
        %v2238 = vld [vmem:[%s693 + $0x29a] sm:$0xff]
        %v2239 = vld [vmem:[%s693 + $0x2a2] sm:$0xff]
        %v2240 = vld [vmem:[%s693 + $0x2aa] sm:$0xff]
        %v2241 = vld [vmem:[%s693 + $0x2b2] sm:$0xff]
        %v2242 = vld [vmem:[%s693 + $0x2ba] sm:$0xff]
        %v2243 = vld [vmem:[%s693 + $0x2c2] sm:$0xff]
        %v2244 = vld [vmem:[%s693 + $0x2ca] sm:$0xff]
        %v2245 = vld [vmem:[%s693 + $0x2d2] sm:$0xff]
        %v2246 = vld [vmem:[%s693 + $0x2da] sm:$0xff]
        %v2247 = vld [vmem:[%s693 + $0x2e2] sm:$0xff]
        %v2248 = vld [vmem:[%s693 + $0x2ea] sm:$0xff]
        %v2249 = vld [vmem:[%s693 + $0x2f2] sm:$0xff]
        %v2250 = vld [vmem:[%s693 + $0x2fa] sm:$0x3f]
        %s2251 = scalar_lea.vmem [#allocation12], 2
        %v2252 = vld [vmem:[%s2251] sm:$0x1]
        %2254 = vset.pattern.permute.xlu0 0
        %2255 = vperm.xlu0 %2254, %v2155
        %v2256 = vpop.permute.xlu0 %2255
        %2259 = vset.pattern.permute.xlu0 0
        %2260 = vperm.xlu0 %2259, %v2156
        %v2261 = vpop.permute.xlu0 %2260
        %2264 = vset.pattern.permute.xlu0 0
        %2265 = vperm.xlu0 %2264, %v2157
        %v2266 = vpop.permute.xlu0 %2265
        %2269 = vset.pattern.permute.xlu0 0
        %2270 = vperm.xlu0 %2269, %v2158
        %v2271 = vpop.permute.xlu0 %2270
        %2274 = vset.pattern.permute.xlu0 0
        %2275 = vperm.xlu0 %2274, %v2159
        %v2276 = vpop.permute.xlu0 %2275
        %2279 = vset.pattern.permute.xlu0 0
        %2280 = vperm.xlu0 %2279, %v2160
        %v2281 = vpop.permute.xlu0 %2280
        %2284 = vset.pattern.permute.xlu0 0
        %2285 = vperm.xlu0 %2284, %v2161
        %v2286 = vpop.permute.xlu0 %2285
        %2289 = vset.pattern.permute.xlu0 0
        %2290 = vperm.xlu0 %2289, %v2162
        %v2291 = vpop.permute.xlu0 %2290
        %2294 = vset.pattern.permute.xlu0 0
        %2295 = vperm.xlu0 %2294, %v2163
        %v2296 = vpop.permute.xlu0 %2295
        %2299 = vset.pattern.permute.xlu0 0
        %2300 = vperm.xlu0 %2299, %v2164
        %v2301 = vpop.permute.xlu0 %2300
        %2304 = vset.pattern.permute.xlu0 0
        %2305 = vperm.xlu0 %2304, %v2165
        %v2306 = vpop.permute.xlu0 %2305
        %2309 = vset.pattern.permute.xlu0 0
        %2310 = vperm.xlu0 %2309, %v2166
        %v2311 = vpop.permute.xlu0 %2310
        %2314 = vset.pattern.permute.xlu0 0
        %2315 = vperm.xlu0 %2314, %v2167
        %v2316 = vpop.permute.xlu0 %2315
        %2319 = vset.pattern.permute.xlu0 0
        %2320 = vperm.xlu0 %2319, %v2168
        %v2321 = vpop.permute.xlu0 %2320
        %2324 = vset.pattern.permute.xlu0 0
        %2325 = vperm.xlu0 %2324, %v2169
        %v2326 = vpop.permute.xlu0 %2325
        %2329 = vset.pattern.permute.xlu0 0
        %2330 = vperm.xlu0 %2329, %v2170
        %v2331 = vpop.permute.xlu0 %2330
        %2334 = vset.pattern.permute.xlu0 0
        %2335 = vperm.xlu0 %2334, %v2171
        %v2336 = vpop.permute.xlu0 %2335
        %2339 = vset.pattern.permute.xlu0 0
        %2340 = vperm.xlu0 %2339, %v2172
        %v2341 = vpop.permute.xlu0 %2340
        %2344 = vset.pattern.permute.xlu0 0
        %2345 = vperm.xlu0 %2344, %v2173
        %v2346 = vpop.permute.xlu0 %2345
        %2349 = vset.pattern.permute.xlu0 0
        %2350 = vperm.xlu0 %2349, %v2174
        %v2351 = vpop.permute.xlu0 %2350
        %2354 = vset.pattern.permute.xlu0 0
        %2355 = vperm.xlu0 %2354, %v2175
        %v2356 = vpop.permute.xlu0 %2355
        %2359 = vset.pattern.permute.xlu0 0
        %2360 = vperm.xlu0 %2359, %v2176
        %v2361 = vpop.permute.xlu0 %2360
        %2364 = vset.pattern.permute.xlu0 0
        %2365 = vperm.xlu0 %2364, %v2177
        %v2366 = vpop.permute.xlu0 %2365
        %2369 = vset.pattern.permute.xlu0 0
        %2370 = vperm.xlu0 %2369, %v2178
        %v2371 = vpop.permute.xlu0 %2370
        %2374 = vset.pattern.permute.xlu0 0
        %2375 = vperm.xlu0 %2374, %v2179
        %v2376 = vpop.permute.xlu0 %2375
        %2379 = vset.pattern.permute.xlu0 0
        %2380 = vperm.xlu0 %2379, %v2180
        %v2381 = vpop.permute.xlu0 %2380
        %2384 = vset.pattern.permute.xlu0 0
        %2385 = vperm.xlu0 %2384, %v2181
        %v2386 = vpop.permute.xlu0 %2385
        %2389 = vset.pattern.permute.xlu0 0
        %2390 = vperm.xlu0 %2389, %v2182
        %v2391 = vpop.permute.xlu0 %2390
        %2394 = vset.pattern.permute.xlu0 0
        %2395 = vperm.xlu0 %2394, %v2183
        %v2396 = vpop.permute.xlu0 %2395
        %2399 = vset.pattern.permute.xlu0 0
        %2400 = vperm.xlu0 %2399, %v2184
        %v2401 = vpop.permute.xlu0 %2400
        %2404 = vset.pattern.permute.xlu0 0
        %2405 = vperm.xlu0 %2404, %v2185
        %v2406 = vpop.permute.xlu0 %2405
        %2409 = vset.pattern.permute.xlu0 0
        %2410 = vperm.xlu0 %2409, %v2186
        %v2411 = vpop.permute.xlu0 %2410
        %2414 = vset.pattern.permute.xlu0 0
        %2415 = vperm.xlu0 %2414, %v2187
        %v2416 = vpop.permute.xlu0 %2415
        %2419 = vset.pattern.permute.xlu0 0
        %2420 = vperm.xlu0 %2419, %v2188
        %v2421 = vpop.permute.xlu0 %2420
        %2424 = vset.pattern.permute.xlu0 0
        %2425 = vperm.xlu0 %2424, %v2189
        %v2426 = vpop.permute.xlu0 %2425
        %2429 = vset.pattern.permute.xlu0 0
        %2430 = vperm.xlu0 %2429, %v2190
        %v2431 = vpop.permute.xlu0 %2430
        %2434 = vset.pattern.permute.xlu0 0
        %2435 = vperm.xlu0 %2434, %v2191
        %v2436 = vpop.permute.xlu0 %2435
        %2439 = vset.pattern.permute.xlu0 0
        %2440 = vperm.xlu0 %2439, %v2192
        %v2441 = vpop.permute.xlu0 %2440
        %2444 = vset.pattern.permute.xlu0 0
        %2445 = vperm.xlu0 %2444, %v2193
        %v2446 = vpop.permute.xlu0 %2445
        %2449 = vset.pattern.permute.xlu0 0
        %2450 = vperm.xlu0 %2449, %v2194
        %v2451 = vpop.permute.xlu0 %2450
        %2454 = vset.pattern.permute.xlu0 0
        %2455 = vperm.xlu0 %2454, %v2195
        %v2456 = vpop.permute.xlu0 %2455
        %2459 = vset.pattern.permute.xlu0 0
        %2460 = vperm.xlu0 %2459, %v2196
        %v2461 = vpop.permute.xlu0 %2460
        %2464 = vset.pattern.permute.xlu0 0
        %2465 = vperm.xlu0 %2464, %v2197
        %v2466 = vpop.permute.xlu0 %2465
        %2469 = vset.pattern.permute.xlu0 0
        %2470 = vperm.xlu0 %2469, %v2198
        %v2471 = vpop.permute.xlu0 %2470
        %2474 = vset.pattern.permute.xlu0 0
        %2475 = vperm.xlu0 %2474, %v2199
        %v2476 = vpop.permute.xlu0 %2475
        %2479 = vset.pattern.permute.xlu0 0
        %2480 = vperm.xlu0 %2479, %v2200
        %v2481 = vpop.permute.xlu0 %2480
        %2484 = vset.pattern.permute.xlu0 0
        %2485 = vperm.xlu0 %2484, %v2201
        %v2486 = vpop.permute.xlu0 %2485
        %2489 = vset.pattern.permute.xlu0 0
        %2490 = vperm.xlu0 %2489, %v2202
        %v2491 = vpop.permute.xlu0 %2490
        %2494 = vset.pattern.permute.xlu0 0
        %2495 = vperm.xlu0 %2494, %v2203
        %v2496 = vpop.permute.xlu0 %2495
        %2499 = vset.pattern.permute.xlu0 0
        %2500 = vperm.xlu0 %2499, %v2204
        %v2501 = vpop.permute.xlu0 %2500
        %2504 = vset.pattern.permute.xlu0 0
        %2505 = vperm.xlu0 %2504, %v2205
        %v2506 = vpop.permute.xlu0 %2505
        %2509 = vset.pattern.permute.xlu0 0
        %2510 = vperm.xlu0 %2509, %v2206
        %v2511 = vpop.permute.xlu0 %2510
        %2514 = vset.pattern.permute.xlu0 0
        %2515 = vperm.xlu0 %2514, %v2207
        %v2516 = vpop.permute.xlu0 %2515
        %2519 = vset.pattern.permute.xlu0 0
        %2520 = vperm.xlu0 %2519, %v2208
        %v2521 = vpop.permute.xlu0 %2520
        %2524 = vset.pattern.permute.xlu0 0
        %2525 = vperm.xlu0 %2524, %v2209
        %v2526 = vpop.permute.xlu0 %2525
        %2529 = vset.pattern.permute.xlu0 0
        %2530 = vperm.xlu0 %2529, %v2210
        %v2531 = vpop.permute.xlu0 %2530
        %2534 = vset.pattern.permute.xlu0 0
        %2535 = vperm.xlu0 %2534, %v2211
        %v2536 = vpop.permute.xlu0 %2535
        %2539 = vset.pattern.permute.xlu0 0
        %2540 = vperm.xlu0 %2539, %v2212
        %v2541 = vpop.permute.xlu0 %2540
        %2544 = vset.pattern.permute.xlu0 0
        %2545 = vperm.xlu0 %2544, %v2213
        %v2546 = vpop.permute.xlu0 %2545
        %2549 = vset.pattern.permute.xlu0 0
        %2550 = vperm.xlu0 %2549, %v2214
        %v2551 = vpop.permute.xlu0 %2550
        %2554 = vset.pattern.permute.xlu0 0
        %2555 = vperm.xlu0 %2554, %v2215
        %v2556 = vpop.permute.xlu0 %2555
        %2559 = vset.pattern.permute.xlu0 0
        %2560 = vperm.xlu0 %2559, %v2216
        %v2561 = vpop.permute.xlu0 %2560
        %2564 = vset.pattern.permute.xlu0 0
        %2565 = vperm.xlu0 %2564, %v2217
        %v2566 = vpop.permute.xlu0 %2565
        %2569 = vset.pattern.permute.xlu0 0
        %2570 = vperm.xlu0 %2569, %v2218
        %v2571 = vpop.permute.xlu0 %2570
        %2574 = vset.pattern.permute.xlu0 0
        %2575 = vperm.xlu0 %2574, %v2219
        %v2576 = vpop.permute.xlu0 %2575
        %2579 = vset.pattern.permute.xlu0 0
        %2580 = vperm.xlu0 %2579, %v2220
        %v2581 = vpop.permute.xlu0 %2580
        %2584 = vset.pattern.permute.xlu0 0
        %2585 = vperm.xlu0 %2584, %v2221
        %v2586 = vpop.permute.xlu0 %2585
        %2589 = vset.pattern.permute.xlu0 0
        %2590 = vperm.xlu0 %2589, %v2222
        %v2591 = vpop.permute.xlu0 %2590
        %2594 = vset.pattern.permute.xlu0 0
        %2595 = vperm.xlu0 %2594, %v2223
        %v2596 = vpop.permute.xlu0 %2595
        %2599 = vset.pattern.permute.xlu0 0
        %2600 = vperm.xlu0 %2599, %v2224
        %v2601 = vpop.permute.xlu0 %2600
        %2604 = vset.pattern.permute.xlu0 0
        %2605 = vperm.xlu0 %2604, %v2225
        %v2606 = vpop.permute.xlu0 %2605
        %2609 = vset.pattern.permute.xlu0 0
        %2610 = vperm.xlu0 %2609, %v2226
        %v2611 = vpop.permute.xlu0 %2610
        %2614 = vset.pattern.permute.xlu0 0
        %2615 = vperm.xlu0 %2614, %v2227
        %v2616 = vpop.permute.xlu0 %2615
        %2619 = vset.pattern.permute.xlu0 0
        %2620 = vperm.xlu0 %2619, %v2228
        %v2621 = vpop.permute.xlu0 %2620
        %2624 = vset.pattern.permute.xlu0 0
        %2625 = vperm.xlu0 %2624, %v2229
        %v2626 = vpop.permute.xlu0 %2625
        %2629 = vset.pattern.permute.xlu0 0
        %2630 = vperm.xlu0 %2629, %v2230
        %v2631 = vpop.permute.xlu0 %2630
        %2634 = vset.pattern.permute.xlu0 0
        %2635 = vperm.xlu0 %2634, %v2231
        %v2636 = vpop.permute.xlu0 %2635
        %2639 = vset.pattern.permute.xlu0 0
        %2640 = vperm.xlu0 %2639, %v2232
        %v2641 = vpop.permute.xlu0 %2640
        %2644 = vset.pattern.permute.xlu0 0
        %2645 = vperm.xlu0 %2644, %v2233
        %v2646 = vpop.permute.xlu0 %2645
        %2649 = vset.pattern.permute.xlu0 0
        %2650 = vperm.xlu0 %2649, %v2234
        %v2651 = vpop.permute.xlu0 %2650
        %2654 = vset.pattern.permute.xlu0 0
        %2655 = vperm.xlu0 %2654, %v2235
        %v2656 = vpop.permute.xlu0 %2655
        %2659 = vset.pattern.permute.xlu0 0
        %2660 = vperm.xlu0 %2659, %v2236
        %v2661 = vpop.permute.xlu0 %2660
        %2664 = vset.pattern.permute.xlu0 0
        %2665 = vperm.xlu0 %2664, %v2237
        %v2666 = vpop.permute.xlu0 %2665
        %2669 = vset.pattern.permute.xlu0 0
        %2670 = vperm.xlu0 %2669, %v2238
        %v2671 = vpop.permute.xlu0 %2670
        %2674 = vset.pattern.permute.xlu0 0
        %2675 = vperm.xlu0 %2674, %v2239
        %v2676 = vpop.permute.xlu0 %2675
        %2679 = vset.pattern.permute.xlu0 0
        %2680 = vperm.xlu0 %2679, %v2240
        %v2681 = vpop.permute.xlu0 %2680
        %2684 = vset.pattern.permute.xlu0 0
        %2685 = vperm.xlu0 %2684, %v2241
        %v2686 = vpop.permute.xlu0 %2685
        %2689 = vset.pattern.permute.xlu0 0
        %2690 = vperm.xlu0 %2689, %v2242
        %v2691 = vpop.permute.xlu0 %2690
        %2694 = vset.pattern.permute.xlu0 0
        %2695 = vperm.xlu0 %2694, %v2243
        %v2696 = vpop.permute.xlu0 %2695
        %2699 = vset.pattern.permute.xlu0 0
        %2700 = vperm.xlu0 %2699, %v2244
        %v2701 = vpop.permute.xlu0 %2700
        %2704 = vset.pattern.permute.xlu0 0
        %2705 = vperm.xlu0 %2704, %v2245
        %v2706 = vpop.permute.xlu0 %2705
        %2709 = vset.pattern.permute.xlu0 0
        %2710 = vperm.xlu0 %2709, %v2246
        %v2711 = vpop.permute.xlu0 %2710
        %2714 = vset.pattern.permute.xlu0 0
        %2715 = vperm.xlu0 %2714, %v2247
        %v2716 = vpop.permute.xlu0 %2715
        %2719 = vset.pattern.permute.xlu0 0
        %2720 = vperm.xlu0 %2719, %v2248
        %v2721 = vpop.permute.xlu0 %2720
        %2724 = vset.pattern.permute.xlu0 0
        %2725 = vperm.xlu0 %2724, %v2249
        %v2726 = vpop.permute.xlu0 %2725
        %2729 = vset.pattern.permute.xlu0 0
        %2730 = vperm.xlu0 %2729, %v2250
        %v2731 = vpop.permute.xlu0 %2730
        %v2734 = vlaneseq
        %v2735 = vshrl.u32 %v2734, 7
        %v2736 = vsub.s32 0, %v2735
        %v2737 = vrot.slane %v2252, %v2736
        %v2739 = vmul.f32 %v2256, %v2737
        %v2740 = vmul.f32 %v2261, %v2737
        %v2741 = vmul.f32 %v2266, %v2737
        %v2742 = vmul.f32 %v2271, %v2737
        %v2743 = vmul.f32 %v2276, %v2737
        %v2744 = vmul.f32 %v2281, %v2737
        %v2745 = vmul.f32 %v2286, %v2737
        %v2746 = vmul.f32 %v2291, %v2737
        %v2747 = vmul.f32 %v2296, %v2737
        %v2748 = vmul.f32 %v2301, %v2737
        %v2749 = vmul.f32 %v2306, %v2737
        %v2750 = vmul.f32 %v2311, %v2737
        %v2751 = vmul.f32 %v2316, %v2737
        %v2752 = vmul.f32 %v2321, %v2737
        %v2753 = vmul.f32 %v2326, %v2737
        %v2754 = vmul.f32 %v2331, %v2737
        %v2755 = vmul.f32 %v2336, %v2737
        %v2756 = vmul.f32 %v2341, %v2737
        %v2757 = vmul.f32 %v2346, %v2737
        %v2758 = vmul.f32 %v2351, %v2737
        %v2759 = vmul.f32 %v2356, %v2737
        %v2760 = vmul.f32 %v2361, %v2737
        %v2761 = vmul.f32 %v2366, %v2737
        %v2762 = vmul.f32 %v2371, %v2737
        %v2763 = vmul.f32 %v2376, %v2737
        %v2764 = vmul.f32 %v2381, %v2737
        %v2765 = vmul.f32 %v2386, %v2737
        %v2766 = vmul.f32 %v2391, %v2737
        %v2767 = vmul.f32 %v2396, %v2737
        %v2768 = vmul.f32 %v2401, %v2737
        %v2769 = vmul.f32 %v2406, %v2737
        %v2770 = vmul.f32 %v2411, %v2737
        %v2771 = vmul.f32 %v2416, %v2737
        %v2772 = vmul.f32 %v2421, %v2737
        %v2773 = vmul.f32 %v2426, %v2737
        %v2774 = vmul.f32 %v2431, %v2737
        %v2775 = vmul.f32 %v2436, %v2737
        %v2776 = vmul.f32 %v2441, %v2737
        %v2777 = vmul.f32 %v2446, %v2737
        %v2778 = vmul.f32 %v2451, %v2737
        %v2779 = vmul.f32 %v2456, %v2737
        %v2780 = vmul.f32 %v2461, %v2737
        %v2781 = vmul.f32 %v2466, %v2737
        %v2782 = vmul.f32 %v2471, %v2737
        %v2783 = vmul.f32 %v2476, %v2737
        %v2784 = vmul.f32 %v2481, %v2737
        %v2785 = vmul.f32 %v2486, %v2737
        %v2786 = vmul.f32 %v2491, %v2737
        %v2787 = vmul.f32 %v2496, %v2737
        %v2788 = vmul.f32 %v2501, %v2737
        %v2789 = vmul.f32 %v2506, %v2737
        %v2790 = vmul.f32 %v2511, %v2737
        %v2791 = vmul.f32 %v2516, %v2737
        %v2792 = vmul.f32 %v2521, %v2737
        %v2793 = vmul.f32 %v2526, %v2737
        %v2794 = vmul.f32 %v2531, %v2737
        %v2795 = vmul.f32 %v2536, %v2737
        %v2796 = vmul.f32 %v2541, %v2737
        %v2797 = vmul.f32 %v2546, %v2737
        %v2798 = vmul.f32 %v2551, %v2737
        %v2799 = vmul.f32 %v2556, %v2737
        %v2800 = vmul.f32 %v2561, %v2737
        %v2801 = vmul.f32 %v2566, %v2737
        %v2802 = vmul.f32 %v2571, %v2737
        %v2803 = vmul.f32 %v2576, %v2737
        %v2804 = vmul.f32 %v2581, %v2737
        %v2805 = vmul.f32 %v2586, %v2737
        %v2806 = vmul.f32 %v2591, %v2737
        %v2807 = vmul.f32 %v2596, %v2737
        %v2808 = vmul.f32 %v2601, %v2737
        %v2809 = vmul.f32 %v2606, %v2737
        %v2810 = vmul.f32 %v2611, %v2737
        %v2811 = vmul.f32 %v2616, %v2737
        %v2812 = vmul.f32 %v2621, %v2737
        %v2813 = vmul.f32 %v2626, %v2737
        %v2814 = vmul.f32 %v2631, %v2737
        %v2815 = vmul.f32 %v2636, %v2737
        %v2816 = vmul.f32 %v2641, %v2737
        %v2817 = vmul.f32 %v2646, %v2737
        %v2818 = vmul.f32 %v2651, %v2737
        %v2819 = vmul.f32 %v2656, %v2737
        %v2820 = vmul.f32 %v2661, %v2737
        %v2821 = vmul.f32 %v2666, %v2737
        %v2822 = vmul.f32 %v2671, %v2737
        %v2823 = vmul.f32 %v2676, %v2737
        %v2824 = vmul.f32 %v2681, %v2737
        %v2825 = vmul.f32 %v2686, %v2737
        %v2826 = vmul.f32 %v2691, %v2737
        %v2827 = vmul.f32 %v2696, %v2737
        %v2828 = vmul.f32 %v2701, %v2737
        %v2829 = vmul.f32 %v2706, %v2737
        %v2830 = vmul.f32 %v2711, %v2737
        %v2831 = vmul.f32 %v2716, %v2737
        %v2832 = vmul.f32 %v2721, %v2737
        %v2833 = vmul.f32 %v2726, %v2737
        %v2834 = vmul.f32 %v2731, %v2737
        %v2835 = vadd.f32 %v2059, %v2739
        %v2836 = vadd.f32 %v2060, %v2740
        %v2837 = vadd.f32 %v2061, %v2741
        %v2838 = vadd.f32 %v2062, %v2742
        %v2839 = vadd.f32 %v2063, %v2743
        %v2840 = vadd.f32 %v2064, %v2744
        %v2841 = vadd.f32 %v2065, %v2745
        %v2842 = vadd.f32 %v2066, %v2746
        %v2843 = vadd.f32 %v2067, %v2747
        %v2844 = vadd.f32 %v2068, %v2748
        %v2845 = vadd.f32 %v2069, %v2749
        %v2846 = vadd.f32 %v2070, %v2750
        %v2847 = vadd.f32 %v2071, %v2751
        %v2848 = vadd.f32 %v2072, %v2752
        %v2849 = vadd.f32 %v2073, %v2753
        %v2850 = vadd.f32 %v2074, %v2754
        %v2851 = vadd.f32 %v2075, %v2755
        %v2852 = vadd.f32 %v2076, %v2756
        %v2853 = vadd.f32 %v2077, %v2757
        %v2854 = vadd.f32 %v2078, %v2758
        %v2855 = vadd.f32 %v2079, %v2759
        %v2856 = vadd.f32 %v2080, %v2760
        %v2857 = vadd.f32 %v2081, %v2761
        %v2858 = vadd.f32 %v2082, %v2762
        %v2859 = vadd.f32 %v2083, %v2763
        %v2860 = vadd.f32 %v2084, %v2764
        %v2861 = vadd.f32 %v2085, %v2765
        %v2862 = vadd.f32 %v2086, %v2766
        %v2863 = vadd.f32 %v2087, %v2767
        %v2864 = vadd.f32 %v2088, %v2768
        %v2865 = vadd.f32 %v2089, %v2769
        %v2866 = vadd.f32 %v2090, %v2770
        %v2867 = vadd.f32 %v2091, %v2771
        %v2868 = vadd.f32 %v2092, %v2772
        %v2869 = vadd.f32 %v2093, %v2773
        %v2870 = vadd.f32 %v2094, %v2774
        %v2871 = vadd.f32 %v2095, %v2775
        %v2872 = vadd.f32 %v2096, %v2776
        %v2873 = vadd.f32 %v2097, %v2777
        %v2874 = vadd.f32 %v2098, %v2778
        %v2875 = vadd.f32 %v2099, %v2779
        %v2876 = vadd.f32 %v2100, %v2780
        %v2877 = vadd.f32 %v2101, %v2781
        %v2878 = vadd.f32 %v2102, %v2782
        %v2879 = vadd.f32 %v2103, %v2783
        %v2880 = vadd.f32 %v2104, %v2784
        %v2881 = vadd.f32 %v2105, %v2785
        %v2882 = vadd.f32 %v2106, %v2786
        %v2883 = vadd.f32 %v2107, %v2787
        %v2884 = vadd.f32 %v2108, %v2788
        %v2885 = vadd.f32 %v2109, %v2789
        %v2886 = vadd.f32 %v2110, %v2790
        %v2887 = vadd.f32 %v2111, %v2791
        %v2888 = vadd.f32 %v2112, %v2792
        %v2889 = vadd.f32 %v2113, %v2793
        %v2890 = vadd.f32 %v2114, %v2794
        %v2891 = vadd.f32 %v2115, %v2795
        %v2892 = vadd.f32 %v2116, %v2796
        %v2893 = vadd.f32 %v2117, %v2797
        %v2894 = vadd.f32 %v2118, %v2798
        %v2895 = vadd.f32 %v2119, %v2799
        %v2896 = vadd.f32 %v2120, %v2800
        %v2897 = vadd.f32 %v2121, %v2801
        %v2898 = vadd.f32 %v2122, %v2802
        %v2899 = vadd.f32 %v2123, %v2803
        %v2900 = vadd.f32 %v2124, %v2804
        %v2901 = vadd.f32 %v2125, %v2805
        %v2902 = vadd.f32 %v2126, %v2806
        %v2903 = vadd.f32 %v2127, %v2807
        %v2904 = vadd.f32 %v2128, %v2808
        %v2905 = vadd.f32 %v2129, %v2809
        %v2906 = vadd.f32 %v2130, %v2810
        %v2907 = vadd.f32 %v2131, %v2811
        %v2908 = vadd.f32 %v2132, %v2812
        %v2909 = vadd.f32 %v2133, %v2813
        %v2910 = vadd.f32 %v2134, %v2814
        %v2911 = vadd.f32 %v2135, %v2815
        %v2912 = vadd.f32 %v2136, %v2816
        %v2913 = vadd.f32 %v2137, %v2817
        %v2914 = vadd.f32 %v2138, %v2818
        %v2915 = vadd.f32 %v2139, %v2819
        %v2916 = vadd.f32 %v2140, %v2820
        %v2917 = vadd.f32 %v2141, %v2821
        %v2918 = vadd.f32 %v2142, %v2822
        %v2919 = vadd.f32 %v2143, %v2823
        %v2920 = vadd.f32 %v2144, %v2824
        %v2921 = vadd.f32 %v2145, %v2825
        %v2922 = vadd.f32 %v2146, %v2826
        %v2923 = vadd.f32 %v2147, %v2827
        %v2924 = vadd.f32 %v2148, %v2828
        %v2925 = vadd.f32 %v2149, %v2829
        %v2926 = vadd.f32 %v2150, %v2830
        %v2927 = vadd.f32 %v2151, %v2831
        %v2928 = vadd.f32 %v2152, %v2832
        %v2929 = vadd.f32 %v2153, %v2833
        %v2930 = vadd.f32 %v2154, %v2834
        %v2931 = vld [vmem:[%s2] sm:$0x1]
        %v2933 = vlaneseq
        %v2934 = vshrl.u32 %v2933, 7
        %v2935 = vsub.s32 0, %v2934
        %v2936 = vrot.slane %v2931, %v2935
        %v2938 = vadd.f32 %v2835, %v2936
        %v2939 = vadd.f32 %v2836, %v2936
        %v2940 = vadd.f32 %v2837, %v2936
        %v2941 = vadd.f32 %v2838, %v2936
        %v2942 = vadd.f32 %v2839, %v2936
        %v2943 = vadd.f32 %v2840, %v2936
        %v2944 = vadd.f32 %v2841, %v2936
        %v2945 = vadd.f32 %v2842, %v2936
        %v2946 = vadd.f32 %v2843, %v2936
        %v2947 = vadd.f32 %v2844, %v2936
        %v2948 = vadd.f32 %v2845, %v2936
        %v2949 = vadd.f32 %v2846, %v2936
        %v2950 = vadd.f32 %v2847, %v2936
        %v2951 = vadd.f32 %v2848, %v2936
        %v2952 = vadd.f32 %v2849, %v2936
        %v2953 = vadd.f32 %v2850, %v2936
        %v2954 = vadd.f32 %v2851, %v2936
        %v2955 = vadd.f32 %v2852, %v2936
        %v2956 = vadd.f32 %v2853, %v2936
        %v2957 = vadd.f32 %v2854, %v2936
        %v2958 = vadd.f32 %v2855, %v2936
        %v2959 = vadd.f32 %v2856, %v2936
        %v2960 = vadd.f32 %v2857, %v2936
        %v2961 = vadd.f32 %v2858, %v2936
        %v2962 = vadd.f32 %v2859, %v2936
        %v2963 = vadd.f32 %v2860, %v2936
        %v2964 = vadd.f32 %v2861, %v2936
        %v2965 = vadd.f32 %v2862, %v2936
        %v2966 = vadd.f32 %v2863, %v2936
        %v2967 = vadd.f32 %v2864, %v2936
        %v2968 = vadd.f32 %v2865, %v2936
        %v2969 = vadd.f32 %v2866, %v2936
        %v2970 = vadd.f32 %v2867, %v2936
        %v2971 = vadd.f32 %v2868, %v2936
        %v2972 = vadd.f32 %v2869, %v2936
        %v2973 = vadd.f32 %v2870, %v2936
        %v2974 = vadd.f32 %v2871, %v2936
        %v2975 = vadd.f32 %v2872, %v2936
        %v2976 = vadd.f32 %v2873, %v2936
        %v2977 = vadd.f32 %v2874, %v2936
        %v2978 = vadd.f32 %v2875, %v2936
        %v2979 = vadd.f32 %v2876, %v2936
        %v2980 = vadd.f32 %v2877, %v2936
        %v2981 = vadd.f32 %v2878, %v2936
        %v2982 = vadd.f32 %v2879, %v2936
        %v2983 = vadd.f32 %v2880, %v2936
        %v2984 = vadd.f32 %v2881, %v2936
        %v2985 = vadd.f32 %v2882, %v2936
        %v2986 = vadd.f32 %v2883, %v2936
        %v2987 = vadd.f32 %v2884, %v2936
        %v2988 = vadd.f32 %v2885, %v2936
        %v2989 = vadd.f32 %v2886, %v2936
        %v2990 = vadd.f32 %v2887, %v2936
        %v2991 = vadd.f32 %v2888, %v2936
        %v2992 = vadd.f32 %v2889, %v2936
        %v2993 = vadd.f32 %v2890, %v2936
        %v2994 = vadd.f32 %v2891, %v2936
        %v2995 = vadd.f32 %v2892, %v2936
        %v2996 = vadd.f32 %v2893, %v2936
        %v2997 = vadd.f32 %v2894, %v2936
        %v2998 = vadd.f32 %v2895, %v2936
        %v2999 = vadd.f32 %v2896, %v2936
        %v3000 = vadd.f32 %v2897, %v2936
        %v3001 = vadd.f32 %v2898, %v2936
        %v3002 = vadd.f32 %v2899, %v2936
        %v3003 = vadd.f32 %v2900, %v2936
        %v3004 = vadd.f32 %v2901, %v2936
        %v3005 = vadd.f32 %v2902, %v2936
        %v3006 = vadd.f32 %v2903, %v2936
        %v3007 = vadd.f32 %v2904, %v2936
        %v3008 = vadd.f32 %v2905, %v2936
        %v3009 = vadd.f32 %v2906, %v2936
        %v3010 = vadd.f32 %v2907, %v2936
        %v3011 = vadd.f32 %v2908, %v2936
        %v3012 = vadd.f32 %v2909, %v2936
        %v3013 = vadd.f32 %v2910, %v2936
        %v3014 = vadd.f32 %v2911, %v2936
        %v3015 = vadd.f32 %v2912, %v2936
        %v3016 = vadd.f32 %v2913, %v2936
        %v3017 = vadd.f32 %v2914, %v2936
        %v3018 = vadd.f32 %v2915, %v2936
        %v3019 = vadd.f32 %v2916, %v2936
        %v3020 = vadd.f32 %v2917, %v2936
        %v3021 = vadd.f32 %v2918, %v2936
        %v3022 = vadd.f32 %v2919, %v2936
        %v3023 = vadd.f32 %v2920, %v2936
        %v3024 = vadd.f32 %v2921, %v2936
        %v3025 = vadd.f32 %v2922, %v2936
        %v3026 = vadd.f32 %v2923, %v2936
        %v3027 = vadd.f32 %v2924, %v2936
        %v3028 = vadd.f32 %v2925, %v2936
        %v3029 = vadd.f32 %v2926, %v2936
        %v3030 = vadd.f32 %v2927, %v2936
        %v3031 = vadd.f32 %v2928, %v2936
        %v3032 = vadd.f32 %v2929, %v2936
        %v3033 = vadd.f32 %v2930, %v2936
        %vm3034 = vcmask 130048
        %3035 = vst.msk [vmem:[#allocation2] sm:$0xff] %vm3034, %v2938
        %3036 = vst.msk [vmem:[#allocation2 + $0x8] sm:$0xff] %vm3034, %v2939
        %3037 = vst.msk [vmem:[#allocation2 + $0x10] sm:$0xff] %vm3034, %v2940
        %3038 = vst.msk [vmem:[#allocation2 + $0x18] sm:$0xff] %vm3034, %v2941
        %3039 = vst.msk [vmem:[#allocation2 + $0x20] sm:$0xff] %vm3034, %v2942
        %3040 = vst.msk [vmem:[#allocation2 + $0x28] sm:$0xff] %vm3034, %v2943
        %3041 = vst.msk [vmem:[#allocation2 + $0x30] sm:$0xff] %vm3034, %v2944
        %3042 = vst.msk [vmem:[#allocation2 + $0x38] sm:$0xff] %vm3034, %v2945
        %3043 = vst.msk [vmem:[#allocation2 + $0x40] sm:$0xff] %vm3034, %v2946
        %3044 = vst.msk [vmem:[#allocation2 + $0x48] sm:$0xff] %vm3034, %v2947
        %3045 = vst.msk [vmem:[#allocation2 + $0x50] sm:$0xff] %vm3034, %v2948
        %3046 = vst.msk [vmem:[#allocation2 + $0x58] sm:$0xff] %vm3034, %v2949
        %3047 = vst.msk [vmem:[#allocation2 + $0x60] sm:$0xff] %vm3034, %v2950
        %3048 = vst.msk [vmem:[#allocation2 + $0x68] sm:$0xff] %vm3034, %v2951
        %3049 = vst.msk [vmem:[#allocation2 + $0x70] sm:$0xff] %vm3034, %v2952
        %3050 = vst.msk [vmem:[#allocation2 + $0x78] sm:$0xff] %vm3034, %v2953
        %3051 = vst.msk [vmem:[#allocation2 + $0x80] sm:$0xff] %vm3034, %v2954
        %3052 = vst.msk [vmem:[#allocation2 + $0x88] sm:$0xff] %vm3034, %v2955
        %3053 = vst.msk [vmem:[#allocation2 + $0x90] sm:$0xff] %vm3034, %v2956
        %3054 = vst.msk [vmem:[#allocation2 + $0x98] sm:$0xff] %vm3034, %v2957
        %3055 = vst.msk [vmem:[#allocation2 + $0xa0] sm:$0xff] %vm3034, %v2958
        %3056 = vst.msk [vmem:[#allocation2 + $0xa8] sm:$0xff] %vm3034, %v2959
        %3057 = vst.msk [vmem:[#allocation2 + $0xb0] sm:$0xff] %vm3034, %v2960
        %3058 = vst.msk [vmem:[#allocation2 + $0xb8] sm:$0xff] %vm3034, %v2961
        %3059 = vst.msk [vmem:[#allocation2 + $0xc0] sm:$0xff] %vm3034, %v2962
        %3060 = vst.msk [vmem:[#allocation2 + $0xc8] sm:$0xff] %vm3034, %v2963
        %3061 = vst.msk [vmem:[#allocation2 + $0xd0] sm:$0xff] %vm3034, %v2964
        %3062 = vst.msk [vmem:[#allocation2 + $0xd8] sm:$0xff] %vm3034, %v2965
        %3063 = vst.msk [vmem:[#allocation2 + $0xe0] sm:$0xff] %vm3034, %v2966
        %3064 = vst.msk [vmem:[#allocation2 + $0xe8] sm:$0xff] %vm3034, %v2967
        %3065 = vst.msk [vmem:[#allocation2 + $0xf0] sm:$0xff] %vm3034, %v2968
        %3066 = vst.msk [vmem:[#allocation2 + $0xf8] sm:$0xff] %vm3034, %v2969
        %3067 = vst.msk [vmem:[#allocation2 + $0x100] sm:$0xff] %vm3034, %v2970
        %3068 = vst.msk [vmem:[#allocation2 + $0x108] sm:$0xff] %vm3034, %v2971
        %3069 = vst.msk [vmem:[#allocation2 + $0x110] sm:$0xff] %vm3034, %v2972
        %3070 = vst.msk [vmem:[#allocation2 + $0x118] sm:$0xff] %vm3034, %v2973
        %3071 = vst.msk [vmem:[#allocation2 + $0x120] sm:$0xff] %vm3034, %v2974
        %3072 = vst.msk [vmem:[#allocation2 + $0x128] sm:$0xff] %vm3034, %v2975
        %3073 = vst.msk [vmem:[#allocation2 + $0x130] sm:$0xff] %vm3034, %v2976
        %3074 = vst.msk [vmem:[#allocation2 + $0x138] sm:$0xff] %vm3034, %v2977
        %3075 = vst.msk [vmem:[#allocation2 + $0x140] sm:$0xff] %vm3034, %v2978
        %3076 = vst.msk [vmem:[#allocation2 + $0x148] sm:$0xff] %vm3034, %v2979
        %3077 = vst.msk [vmem:[#allocation2 + $0x150] sm:$0xff] %vm3034, %v2980
        %3078 = vst.msk [vmem:[#allocation2 + $0x158] sm:$0xff] %vm3034, %v2981
        %3079 = vst.msk [vmem:[#allocation2 + $0x160] sm:$0xff] %vm3034, %v2982
        %3080 = vst.msk [vmem:[#allocation2 + $0x168] sm:$0xff] %vm3034, %v2983
        %3081 = vst.msk [vmem:[#allocation2 + $0x170] sm:$0xff] %vm3034, %v2984
        %3082 = vst.msk [vmem:[#allocation2 + $0x178] sm:$0xff] %vm3034, %v2985
        %3083 = vst.msk [vmem:[#allocation2 + $0x180] sm:$0xff] %vm3034, %v2986
        %3084 = vst.msk [vmem:[#allocation2 + $0x188] sm:$0xff] %vm3034, %v2987
        %3085 = vst.msk [vmem:[#allocation2 + $0x190] sm:$0xff] %vm3034, %v2988
        %3086 = vst.msk [vmem:[#allocation2 + $0x198] sm:$0xff] %vm3034, %v2989
        %3087 = vst.msk [vmem:[#allocation2 + $0x1a0] sm:$0xff] %vm3034, %v2990
        %3088 = vst.msk [vmem:[#allocation2 + $0x1a8] sm:$0xff] %vm3034, %v2991
        %3089 = vst.msk [vmem:[#allocation2 + $0x1b0] sm:$0xff] %vm3034, %v2992
        %3090 = vst.msk [vmem:[#allocation2 + $0x1b8] sm:$0xff] %vm3034, %v2993
        %3091 = vst.msk [vmem:[#allocation2 + $0x1c0] sm:$0xff] %vm3034, %v2994
        %3092 = vst.msk [vmem:[#allocation2 + $0x1c8] sm:$0xff] %vm3034, %v2995
        %3093 = vst.msk [vmem:[#allocation2 + $0x1d0] sm:$0xff] %vm3034, %v2996
        %3094 = vst.msk [vmem:[#allocation2 + $0x1d8] sm:$0xff] %vm3034, %v2997
        %3095 = vst.msk [vmem:[#allocation2 + $0x1e0] sm:$0xff] %vm3034, %v2998
        %3096 = vst.msk [vmem:[#allocation2 + $0x1e8] sm:$0xff] %vm3034, %v2999
        %3097 = vst.msk [vmem:[#allocation2 + $0x1f0] sm:$0xff] %vm3034, %v3000
        %3098 = vst.msk [vmem:[#allocation2 + $0x1f8] sm:$0xff] %vm3034, %v3001
        %3099 = vst.msk [vmem:[#allocation2 + $0x200] sm:$0xff] %vm3034, %v3002
        %3100 = vst.msk [vmem:[#allocation2 + $0x208] sm:$0xff] %vm3034, %v3003
        %3101 = vst.msk [vmem:[#allocation2 + $0x210] sm:$0xff] %vm3034, %v3004
        %3102 = vst.msk [vmem:[#allocation2 + $0x218] sm:$0xff] %vm3034, %v3005
        %3103 = vst.msk [vmem:[#allocation2 + $0x220] sm:$0xff] %vm3034, %v3006
        %3104 = vst.msk [vmem:[#allocation2 + $0x228] sm:$0xff] %vm3034, %v3007
        %3105 = vst.msk [vmem:[#allocation2 + $0x230] sm:$0xff] %vm3034, %v3008
        %3106 = vst.msk [vmem:[#allocation2 + $0x238] sm:$0xff] %vm3034, %v3009
        %3107 = vst.msk [vmem:[#allocation2 + $0x240] sm:$0xff] %vm3034, %v3010
        %3108 = vst.msk [vmem:[#allocation2 + $0x248] sm:$0xff] %vm3034, %v3011
        %3109 = vst.msk [vmem:[#allocation2 + $0x250] sm:$0xff] %vm3034, %v3012
        %3110 = vst.msk [vmem:[#allocation2 + $0x258] sm:$0xff] %vm3034, %v3013
        %3111 = vst.msk [vmem:[#allocation2 + $0x260] sm:$0xff] %vm3034, %v3014
        %3112 = vst.msk [vmem:[#allocation2 + $0x268] sm:$0xff] %vm3034, %v3015
        %3113 = vst.msk [vmem:[#allocation2 + $0x270] sm:$0xff] %vm3034, %v3016
        %3114 = vst.msk [vmem:[#allocation2 + $0x278] sm:$0xff] %vm3034, %v3017
        %3115 = vst.msk [vmem:[#allocation2 + $0x280] sm:$0xff] %vm3034, %v3018
        %3116 = vst.msk [vmem:[#allocation2 + $0x288] sm:$0xff] %vm3034, %v3019
        %3117 = vst.msk [vmem:[#allocation2 + $0x290] sm:$0xff] %vm3034, %v3020
        %3118 = vst.msk [vmem:[#allocation2 + $0x298] sm:$0xff] %vm3034, %v3021
        %3119 = vst.msk [vmem:[#allocation2 + $0x2a0] sm:$0xff] %vm3034, %v3022
        %3120 = vst.msk [vmem:[#allocation2 + $0x2a8] sm:$0xff] %vm3034, %v3023
        %3121 = vst.msk [vmem:[#allocation2 + $0x2b0] sm:$0xff] %vm3034, %v3024
        %3122 = vst.msk [vmem:[#allocation2 + $0x2b8] sm:$0xff] %vm3034, %v3025
        %3123 = vst.msk [vmem:[#allocation2 + $0x2c0] sm:$0xff] %vm3034, %v3026
        %3124 = vst.msk [vmem:[#allocation2 + $0x2c8] sm:$0xff] %vm3034, %v3027
        %3125 = vst.msk [vmem:[#allocation2 + $0x2d0] sm:$0xff] %vm3034, %v3028
        %3126 = vst.msk [vmem:[#allocation2 + $0x2d8] sm:$0xff] %vm3034, %v3029
        %3127 = vst.msk [vmem:[#allocation2 + $0x2e0] sm:$0xff] %vm3034, %v3030
        %3128 = vst.msk [vmem:[#allocation2 + $0x2e8] sm:$0xff] %vm3034, %v3031
        %3129 = vst.msk [vmem:[#allocation2 + $0x2f0] sm:$0xff] %vm3034, %v3032
        %vm3130 = vcmask 128000
        %3131 = vst.msk [vmem:[#allocation2 + $0x2f8] sm:$0x3f] %vm3130, %v3033
        %v3132 = vld [vmem:[#allocation2] ss:$2 sm:$0xff]
        %s3133 = scalar_lea.vmem [#allocation2], 16
        %v3134 = vld [vmem:[%s3133] ss:$2 sm:$0xff]
        %s3135 = scalar_lea.vmem [#allocation2], 32
        %v3136 = vld [vmem:[%s3135] ss:$2 sm:$0xff]
        %s3137 = scalar_lea.vmem [#allocation2], 48
        %v3138 = vld [vmem:[%s3137] ss:$2 sm:$0xff]
        %s3139 = scalar_lea.vmem [#allocation2], 64
        %v3140 = vld [vmem:[%s3139] ss:$2 sm:$0xff]
        %s3141 = scalar_lea.vmem [#allocation2], 80
        %v3142 = vld [vmem:[%s3141] ss:$2 sm:$0xff]
        %s3143 = scalar_lea.vmem [#allocation2], 96
        %v3144 = vld [vmem:[%s3143] ss:$2 sm:$0xff]
        %s3145 = scalar_lea.vmem [#allocation2], 112
        %v3146 = vld [vmem:[%s3145] ss:$2 sm:$0xff]
        %s3147 = scalar_lea.vmem [#allocation2], 128
        %v3148 = vld [vmem:[%s3147] ss:$2 sm:$0xff]
        %s3149 = scalar_lea.vmem [#allocation2], 144
        %v3150 = vld [vmem:[%s3149] ss:$2 sm:$0xff]
        %s3151 = scalar_lea.vmem [#allocation2], 160
        %v3152 = vld [vmem:[%s3151] ss:$2 sm:$0xff]
        %s3153 = scalar_lea.vmem [#allocation2], 176
        %v3154 = vld [vmem:[%s3153] ss:$2 sm:$0xff]
        %s3155 = scalar_lea.vmem [#allocation2], 192
        %v3156 = vld [vmem:[%s3155] ss:$2 sm:$0xff]
        %s3157 = scalar_lea.vmem [#allocation2], 208
        %v3158 = vld [vmem:[%s3157] ss:$2 sm:$0xff]
        %s3159 = scalar_lea.vmem [#allocation2], 224
        %v3160 = vld [vmem:[%s3159] ss:$2 sm:$0xff]
        %s3161 = scalar_lea.vmem [#allocation2], 240
        %v3162 = vld [vmem:[%s3161] ss:$2 sm:$0xff]
        %s3163 = scalar_lea.vmem [#allocation2], 256
        %v3164 = vld [vmem:[%s3163] ss:$2 sm:$0xff]
        %s3165 = scalar_lea.vmem [#allocation2], 272
        %v3166 = vld [vmem:[%s3165] ss:$2 sm:$0xff]
        %s3167 = scalar_lea.vmem [#allocation2], 288
        %v3168 = vld [vmem:[%s3167] ss:$2 sm:$0xff]
        %s3169 = scalar_lea.vmem [#allocation2], 304
        %v3170 = vld [vmem:[%s3169] ss:$2 sm:$0xff]
        %s3171 = scalar_lea.vmem [#allocation2], 320
        %v3172 = vld [vmem:[%s3171] ss:$2 sm:$0xff]
        %s3173 = scalar_lea.vmem [#allocation2], 336
        %v3174 = vld [vmem:[%s3173] ss:$2 sm:$0xff]
        %s3175 = scalar_lea.vmem [#allocation2], 352
        %v3176 = vld [vmem:[%s3175] ss:$2 sm:$0xff]
        %s3177 = scalar_lea.vmem [#allocation2], 368
        %v3178 = vld [vmem:[%s3177] ss:$2 sm:$0xff]
        %s3179 = scalar_lea.vmem [#allocation2], 384
        %v3180 = vld [vmem:[%s3179] ss:$2 sm:$0xff]
        %s3181 = scalar_lea.vmem [#allocation2], 400
        %v3182 = vld [vmem:[%s3181] ss:$2 sm:$0xff]
        %s3183 = scalar_lea.vmem [#allocation2], 416
        %v3184 = vld [vmem:[%s3183] ss:$2 sm:$0xff]
        %s3185 = scalar_lea.vmem [#allocation2], 432
        %v3186 = vld [vmem:[%s3185] ss:$2 sm:$0xff]
        %s3187 = scalar_lea.vmem [#allocation2], 448
        %v3188 = vld [vmem:[%s3187] ss:$2 sm:$0xff]
        %s3189 = scalar_lea.vmem [#allocation2], 464
        %v3190 = vld [vmem:[%s3189] ss:$2 sm:$0xff]
        %s3191 = scalar_lea.vmem [#allocation2], 480
        %v3192 = vld [vmem:[%s3191] ss:$2 sm:$0xff]
        %s3193 = scalar_lea.vmem [#allocation2], 496
        %v3194 = vld [vmem:[%s3193] ss:$2 sm:$0xff]
        %s3195 = scalar_lea.vmem [#allocation2], 512
        %v3196 = vld [vmem:[%s3195] ss:$2 sm:$0xff]
        %s3197 = scalar_lea.vmem [#allocation2], 528
        %v3198 = vld [vmem:[%s3197] ss:$2 sm:$0xff]
        %s3199 = scalar_lea.vmem [#allocation2], 544
        %v3200 = vld [vmem:[%s3199] ss:$2 sm:$0xff]
        %s3201 = scalar_lea.vmem [#allocation2], 560
        %v3202 = vld [vmem:[%s3201] ss:$2 sm:$0xff]
        %s3203 = scalar_lea.vmem [#allocation2], 576
        %v3204 = vld [vmem:[%s3203] ss:$2 sm:$0xff]
        %s3205 = scalar_lea.vmem [#allocation2], 592
        %v3206 = vld [vmem:[%s3205] ss:$2 sm:$0xff]
        %s3207 = scalar_lea.vmem [#allocation2], 608
        %v3208 = vld [vmem:[%s3207] ss:$2 sm:$0xff]
        %s3209 = scalar_lea.vmem [#allocation2], 624
        %v3210 = vld [vmem:[%s3209] ss:$2 sm:$0xff]
        %s3211 = scalar_lea.vmem [#allocation2], 640
        %v3212 = vld [vmem:[%s3211] ss:$2 sm:$0xff]
        %s3213 = scalar_lea.vmem [#allocation2], 656
        %v3214 = vld [vmem:[%s3213] ss:$2 sm:$0xff]
        %s3215 = scalar_lea.vmem [#allocation2], 672
        %v3216 = vld [vmem:[%s3215] ss:$2 sm:$0xff]
        %s3217 = scalar_lea.vmem [#allocation2], 688
        %v3218 = vld [vmem:[%s3217] ss:$2 sm:$0xff]
        %s3219 = scalar_lea.vmem [#allocation2], 704
        %v3220 = vld [vmem:[%s3219] ss:$2 sm:$0xff]
        %s3221 = scalar_lea.vmem [#allocation2], 720
        %v3222 = vld [vmem:[%s3221] ss:$2 sm:$0xff]
        %s3223 = scalar_lea.vmem [#allocation2], 736
        %v3224 = vld [vmem:[%s3223] ss:$2 sm:$0xff]
        %s3225 = scalar_lea.vmem [#allocation2], 752
        %v3226 = vld [vmem:[%s3225] ss:$2 sm:$0xff]
        %s3227 = scalar_lea.vmem [#allocation2], 1
        %v3228 = vld [vmem:[%s3227] ss:$2 sm:$0xff]
        %s3229 = scalar_lea.vmem [#allocation2], 17
        %v3230 = vld [vmem:[%s3229] ss:$2 sm:$0xff]
        %s3231 = scalar_lea.vmem [#allocation2], 33
        %v3232 = vld [vmem:[%s3231] ss:$2 sm:$0xff]
        %s3233 = scalar_lea.vmem [#allocation2], 49
        %v3234 = vld [vmem:[%s3233] ss:$2 sm:$0xff]
        %s3235 = scalar_lea.vmem [#allocation2], 65
        %v3236 = vld [vmem:[%s3235] ss:$2 sm:$0xff]
        %s3237 = scalar_lea.vmem [#allocation2], 81
        %v3238 = vld [vmem:[%s3237] ss:$2 sm:$0xff]
        %s3239 = scalar_lea.vmem [#allocation2], 97
        %v3240 = vld [vmem:[%s3239] ss:$2 sm:$0xff]
        %s3241 = scalar_lea.vmem [#allocation2], 113
        %v3242 = vld [vmem:[%s3241] ss:$2 sm:$0xff]
        %s3243 = scalar_lea.vmem [#allocation2], 129
        %v3244 = vld [vmem:[%s3243] ss:$2 sm:$0xff]
        %s3245 = scalar_lea.vmem [#allocation2], 145
        %v3246 = vld [vmem:[%s3245] ss:$2 sm:$0xff]
        %s3247 = scalar_lea.vmem [#allocation2], 161
        %v3248 = vld [vmem:[%s3247] ss:$2 sm:$0xff]
        %s3249 = scalar_lea.vmem [#allocation2], 177
        %v3250 = vld [vmem:[%s3249] ss:$2 sm:$0xff]
        %s3251 = scalar_lea.vmem [#allocation2], 193
        %v3252 = vld [vmem:[%s3251] ss:$2 sm:$0xff]
        %s3253 = scalar_lea.vmem [#allocation2], 209
        %v3254 = vld [vmem:[%s3253] ss:$2 sm:$0xff]
        %s3255 = scalar_lea.vmem [#allocation2], 225
        %v3256 = vld [vmem:[%s3255] ss:$2 sm:$0xff]
        %s3257 = scalar_lea.vmem [#allocation2], 241
        %v3258 = vld [vmem:[%s3257] ss:$2 sm:$0xff]
        %s3259 = scalar_lea.vmem [#allocation2], 257
        %v3260 = vld [vmem:[%s3259] ss:$2 sm:$0xff]
        %s3261 = scalar_lea.vmem [#allocation2], 273
        %v3262 = vld [vmem:[%s3261] ss:$2 sm:$0xff]
        %s3263 = scalar_lea.vmem [#allocation2], 289
        %v3264 = vld [vmem:[%s3263] ss:$2 sm:$0xff]
        %s3265 = scalar_lea.vmem [#allocation2], 305
        %v3266 = vld [vmem:[%s3265] ss:$2 sm:$0xff]
        %s3267 = scalar_lea.vmem [#allocation2], 321
        %v3268 = vld [vmem:[%s3267] ss:$2 sm:$0xff]
        %s3269 = scalar_lea.vmem [#allocation2], 337
        %v3270 = vld [vmem:[%s3269] ss:$2 sm:$0xff]
        %s3271 = scalar_lea.vmem [#allocation2], 353
        %v3272 = vld [vmem:[%s3271] ss:$2 sm:$0xff]
        %s3273 = scalar_lea.vmem [#allocation2], 369
        %v3274 = vld [vmem:[%s3273] ss:$2 sm:$0xff]
        %s3275 = scalar_lea.vmem [#allocation2], 385
        %v3276 = vld [vmem:[%s3275] ss:$2 sm:$0xff]
        %s3277 = scalar_lea.vmem [#allocation2], 401
        %v3278 = vld [vmem:[%s3277] ss:$2 sm:$0xff]
        %s3279 = scalar_lea.vmem [#allocation2], 417
        %v3280 = vld [vmem:[%s3279] ss:$2 sm:$0xff]
        %s3281 = scalar_lea.vmem [#allocation2], 433
        %v3282 = vld [vmem:[%s3281] ss:$2 sm:$0xff]
        %s3283 = scalar_lea.vmem [#allocation2], 449
        %v3284 = vld [vmem:[%s3283] ss:$2 sm:$0xff]
        %s3285 = scalar_lea.vmem [#allocation2], 465
        %v3286 = vld [vmem:[%s3285] ss:$2 sm:$0xff]
        %s3287 = scalar_lea.vmem [#allocation2], 481
        %v3288 = vld [vmem:[%s3287] ss:$2 sm:$0xff]
        %s3289 = scalar_lea.vmem [#allocation2], 497
        %v3290 = vld [vmem:[%s3289] ss:$2 sm:$0xff]
        %s3291 = scalar_lea.vmem [#allocation2], 513
        %v3292 = vld [vmem:[%s3291] ss:$2 sm:$0xff]
        %s3293 = scalar_lea.vmem [#allocation2], 529
        %v3294 = vld [vmem:[%s3293] ss:$2 sm:$0xff]
        %s3295 = scalar_lea.vmem [#allocation2], 545
        %v3296 = vld [vmem:[%s3295] ss:$2 sm:$0xff]
        %s3297 = scalar_lea.vmem [#allocation2], 561
        %v3298 = vld [vmem:[%s3297] ss:$2 sm:$0xff]
        %s3299 = scalar_lea.vmem [#allocation2], 577
        %v3300 = vld [vmem:[%s3299] ss:$2 sm:$0xff]
        %s3301 = scalar_lea.vmem [#allocation2], 593
        %v3302 = vld [vmem:[%s3301] ss:$2 sm:$0xff]
        %s3303 = scalar_lea.vmem [#allocation2], 609
        %v3304 = vld [vmem:[%s3303] ss:$2 sm:$0xff]
        %s3305 = scalar_lea.vmem [#allocation2], 625
        %v3306 = vld [vmem:[%s3305] ss:$2 sm:$0xff]
        %s3307 = scalar_lea.vmem [#allocation2], 641
        %v3308 = vld [vmem:[%s3307] ss:$2 sm:$0xff]
        %s3309 = scalar_lea.vmem [#allocation2], 657
        %v3310 = vld [vmem:[%s3309] ss:$2 sm:$0xff]
        %s3311 = scalar_lea.vmem [#allocation2], 673
        %v3312 = vld [vmem:[%s3311] ss:$2 sm:$0xff]
        %s3313 = scalar_lea.vmem [#allocation2], 689
        %v3314 = vld [vmem:[%s3313] ss:$2 sm:$0xff]
        %s3315 = scalar_lea.vmem [#allocation2], 705
        %v3316 = vld [vmem:[%s3315] ss:$2 sm:$0xff]
        %s3317 = scalar_lea.vmem [#allocation2], 721
        %v3318 = vld [vmem:[%s3317] ss:$2 sm:$0xff]
        %s3319 = scalar_lea.vmem [#allocation2], 737
        %v3320 = vld [vmem:[%s3319] ss:$2 sm:$0xff]
        %s3321 = scalar_lea.vmem [#allocation2], 753
        %v3322 = vld [vmem:[%s3321] ss:$2 sm:$0xff]
        %v3323 = vmax.f32 %v3132, %v3228
        %v3324 = vmax.f32 %v3134, %v3230
        %v3325 = vmax.f32 %v3136, %v3232
        %v3326 = vmax.f32 %v3138, %v3234
        %v3327 = vmax.f32 %v3140, %v3236
        %v3328 = vmax.f32 %v3142, %v3238
        %v3329 = vmax.f32 %v3144, %v3240
        %v3330 = vmax.f32 %v3146, %v3242
        %v3331 = vmax.f32 %v3148, %v3244
        %v3332 = vmax.f32 %v3150, %v3246
        %v3333 = vmax.f32 %v3152, %v3248
        %v3334 = vmax.f32 %v3154, %v3250
        %v3335 = vmax.f32 %v3156, %v3252
        %v3336 = vmax.f32 %v3158, %v3254
        %v3337 = vmax.f32 %v3160, %v3256
        %v3338 = vmax.f32 %v3162, %v3258
        %v3339 = vmax.f32 %v3164, %v3260
        %v3340 = vmax.f32 %v3166, %v3262
        %v3341 = vmax.f32 %v3168, %v3264
        %v3342 = vmax.f32 %v3170, %v3266
        %v3343 = vmax.f32 %v3172, %v3268
        %v3344 = vmax.f32 %v3174, %v3270
        %v3345 = vmax.f32 %v3176, %v3272
        %v3346 = vmax.f32 %v3178, %v3274
        %v3347 = vmax.f32 %v3180, %v3276
        %v3348 = vmax.f32 %v3182, %v3278
        %v3349 = vmax.f32 %v3184, %v3280
        %v3350 = vmax.f32 %v3186, %v3282
        %v3351 = vmax.f32 %v3188, %v3284
        %v3352 = vmax.f32 %v3190, %v3286
        %v3353 = vmax.f32 %v3192, %v3288
        %v3354 = vmax.f32 %v3194, %v3290
        %v3355 = vmax.f32 %v3196, %v3292
        %v3356 = vmax.f32 %v3198, %v3294
        %v3357 = vmax.f32 %v3200, %v3296
        %v3358 = vmax.f32 %v3202, %v3298
        %v3359 = vmax.f32 %v3204, %v3300
        %v3360 = vmax.f32 %v3206, %v3302
        %v3361 = vmax.f32 %v3208, %v3304
        %v3362 = vmax.f32 %v3210, %v3306
        %v3363 = vmax.f32 %v3212, %v3308
        %v3364 = vmax.f32 %v3214, %v3310
        %v3365 = vmax.f32 %v3216, %v3312
        %v3366 = vmax.f32 %v3218, %v3314
        %v3367 = vmax.f32 %v3220, %v3316
        %v3368 = vmax.f32 %v3222, %v3318
        %v3369 = vmax.f32 %v3224, %v3320
        %v3370 = vmax.f32 %v3226, %v3322
        %v3371 = vmax.f32 %v3323, 0.0
        %v3372 = vmax.f32 %v3324, 0.0
        %v3373 = vmax.f32 %v3325, 0.0
        %v3374 = vmax.f32 %v3326, 0.0
        %v3375 = vmax.f32 %v3327, 0.0
        %v3376 = vmax.f32 %v3328, 0.0
        %v3377 = vmax.f32 %v3329, 0.0
        %v3378 = vmax.f32 %v3330, 0.0
        %v3379 = vmax.f32 %v3331, 0.0
        %v3380 = vmax.f32 %v3332, 0.0
        %v3381 = vmax.f32 %v3333, 0.0
        %v3382 = vmax.f32 %v3334, 0.0
        %v3383 = vmax.f32 %v3335, 0.0
        %v3384 = vmax.f32 %v3336, 0.0
        %v3385 = vmax.f32 %v3337, 0.0
        %v3386 = vmax.f32 %v3338, 0.0
        %v3387 = vmax.f32 %v3339, 0.0
        %v3388 = vmax.f32 %v3340, 0.0
        %v3389 = vmax.f32 %v3341, 0.0
        %v3390 = vmax.f32 %v3342, 0.0
        %v3391 = vmax.f32 %v3343, 0.0
        %v3392 = vmax.f32 %v3344, 0.0
        %v3393 = vmax.f32 %v3345, 0.0
        %v3394 = vmax.f32 %v3346, 0.0
        %v3395 = vmax.f32 %v3347, 0.0
        %v3396 = vmax.f32 %v3348, 0.0
        %v3397 = vmax.f32 %v3349, 0.0
        %v3398 = vmax.f32 %v3350, 0.0
        %v3399 = vmax.f32 %v3351, 0.0
        %v3400 = vmax.f32 %v3352, 0.0
        %v3401 = vmax.f32 %v3353, 0.0
        %v3402 = vmax.f32 %v3354, 0.0
        %v3403 = vmax.f32 %v3355, 0.0
        %v3404 = vmax.f32 %v3356, 0.0
        %v3405 = vmax.f32 %v3357, 0.0
        %v3406 = vmax.f32 %v3358, 0.0
        %v3407 = vmax.f32 %v3359, 0.0
        %v3408 = vmax.f32 %v3360, 0.0
        %v3409 = vmax.f32 %v3361, 0.0
        %v3410 = vmax.f32 %v3362, 0.0
        %v3411 = vmax.f32 %v3363, 0.0
        %v3412 = vmax.f32 %v3364, 0.0
        %v3413 = vmax.f32 %v3365, 0.0
        %v3414 = vmax.f32 %v3366, 0.0
        %v3415 = vmax.f32 %v3367, 0.0
        %v3416 = vmax.f32 %v3368, 0.0
        %v3417 = vmax.f32 %v3369, 0.0
        %v3418 = vmax.f32 %v3370, 0.0
        %3419 = vst.msk [vmem:[#allocation3] sm:$0xff] %vm3034, %v3371
        %3420 = vst.msk [vmem:[#allocation3 + $0x8] sm:$0xff] %vm3034, %v3372
        %3421 = vst.msk [vmem:[#allocation3 + $0x10] sm:$0xff] %vm3034, %v3373
        %3422 = vst.msk [vmem:[#allocation3 + $0x18] sm:$0xff] %vm3034, %v3374
        %3423 = vst.msk [vmem:[#allocation3 + $0x20] sm:$0xff] %vm3034, %v3375
        %3424 = vst.msk [vmem:[#allocation3 + $0x28] sm:$0xff] %vm3034, %v3376
        %3425 = vst.msk [vmem:[#allocation3 + $0x30] sm:$0xff] %vm3034, %v3377
        %3426 = vst.msk [vmem:[#allocation3 + $0x38] sm:$0xff] %vm3034, %v3378
        %3427 = vst.msk [vmem:[#allocation3 + $0x40] sm:$0xff] %vm3034, %v3379
        %3428 = vst.msk [vmem:[#allocation3 + $0x48] sm:$0xff] %vm3034, %v3380
        %3429 = vst.msk [vmem:[#allocation3 + $0x50] sm:$0xff] %vm3034, %v3381
        %3430 = vst.msk [vmem:[#allocation3 + $0x58] sm:$0xff] %vm3034, %v3382
        %3431 = vst.msk [vmem:[#allocation3 + $0x60] sm:$0xff] %vm3034, %v3383
        %3432 = vst.msk [vmem:[#allocation3 + $0x68] sm:$0xff] %vm3034, %v3384
        %3433 = vst.msk [vmem:[#allocation3 + $0x70] sm:$0xff] %vm3034, %v3385
        %3434 = vst.msk [vmem:[#allocation3 + $0x78] sm:$0xff] %vm3034, %v3386
        %3435 = vst.msk [vmem:[#allocation3 + $0x80] sm:$0xff] %vm3034, %v3387
        %3436 = vst.msk [vmem:[#allocation3 + $0x88] sm:$0xff] %vm3034, %v3388
        %3437 = vst.msk [vmem:[#allocation3 + $0x90] sm:$0xff] %vm3034, %v3389
        %3438 = vst.msk [vmem:[#allocation3 + $0x98] sm:$0xff] %vm3034, %v3390
        %3439 = vst.msk [vmem:[#allocation3 + $0xa0] sm:$0xff] %vm3034, %v3391
        %3440 = vst.msk [vmem:[#allocation3 + $0xa8] sm:$0xff] %vm3034, %v3392
        %3441 = vst.msk [vmem:[#allocation3 + $0xb0] sm:$0xff] %vm3034, %v3393
        %3442 = vst.msk [vmem:[#allocation3 + $0xb8] sm:$0xff] %vm3034, %v3394
        %3443 = vst.msk [vmem:[#allocation3 + $0xc0] sm:$0xff] %vm3034, %v3395
        %3444 = vst.msk [vmem:[#allocation3 + $0xc8] sm:$0xff] %vm3034, %v3396
        %3445 = vst.msk [vmem:[#allocation3 + $0xd0] sm:$0xff] %vm3034, %v3397
        %3446 = vst.msk [vmem:[#allocation3 + $0xd8] sm:$0xff] %vm3034, %v3398
        %3447 = vst.msk [vmem:[#allocation3 + $0xe0] sm:$0xff] %vm3034, %v3399
        %3448 = vst.msk [vmem:[#allocation3 + $0xe8] sm:$0xff] %vm3034, %v3400
        %3449 = vst.msk [vmem:[#allocation3 + $0xf0] sm:$0xff] %vm3034, %v3401
        %3450 = vst.msk [vmem:[#allocation3 + $0xf8] sm:$0xff] %vm3034, %v3402
        %3451 = vst.msk [vmem:[#allocation3 + $0x100] sm:$0xff] %vm3034, %v3403
        %3452 = vst.msk [vmem:[#allocation3 + $0x108] sm:$0xff] %vm3034, %v3404
        %3453 = vst.msk [vmem:[#allocation3 + $0x110] sm:$0xff] %vm3034, %v3405
        %3454 = vst.msk [vmem:[#allocation3 + $0x118] sm:$0xff] %vm3034, %v3406
        %3455 = vst.msk [vmem:[#allocation3 + $0x120] sm:$0xff] %vm3034, %v3407
        %3456 = vst.msk [vmem:[#allocation3 + $0x128] sm:$0xff] %vm3034, %v3408
        %3457 = vst.msk [vmem:[#allocation3 + $0x130] sm:$0xff] %vm3034, %v3409
        %3458 = vst.msk [vmem:[#allocation3 + $0x138] sm:$0xff] %vm3034, %v3410
        %3459 = vst.msk [vmem:[#allocation3 + $0x140] sm:$0xff] %vm3034, %v3411
        %3460 = vst.msk [vmem:[#allocation3 + $0x148] sm:$0xff] %vm3034, %v3412
        %3461 = vst.msk [vmem:[#allocation3 + $0x150] sm:$0xff] %vm3034, %v3413
        %3462 = vst.msk [vmem:[#allocation3 + $0x158] sm:$0xff] %vm3034, %v3414
        %3463 = vst.msk [vmem:[#allocation3 + $0x160] sm:$0xff] %vm3034, %v3415
        %3464 = vst.msk [vmem:[#allocation3 + $0x168] sm:$0xff] %vm3034, %v3416
        %3465 = vst.msk [vmem:[#allocation3 + $0x170] sm:$0xff] %vm3034, %v3417
        %3466 = vst.msk [vmem:[#allocation3 + $0x178] sm:$0xff] %vm3034, %v3418
        %v3467 = vld [vmem:[%s3] sm:$0xf]
        %v3468 = vld [vmem:[%s3 + $0x4] sm:$0xf]
        %v3469 = vld [vmem:[#allocation3] sm:$0xff]
        %v3470 = vld [vmem:[#allocation3 + $0x8] sm:$0xff]
        %v3471 = vld [vmem:[#allocation3 + $0x10] sm:$0xff]
        %v3472 = vld [vmem:[#allocation3 + $0x18] sm:$0xff]
        %v3473 = vld [vmem:[#allocation3 + $0x20] sm:$0xff]
        %v3474 = vld [vmem:[#allocation3 + $0x28] sm:$0xff]
        %v3475 = vld [vmem:[#allocation3 + $0x30] sm:$0xff]
        %v3476 = vld [vmem:[#allocation3 + $0x38] sm:$0xff]
        %v3477 = vld [vmem:[#allocation3 + $0x40] sm:$0xff]
        %v3478 = vld [vmem:[#allocation3 + $0x48] sm:$0xff]
        %v3479 = vld [vmem:[#allocation3 + $0x50] sm:$0xff]
        %v3480 = vld [vmem:[#allocation3 + $0x58] sm:$0xff]
        %v3481 = vld [vmem:[#allocation3 + $0x60] sm:$0xff]
        %v3482 = vld [vmem:[#allocation3 + $0x68] sm:$0xff]
        %v3483 = vld [vmem:[#allocation3 + $0x70] sm:$0xff]
        %v3484 = vld [vmem:[#allocation3 + $0x78] sm:$0xff]
        %v3485 = vld [vmem:[#allocation3 + $0x80] sm:$0xff]
        %v3486 = vld [vmem:[#allocation3 + $0x88] sm:$0xff]
        %v3487 = vld [vmem:[#allocation3 + $0x90] sm:$0xff]
        %v3488 = vld [vmem:[#allocation3 + $0x98] sm:$0xff]
        %v3489 = vld [vmem:[#allocation3 + $0xa0] sm:$0xff]
        %v3490 = vld [vmem:[#allocation3 + $0xa8] sm:$0xff]
        %v3491 = vld [vmem:[#allocation3 + $0xb0] sm:$0xff]
        %v3492 = vld [vmem:[#allocation3 + $0xb8] sm:$0xff]
        %v3493 = vld [vmem:[#allocation3 + $0xc0] sm:$0xff]
        %v3494 = vld [vmem:[#allocation3 + $0xc8] sm:$0xff]
        %v3495 = vld [vmem:[#allocation3 + $0xd0] sm:$0xff]
        %v3496 = vld [vmem:[#allocation3 + $0xd8] sm:$0xff]
        %v3497 = vld [vmem:[#allocation3 + $0xe0] sm:$0xff]
        %v3498 = vld [vmem:[#allocation3 + $0xe8] sm:$0xff]
        %v3499 = vld [vmem:[#allocation3 + $0xf0] sm:$0xff]
        %v3500 = vld [vmem:[#allocation3 + $0xf8] sm:$0xff]
        %v3501 = vld [vmem:[#allocation3 + $0x100] sm:$0xff]
        %v3502 = vld [vmem:[#allocation3 + $0x108] sm:$0xff]
        %v3503 = vld [vmem:[#allocation3 + $0x110] sm:$0xff]
        %v3504 = vld [vmem:[#allocation3 + $0x118] sm:$0xff]
        %v3505 = vld [vmem:[#allocation3 + $0x120] sm:$0xff]
        %v3506 = vld [vmem:[#allocation3 + $0x128] sm:$0xff]
        %v3507 = vld [vmem:[#allocation3 + $0x130] sm:$0xff]
        %v3508 = vld [vmem:[#allocation3 + $0x138] sm:$0xff]
        %v3509 = vld [vmem:[#allocation3 + $0x140] sm:$0xff]
        %v3510 = vld [vmem:[#allocation3 + $0x148] sm:$0xff]
        %v3511 = vld [vmem:[#allocation3 + $0x150] sm:$0xff]
        %v3512 = vld [vmem:[#allocation3 + $0x158] sm:$0xff]
        %v3513 = vld [vmem:[#allocation3 + $0x160] sm:$0xff]
        %v3514 = vld [vmem:[#allocation3 + $0x168] sm:$0xff]
        %v3515 = vld [vmem:[#allocation3 + $0x170] sm:$0xff]
        %v3516 = vld [vmem:[#allocation3 + $0x178] sm:$0x3f]
        %v3517 = vpack.c.bf16 %v3470, %v3469
        %v3518 = vpack.c.bf16 %v3472, %v3471
        %v3519 = vpack.c.bf16 %v3474, %v3473
        %v3520 = vpack.c.bf16 %v3476, %v3475
        %v3521 = vpack.c.bf16 %v3478, %v3477
        %v3522 = vpack.c.bf16 %v3480, %v3479
        %v3523 = vpack.c.bf16 %v3482, %v3481
        %v3524 = vpack.c.bf16 %v3484, %v3483
        %v3525 = vpack.c.bf16 %v3486, %v3485
        %v3526 = vpack.c.bf16 %v3488, %v3487
        %v3527 = vpack.c.bf16 %v3490, %v3489
        %v3528 = vpack.c.bf16 %v3492, %v3491
        %v3529 = vpack.c.bf16 %v3494, %v3493
        %v3530 = vpack.c.bf16 %v3496, %v3495
        %v3531 = vpack.c.bf16 %v3498, %v3497
        %v3532 = vpack.c.bf16 %v3500, %v3499
        %v3533 = vpack.c.bf16 %v3502, %v3501
        %v3534 = vpack.c.bf16 %v3504, %v3503
        %v3535 = vpack.c.bf16 %v3506, %v3505
        %v3536 = vpack.c.bf16 %v3508, %v3507
        %v3537 = vpack.c.bf16 %v3510, %v3509
        %v3538 = vpack.c.bf16 %v3512, %v3511
        %v3539 = vpack.c.bf16 %v3514, %v3513
        %v3540 = vpack.c.bf16 %v3516, %v3515
        %s3541 = scalar_lea.vmem %s3, 8
        %v3542 = vld [vmem:[%s3541] sm:$0xf]
        %v3543 = vld [vmem:[%s3541 + $0x4] sm:$0xf]
        %v3544 = vld [vmem:[#allocation3 + $0x1] sm:$0xff]
        %v3545 = vld [vmem:[#allocation3 + $0x9] sm:$0xff]
        %v3546 = vld [vmem:[#allocation3 + $0x11] sm:$0xff]
        %v3547 = vld [vmem:[#allocation3 + $0x19] sm:$0xff]
        %v3548 = vld [vmem:[#allocation3 + $0x21] sm:$0xff]
        %v3549 = vld [vmem:[#allocation3 + $0x29] sm:$0xff]
        %v3550 = vld [vmem:[#allocation3 + $0x31] sm:$0xff]
        %v3551 = vld [vmem:[#allocation3 + $0x39] sm:$0xff]
        %v3552 = vld [vmem:[#allocation3 + $0x41] sm:$0xff]
        %v3553 = vld [vmem:[#allocation3 + $0x49] sm:$0xff]
        %v3554 = vld [vmem:[#allocation3 + $0x51] sm:$0xff]
        %v3555 = vld [vmem:[#allocation3 + $0x59] sm:$0xff]
        %v3556 = vld [vmem:[#allocation3 + $0x61] sm:$0xff]
        %v3557 = vld [vmem:[#allocation3 + $0x69] sm:$0xff]
        %v3558 = vld [vmem:[#allocation3 + $0x71] sm:$0xff]
        %v3559 = vld [vmem:[#allocation3 + $0x79] sm:$0xff]
        %v3560 = vld [vmem:[#allocation3 + $0x81] sm:$0xff]
        %v3561 = vld [vmem:[#allocation3 + $0x89] sm:$0xff]
        %v3562 = vld [vmem:[#allocation3 + $0x91] sm:$0xff]
        %v3563 = vld [vmem:[#allocation3 + $0x99] sm:$0xff]
        %v3564 = vld [vmem:[#allocation3 + $0xa1] sm:$0xff]
        %v3565 = vld [vmem:[#allocation3 + $0xa9] sm:$0xff]
        %v3566 = vld [vmem:[#allocation3 + $0xb1] sm:$0xff]
        %v3567 = vld [vmem:[#allocation3 + $0xb9] sm:$0xff]
        %v3568 = vld [vmem:[#allocation3 + $0xc1] sm:$0xff]
        %v3569 = vld [vmem:[#allocation3 + $0xc9] sm:$0xff]
        %v3570 = vld [vmem:[#allocation3 + $0xd1] sm:$0xff]
        %v3571 = vld [vmem:[#allocation3 + $0xd9] sm:$0xff]
        %v3572 = vld [vmem:[#allocation3 + $0xe1] sm:$0xff]
        %v3573 = vld [vmem:[#allocation3 + $0xe9] sm:$0xff]
        %v3574 = vld [vmem:[#allocation3 + $0xf1] sm:$0xff]
        %v3575 = vld [vmem:[#allocation3 + $0xf9] sm:$0xff]
        %v3576 = vld [vmem:[#allocation3 + $0x101] sm:$0xff]
        %v3577 = vld [vmem:[#allocation3 + $0x109] sm:$0xff]
        %v3578 = vld [vmem:[#allocation3 + $0x111] sm:$0xff]
        %v3579 = vld [vmem:[#allocation3 + $0x119] sm:$0xff]
        %v3580 = vld [vmem:[#allocation3 + $0x121] sm:$0xff]
        %v3581 = vld [vmem:[#allocation3 + $0x129] sm:$0xff]
        %v3582 = vld [vmem:[#allocation3 + $0x131] sm:$0xff]
        %v3583 = vld [vmem:[#allocation3 + $0x139] sm:$0xff]
        %v3584 = vld [vmem:[#allocation3 + $0x141] sm:$0xff]
        %v3585 = vld [vmem:[#allocation3 + $0x149] sm:$0xff]
        %v3586 = vld [vmem:[#allocation3 + $0x151] sm:$0xff]
        %v3587 = vld [vmem:[#allocation3 + $0x159] sm:$0xff]
        %v3588 = vld [vmem:[#allocation3 + $0x161] sm:$0xff]
        %v3589 = vld [vmem:[#allocation3 + $0x169] sm:$0xff]
        %v3590 = vld [vmem:[#allocation3 + $0x171] sm:$0xff]
        %v3591 = vld [vmem:[#allocation3 + $0x179] sm:$0x3f]
        %v3592 = vpack.c.bf16 %v3545, %v3544
        %v3593 = vpack.c.bf16 %v3547, %v3546
        %v3594 = vpack.c.bf16 %v3549, %v3548
        %v3595 = vpack.c.bf16 %v3551, %v3550
        %v3596 = vpack.c.bf16 %v3553, %v3552
        %v3597 = vpack.c.bf16 %v3555, %v3554
        %v3598 = vpack.c.bf16 %v3557, %v3556
        %v3599 = vpack.c.bf16 %v3559, %v3558
        %v3600 = vpack.c.bf16 %v3561, %v3560
        %v3601 = vpack.c.bf16 %v3563, %v3562
        %v3602 = vpack.c.bf16 %v3565, %v3564
        %v3603 = vpack.c.bf16 %v3567, %v3566
        %v3604 = vpack.c.bf16 %v3569, %v3568
        %v3605 = vpack.c.bf16 %v3571, %v3570
        %v3606 = vpack.c.bf16 %v3573, %v3572
        %v3607 = vpack.c.bf16 %v3575, %v3574
        %v3608 = vpack.c.bf16 %v3577, %v3576
        %v3609 = vpack.c.bf16 %v3579, %v3578
        %v3610 = vpack.c.bf16 %v3581, %v3580
        %v3611 = vpack.c.bf16 %v3583, %v3582
        %v3612 = vpack.c.bf16 %v3585, %v3584
        %v3613 = vpack.c.bf16 %v3587, %v3586
        %v3614 = vpack.c.bf16 %v3589, %v3588
        %v3615 = vpack.c.bf16 %v3591, %v3590
        %v3618 = vunpack.c.l.b16 %v3542
        %v3619 = vunpack.c.l.b16 %v3543
        %v3620 = vpack.c.b16 %v3619, %v3618
        %v3623 = vsel %vm3034, %v3592, 0
        %v3626 = vsel %vm3034, %v3593, 0
        %v3629 = vsel %vm3034, %v3594, 0
        %v3632 = vsel %vm3034, %v3595, 0
        %v3635 = vsel %vm3034, %v3596, 0
        %v3638 = vsel %vm3034, %v3597, 0
        %v3641 = vsel %vm3034, %v3598, 0
        %v3644 = vsel %vm3034, %v3599, 0
        %v3647 = vsel %vm3034, %v3600, 0
        %v3650 = vsel %vm3034, %v3601, 0
        %v3653 = vsel %vm3034, %v3602, 0
        %v3656 = vsel %vm3034, %v3603, 0
        %v3659 = vsel %vm3034, %v3604, 0
        %v3662 = vsel %vm3034, %v3605, 0
        %v3665 = vsel %vm3034, %v3606, 0
        %v3668 = vsel %vm3034, %v3607, 0
        %v3671 = vsel %vm3034, %v3608, 0
        %v3674 = vsel %vm3034, %v3609, 0
        %v3677 = vsel %vm3034, %v3610, 0
        %v3680 = vsel %vm3034, %v3611, 0
        %v3683 = vsel %vm3034, %v3612, 0
        %v3686 = vsel %vm3034, %v3613, 0
        %v3689 = vsel %vm3034, %v3614, 0
        %v3692 = vsel %vm3034, %v3615, 0
        %3694 = vmatprep.subr.bf16.mxu0 0
        %3695 = vmatpush1.bf16.msra.mxu0 %v3620
        %3696 = vmatprep.subr.bf16.mxu0 0
        %3697 = vmatpush1.bf16.msra.mxu0 0
        %3698 = vmatprep.subr.bf16.mxu0 0
        %3699 = vmatpush1.bf16.msra.mxu0 0
        %3700 = vmatprep.subr.bf16.mxu0 0
        %3701 = vmatpush1.bf16.msra.mxu0 0
        %3702 = vmatprep.subr.bf16.mxu0 0
        %3703 = vmatpush1.bf16.msra.mxu0 0
        %3704 = vmatprep.subr.bf16.mxu0 0
        %3705 = vmatpush1.bf16.msra.mxu0 0
        %3706 = vmatprep.subr.bf16.mxu0 0
        %3707 = vmatpush1.bf16.msra.mxu0 0
        %3708 = vmatprep.subr.bf16.mxu0 0
        %3709 = vmatpush1.bf16.msra.mxu0 0
        %3710 = vmatprep.subr.bf16.mxu0 0
        %3711 = vmatpush1.bf16.msra.mxu0 0
        %3712 = vmatprep.subr.bf16.mxu0 0
        %3713 = vmatpush1.bf16.msra.mxu0 0
        %3714 = vmatprep.subr.bf16.mxu0 0
        %3715 = vmatpush1.bf16.msra.mxu0 0
        %3716 = vmatprep.subr.bf16.mxu0 0
        %3717 = vmatpush1.bf16.msra.mxu0 0
        %3718 = vmatprep.subr.bf16.mxu0 0
        %3719 = vmatpush1.bf16.msra.mxu0 0
        %3720 = vmatprep.subr.bf16.mxu0 0
        %3721 = vmatpush1.bf16.msra.mxu0 0
        %3722 = vmatprep.subr.bf16.mxu0 0
        %3723 = vmatpush1.bf16.msra.mxu0 0
        %3724 = vmatprep.subr.bf16.mxu0 0
        %3725 = vmatpush1.bf16.msra.mxu0 0
        %3726 = vmatprep.mubr.bf16.mxu0 0
        %3727 = vmatmul.mubr.bf16.gmra.mrb[0].mxu0 %v3623
        %v3728 = vpop.f32.mrb[0].mxu0
        %v3729 = vadd.f32 0.0, %v3728
        %v3730 = vpop.f32.mrb[0].mxu0
        %v3731 = vpop.f32.mrb[0].mxu0
        %v3732 = vadd.f32 0.0, %v3731
        %v3733 = vpop.f32.mrb[0].mxu0
        %3734 = vmatprep.mubr.bf16.mxu0 0
        %3735 = vmatmul.mubr.bf16.gmra.mrb[0].mxu0 %v3626
        %v3736 = vpop.f32.mrb[0].mxu0
        %v3737 = vadd.f32 0.0, %v3736
        %v3738 = vpop.f32.mrb[0].mxu0
        %v3739 = vpop.f32.mrb[0].mxu0
        %v3740 = vadd.f32 0.0, %v3739
        %v3741 = vpop.f32.mrb[0].mxu0
        %3742 = vmatprep.mubr.bf16.mxu0 0
        %3743 = vmatmul.mubr.bf16.gmra.mrb[0].mxu0 %v3629
        %v3744 = vpop.f32.mrb[0].mxu0
        %v3745 = vadd.f32 0.0, %v3744
        %v3746 = vpop.f32.mrb[0].mxu0
        %v3747 = vpop.f32.mrb[0].mxu0
        %v3748 = vadd.f32 0.0, %v3747
        %v3749 = vpop.f32.mrb[0].mxu0
        %3750 = vmatprep.mubr.bf16.mxu0 0
        %3751 = vmatmul.mubr.bf16.gmra.mrb[0].mxu0 %v3632
        %v3752 = vpop.f32.mrb[0].mxu0
        %v3753 = vadd.f32 0.0, %v3752
        %v3754 = vpop.f32.mrb[0].mxu0
        %v3755 = vpop.f32.mrb[0].mxu0
        %v3756 = vadd.f32 0.0, %v3755
        %v3757 = vpop.f32.mrb[0].mxu0
        %3758 = vmatprep.mubr.bf16.mxu0 0
        %3759 = vmatmul.mubr.bf16.gmra.mrb[0].mxu0 %v3635
        %v3760 = vpop.f32.mrb[0].mxu0
        %v3761 = vadd.f32 0.0, %v3760
        %v3762 = vpop.f32.mrb[0].mxu0
        %v3763 = vpop.f32.mrb[0].mxu0
        %v3764 = vadd.f32 0.0, %v3763
        %v3765 = vpop.f32.mrb[0].mxu0
        %3766 = vmatprep.mubr.bf16.mxu0 0
        %3767 = vmatmul.mubr.bf16.gmra.mrb[0].mxu0 %v3638
        %v3768 = vpop.f32.mrb[0].mxu0
        %v3769 = vadd.f32 0.0, %v3768
        %v3770 = vpop.f32.mrb[0].mxu0
        %v3771 = vpop.f32.mrb[0].mxu0
        %v3772 = vadd.f32 0.0, %v3771
        %v3773 = vpop.f32.mrb[0].mxu0
        %3774 = vmatprep.mubr.bf16.mxu0 0
        %3775 = vmatmul.mubr.bf16.gmra.mrb[0].mxu0 %v3641
        %v3776 = vpop.f32.mrb[0].mxu0
        %v3777 = vadd.f32 0.0, %v3776
        %v3778 = vpop.f32.mrb[0].mxu0
        %v3779 = vpop.f32.mrb[0].mxu0
        %v3780 = vadd.f32 0.0, %v3779
        %v3781 = vpop.f32.mrb[0].mxu0
        %3782 = vmatprep.mubr.bf16.mxu0 0
        %3783 = vmatmul.mubr.bf16.gmra.mrb[0].mxu0 %v3644
        %v3784 = vpop.f32.mrb[0].mxu0
        %v3785 = vadd.f32 0.0, %v3784
        %v3786 = vpop.f32.mrb[0].mxu0
        %v3787 = vpop.f32.mrb[0].mxu0
        %v3788 = vadd.f32 0.0, %v3787
        %v3789 = vpop.f32.mrb[0].mxu0
        %3790 = vmatprep.mubr.bf16.mxu0 0
        %3791 = vmatmul.mubr.bf16.gmra.mrb[0].mxu0 %v3647
        %v3792 = vpop.f32.mrb[0].mxu0
        %v3793 = vadd.f32 0.0, %v3792
        %v3794 = vpop.f32.mrb[0].mxu0
        %v3795 = vpop.f32.mrb[0].mxu0
        %v3796 = vadd.f32 0.0, %v3795
        %v3797 = vpop.f32.mrb[0].mxu0
        %3798 = vmatprep.mubr.bf16.mxu0 0
        %3799 = vmatmul.mubr.bf16.gmra.mrb[0].mxu0 %v3650
        %v3800 = vpop.f32.mrb[0].mxu0
        %v3801 = vadd.f32 0.0, %v3800
        %v3802 = vpop.f32.mrb[0].mxu0
        %v3803 = vpop.f32.mrb[0].mxu0
        %v3804 = vadd.f32 0.0, %v3803
        %v3805 = vpop.f32.mrb[0].mxu0
        %3806 = vmatprep.mubr.bf16.mxu0 0
        %3807 = vmatmul.mubr.bf16.gmra.mrb[0].mxu0 %v3653
        %v3808 = vpop.f32.mrb[0].mxu0
        %v3809 = vadd.f32 0.0, %v3808
        %v3810 = vpop.f32.mrb[0].mxu0
        %v3811 = vpop.f32.mrb[0].mxu0
        %v3812 = vadd.f32 0.0, %v3811
        %v3813 = vpop.f32.mrb[0].mxu0
        %3814 = vmatprep.mubr.bf16.mxu0 0
        %3815 = vmatmul.mubr.bf16.gmra.mrb[0].mxu0 %v3656
        %v3816 = vpop.f32.mrb[0].mxu0
        %v3817 = vadd.f32 0.0, %v3816
        %v3818 = vpop.f32.mrb[0].mxu0
        %v3819 = vpop.f32.mrb[0].mxu0
        %v3820 = vadd.f32 0.0, %v3819
        %v3821 = vpop.f32.mrb[0].mxu0
        %3822 = vmatprep.mubr.bf16.mxu0 0
        %3823 = vmatmul.mubr.bf16.gmra.mrb[0].mxu0 %v3659
        %v3824 = vpop.f32.mrb[0].mxu0
        %v3825 = vadd.f32 0.0, %v3824
        %v3826 = vpop.f32.mrb[0].mxu0
        %v3827 = vpop.f32.mrb[0].mxu0
        %v3828 = vadd.f32 0.0, %v3827
        %v3829 = vpop.f32.mrb[0].mxu0
        %3830 = vmatprep.mubr.bf16.mxu0 0
        %3831 = vmatmul.mubr.bf16.gmra.mrb[0].mxu0 %v3662
        %v3832 = vpop.f32.mrb[0].mxu0
        %v3833 = vadd.f32 0.0, %v3832
        %v3834 = vpop.f32.mrb[0].mxu0
        %v3835 = vpop.f32.mrb[0].mxu0
        %v3836 = vadd.f32 0.0, %v3835
        %v3837 = vpop.f32.mrb[0].mxu0
        %3838 = vmatprep.mubr.bf16.mxu0 0
        %3839 = vmatmul.mubr.bf16.gmra.mrb[0].mxu0 %v3665
        %v3840 = vpop.f32.mrb[0].mxu0
        %v3841 = vadd.f32 0.0, %v3840
        %v3842 = vpop.f32.mrb[0].mxu0
        %v3843 = vpop.f32.mrb[0].mxu0
        %v3844 = vadd.f32 0.0, %v3843
        %v3845 = vpop.f32.mrb[0].mxu0
        %3846 = vmatprep.mubr.bf16.mxu0 0
        %3847 = vmatmul.mubr.bf16.gmra.mrb[0].mxu0 %v3668
        %v3848 = vpop.f32.mrb[0].mxu0
        %v3849 = vadd.f32 0.0, %v3848
        %v3850 = vpop.f32.mrb[0].mxu0
        %v3851 = vpop.f32.mrb[0].mxu0
        %v3852 = vadd.f32 0.0, %v3851
        %v3853 = vpop.f32.mrb[0].mxu0
        %3854 = vmatprep.mubr.bf16.mxu0 0
        %3855 = vmatmul.mubr.bf16.gmra.mrb[0].mxu0 %v3671
        %v3856 = vpop.f32.mrb[0].mxu0
        %v3857 = vadd.f32 0.0, %v3856
        %v3858 = vpop.f32.mrb[0].mxu0
        %v3859 = vpop.f32.mrb[0].mxu0
        %v3860 = vadd.f32 0.0, %v3859
        %v3861 = vpop.f32.mrb[0].mxu0
        %3862 = vmatprep.mubr.bf16.mxu0 0
        %3863 = vmatmul.mubr.bf16.gmra.mrb[0].mxu0 %v3674
        %v3864 = vpop.f32.mrb[0].mxu0
        %v3865 = vadd.f32 0.0, %v3864
        %v3866 = vpop.f32.mrb[0].mxu0
        %v3867 = vpop.f32.mrb[0].mxu0
        %v3868 = vadd.f32 0.0, %v3867
        %v3869 = vpop.f32.mrb[0].mxu0
        %3870 = vmatprep.mubr.bf16.mxu0 0
        %3871 = vmatmul.mubr.bf16.gmra.mrb[0].mxu0 %v3677
        %v3872 = vpop.f32.mrb[0].mxu0
        %v3873 = vadd.f32 0.0, %v3872
        %v3874 = vpop.f32.mrb[0].mxu0
        %v3875 = vpop.f32.mrb[0].mxu0
        %v3876 = vadd.f32 0.0, %v3875
        %v3877 = vpop.f32.mrb[0].mxu0
        %3878 = vmatprep.mubr.bf16.mxu0 0
        %3879 = vmatmul.mubr.bf16.gmra.mrb[0].mxu0 %v3680
        %v3880 = vpop.f32.mrb[0].mxu0
        %v3881 = vadd.f32 0.0, %v3880
        %v3882 = vpop.f32.mrb[0].mxu0
        %v3883 = vpop.f32.mrb[0].mxu0
        %v3884 = vadd.f32 0.0, %v3883
        %v3885 = vpop.f32.mrb[0].mxu0
        %3886 = vmatprep.mubr.bf16.mxu0 0
        %3887 = vmatmul.mubr.bf16.gmra.mrb[0].mxu0 %v3683
        %v3888 = vpop.f32.mrb[0].mxu0
        %v3889 = vadd.f32 0.0, %v3888
        %v3890 = vpop.f32.mrb[0].mxu0
        %v3891 = vpop.f32.mrb[0].mxu0
        %v3892 = vadd.f32 0.0, %v3891
        %v3893 = vpop.f32.mrb[0].mxu0
        %3894 = vmatprep.mubr.bf16.mxu0 0
        %3895 = vmatmul.mubr.bf16.gmra.mrb[0].mxu0 %v3686
        %v3896 = vpop.f32.mrb[0].mxu0
        %v3897 = vadd.f32 0.0, %v3896
        %v3898 = vpop.f32.mrb[0].mxu0
        %v3899 = vpop.f32.mrb[0].mxu0
        %v3900 = vadd.f32 0.0, %v3899
        %v3901 = vpop.f32.mrb[0].mxu0
        %3902 = vmatprep.mubr.bf16.mxu0 0
        %3903 = vmatmul.mubr.bf16.gmra.mrb[0].mxu0 %v3689
        %v3904 = vpop.f32.mrb[0].mxu0
        %v3905 = vadd.f32 0.0, %v3904
        %v3906 = vpop.f32.mrb[0].mxu0
        %v3907 = vpop.f32.mrb[0].mxu0
        %v3908 = vadd.f32 0.0, %v3907
        %v3909 = vpop.f32.mrb[0].mxu0
        %3910 = vmatprep.mubr.bf16.mxu0 0
        %3911 = vmatmul.mubr.bf16.gmra.mrb[0].mxu0 %v3692
        %v3912 = vpop.f32.mrb[0].mxu0
        %v3913 = vadd.f32 0.0, %v3912
        %v3914 = vpop.f32.mrb[0].mxu0
        %v3915 = vpop.f32.mrb[0].mxu0
        %v3916 = vadd.f32 0.0, %v3915
        %v3917 = vpop.f32.mrb[0].mxu0
        %3918 = vdwg.mxu0
        %v3921 = vunpack.c.l.b16 %v3467
        %v3922 = vunpack.c.l.b16 %v3468
        %v3923 = vpack.c.b16 %v3922, %v3921
        %v3926 = vsel %vm3034, %v3517, 0
        %v3929 = vsel %vm3034, %v3518, 0
        %v3932 = vsel %vm3034, %v3519, 0
        %v3935 = vsel %vm3034, %v3520, 0
        %v3938 = vsel %vm3034, %v3521, 0
        %v3941 = vsel %vm3034, %v3522, 0
        %v3944 = vsel %vm3034, %v3523, 0
        %v3947 = vsel %vm3034, %v3524, 0
        %v3950 = vsel %vm3034, %v3525, 0
        %v3953 = vsel %vm3034, %v3526, 0
        %v3956 = vsel %vm3034, %v3527, 0
        %v3959 = vsel %vm3034, %v3528, 0
        %v3962 = vsel %vm3034, %v3529, 0
        %v3965 = vsel %vm3034, %v3530, 0
        %v3968 = vsel %vm3034, %v3531, 0
        %v3971 = vsel %vm3034, %v3532, 0
        %v3974 = vsel %vm3034, %v3533, 0
        %v3977 = vsel %vm3034, %v3534, 0
        %v3980 = vsel %vm3034, %v3535, 0
        %v3983 = vsel %vm3034, %v3536, 0
        %v3986 = vsel %vm3034, %v3537, 0
        %v3989 = vsel %vm3034, %v3538, 0
        %v3992 = vsel %vm3034, %v3539, 0
        %v3995 = vsel %vm3034, %v3540, 0
        %3997 = vmatprep.subr.bf16.mxu0 0
        %3998 = vmatpush1.bf16.msra.mxu0 %v3923
        %3999 = vmatprep.subr.bf16.mxu0 0
        %4000 = vmatpush1.bf16.msra.mxu0 0
        %4001 = vmatprep.subr.bf16.mxu0 0
        %4002 = vmatpush1.bf16.msra.mxu0 0
        %4003 = vmatprep.subr.bf16.mxu0 0
        %4004 = vmatpush1.bf16.msra.mxu0 0
        %4005 = vmatprep.subr.bf16.mxu0 0
        %4006 = vmatpush1.bf16.msra.mxu0 0
        %4007 = vmatprep.subr.bf16.mxu0 0
        %4008 = vmatpush1.bf16.msra.mxu0 0
        %4009 = vmatprep.subr.bf16.mxu0 0
        %4010 = vmatpush1.bf16.msra.mxu0 0
        %4011 = vmatprep.subr.bf16.mxu0 0
        %4012 = vmatpush1.bf16.msra.mxu0 0
        %4013 = vmatprep.subr.bf16.mxu0 0
        %4014 = vmatpush1.bf16.msra.mxu0 0
        %4015 = vmatprep.subr.bf16.mxu0 0
        %4016 = vmatpush1.bf16.msra.mxu0 0
        %4017 = vmatprep.subr.bf16.mxu0 0
        %4018 = vmatpush1.bf16.msra.mxu0 0
        %4019 = vmatprep.subr.bf16.mxu0 0
        %4020 = vmatpush1.bf16.msra.mxu0 0
        %4021 = vmatprep.subr.bf16.mxu0 0
        %4022 = vmatpush1.bf16.msra.mxu0 0
        %4023 = vmatprep.subr.bf16.mxu0 0
        %4024 = vmatpush1.bf16.msra.mxu0 0
        %4025 = vmatprep.subr.bf16.mxu0 0
        %4026 = vmatpush1.bf16.msra.mxu0 0
        %4027 = vmatprep.subr.bf16.mxu0 0
        %4028 = vmatpush1.bf16.msra.mxu0 0
        %4029 = vmatprep.mubr.bf16.mxu0 0
        %4030 = vmatmul.mubr.bf16.gmra.mrb[0].mxu0 %v3926
        %v4031 = vpop.f32.mrb[0].mxu0
        %v4032 = vadd.f32 %v3729, %v4031
        %v4033 = vpop.f32.mrb[0].mxu0
        %v4034 = vpop.f32.mrb[0].mxu0
        %v4035 = vadd.f32 %v3732, %v4034
        %v4036 = vpop.f32.mrb[0].mxu0
        %4037 = vmatprep.mubr.bf16.mxu0 0
        %4038 = vmatmul.mubr.bf16.gmra.mrb[0].mxu0 %v3929
        %v4039 = vpop.f32.mrb[0].mxu0
        %v4040 = vadd.f32 %v3737, %v4039
        %v4041 = vpop.f32.mrb[0].mxu0
        %v4042 = vpop.f32.mrb[0].mxu0
        %v4043 = vadd.f32 %v3740, %v4042
        %v4044 = vpop.f32.mrb[0].mxu0
        %4045 = vmatprep.mubr.bf16.mxu0 0
        %4046 = vmatmul.mubr.bf16.gmra.mrb[0].mxu0 %v3932
        %v4047 = vpop.f32.mrb[0].mxu0
        %v4048 = vadd.f32 %v3745, %v4047
        %v4049 = vpop.f32.mrb[0].mxu0
        %v4050 = vpop.f32.mrb[0].mxu0
        %v4051 = vadd.f32 %v3748, %v4050
        %v4052 = vpop.f32.mrb[0].mxu0
        %4053 = vmatprep.mubr.bf16.mxu0 0
        %4054 = vmatmul.mubr.bf16.gmra.mrb[0].mxu0 %v3935
        %v4055 = vpop.f32.mrb[0].mxu0
        %v4056 = vadd.f32 %v3753, %v4055
        %v4057 = vpop.f32.mrb[0].mxu0
        %v4058 = vpop.f32.mrb[0].mxu0
        %v4059 = vadd.f32 %v3756, %v4058
        %v4060 = vpop.f32.mrb[0].mxu0
        %4061 = vmatprep.mubr.bf16.mxu0 0
        %4062 = vmatmul.mubr.bf16.gmra.mrb[0].mxu0 %v3938
        %v4063 = vpop.f32.mrb[0].mxu0
        %v4064 = vadd.f32 %v3761, %v4063
        %v4065 = vpop.f32.mrb[0].mxu0
        %v4066 = vpop.f32.mrb[0].mxu0
        %v4067 = vadd.f32 %v3764, %v4066
        %v4068 = vpop.f32.mrb[0].mxu0
        %4069 = vmatprep.mubr.bf16.mxu0 0
        %4070 = vmatmul.mubr.bf16.gmra.mrb[0].mxu0 %v3941
        %v4071 = vpop.f32.mrb[0].mxu0
        %v4072 = vadd.f32 %v3769, %v4071
        %v4073 = vpop.f32.mrb[0].mxu0
        %v4074 = vpop.f32.mrb[0].mxu0
        %v4075 = vadd.f32 %v3772, %v4074
        %v4076 = vpop.f32.mrb[0].mxu0
        %4077 = vmatprep.mubr.bf16.mxu0 0
        %4078 = vmatmul.mubr.bf16.gmra.mrb[0].mxu0 %v3944
        %v4079 = vpop.f32.mrb[0].mxu0
        %v4080 = vadd.f32 %v3777, %v4079
        %v4081 = vpop.f32.mrb[0].mxu0
        %v4082 = vpop.f32.mrb[0].mxu0
        %v4083 = vadd.f32 %v3780, %v4082
        %v4084 = vpop.f32.mrb[0].mxu0
        %4085 = vmatprep.mubr.bf16.mxu0 0
        %4086 = vmatmul.mubr.bf16.gmra.mrb[0].mxu0 %v3947
        %v4087 = vpop.f32.mrb[0].mxu0
        %v4088 = vadd.f32 %v3785, %v4087
        %v4089 = vpop.f32.mrb[0].mxu0
        %v4090 = vpop.f32.mrb[0].mxu0
        %v4091 = vadd.f32 %v3788, %v4090
        %v4092 = vpop.f32.mrb[0].mxu0
        %4093 = vmatprep.mubr.bf16.mxu0 0
        %4094 = vmatmul.mubr.bf16.gmra.mrb[0].mxu0 %v3950
        %v4095 = vpop.f32.mrb[0].mxu0
        %v4096 = vadd.f32 %v3793, %v4095
        %v4097 = vpop.f32.mrb[0].mxu0
        %v4098 = vpop.f32.mrb[0].mxu0
        %v4099 = vadd.f32 %v3796, %v4098
        %v4100 = vpop.f32.mrb[0].mxu0
        %4101 = vmatprep.mubr.bf16.mxu0 0
        %4102 = vmatmul.mubr.bf16.gmra.mrb[0].mxu0 %v3953
        %v4103 = vpop.f32.mrb[0].mxu0
        %v4104 = vadd.f32 %v3801, %v4103
        %v4105 = vpop.f32.mrb[0].mxu0
        %v4106 = vpop.f32.mrb[0].mxu0
        %v4107 = vadd.f32 %v3804, %v4106
        %v4108 = vpop.f32.mrb[0].mxu0
        %4109 = vmatprep.mubr.bf16.mxu0 0
        %4110 = vmatmul.mubr.bf16.gmra.mrb[0].mxu0 %v3956
        %v4111 = vpop.f32.mrb[0].mxu0
        %v4112 = vadd.f32 %v3809, %v4111
        %v4113 = vpop.f32.mrb[0].mxu0
        %v4114 = vpop.f32.mrb[0].mxu0
        %v4115 = vadd.f32 %v3812, %v4114
        %v4116 = vpop.f32.mrb[0].mxu0
        %4117 = vmatprep.mubr.bf16.mxu0 0
        %4118 = vmatmul.mubr.bf16.gmra.mrb[0].mxu0 %v3959
        %v4119 = vpop.f32.mrb[0].mxu0
        %v4120 = vadd.f32 %v3817, %v4119
        %v4121 = vpop.f32.mrb[0].mxu0
        %v4122 = vpop.f32.mrb[0].mxu0
        %v4123 = vadd.f32 %v3820, %v4122
        %v4124 = vpop.f32.mrb[0].mxu0
        %4125 = vmatprep.mubr.bf16.mxu0 0
        %4126 = vmatmul.mubr.bf16.gmra.mrb[0].mxu0 %v3962
        %v4127 = vpop.f32.mrb[0].mxu0
        %v4128 = vadd.f32 %v3825, %v4127
        %v4129 = vpop.f32.mrb[0].mxu0
        %v4130 = vpop.f32.mrb[0].mxu0
        %v4131 = vadd.f32 %v3828, %v4130
        %v4132 = vpop.f32.mrb[0].mxu0
        %4133 = vmatprep.mubr.bf16.mxu0 0
        %4134 = vmatmul.mubr.bf16.gmra.mrb[0].mxu0 %v3965
        %v4135 = vpop.f32.mrb[0].mxu0
        %v4136 = vadd.f32 %v3833, %v4135
        %v4137 = vpop.f32.mrb[0].mxu0
        %v4138 = vpop.f32.mrb[0].mxu0
        %v4139 = vadd.f32 %v3836, %v4138
        %v4140 = vpop.f32.mrb[0].mxu0
        %4141 = vmatprep.mubr.bf16.mxu0 0
        %4142 = vmatmul.mubr.bf16.gmra.mrb[0].mxu0 %v3968
        %v4143 = vpop.f32.mrb[0].mxu0
        %v4144 = vadd.f32 %v3841, %v4143
        %v4145 = vpop.f32.mrb[0].mxu0
        %v4146 = vpop.f32.mrb[0].mxu0
        %v4147 = vadd.f32 %v3844, %v4146
        %v4148 = vpop.f32.mrb[0].mxu0
        %4149 = vmatprep.mubr.bf16.mxu0 0
        %4150 = vmatmul.mubr.bf16.gmra.mrb[0].mxu0 %v3971
        %v4151 = vpop.f32.mrb[0].mxu0
        %v4152 = vadd.f32 %v3849, %v4151
        %v4153 = vpop.f32.mrb[0].mxu0
        %v4154 = vpop.f32.mrb[0].mxu0
        %v4155 = vadd.f32 %v3852, %v4154
        %v4156 = vpop.f32.mrb[0].mxu0
        %4157 = vmatprep.mubr.bf16.mxu0 0
        %4158 = vmatmul.mubr.bf16.gmra.mrb[0].mxu0 %v3974
        %v4159 = vpop.f32.mrb[0].mxu0
        %v4160 = vadd.f32 %v3857, %v4159
        %v4161 = vpop.f32.mrb[0].mxu0
        %v4162 = vpop.f32.mrb[0].mxu0
        %v4163 = vadd.f32 %v3860, %v4162
        %v4164 = vpop.f32.mrb[0].mxu0
        %4165 = vmatprep.mubr.bf16.mxu0 0
        %4166 = vmatmul.mubr.bf16.gmra.mrb[0].mxu0 %v3977
        %v4167 = vpop.f32.mrb[0].mxu0
        %v4168 = vadd.f32 %v3865, %v4167
        %v4169 = vpop.f32.mrb[0].mxu0
        %v4170 = vpop.f32.mrb[0].mxu0
        %v4171 = vadd.f32 %v3868, %v4170
        %v4172 = vpop.f32.mrb[0].mxu0
        %4173 = vmatprep.mubr.bf16.mxu0 0
        %4174 = vmatmul.mubr.bf16.gmra.mrb[0].mxu0 %v3980
        %v4175 = vpop.f32.mrb[0].mxu0
        %v4176 = vadd.f32 %v3873, %v4175
        %v4177 = vpop.f32.mrb[0].mxu0
        %v4178 = vpop.f32.mrb[0].mxu0
        %v4179 = vadd.f32 %v3876, %v4178
        %v4180 = vpop.f32.mrb[0].mxu0
        %4181 = vmatprep.mubr.bf16.mxu0 0
        %4182 = vmatmul.mubr.bf16.gmra.mrb[0].mxu0 %v3983
        %v4183 = vpop.f32.mrb[0].mxu0
        %v4184 = vadd.f32 %v3881, %v4183
        %v4185 = vpop.f32.mrb[0].mxu0
        %v4186 = vpop.f32.mrb[0].mxu0
        %v4187 = vadd.f32 %v3884, %v4186
        %v4188 = vpop.f32.mrb[0].mxu0
        %4189 = vmatprep.mubr.bf16.mxu0 0
        %4190 = vmatmul.mubr.bf16.gmra.mrb[0].mxu0 %v3986
        %v4191 = vpop.f32.mrb[0].mxu0
        %v4192 = vadd.f32 %v3889, %v4191
        %v4193 = vpop.f32.mrb[0].mxu0
        %v4194 = vpop.f32.mrb[0].mxu0
        %v4195 = vadd.f32 %v3892, %v4194
        %v4196 = vpop.f32.mrb[0].mxu0
        %4197 = vmatprep.mubr.bf16.mxu0 0
        %4198 = vmatmul.mubr.bf16.gmra.mrb[0].mxu0 %v3989
        %v4199 = vpop.f32.mrb[0].mxu0
        %v4200 = vadd.f32 %v3897, %v4199
        %v4201 = vpop.f32.mrb[0].mxu0
        %v4202 = vpop.f32.mrb[0].mxu0
        %v4203 = vadd.f32 %v3900, %v4202
        %v4204 = vpop.f32.mrb[0].mxu0
        %4205 = vmatprep.mubr.bf16.mxu0 0
        %4206 = vmatmul.mubr.bf16.gmra.mrb[0].mxu0 %v3992
        %v4207 = vpop.f32.mrb[0].mxu0
        %v4208 = vadd.f32 %v3905, %v4207
        %v4209 = vpop.f32.mrb[0].mxu0
        %v4210 = vpop.f32.mrb[0].mxu0
        %v4211 = vadd.f32 %v3908, %v4210
        %v4212 = vpop.f32.mrb[0].mxu0
        %4213 = vmatprep.mubr.bf16.mxu0 0
        %4214 = vmatmul.mubr.bf16.gmra.mrb[0].mxu0 %v3995
        %v4215 = vpop.f32.mrb[0].mxu0
        %v4216 = vadd.f32 %v3913, %v4215
        %v4217 = vpop.f32.mrb[0].mxu0
        %v4218 = vpop.f32.mrb[0].mxu0
        %v4219 = vadd.f32 %v3916, %v4218
        %v4220 = vpop.f32.mrb[0].mxu0
        %4221 = vdwg.mxu0
        %s4222 = scalar_lea.vmem %s3, 16
        %v4223 = vld [vmem:[%s4222] sm:$0xf]
        %v4224 = vld [vmem:[%s4222 + $0x4] sm:$0xf]
        %v4225 = vld [vmem:[#allocation3 + $0x2] sm:$0xff]
        %v4226 = vld [vmem:[#allocation3 + $0xa] sm:$0xff]
        %v4227 = vld [vmem:[#allocation3 + $0x12] sm:$0xff]
        %v4228 = vld [vmem:[#allocation3 + $0x1a] sm:$0xff]
        %v4229 = vld [vmem:[#allocation3 + $0x22] sm:$0xff]
        %v4230 = vld [vmem:[#allocation3 + $0x2a] sm:$0xff]
        %v4231 = vld [vmem:[#allocation3 + $0x32] sm:$0xff]
        %v4232 = vld [vmem:[#allocation3 + $0x3a] sm:$0xff]
        %v4233 = vld [vmem:[#allocation3 + $0x42] sm:$0xff]
        %v4234 = vld [vmem:[#allocation3 + $0x4a] sm:$0xff]
        %v4235 = vld [vmem:[#allocation3 + $0x52] sm:$0xff]
        %v4236 = vld [vmem:[#allocation3 + $0x5a] sm:$0xff]
        %v4237 = vld [vmem:[#allocation3 + $0x62] sm:$0xff]
        %v4238 = vld [vmem:[#allocation3 + $0x6a] sm:$0xff]
        %v4239 = vld [vmem:[#allocation3 + $0x72] sm:$0xff]
        %v4240 = vld [vmem:[#allocation3 + $0x7a] sm:$0xff]
        %v4241 = vld [vmem:[#allocation3 + $0x82] sm:$0xff]
        %v4242 = vld [vmem:[#allocation3 + $0x8a] sm:$0xff]
        %v4243 = vld [vmem:[#allocation3 + $0x92] sm:$0xff]
        %v4244 = vld [vmem:[#allocation3 + $0x9a] sm:$0xff]
        %v4245 = vld [vmem:[#allocation3 + $0xa2] sm:$0xff]
        %v4246 = vld [vmem:[#allocation3 + $0xaa] sm:$0xff]
        %v4247 = vld [vmem:[#allocation3 + $0xb2] sm:$0xff]
        %v4248 = vld [vmem:[#allocation3 + $0xba] sm:$0xff]
        %v4249 = vld [vmem:[#allocation3 + $0xc2] sm:$0xff]
        %v4250 = vld [vmem:[#allocation3 + $0xca] sm:$0xff]
        %v4251 = vld [vmem:[#allocation3 + $0xd2] sm:$0xff]
        %v4252 = vld [vmem:[#allocation3 + $0xda] sm:$0xff]
        %v4253 = vld [vmem:[#allocation3 + $0xe2] sm:$0xff]
        %v4254 = vld [vmem:[#allocation3 + $0xea] sm:$0xff]
        %v4255 = vld [vmem:[#allocation3 + $0xf2] sm:$0xff]
        %v4256 = vld [vmem:[#allocation3 + $0xfa] sm:$0xff]
        %v4257 = vld [vmem:[#allocation3 + $0x102] sm:$0xff]
        %v4258 = vld [vmem:[#allocation3 + $0x10a] sm:$0xff]
        %v4259 = vld [vmem:[#allocation3 + $0x112] sm:$0xff]
        %v4260 = vld [vmem:[#allocation3 + $0x11a] sm:$0xff]
        %v4261 = vld [vmem:[#allocation3 + $0x122] sm:$0xff]
        %v4262 = vld [vmem:[#allocation3 + $0x12a] sm:$0xff]
        %v4263 = vld [vmem:[#allocation3 + $0x132] sm:$0xff]
        %v4264 = vld [vmem:[#allocation3 + $0x13a] sm:$0xff]
        %v4265 = vld [vmem:[#allocation3 + $0x142] sm:$0xff]
        %v4266 = vld [vmem:[#allocation3 + $0x14a] sm:$0xff]
        %v4267 = vld [vmem:[#allocation3 + $0x152] sm:$0xff]
        %v4268 = vld [vmem:[#allocation3 + $0x15a] sm:$0xff]
        %v4269 = vld [vmem:[#allocation3 + $0x162] sm:$0xff]
        %v4270 = vld [vmem:[#allocation3 + $0x16a] sm:$0xff]
        %v4271 = vld [vmem:[#allocation3 + $0x172] sm:$0xff]
        %v4272 = vld [vmem:[#allocation3 + $0x17a] sm:$0x3f]
        %v4273 = vpack.c.bf16 %v4226, %v4225
        %v4274 = vpack.c.bf16 %v4228, %v4227
        %v4275 = vpack.c.bf16 %v4230, %v4229
        %v4276 = vpack.c.bf16 %v4232, %v4231
        %v4277 = vpack.c.bf16 %v4234, %v4233
        %v4278 = vpack.c.bf16 %v4236, %v4235
        %v4279 = vpack.c.bf16 %v4238, %v4237
        %v4280 = vpack.c.bf16 %v4240, %v4239
        %v4281 = vpack.c.bf16 %v4242, %v4241
        %v4282 = vpack.c.bf16 %v4244, %v4243
        %v4283 = vpack.c.bf16 %v4246, %v4245
        %v4284 = vpack.c.bf16 %v4248, %v4247
        %v4285 = vpack.c.bf16 %v4250, %v4249
        %v4286 = vpack.c.bf16 %v4252, %v4251
        %v4287 = vpack.c.bf16 %v4254, %v4253
        %v4288 = vpack.c.bf16 %v4256, %v4255
        %v4289 = vpack.c.bf16 %v4258, %v4257
        %v4290 = vpack.c.bf16 %v4260, %v4259
        %v4291 = vpack.c.bf16 %v4262, %v4261
        %v4292 = vpack.c.bf16 %v4264, %v4263
        %v4293 = vpack.c.bf16 %v4266, %v4265
        %v4294 = vpack.c.bf16 %v4268, %v4267
        %v4295 = vpack.c.bf16 %v4270, %v4269
        %v4296 = vpack.c.bf16 %v4272, %v4271
        %v4299 = vunpack.c.l.b16 %v4223
        %v4300 = vunpack.c.l.b16 %v4224
        %v4301 = vpack.c.b16 %v4300, %v4299
        %v4304 = vsel %vm3034, %v4273, 0
        %v4307 = vsel %vm3034, %v4274, 0
        %v4310 = vsel %vm3034, %v4275, 0
        %v4313 = vsel %vm3034, %v4276, 0
        %v4316 = vsel %vm3034, %v4277, 0
        %v4319 = vsel %vm3034, %v4278, 0
        %v4322 = vsel %vm3034, %v4279, 0
        %v4325 = vsel %vm3034, %v4280, 0
        %v4328 = vsel %vm3034, %v4281, 0
        %v4331 = vsel %vm3034, %v4282, 0
        %v4334 = vsel %vm3034, %v4283, 0
        %v4337 = vsel %vm3034, %v4284, 0
        %v4340 = vsel %vm3034, %v4285, 0
        %v4343 = vsel %vm3034, %v4286, 0
        %v4346 = vsel %vm3034, %v4287, 0
        %v4349 = vsel %vm3034, %v4288, 0
        %v4352 = vsel %vm3034, %v4289, 0
        %v4355 = vsel %vm3034, %v4290, 0
        %v4358 = vsel %vm3034, %v4291, 0
        %v4361 = vsel %vm3034, %v4292, 0
        %v4364 = vsel %vm3034, %v4293, 0
        %v4367 = vsel %vm3034, %v4294, 0
        %v4370 = vsel %vm3034, %v4295, 0
        %v4373 = vsel %vm3034, %v4296, 0
        %4375 = vmatprep.subr.bf16.mxu0 0
        %4376 = vmatpush1.bf16.msra.mxu0 %v4301
        %4377 = vmatprep.subr.bf16.mxu0 0
        %4378 = vmatpush1.bf16.msra.mxu0 0
        %4379 = vmatprep.subr.bf16.mxu0 0
        %4380 = vmatpush1.bf16.msra.mxu0 0
        %4381 = vmatprep.subr.bf16.mxu0 0
        %4382 = vmatpush1.bf16.msra.mxu0 0
        %4383 = vmatprep.subr.bf16.mxu0 0
        %4384 = vmatpush1.bf16.msra.mxu0 0
        %4385 = vmatprep.subr.bf16.mxu0 0
        %4386 = vmatpush1.bf16.msra.mxu0 0
        %4387 = vmatprep.subr.bf16.mxu0 0
        %4388 = vmatpush1.bf16.msra.mxu0 0
        %4389 = vmatprep.subr.bf16.mxu0 0
        %4390 = vmatpush1.bf16.msra.mxu0 0
        %4391 = vmatprep.subr.bf16.mxu0 0
        %4392 = vmatpush1.bf16.msra.mxu0 0
        %4393 = vmatprep.subr.bf16.mxu0 0
        %4394 = vmatpush1.bf16.msra.mxu0 0
        %4395 = vmatprep.subr.bf16.mxu0 0
        %4396 = vmatpush1.bf16.msra.mxu0 0
        %4397 = vmatprep.subr.bf16.mxu0 0
        %4398 = vmatpush1.bf16.msra.mxu0 0
        %4399 = vmatprep.subr.bf16.mxu0 0
        %4400 = vmatpush1.bf16.msra.mxu0 0
        %4401 = vmatprep.subr.bf16.mxu0 0
        %4402 = vmatpush1.bf16.msra.mxu0 0
        %4403 = vmatprep.subr.bf16.mxu0 0
        %4404 = vmatpush1.bf16.msra.mxu0 0
        %4405 = vmatprep.subr.bf16.mxu0 0
        %4406 = vmatpush1.bf16.msra.mxu0 0
        %4407 = vmatprep.mubr.bf16.mxu0 0
        %4408 = vmatmul.mubr.bf16.gmra.mrb[0].mxu0 %v4304
        %v4409 = vpop.f32.mrb[0].mxu0
        %v4410 = vadd.f32 0.0, %v4409
        %v4411 = vpop.f32.mrb[0].mxu0
        %v4412 = vpop.f32.mrb[0].mxu0
        %v4413 = vadd.f32 0.0, %v4412
        %v4414 = vpop.f32.mrb[0].mxu0
        %4415 = vmatprep.mubr.bf16.mxu0 0
        %4416 = vmatmul.mubr.bf16.gmra.mrb[0].mxu0 %v4307
        %v4417 = vpop.f32.mrb[0].mxu0
        %v4418 = vadd.f32 0.0, %v4417
        %v4419 = vpop.f32.mrb[0].mxu0
        %v4420 = vpop.f32.mrb[0].mxu0
        %v4421 = vadd.f32 0.0, %v4420
        %v4422 = vpop.f32.mrb[0].mxu0
        %4423 = vmatprep.mubr.bf16.mxu0 0
        %4424 = vmatmul.mubr.bf16.gmra.mrb[0].mxu0 %v4310
        %v4425 = vpop.f32.mrb[0].mxu0
        %v4426 = vadd.f32 0.0, %v4425
        %v4427 = vpop.f32.mrb[0].mxu0
        %v4428 = vpop.f32.mrb[0].mxu0
        %v4429 = vadd.f32 0.0, %v4428
        %v4430 = vpop.f32.mrb[0].mxu0
        %4431 = vmatprep.mubr.bf16.mxu0 0
        %4432 = vmatmul.mubr.bf16.gmra.mrb[0].mxu0 %v4313
        %v4433 = vpop.f32.mrb[0].mxu0
        %v4434 = vadd.f32 0.0, %v4433
        %v4435 = vpop.f32.mrb[0].mxu0
        %v4436 = vpop.f32.mrb[0].mxu0
        %v4437 = vadd.f32 0.0, %v4436
        %v4438 = vpop.f32.mrb[0].mxu0
        %4439 = vmatprep.mubr.bf16.mxu0 0
        %4440 = vmatmul.mubr.bf16.gmra.mrb[0].mxu0 %v4316
        %v4441 = vpop.f32.mrb[0].mxu0
        %v4442 = vadd.f32 0.0, %v4441
        %v4443 = vpop.f32.mrb[0].mxu0
        %v4444 = vpop.f32.mrb[0].mxu0
        %v4445 = vadd.f32 0.0, %v4444
        %v4446 = vpop.f32.mrb[0].mxu0
        %4447 = vmatprep.mubr.bf16.mxu0 0
        %4448 = vmatmul.mubr.bf16.gmra.mrb[0].mxu0 %v4319
        %v4449 = vpop.f32.mrb[0].mxu0
        %v4450 = vadd.f32 0.0, %v4449
        %v4451 = vpop.f32.mrb[0].mxu0
        %v4452 = vpop.f32.mrb[0].mxu0
        %v4453 = vadd.f32 0.0, %v4452
        %v4454 = vpop.f32.mrb[0].mxu0
        %4455 = vmatprep.mubr.bf16.mxu0 0
        %4456 = vmatmul.mubr.bf16.gmra.mrb[0].mxu0 %v4322
        %v4457 = vpop.f32.mrb[0].mxu0
        %v4458 = vadd.f32 0.0, %v4457
        %v4459 = vpop.f32.mrb[0].mxu0
        %v4460 = vpop.f32.mrb[0].mxu0
        %v4461 = vadd.f32 0.0, %v4460
        %v4462 = vpop.f32.mrb[0].mxu0
        %4463 = vmatprep.mubr.bf16.mxu0 0
        %4464 = vmatmul.mubr.bf16.gmra.mrb[0].mxu0 %v4325
        %v4465 = vpop.f32.mrb[0].mxu0
        %v4466 = vadd.f32 0.0, %v4465
        %v4467 = vpop.f32.mrb[0].mxu0
        %v4468 = vpop.f32.mrb[0].mxu0
        %v4469 = vadd.f32 0.0, %v4468
        %v4470 = vpop.f32.mrb[0].mxu0
        %4471 = vmatprep.mubr.bf16.mxu0 0
        %4472 = vmatmul.mubr.bf16.gmra.mrb[0].mxu0 %v4328
        %v4473 = vpop.f32.mrb[0].mxu0
        %v4474 = vadd.f32 0.0, %v4473
        %v4475 = vpop.f32.mrb[0].mxu0
        %v4476 = vpop.f32.mrb[0].mxu0
        %v4477 = vadd.f32 0.0, %v4476
        %v4478 = vpop.f32.mrb[0].mxu0
        %4479 = vmatprep.mubr.bf16.mxu0 0
        %4480 = vmatmul.mubr.bf16.gmra.mrb[0].mxu0 %v4331
        %v4481 = vpop.f32.mrb[0].mxu0
        %v4482 = vadd.f32 0.0, %v4481
        %v4483 = vpop.f32.mrb[0].mxu0
        %v4484 = vpop.f32.mrb[0].mxu0
        %v4485 = vadd.f32 0.0, %v4484
        %v4486 = vpop.f32.mrb[0].mxu0
        %4487 = vmatprep.mubr.bf16.mxu0 0
        %4488 = vmatmul.mubr.bf16.gmra.mrb[0].mxu0 %v4334
        %v4489 = vpop.f32.mrb[0].mxu0
        %v4490 = vadd.f32 0.0, %v4489
        %v4491 = vpop.f32.mrb[0].mxu0
        %v4492 = vpop.f32.mrb[0].mxu0
        %v4493 = vadd.f32 0.0, %v4492
        %v4494 = vpop.f32.mrb[0].mxu0
        %4495 = vmatprep.mubr.bf16.mxu0 0
        %4496 = vmatmul.mubr.bf16.gmra.mrb[0].mxu0 %v4337
        %v4497 = vpop.f32.mrb[0].mxu0
        %v4498 = vadd.f32 0.0, %v4497
        %v4499 = vpop.f32.mrb[0].mxu0
        %v4500 = vpop.f32.mrb[0].mxu0
        %v4501 = vadd.f32 0.0, %v4500
        %v4502 = vpop.f32.mrb[0].mxu0
        %4503 = vmatprep.mubr.bf16.mxu0 0
        %4504 = vmatmul.mubr.bf16.gmra.mrb[0].mxu0 %v4340
        %v4505 = vpop.f32.mrb[0].mxu0
        %v4506 = vadd.f32 0.0, %v4505
        %v4507 = vpop.f32.mrb[0].mxu0
        %v4508 = vpop.f32.mrb[0].mxu0
        %v4509 = vadd.f32 0.0, %v4508
        %v4510 = vpop.f32.mrb[0].mxu0
        %4511 = vmatprep.mubr.bf16.mxu0 0
        %4512 = vmatmul.mubr.bf16.gmra.mrb[0].mxu0 %v4343
        %v4513 = vpop.f32.mrb[0].mxu0
        %v4514 = vadd.f32 0.0, %v4513
        %v4515 = vpop.f32.mrb[0].mxu0
        %v4516 = vpop.f32.mrb[0].mxu0
        %v4517 = vadd.f32 0.0, %v4516
        %v4518 = vpop.f32.mrb[0].mxu0
        %4519 = vmatprep.mubr.bf16.mxu0 0
        %4520 = vmatmul.mubr.bf16.gmra.mrb[0].mxu0 %v4346
        %v4521 = vpop.f32.mrb[0].mxu0
        %v4522 = vadd.f32 0.0, %v4521
        %v4523 = vpop.f32.mrb[0].mxu0
        %v4524 = vpop.f32.mrb[0].mxu0
        %v4525 = vadd.f32 0.0, %v4524
        %v4526 = vpop.f32.mrb[0].mxu0
        %4527 = vmatprep.mubr.bf16.mxu0 0
        %4528 = vmatmul.mubr.bf16.gmra.mrb[0].mxu0 %v4349
        %v4529 = vpop.f32.mrb[0].mxu0
        %v4530 = vadd.f32 0.0, %v4529
        %v4531 = vpop.f32.mrb[0].mxu0
        %v4532 = vpop.f32.mrb[0].mxu0
        %v4533 = vadd.f32 0.0, %v4532
        %v4534 = vpop.f32.mrb[0].mxu0
        %4535 = vmatprep.mubr.bf16.mxu0 0
        %4536 = vmatmul.mubr.bf16.gmra.mrb[0].mxu0 %v4352
        %v4537 = vpop.f32.mrb[0].mxu0
        %v4538 = vadd.f32 0.0, %v4537
        %v4539 = vpop.f32.mrb[0].mxu0
        %v4540 = vpop.f32.mrb[0].mxu0
        %v4541 = vadd.f32 0.0, %v4540
        %v4542 = vpop.f32.mrb[0].mxu0
        %4543 = vmatprep.mubr.bf16.mxu0 0
        %4544 = vmatmul.mubr.bf16.gmra.mrb[0].mxu0 %v4355
        %v4545 = vpop.f32.mrb[0].mxu0
        %v4546 = vadd.f32 0.0, %v4545
        %v4547 = vpop.f32.mrb[0].mxu0
        %v4548 = vpop.f32.mrb[0].mxu0
        %v4549 = vadd.f32 0.0, %v4548
        %v4550 = vpop.f32.mrb[0].mxu0
        %4551 = vmatprep.mubr.bf16.mxu0 0
        %4552 = vmatmul.mubr.bf16.gmra.mrb[0].mxu0 %v4358
        %v4553 = vpop.f32.mrb[0].mxu0
        %v4554 = vadd.f32 0.0, %v4553
        %v4555 = vpop.f32.mrb[0].mxu0
        %v4556 = vpop.f32.mrb[0].mxu0
        %v4557 = vadd.f32 0.0, %v4556
        %v4558 = vpop.f32.mrb[0].mxu0
        %4559 = vmatprep.mubr.bf16.mxu0 0
        %4560 = vmatmul.mubr.bf16.gmra.mrb[0].mxu0 %v4361
        %v4561 = vpop.f32.mrb[0].mxu0
        %v4562 = vadd.f32 0.0, %v4561
        %v4563 = vpop.f32.mrb[0].mxu0
        %v4564 = vpop.f32.mrb[0].mxu0
        %v4565 = vadd.f32 0.0, %v4564
        %v4566 = vpop.f32.mrb[0].mxu0
        %4567 = vmatprep.mubr.bf16.mxu0 0
        %4568 = vmatmul.mubr.bf16.gmra.mrb[0].mxu0 %v4364
        %v4569 = vpop.f32.mrb[0].mxu0
        %v4570 = vadd.f32 0.0, %v4569
        %v4571 = vpop.f32.mrb[0].mxu0
        %v4572 = vpop.f32.mrb[0].mxu0
        %v4573 = vadd.f32 0.0, %v4572
        %v4574 = vpop.f32.mrb[0].mxu0
        %4575 = vmatprep.mubr.bf16.mxu0 0
        %4576 = vmatmul.mubr.bf16.gmra.mrb[0].mxu0 %v4367
        %v4577 = vpop.f32.mrb[0].mxu0
        %v4578 = vadd.f32 0.0, %v4577
        %v4579 = vpop.f32.mrb[0].mxu0
        %v4580 = vpop.f32.mrb[0].mxu0
        %v4581 = vadd.f32 0.0, %v4580
        %v4582 = vpop.f32.mrb[0].mxu0
        %4583 = vmatprep.mubr.bf16.mxu0 0
        %4584 = vmatmul.mubr.bf16.gmra.mrb[0].mxu0 %v4370
        %v4585 = vpop.f32.mrb[0].mxu0
        %v4586 = vadd.f32 0.0, %v4585
        %v4587 = vpop.f32.mrb[0].mxu0
        %v4588 = vpop.f32.mrb[0].mxu0
        %v4589 = vadd.f32 0.0, %v4588
        %v4590 = vpop.f32.mrb[0].mxu0
        %4591 = vmatprep.mubr.bf16.mxu0 0
        %4592 = vmatmul.mubr.bf16.gmra.mrb[0].mxu0 %v4373
        %v4593 = vpop.f32.mrb[0].mxu0
        %v4594 = vadd.f32 0.0, %v4593
        %v4595 = vpop.f32.mrb[0].mxu0
        %v4596 = vpop.f32.mrb[0].mxu0
        %v4597 = vadd.f32 0.0, %v4596
        %v4598 = vpop.f32.mrb[0].mxu0
        %4599 = vdwg.mxu0
        %v4600 = vadd.f32 %v4032, %v4410
        %v4601 = vadd.f32 %v4035, %v4413
        %v4602 = vadd.f32 %v4040, %v4418
        %v4603 = vadd.f32 %v4043, %v4421
        %v4604 = vadd.f32 %v4048, %v4426
        %v4605 = vadd.f32 %v4051, %v4429
        %v4606 = vadd.f32 %v4056, %v4434
        %v4607 = vadd.f32 %v4059, %v4437
        %v4608 = vadd.f32 %v4064, %v4442
        %v4609 = vadd.f32 %v4067, %v4445
        %v4610 = vadd.f32 %v4072, %v4450
        %v4611 = vadd.f32 %v4075, %v4453
        %v4612 = vadd.f32 %v4080, %v4458
        %v4613 = vadd.f32 %v4083, %v4461
        %v4614 = vadd.f32 %v4088, %v4466
        %v4615 = vadd.f32 %v4091, %v4469
        %v4616 = vadd.f32 %v4096, %v4474
        %v4617 = vadd.f32 %v4099, %v4477
        %v4618 = vadd.f32 %v4104, %v4482
        %v4619 = vadd.f32 %v4107, %v4485
        %v4620 = vadd.f32 %v4112, %v4490
        %v4621 = vadd.f32 %v4115, %v4493
        %v4622 = vadd.f32 %v4120, %v4498
        %v4623 = vadd.f32 %v4123, %v4501
        %v4624 = vadd.f32 %v4128, %v4506
        %v4625 = vadd.f32 %v4131, %v4509
        %v4626 = vadd.f32 %v4136, %v4514
        %v4627 = vadd.f32 %v4139, %v4517
        %v4628 = vadd.f32 %v4144, %v4522
        %v4629 = vadd.f32 %v4147, %v4525
        %v4630 = vadd.f32 %v4152, %v4530
        %v4631 = vadd.f32 %v4155, %v4533
        %v4632 = vadd.f32 %v4160, %v4538
        %v4633 = vadd.f32 %v4163, %v4541
        %v4634 = vadd.f32 %v4168, %v4546
        %v4635 = vadd.f32 %v4171, %v4549
        %v4636 = vadd.f32 %v4176, %v4554
        %v4637 = vadd.f32 %v4179, %v4557
        %v4638 = vadd.f32 %v4184, %v4562
        %v4639 = vadd.f32 %v4187, %v4565
        %v4640 = vadd.f32 %v4192, %v4570
        %v4641 = vadd.f32 %v4195, %v4573
        %v4642 = vadd.f32 %v4200, %v4578
        %v4643 = vadd.f32 %v4203, %v4581
        %v4644 = vadd.f32 %v4208, %v4586
        %v4645 = vadd.f32 %v4211, %v4589
        %v4646 = vadd.f32 %v4216, %v4594
        %v4647 = vadd.f32 %v4219, %v4597
        %v4648 = vld [vmem:[%s4] sm:$0x1]
        %v4650 = vlaneseq
        %v4651 = vshrl.u32 %v4650, 7
        %v4652 = vsub.s32 0, %v4651
        %v4653 = vrot.slane %v4648, %v4652
        %v4655 = vadd.f32 %v4600, %v4653
        %v4656 = vadd.f32 %v4601, %v4653
        %v4657 = vadd.f32 %v4602, %v4653
        %v4658 = vadd.f32 %v4603, %v4653
        %v4659 = vadd.f32 %v4604, %v4653
        %v4660 = vadd.f32 %v4605, %v4653
        %v4661 = vadd.f32 %v4606, %v4653
        %v4662 = vadd.f32 %v4607, %v4653
        %v4663 = vadd.f32 %v4608, %v4653
        %v4664 = vadd.f32 %v4609, %v4653
        %v4665 = vadd.f32 %v4610, %v4653
        %v4666 = vadd.f32 %v4611, %v4653
        %v4667 = vadd.f32 %v4612, %v4653
        %v4668 = vadd.f32 %v4613, %v4653
        %v4669 = vadd.f32 %v4614, %v4653
        %v4670 = vadd.f32 %v4615, %v4653
        %v4671 = vadd.f32 %v4616, %v4653
        %v4672 = vadd.f32 %v4617, %v4653
        %v4673 = vadd.f32 %v4618, %v4653
        %v4674 = vadd.f32 %v4619, %v4653
        %v4675 = vadd.f32 %v4620, %v4653
        %v4676 = vadd.f32 %v4621, %v4653
        %v4677 = vadd.f32 %v4622, %v4653
        %v4678 = vadd.f32 %v4623, %v4653
        %v4679 = vadd.f32 %v4624, %v4653
        %v4680 = vadd.f32 %v4625, %v4653
        %v4681 = vadd.f32 %v4626, %v4653
        %v4682 = vadd.f32 %v4627, %v4653
        %v4683 = vadd.f32 %v4628, %v4653
        %v4684 = vadd.f32 %v4629, %v4653
        %v4685 = vadd.f32 %v4630, %v4653
        %v4686 = vadd.f32 %v4631, %v4653
        %v4687 = vadd.f32 %v4632, %v4653
        %v4688 = vadd.f32 %v4633, %v4653
        %v4689 = vadd.f32 %v4634, %v4653
        %v4690 = vadd.f32 %v4635, %v4653
        %v4691 = vadd.f32 %v4636, %v4653
        %v4692 = vadd.f32 %v4637, %v4653
        %v4693 = vadd.f32 %v4638, %v4653
        %v4694 = vadd.f32 %v4639, %v4653
        %v4695 = vadd.f32 %v4640, %v4653
        %v4696 = vadd.f32 %v4641, %v4653
        %v4697 = vadd.f32 %v4642, %v4653
        %v4698 = vadd.f32 %v4643, %v4653
        %v4699 = vadd.f32 %v4644, %v4653
        %v4700 = vadd.f32 %v4645, %v4653
        %v4701 = vadd.f32 %v4646, %v4653
        %v4702 = vadd.f32 %v4647, %v4653
        %vm4703 = vcmask 261120
        %4704 = vst.msk [vmem:[#allocation4] sm:$0xff] %vm4703, %v4655
        %4705 = vst.msk [vmem:[#allocation4 + $0x8] sm:$0xff] %vm4703, %v4656
        %4706 = vst.msk [vmem:[#allocation4 + $0x10] sm:$0xff] %vm4703, %v4657
        %4707 = vst.msk [vmem:[#allocation4 + $0x18] sm:$0xff] %vm4703, %v4658
        %4708 = vst.msk [vmem:[#allocation4 + $0x20] sm:$0xff] %vm4703, %v4659
        %4709 = vst.msk [vmem:[#allocation4 + $0x28] sm:$0xff] %vm4703, %v4660
        %4710 = vst.msk [vmem:[#allocation4 + $0x30] sm:$0xff] %vm4703, %v4661
        %4711 = vst.msk [vmem:[#allocation4 + $0x38] sm:$0xff] %vm4703, %v4662
        %4712 = vst.msk [vmem:[#allocation4 + $0x40] sm:$0xff] %vm4703, %v4663
        %4713 = vst.msk [vmem:[#allocation4 + $0x48] sm:$0xff] %vm4703, %v4664
        %4714 = vst.msk [vmem:[#allocation4 + $0x50] sm:$0xff] %vm4703, %v4665
        %4715 = vst.msk [vmem:[#allocation4 + $0x58] sm:$0xff] %vm4703, %v4666
        %4716 = vst.msk [vmem:[#allocation4 + $0x60] sm:$0xff] %vm4703, %v4667
        %4717 = vst.msk [vmem:[#allocation4 + $0x68] sm:$0xff] %vm4703, %v4668
        %4718 = vst.msk [vmem:[#allocation4 + $0x70] sm:$0xff] %vm4703, %v4669
        %4719 = vst.msk [vmem:[#allocation4 + $0x78] sm:$0xff] %vm4703, %v4670
        %4720 = vst.msk [vmem:[#allocation4 + $0x80] sm:$0xff] %vm4703, %v4671
        %4721 = vst.msk [vmem:[#allocation4 + $0x88] sm:$0xff] %vm4703, %v4672
        %4722 = vst.msk [vmem:[#allocation4 + $0x90] sm:$0xff] %vm4703, %v4673
        %4723 = vst.msk [vmem:[#allocation4 + $0x98] sm:$0xff] %vm4703, %v4674
        %4724 = vst.msk [vmem:[#allocation4 + $0xa0] sm:$0xff] %vm4703, %v4675
        %4725 = vst.msk [vmem:[#allocation4 + $0xa8] sm:$0xff] %vm4703, %v4676
        %4726 = vst.msk [vmem:[#allocation4 + $0xb0] sm:$0xff] %vm4703, %v4677
        %4727 = vst.msk [vmem:[#allocation4 + $0xb8] sm:$0xff] %vm4703, %v4678
        %4728 = vst.msk [vmem:[#allocation4 + $0xc0] sm:$0xff] %vm4703, %v4679
        %4729 = vst.msk [vmem:[#allocation4 + $0xc8] sm:$0xff] %vm4703, %v4680
        %4730 = vst.msk [vmem:[#allocation4 + $0xd0] sm:$0xff] %vm4703, %v4681
        %4731 = vst.msk [vmem:[#allocation4 + $0xd8] sm:$0xff] %vm4703, %v4682
        %4732 = vst.msk [vmem:[#allocation4 + $0xe0] sm:$0xff] %vm4703, %v4683
        %4733 = vst.msk [vmem:[#allocation4 + $0xe8] sm:$0xff] %vm4703, %v4684
        %4734 = vst.msk [vmem:[#allocation4 + $0xf0] sm:$0xff] %vm4703, %v4685
        %4735 = vst.msk [vmem:[#allocation4 + $0xf8] sm:$0xff] %vm4703, %v4686
        %4736 = vst.msk [vmem:[#allocation4 + $0x100] sm:$0xff] %vm4703, %v4687
        %4737 = vst.msk [vmem:[#allocation4 + $0x108] sm:$0xff] %vm4703, %v4688
        %4738 = vst.msk [vmem:[#allocation4 + $0x110] sm:$0xff] %vm4703, %v4689
        %4739 = vst.msk [vmem:[#allocation4 + $0x118] sm:$0xff] %vm4703, %v4690
        %4740 = vst.msk [vmem:[#allocation4 + $0x120] sm:$0xff] %vm4703, %v4691
        %4741 = vst.msk [vmem:[#allocation4 + $0x128] sm:$0xff] %vm4703, %v4692
        %4742 = vst.msk [vmem:[#allocation4 + $0x130] sm:$0xff] %vm4703, %v4693
        %4743 = vst.msk [vmem:[#allocation4 + $0x138] sm:$0xff] %vm4703, %v4694
        %4744 = vst.msk [vmem:[#allocation4 + $0x140] sm:$0xff] %vm4703, %v4695
        %4745 = vst.msk [vmem:[#allocation4 + $0x148] sm:$0xff] %vm4703, %v4696
        %4746 = vst.msk [vmem:[#allocation4 + $0x150] sm:$0xff] %vm4703, %v4697
        %4747 = vst.msk [vmem:[#allocation4 + $0x158] sm:$0xff] %vm4703, %v4698
        %4748 = vst.msk [vmem:[#allocation4 + $0x160] sm:$0xff] %vm4703, %v4699
        %4749 = vst.msk [vmem:[#allocation4 + $0x168] sm:$0xff] %vm4703, %v4700
        %4750 = vst.msk [vmem:[#allocation4 + $0x170] sm:$0xff] %vm4703, %v4701
        %vm4751 = vcmask 259072
        %4752 = vst.msk [vmem:[#allocation4 + $0x178] sm:$0x3f] %vm4751, %v4702
        %v4753 = vld [vmem:[#allocation4] ss:$2 sm:$0xff]
        %s4754 = scalar_lea.vmem [#allocation4], 16
        %v4755 = vld [vmem:[%s4754] ss:$2 sm:$0xff]
        %s4756 = scalar_lea.vmem [#allocation4], 32
        %v4757 = vld [vmem:[%s4756] ss:$2 sm:$0xff]
        %s4758 = scalar_lea.vmem [#allocation4], 48
        %v4759 = vld [vmem:[%s4758] ss:$2 sm:$0xff]
        %s4760 = scalar_lea.vmem [#allocation4], 64
        %v4761 = vld [vmem:[%s4760] ss:$2 sm:$0xff]
        %s4762 = scalar_lea.vmem [#allocation4], 80
        %v4763 = vld [vmem:[%s4762] ss:$2 sm:$0xff]
        %s4764 = scalar_lea.vmem [#allocation4], 96
        %v4765 = vld [vmem:[%s4764] ss:$2 sm:$0xff]
        %s4766 = scalar_lea.vmem [#allocation4], 112
        %v4767 = vld [vmem:[%s4766] ss:$2 sm:$0xff]
        %s4768 = scalar_lea.vmem [#allocation4], 128
        %v4769 = vld [vmem:[%s4768] ss:$2 sm:$0xff]
        %s4770 = scalar_lea.vmem [#allocation4], 144
        %v4771 = vld [vmem:[%s4770] ss:$2 sm:$0xff]
        %s4772 = scalar_lea.vmem [#allocation4], 160
        %v4773 = vld [vmem:[%s4772] ss:$2 sm:$0xff]
        %s4774 = scalar_lea.vmem [#allocation4], 176
        %v4775 = vld [vmem:[%s4774] ss:$2 sm:$0xff]
        %s4776 = scalar_lea.vmem [#allocation4], 192
        %v4777 = vld [vmem:[%s4776] ss:$2 sm:$0xff]
        %s4778 = scalar_lea.vmem [#allocation4], 208
        %v4779 = vld [vmem:[%s4778] ss:$2 sm:$0xff]
        %s4780 = scalar_lea.vmem [#allocation4], 224
        %v4781 = vld [vmem:[%s4780] ss:$2 sm:$0xff]
        %s4782 = scalar_lea.vmem [#allocation4], 240
        %v4783 = vld [vmem:[%s4782] ss:$2 sm:$0xff]
        %s4784 = scalar_lea.vmem [#allocation4], 256
        %v4785 = vld [vmem:[%s4784] ss:$2 sm:$0xff]
        %s4786 = scalar_lea.vmem [#allocation4], 272
        %v4787 = vld [vmem:[%s4786] ss:$2 sm:$0xff]
        %s4788 = scalar_lea.vmem [#allocation4], 288
        %v4789 = vld [vmem:[%s4788] ss:$2 sm:$0xff]
        %s4790 = scalar_lea.vmem [#allocation4], 304
        %v4791 = vld [vmem:[%s4790] ss:$2 sm:$0xff]
        %s4792 = scalar_lea.vmem [#allocation4], 320
        %v4793 = vld [vmem:[%s4792] ss:$2 sm:$0xff]
        %s4794 = scalar_lea.vmem [#allocation4], 336
        %v4795 = vld [vmem:[%s4794] ss:$2 sm:$0xff]
        %s4796 = scalar_lea.vmem [#allocation4], 352
        %v4797 = vld [vmem:[%s4796] ss:$2 sm:$0xff]
        %s4798 = scalar_lea.vmem [#allocation4], 368
        %v4799 = vld [vmem:[%s4798] ss:$2 sm:$0xff]
        %s4800 = scalar_lea.vmem [#allocation4], 1
        %v4801 = vld [vmem:[%s4800] ss:$2 sm:$0xff]
        %s4802 = scalar_lea.vmem [#allocation4], 17
        %v4803 = vld [vmem:[%s4802] ss:$2 sm:$0xff]
        %s4804 = scalar_lea.vmem [#allocation4], 33
        %v4805 = vld [vmem:[%s4804] ss:$2 sm:$0xff]
        %s4806 = scalar_lea.vmem [#allocation4], 49
        %v4807 = vld [vmem:[%s4806] ss:$2 sm:$0xff]
        %s4808 = scalar_lea.vmem [#allocation4], 65
        %v4809 = vld [vmem:[%s4808] ss:$2 sm:$0xff]
        %s4810 = scalar_lea.vmem [#allocation4], 81
        %v4811 = vld [vmem:[%s4810] ss:$2 sm:$0xff]
        %s4812 = scalar_lea.vmem [#allocation4], 97
        %v4813 = vld [vmem:[%s4812] ss:$2 sm:$0xff]
        %s4814 = scalar_lea.vmem [#allocation4], 113
        %v4815 = vld [vmem:[%s4814] ss:$2 sm:$0xff]
        %s4816 = scalar_lea.vmem [#allocation4], 129
        %v4817 = vld [vmem:[%s4816] ss:$2 sm:$0xff]
        %s4818 = scalar_lea.vmem [#allocation4], 145
        %v4819 = vld [vmem:[%s4818] ss:$2 sm:$0xff]
        %s4820 = scalar_lea.vmem [#allocation4], 161
        %v4821 = vld [vmem:[%s4820] ss:$2 sm:$0xff]
        %s4822 = scalar_lea.vmem [#allocation4], 177
        %v4823 = vld [vmem:[%s4822] ss:$2 sm:$0xff]
        %s4824 = scalar_lea.vmem [#allocation4], 193
        %v4825 = vld [vmem:[%s4824] ss:$2 sm:$0xff]
        %s4826 = scalar_lea.vmem [#allocation4], 209
        %v4827 = vld [vmem:[%s4826] ss:$2 sm:$0xff]
        %s4828 = scalar_lea.vmem [#allocation4], 225
        %v4829 = vld [vmem:[%s4828] ss:$2 sm:$0xff]
        %s4830 = scalar_lea.vmem [#allocation4], 241
        %v4831 = vld [vmem:[%s4830] ss:$2 sm:$0xff]
        %s4832 = scalar_lea.vmem [#allocation4], 257
        %v4833 = vld [vmem:[%s4832] ss:$2 sm:$0xff]
        %s4834 = scalar_lea.vmem [#allocation4], 273
        %v4835 = vld [vmem:[%s4834] ss:$2 sm:$0xff]
        %s4836 = scalar_lea.vmem [#allocation4], 289
        %v4837 = vld [vmem:[%s4836] ss:$2 sm:$0xff]
        %s4838 = scalar_lea.vmem [#allocation4], 305
        %v4839 = vld [vmem:[%s4838] ss:$2 sm:$0xff]
        %s4840 = scalar_lea.vmem [#allocation4], 321
        %v4841 = vld [vmem:[%s4840] ss:$2 sm:$0xff]
        %s4842 = scalar_lea.vmem [#allocation4], 337
        %v4843 = vld [vmem:[%s4842] ss:$2 sm:$0xff]
        %s4844 = scalar_lea.vmem [#allocation4], 353
        %v4845 = vld [vmem:[%s4844] ss:$2 sm:$0xff]
        %s4846 = scalar_lea.vmem [#allocation4], 369
        %v4847 = vld [vmem:[%s4846] ss:$2 sm:$0xff]
        %v4848 = vmax.f32 %v4753, %v4801
        %v4849 = vmax.f32 %v4755, %v4803
        %v4850 = vmax.f32 %v4757, %v4805
        %v4851 = vmax.f32 %v4759, %v4807
        %v4852 = vmax.f32 %v4761, %v4809
        %v4853 = vmax.f32 %v4763, %v4811
        %v4854 = vmax.f32 %v4765, %v4813
        %v4855 = vmax.f32 %v4767, %v4815
        %v4856 = vmax.f32 %v4769, %v4817
        %v4857 = vmax.f32 %v4771, %v4819
        %v4858 = vmax.f32 %v4773, %v4821
        %v4859 = vmax.f32 %v4775, %v4823
        %v4860 = vmax.f32 %v4777, %v4825
        %v4861 = vmax.f32 %v4779, %v4827
        %v4862 = vmax.f32 %v4781, %v4829
        %v4863 = vmax.f32 %v4783, %v4831
        %v4864 = vmax.f32 %v4785, %v4833
        %v4865 = vmax.f32 %v4787, %v4835
        %v4866 = vmax.f32 %v4789, %v4837
        %v4867 = vmax.f32 %v4791, %v4839
        %v4868 = vmax.f32 %v4793, %v4841
        %v4869 = vmax.f32 %v4795, %v4843
        %v4870 = vmax.f32 %v4797, %v4845
        %v4871 = vmax.f32 %v4799, %v4847
        %v4872 = vmax.f32 %v4848, 0.0
        %v4873 = vmax.f32 %v4849, 0.0
        %v4874 = vmax.f32 %v4850, 0.0
        %v4875 = vmax.f32 %v4851, 0.0
        %v4876 = vmax.f32 %v4852, 0.0
        %v4877 = vmax.f32 %v4853, 0.0
        %v4878 = vmax.f32 %v4854, 0.0
        %v4879 = vmax.f32 %v4855, 0.0
        %v4880 = vmax.f32 %v4856, 0.0
        %v4881 = vmax.f32 %v4857, 0.0
        %v4882 = vmax.f32 %v4858, 0.0
        %v4883 = vmax.f32 %v4859, 0.0
        %v4884 = vmax.f32 %v4860, 0.0
        %v4885 = vmax.f32 %v4861, 0.0
        %v4886 = vmax.f32 %v4862, 0.0
        %v4887 = vmax.f32 %v4863, 0.0
        %v4888 = vmax.f32 %v4864, 0.0
        %v4889 = vmax.f32 %v4865, 0.0
        %v4890 = vmax.f32 %v4866, 0.0
        %v4891 = vmax.f32 %v4867, 0.0
        %v4892 = vmax.f32 %v4868, 0.0
        %v4893 = vmax.f32 %v4869, 0.0
        %v4894 = vmax.f32 %v4870, 0.0
        %v4895 = vmax.f32 %v4871, 0.0
        %4896 = vst.msk [vmem:[#allocation5] sm:$0xff] %vm4703, %v4872
        %4897 = vst.msk [vmem:[#allocation5 + $0x8] sm:$0xff] %vm4703, %v4873
        %4898 = vst.msk [vmem:[#allocation5 + $0x10] sm:$0xff] %vm4703, %v4874
        %4899 = vst.msk [vmem:[#allocation5 + $0x18] sm:$0xff] %vm4703, %v4875
        %4900 = vst.msk [vmem:[#allocation5 + $0x20] sm:$0xff] %vm4703, %v4876
        %4901 = vst.msk [vmem:[#allocation5 + $0x28] sm:$0xff] %vm4703, %v4877
        %4902 = vst.msk [vmem:[#allocation5 + $0x30] sm:$0xff] %vm4703, %v4878
        %4903 = vst.msk [vmem:[#allocation5 + $0x38] sm:$0xff] %vm4703, %v4879
        %4904 = vst.msk [vmem:[#allocation5 + $0x40] sm:$0xff] %vm4703, %v4880
        %4905 = vst.msk [vmem:[#allocation5 + $0x48] sm:$0xff] %vm4703, %v4881
        %4906 = vst.msk [vmem:[#allocation5 + $0x50] sm:$0xff] %vm4703, %v4882
        %4907 = vst.msk [vmem:[#allocation5 + $0x58] sm:$0xff] %vm4703, %v4883
        %4908 = vst.msk [vmem:[#allocation5 + $0x60] sm:$0xff] %vm4703, %v4884
        %4909 = vst.msk [vmem:[#allocation5 + $0x68] sm:$0xff] %vm4703, %v4885
        %4910 = vst.msk [vmem:[#allocation5 + $0x70] sm:$0xff] %vm4703, %v4886
        %4911 = vst.msk [vmem:[#allocation5 + $0x78] sm:$0xff] %vm4703, %v4887
        %4912 = vst.msk [vmem:[#allocation5 + $0x80] sm:$0xff] %vm4703, %v4888
        %4913 = vst.msk [vmem:[#allocation5 + $0x88] sm:$0xff] %vm4703, %v4889
        %4914 = vst.msk [vmem:[#allocation5 + $0x90] sm:$0xff] %vm4703, %v4890
        %4915 = vst.msk [vmem:[#allocation5 + $0x98] sm:$0xff] %vm4703, %v4891
        %4916 = vst.msk [vmem:[#allocation5 + $0xa0] sm:$0xff] %vm4703, %v4892
        %4917 = vst.msk [vmem:[#allocation5 + $0xa8] sm:$0xff] %vm4703, %v4893
        %4918 = vst.msk [vmem:[#allocation5 + $0xb0] sm:$0xff] %vm4703, %v4894
        %4919 = vst.msk [vmem:[#allocation5 + $0xb8] sm:$0xff] %vm4703, %v4895
        %v4920 = vld [vmem:[#allocation14] sm:$0xf]
        %v4921 = vld [vmem:[#allocation14 + $0x4] sm:$0xf]
        %v4922 = vld [vmem:[#allocation14 + $0x8] sm:$0xf]
        %v4923 = vld [vmem:[#allocation14 + $0xc] sm:$0xf]
        %v4924 = vld [vmem:[#allocation5] sm:$0xff]
        %v4925 = vld [vmem:[#allocation5 + $0x8] sm:$0xff]
        %v4926 = vld [vmem:[#allocation5 + $0x10] sm:$0xff]
        %v4927 = vld [vmem:[#allocation5 + $0x18] sm:$0xff]
        %v4928 = vld [vmem:[#allocation5 + $0x20] sm:$0xff]
        %v4929 = vld [vmem:[#allocation5 + $0x28] sm:$0xff]
        %v4930 = vld [vmem:[#allocation5 + $0x30] sm:$0xff]
        %v4931 = vld [vmem:[#allocation5 + $0x38] sm:$0xff]
        %v4932 = vld [vmem:[#allocation5 + $0x40] sm:$0xff]
        %v4933 = vld [vmem:[#allocation5 + $0x48] sm:$0xff]
        %v4934 = vld [vmem:[#allocation5 + $0x50] sm:$0xff]
        %v4935 = vld [vmem:[#allocation5 + $0x58] sm:$0xff]
        %v4936 = vld [vmem:[#allocation5 + $0x60] sm:$0xff]
        %v4937 = vld [vmem:[#allocation5 + $0x68] sm:$0xff]
        %v4938 = vld [vmem:[#allocation5 + $0x70] sm:$0xff]
        %v4939 = vld [vmem:[#allocation5 + $0x78] sm:$0xff]
        %v4940 = vld [vmem:[#allocation5 + $0x80] sm:$0xff]
        %v4941 = vld [vmem:[#allocation5 + $0x88] sm:$0xff]
        %v4942 = vld [vmem:[#allocation5 + $0x90] sm:$0xff]
        %v4943 = vld [vmem:[#allocation5 + $0x98] sm:$0xff]
        %v4944 = vld [vmem:[#allocation5 + $0xa0] sm:$0xff]
        %v4945 = vld [vmem:[#allocation5 + $0xa8] sm:$0xff]
        %v4946 = vld [vmem:[#allocation5 + $0xb0] sm:$0xff]
        %v4947 = vld [vmem:[#allocation5 + $0xb8] sm:$0x3f]
        %v4948 = vpack.c.bf16 %v4925, %v4924
        %v4949 = vpack.c.bf16 %v4927, %v4926
        %v4950 = vpack.c.bf16 %v4929, %v4928
        %v4951 = vpack.c.bf16 %v4931, %v4930
        %v4952 = vpack.c.bf16 %v4933, %v4932
        %v4953 = vpack.c.bf16 %v4935, %v4934
        %v4954 = vpack.c.bf16 %v4937, %v4936
        %v4955 = vpack.c.bf16 %v4939, %v4938
        %v4956 = vpack.c.bf16 %v4941, %v4940
        %v4957 = vpack.c.bf16 %v4943, %v4942
        %v4958 = vpack.c.bf16 %v4945, %v4944
        %v4959 = vpack.c.bf16 %v4947, %v4946
        %s4960 = scalar_lea.vmem [#allocation14], 16
        %v4961 = vld [vmem:[%s4960] sm:$0xf]
        %v4962 = vld [vmem:[%s4960 + $0x4] sm:$0xf]
        %v4963 = vld [vmem:[%s4960 + $0x8] sm:$0xf]
        %v4964 = vld [vmem:[%s4960 + $0xc] sm:$0xf]
        %v4965 = vld [vmem:[#allocation5 + $0x1] sm:$0xff]
        %v4966 = vld [vmem:[#allocation5 + $0x9] sm:$0xff]
        %v4967 = vld [vmem:[#allocation5 + $0x11] sm:$0xff]
        %v4968 = vld [vmem:[#allocation5 + $0x19] sm:$0xff]
        %v4969 = vld [vmem:[#allocation5 + $0x21] sm:$0xff]
        %v4970 = vld [vmem:[#allocation5 + $0x29] sm:$0xff]
        %v4971 = vld [vmem:[#allocation5 + $0x31] sm:$0xff]
        %v4972 = vld [vmem:[#allocation5 + $0x39] sm:$0xff]
        %v4973 = vld [vmem:[#allocation5 + $0x41] sm:$0xff]
        %v4974 = vld [vmem:[#allocation5 + $0x49] sm:$0xff]
        %v4975 = vld [vmem:[#allocation5 + $0x51] sm:$0xff]
        %v4976 = vld [vmem:[#allocation5 + $0x59] sm:$0xff]
        %v4977 = vld [vmem:[#allocation5 + $0x61] sm:$0xff]
        %v4978 = vld [vmem:[#allocation5 + $0x69] sm:$0xff]
        %v4979 = vld [vmem:[#allocation5 + $0x71] sm:$0xff]
        %v4980 = vld [vmem:[#allocation5 + $0x79] sm:$0xff]
        %v4981 = vld [vmem:[#allocation5 + $0x81] sm:$0xff]
        %v4982 = vld [vmem:[#allocation5 + $0x89] sm:$0xff]
        %v4983 = vld [vmem:[#allocation5 + $0x91] sm:$0xff]
        %v4984 = vld [vmem:[#allocation5 + $0x99] sm:$0xff]
        %v4985 = vld [vmem:[#allocation5 + $0xa1] sm:$0xff]
        %v4986 = vld [vmem:[#allocation5 + $0xa9] sm:$0xff]
        %v4987 = vld [vmem:[#allocation5 + $0xb1] sm:$0xff]
        %v4988 = vld [vmem:[#allocation5 + $0xb9] sm:$0x3f]
        %v4989 = vpack.c.bf16 %v4966, %v4965
        %v4990 = vpack.c.bf16 %v4968, %v4967
        %v4991 = vpack.c.bf16 %v4970, %v4969
        %v4992 = vpack.c.bf16 %v4972, %v4971
        %v4993 = vpack.c.bf16 %v4974, %v4973
        %v4994 = vpack.c.bf16 %v4976, %v4975
        %v4995 = vpack.c.bf16 %v4978, %v4977
        %v4996 = vpack.c.bf16 %v4980, %v4979
        %v4997 = vpack.c.bf16 %v4982, %v4981
        %v4998 = vpack.c.bf16 %v4984, %v4983
        %v4999 = vpack.c.bf16 %v4986, %v4985
        %v5000 = vpack.c.bf16 %v4988, %v4987
        %v5005 = vunpack.c.l.b16 %v4961
        %v5006 = vunpack.c.l.b16 %v4962
        %v5007 = vunpack.c.l.b16 %v4963
        %v5008 = vunpack.c.l.b16 %v4964
        %v5009 = vpack.c.b16 %v5006, %v5005
        %v5010 = vpack.c.b16 %v5008, %v5007
        %v5014 = vsel %vm4703, %v4989, 0
        %v5017 = vsel %vm4703, %v4990, 0
        %v5020 = vsel %vm4703, %v4991, 0
        %v5023 = vsel %vm4703, %v4992, 0
        %v5026 = vsel %vm4703, %v4993, 0
        %v5029 = vsel %vm4703, %v4994, 0
        %v5032 = vsel %vm4703, %v4995, 0
        %v5035 = vsel %vm4703, %v4996, 0
        %v5038 = vsel %vm4703, %v4997, 0
        %v5041 = vsel %vm4703, %v4998, 0
        %v5044 = vsel %vm4703, %v4999, 0
        %v5047 = vsel %vm4703, %v5000, 0
        %5049 = vmatprep.subr.bf16.mxu0 0
        %5050 = vmatpush1.bf16.msra.mxu0 %v5009
        %5051 = vmatprep.subr.bf16.mxu0 0
        %5052 = vmatpush1.bf16.msra.mxu0 %v5010
        %5053 = vmatprep.subr.bf16.mxu0 0
        %5054 = vmatpush1.bf16.msra.mxu0 0
        %5055 = vmatprep.subr.bf16.mxu0 0
        %5056 = vmatpush1.bf16.msra.mxu0 0
        %5057 = vmatprep.subr.bf16.mxu0 0
        %5058 = vmatpush1.bf16.msra.mxu0 0
        %5059 = vmatprep.subr.bf16.mxu0 0
        %5060 = vmatpush1.bf16.msra.mxu0 0
        %5061 = vmatprep.subr.bf16.mxu0 0
        %5062 = vmatpush1.bf16.msra.mxu0 0
        %5063 = vmatprep.subr.bf16.mxu0 0
        %5064 = vmatpush1.bf16.msra.mxu0 0
        %5065 = vmatprep.subr.bf16.mxu0 0
        %5066 = vmatpush1.bf16.msra.mxu0 0
        %5067 = vmatprep.subr.bf16.mxu0 0
        %5068 = vmatpush1.bf16.msra.mxu0 0
        %5069 = vmatprep.subr.bf16.mxu0 0
        %5070 = vmatpush1.bf16.msra.mxu0 0
        %5071 = vmatprep.subr.bf16.mxu0 0
        %5072 = vmatpush1.bf16.msra.mxu0 0
        %5073 = vmatprep.subr.bf16.mxu0 0
        %5074 = vmatpush1.bf16.msra.mxu0 0
        %5075 = vmatprep.subr.bf16.mxu0 0
        %5076 = vmatpush1.bf16.msra.mxu0 0
        %5077 = vmatprep.subr.bf16.mxu0 0
        %5078 = vmatpush1.bf16.msra.mxu0 0
        %5079 = vmatprep.subr.bf16.mxu0 0
        %5080 = vmatpush1.bf16.msra.mxu0 0
        %5081 = vmatprep.mubr.bf16.mxu0 0
        %5082 = vmatmul.mubr.bf16.gmra.mrb[0].mxu0 %v5014
        %v5083 = vpop.f32.mrb[0].mxu0
        %v5084 = vadd.f32 0.0, %v5083
        %v5085 = vpop.f32.mrb[0].mxu0
        %v5086 = vpop.f32.mrb[0].mxu0
        %v5087 = vadd.f32 0.0, %v5086
        %v5088 = vpop.f32.mrb[0].mxu0
        %5089 = vmatprep.mubr.bf16.mxu0 0
        %5090 = vmatmul.mubr.bf16.gmra.mrb[0].mxu0 %v5017
        %v5091 = vpop.f32.mrb[0].mxu0
        %v5092 = vadd.f32 0.0, %v5091
        %v5093 = vpop.f32.mrb[0].mxu0
        %v5094 = vpop.f32.mrb[0].mxu0
        %v5095 = vadd.f32 0.0, %v5094
        %v5096 = vpop.f32.mrb[0].mxu0
        %5097 = vmatprep.mubr.bf16.mxu0 0
        %5098 = vmatmul.mubr.bf16.gmra.mrb[0].mxu0 %v5020
        %v5099 = vpop.f32.mrb[0].mxu0
        %v5100 = vadd.f32 0.0, %v5099
        %v5101 = vpop.f32.mrb[0].mxu0
        %v5102 = vpop.f32.mrb[0].mxu0
        %v5103 = vadd.f32 0.0, %v5102
        %v5104 = vpop.f32.mrb[0].mxu0
        %5105 = vmatprep.mubr.bf16.mxu0 0
        %5106 = vmatmul.mubr.bf16.gmra.mrb[0].mxu0 %v5023
        %v5107 = vpop.f32.mrb[0].mxu0
        %v5108 = vadd.f32 0.0, %v5107
        %v5109 = vpop.f32.mrb[0].mxu0
        %v5110 = vpop.f32.mrb[0].mxu0
        %v5111 = vadd.f32 0.0, %v5110
        %v5112 = vpop.f32.mrb[0].mxu0
        %5113 = vmatprep.mubr.bf16.mxu0 0
        %5114 = vmatmul.mubr.bf16.gmra.mrb[0].mxu0 %v5026
        %v5115 = vpop.f32.mrb[0].mxu0
        %v5116 = vadd.f32 0.0, %v5115
        %v5117 = vpop.f32.mrb[0].mxu0
        %v5118 = vpop.f32.mrb[0].mxu0
        %v5119 = vadd.f32 0.0, %v5118
        %v5120 = vpop.f32.mrb[0].mxu0
        %5121 = vmatprep.mubr.bf16.mxu0 0
        %5122 = vmatmul.mubr.bf16.gmra.mrb[0].mxu0 %v5029
        %v5123 = vpop.f32.mrb[0].mxu0
        %v5124 = vadd.f32 0.0, %v5123
        %v5125 = vpop.f32.mrb[0].mxu0
        %v5126 = vpop.f32.mrb[0].mxu0
        %v5127 = vadd.f32 0.0, %v5126
        %v5128 = vpop.f32.mrb[0].mxu0
        %5129 = vmatprep.mubr.bf16.mxu0 0
        %5130 = vmatmul.mubr.bf16.gmra.mrb[0].mxu0 %v5032
        %v5131 = vpop.f32.mrb[0].mxu0
        %v5132 = vadd.f32 0.0, %v5131
        %v5133 = vpop.f32.mrb[0].mxu0
        %v5134 = vpop.f32.mrb[0].mxu0
        %v5135 = vadd.f32 0.0, %v5134
        %v5136 = vpop.f32.mrb[0].mxu0
        %5137 = vmatprep.mubr.bf16.mxu0 0
        %5138 = vmatmul.mubr.bf16.gmra.mrb[0].mxu0 %v5035
        %v5139 = vpop.f32.mrb[0].mxu0
        %v5140 = vadd.f32 0.0, %v5139
        %v5141 = vpop.f32.mrb[0].mxu0
        %v5142 = vpop.f32.mrb[0].mxu0
        %v5143 = vadd.f32 0.0, %v5142
        %v5144 = vpop.f32.mrb[0].mxu0
        %5145 = vmatprep.mubr.bf16.mxu0 0
        %5146 = vmatmul.mubr.bf16.gmra.mrb[0].mxu0 %v5038
        %v5147 = vpop.f32.mrb[0].mxu0
        %v5148 = vadd.f32 0.0, %v5147
        %v5149 = vpop.f32.mrb[0].mxu0
        %v5150 = vpop.f32.mrb[0].mxu0
        %v5151 = vadd.f32 0.0, %v5150
        %v5152 = vpop.f32.mrb[0].mxu0
        %5153 = vmatprep.mubr.bf16.mxu0 0
        %5154 = vmatmul.mubr.bf16.gmra.mrb[0].mxu0 %v5041
        %v5155 = vpop.f32.mrb[0].mxu0
        %v5156 = vadd.f32 0.0, %v5155
        %v5157 = vpop.f32.mrb[0].mxu0
        %v5158 = vpop.f32.mrb[0].mxu0
        %v5159 = vadd.f32 0.0, %v5158
        %v5160 = vpop.f32.mrb[0].mxu0
        %5161 = vmatprep.mubr.bf16.mxu0 0
        %5162 = vmatmul.mubr.bf16.gmra.mrb[0].mxu0 %v5044
        %v5163 = vpop.f32.mrb[0].mxu0
        %v5164 = vadd.f32 0.0, %v5163
        %v5165 = vpop.f32.mrb[0].mxu0
        %v5166 = vpop.f32.mrb[0].mxu0
        %v5167 = vadd.f32 0.0, %v5166
        %v5168 = vpop.f32.mrb[0].mxu0
        %5169 = vmatprep.mubr.bf16.mxu0 0
        %5170 = vmatmul.mubr.bf16.gmra.mrb[0].mxu0 %v5047
        %v5171 = vpop.f32.mrb[0].mxu0
        %v5172 = vadd.f32 0.0, %v5171
        %v5173 = vpop.f32.mrb[0].mxu0
        %v5174 = vpop.f32.mrb[0].mxu0
        %v5175 = vadd.f32 0.0, %v5174
        %v5176 = vpop.f32.mrb[0].mxu0
        %5177 = vdwg.mxu0
        %v5182 = vunpack.c.l.b16 %v4920
        %v5183 = vunpack.c.l.b16 %v4921
        %v5184 = vunpack.c.l.b16 %v4922
        %v5185 = vunpack.c.l.b16 %v4923
        %v5186 = vpack.c.b16 %v5183, %v5182
        %v5187 = vpack.c.b16 %v5185, %v5184
        %v5191 = vsel %vm4703, %v4948, 0
        %v5194 = vsel %vm4703, %v4949, 0
        %v5197 = vsel %vm4703, %v4950, 0
        %v5200 = vsel %vm4703, %v4951, 0
        %v5203 = vsel %vm4703, %v4952, 0
        %v5206 = vsel %vm4703, %v4953, 0
        %v5209 = vsel %vm4703, %v4954, 0
        %v5212 = vsel %vm4703, %v4955, 0
        %v5215 = vsel %vm4703, %v4956, 0
        %v5218 = vsel %vm4703, %v4957, 0
        %v5221 = vsel %vm4703, %v4958, 0
        %v5224 = vsel %vm4703, %v4959, 0
        %5226 = vmatprep.subr.bf16.mxu0 0
        %5227 = vmatpush1.bf16.msra.mxu0 %v5186
        %5228 = vmatprep.subr.bf16.mxu0 0
        %5229 = vmatpush1.bf16.msra.mxu0 %v5187
        %5230 = vmatprep.subr.bf16.mxu0 0
        %5231 = vmatpush1.bf16.msra.mxu0 0
        %5232 = vmatprep.subr.bf16.mxu0 0
        %5233 = vmatpush1.bf16.msra.mxu0 0
        %5234 = vmatprep.subr.bf16.mxu0 0
        %5235 = vmatpush1.bf16.msra.mxu0 0
        %5236 = vmatprep.subr.bf16.mxu0 0
        %5237 = vmatpush1.bf16.msra.mxu0 0
        %5238 = vmatprep.subr.bf16.mxu0 0
        %5239 = vmatpush1.bf16.msra.mxu0 0
        %5240 = vmatprep.subr.bf16.mxu0 0
        %5241 = vmatpush1.bf16.msra.mxu0 0
        %5242 = vmatprep.subr.bf16.mxu0 0
        %5243 = vmatpush1.bf16.msra.mxu0 0
        %5244 = vmatprep.subr.bf16.mxu0 0
        %5245 = vmatpush1.bf16.msra.mxu0 0
        %5246 = vmatprep.subr.bf16.mxu0 0
        %5247 = vmatpush1.bf16.msra.mxu0 0
        %5248 = vmatprep.subr.bf16.mxu0 0
        %5249 = vmatpush1.bf16.msra.mxu0 0
        %5250 = vmatprep.subr.bf16.mxu0 0
        %5251 = vmatpush1.bf16.msra.mxu0 0
        %5252 = vmatprep.subr.bf16.mxu0 0
        %5253 = vmatpush1.bf16.msra.mxu0 0
        %5254 = vmatprep.subr.bf16.mxu0 0
        %5255 = vmatpush1.bf16.msra.mxu0 0
        %5256 = vmatprep.subr.bf16.mxu0 0
        %5257 = vmatpush1.bf16.msra.mxu0 0
        %5258 = vmatprep.mubr.bf16.mxu0 0
        %5259 = vmatmul.mubr.bf16.gmra.mrb[0].mxu0 %v5191
        %v5260 = vpop.f32.mrb[0].mxu0
        %v5261 = vadd.f32 %v5084, %v5260
        %v5262 = vpop.f32.mrb[0].mxu0
        %v5263 = vpop.f32.mrb[0].mxu0
        %v5264 = vadd.f32 %v5087, %v5263
        %v5265 = vpop.f32.mrb[0].mxu0
        %5266 = vmatprep.mubr.bf16.mxu0 0
        %5267 = vmatmul.mubr.bf16.gmra.mrb[0].mxu0 %v5194
        %v5268 = vpop.f32.mrb[0].mxu0
        %v5269 = vadd.f32 %v5092, %v5268
        %v5270 = vpop.f32.mrb[0].mxu0
        %v5271 = vpop.f32.mrb[0].mxu0
        %v5272 = vadd.f32 %v5095, %v5271
        %v5273 = vpop.f32.mrb[0].mxu0
        %5274 = vmatprep.mubr.bf16.mxu0 0
        %5275 = vmatmul.mubr.bf16.gmra.mrb[0].mxu0 %v5197
        %v5276 = vpop.f32.mrb[0].mxu0
        %v5277 = vadd.f32 %v5100, %v5276
        %v5278 = vpop.f32.mrb[0].mxu0
        %v5279 = vpop.f32.mrb[0].mxu0
        %v5280 = vadd.f32 %v5103, %v5279
        %v5281 = vpop.f32.mrb[0].mxu0
        %5282 = vmatprep.mubr.bf16.mxu0 0
        %5283 = vmatmul.mubr.bf16.gmra.mrb[0].mxu0 %v5200
        %v5284 = vpop.f32.mrb[0].mxu0
        %v5285 = vadd.f32 %v5108, %v5284
        %v5286 = vpop.f32.mrb[0].mxu0
        %v5287 = vpop.f32.mrb[0].mxu0
        %v5288 = vadd.f32 %v5111, %v5287
        %v5289 = vpop.f32.mrb[0].mxu0
        %5290 = vmatprep.mubr.bf16.mxu0 0
        %5291 = vmatmul.mubr.bf16.gmra.mrb[0].mxu0 %v5203
        %v5292 = vpop.f32.mrb[0].mxu0
        %v5293 = vadd.f32 %v5116, %v5292
        %v5294 = vpop.f32.mrb[0].mxu0
        %v5295 = vpop.f32.mrb[0].mxu0
        %v5296 = vadd.f32 %v5119, %v5295
        %v5297 = vpop.f32.mrb[0].mxu0
        %5298 = vmatprep.mubr.bf16.mxu0 0
        %5299 = vmatmul.mubr.bf16.gmra.mrb[0].mxu0 %v5206
        %v5300 = vpop.f32.mrb[0].mxu0
        %v5301 = vadd.f32 %v5124, %v5300
        %v5302 = vpop.f32.mrb[0].mxu0
        %v5303 = vpop.f32.mrb[0].mxu0
        %v5304 = vadd.f32 %v5127, %v5303
        %v5305 = vpop.f32.mrb[0].mxu0
        %5306 = vmatprep.mubr.bf16.mxu0 0
        %5307 = vmatmul.mubr.bf16.gmra.mrb[0].mxu0 %v5209
        %v5308 = vpop.f32.mrb[0].mxu0
        %v5309 = vadd.f32 %v5132, %v5308
        %v5310 = vpop.f32.mrb[0].mxu0
        %v5311 = vpop.f32.mrb[0].mxu0
        %v5312 = vadd.f32 %v5135, %v5311
        %v5313 = vpop.f32.mrb[0].mxu0
        %5314 = vmatprep.mubr.bf16.mxu0 0
        %5315 = vmatmul.mubr.bf16.gmra.mrb[0].mxu0 %v5212
        %v5316 = vpop.f32.mrb[0].mxu0
        %v5317 = vadd.f32 %v5140, %v5316
        %v5318 = vpop.f32.mrb[0].mxu0
        %v5319 = vpop.f32.mrb[0].mxu0
        %v5320 = vadd.f32 %v5143, %v5319
        %v5321 = vpop.f32.mrb[0].mxu0
        %5322 = vmatprep.mubr.bf16.mxu0 0
        %5323 = vmatmul.mubr.bf16.gmra.mrb[0].mxu0 %v5215
        %v5324 = vpop.f32.mrb[0].mxu0
        %v5325 = vadd.f32 %v5148, %v5324
        %v5326 = vpop.f32.mrb[0].mxu0
        %v5327 = vpop.f32.mrb[0].mxu0
        %v5328 = vadd.f32 %v5151, %v5327
        %v5329 = vpop.f32.mrb[0].mxu0
        %5330 = vmatprep.mubr.bf16.mxu0 0
        %5331 = vmatmul.mubr.bf16.gmra.mrb[0].mxu0 %v5218
        %v5332 = vpop.f32.mrb[0].mxu0
        %v5333 = vadd.f32 %v5156, %v5332
        %v5334 = vpop.f32.mrb[0].mxu0
        %v5335 = vpop.f32.mrb[0].mxu0
        %v5336 = vadd.f32 %v5159, %v5335
        %v5337 = vpop.f32.mrb[0].mxu0
        %5338 = vmatprep.mubr.bf16.mxu0 0
        %5339 = vmatmul.mubr.bf16.gmra.mrb[0].mxu0 %v5221
        %v5340 = vpop.f32.mrb[0].mxu0
        %v5341 = vadd.f32 %v5164, %v5340
        %v5342 = vpop.f32.mrb[0].mxu0
        %v5343 = vpop.f32.mrb[0].mxu0
        %v5344 = vadd.f32 %v5167, %v5343
        %v5345 = vpop.f32.mrb[0].mxu0
        %5346 = vmatprep.mubr.bf16.mxu0 0
        %5347 = vmatmul.mubr.bf16.gmra.mrb[0].mxu0 %v5224
        %v5348 = vpop.f32.mrb[0].mxu0
        %v5349 = vadd.f32 %v5172, %v5348
        %v5350 = vpop.f32.mrb[0].mxu0
        %v5351 = vpop.f32.mrb[0].mxu0
        %v5352 = vadd.f32 %v5175, %v5351
        %v5353 = vpop.f32.mrb[0].mxu0
        %5354 = vdwg.mxu0
        %s5355 = scalar_lea.vmem [#allocation14], 32
        %v5356 = vld [vmem:[%s5355] sm:$0xf]
        %v5357 = vld [vmem:[%s5355 + $0x4] sm:$0xf]
        %v5358 = vld [vmem:[%s5355 + $0x8] sm:$0xf]
        %v5359 = vld [vmem:[%s5355 + $0xc] sm:$0xf]
        %v5360 = vld [vmem:[#allocation5 + $0x2] sm:$0xff]
        %v5361 = vld [vmem:[#allocation5 + $0xa] sm:$0xff]
        %v5362 = vld [vmem:[#allocation5 + $0x12] sm:$0xff]
        %v5363 = vld [vmem:[#allocation5 + $0x1a] sm:$0xff]
        %v5364 = vld [vmem:[#allocation5 + $0x22] sm:$0xff]
        %v5365 = vld [vmem:[#allocation5 + $0x2a] sm:$0xff]
        %v5366 = vld [vmem:[#allocation5 + $0x32] sm:$0xff]
        %v5367 = vld [vmem:[#allocation5 + $0x3a] sm:$0xff]
        %v5368 = vld [vmem:[#allocation5 + $0x42] sm:$0xff]
        %v5369 = vld [vmem:[#allocation5 + $0x4a] sm:$0xff]
        %v5370 = vld [vmem:[#allocation5 + $0x52] sm:$0xff]
        %v5371 = vld [vmem:[#allocation5 + $0x5a] sm:$0xff]
        %v5372 = vld [vmem:[#allocation5 + $0x62] sm:$0xff]
        %v5373 = vld [vmem:[#allocation5 + $0x6a] sm:$0xff]
        %v5374 = vld [vmem:[#allocation5 + $0x72] sm:$0xff]
        %v5375 = vld [vmem:[#allocation5 + $0x7a] sm:$0xff]
        %v5376 = vld [vmem:[#allocation5 + $0x82] sm:$0xff]
        %v5377 = vld [vmem:[#allocation5 + $0x8a] sm:$0xff]
        %v5378 = vld [vmem:[#allocation5 + $0x92] sm:$0xff]
        %v5379 = vld [vmem:[#allocation5 + $0x9a] sm:$0xff]
        %v5380 = vld [vmem:[#allocation5 + $0xa2] sm:$0xff]
        %v5381 = vld [vmem:[#allocation5 + $0xaa] sm:$0xff]
        %v5382 = vld [vmem:[#allocation5 + $0xb2] sm:$0xff]
        %v5383 = vld [vmem:[#allocation5 + $0xba] sm:$0x3f]
        %v5384 = vpack.c.bf16 %v5361, %v5360
        %v5385 = vpack.c.bf16 %v5363, %v5362
        %v5386 = vpack.c.bf16 %v5365, %v5364
        %v5387 = vpack.c.bf16 %v5367, %v5366
        %v5388 = vpack.c.bf16 %v5369, %v5368
        %v5389 = vpack.c.bf16 %v5371, %v5370
        %v5390 = vpack.c.bf16 %v5373, %v5372
        %v5391 = vpack.c.bf16 %v5375, %v5374
        %v5392 = vpack.c.bf16 %v5377, %v5376
        %v5393 = vpack.c.bf16 %v5379, %v5378
        %v5394 = vpack.c.bf16 %v5381, %v5380
        %v5395 = vpack.c.bf16 %v5383, %v5382
        %v5400 = vunpack.c.l.b16 %v5356
        %v5401 = vunpack.c.l.b16 %v5357
        %v5402 = vunpack.c.l.b16 %v5358
        %v5403 = vunpack.c.l.b16 %v5359
        %v5404 = vpack.c.b16 %v5401, %v5400
        %v5405 = vpack.c.b16 %v5403, %v5402
        %v5409 = vsel %vm4703, %v5384, 0
        %v5412 = vsel %vm4703, %v5385, 0
        %v5415 = vsel %vm4703, %v5386, 0
        %v5418 = vsel %vm4703, %v5387, 0
        %v5421 = vsel %vm4703, %v5388, 0
        %v5424 = vsel %vm4703, %v5389, 0
        %v5427 = vsel %vm4703, %v5390, 0
        %v5430 = vsel %vm4703, %v5391, 0
        %v5433 = vsel %vm4703, %v5392, 0
        %v5436 = vsel %vm4703, %v5393, 0
        %v5439 = vsel %vm4703, %v5394, 0
        %v5442 = vsel %vm4703, %v5395, 0
        %5444 = vmatprep.subr.bf16.mxu0 0
        %5445 = vmatpush1.bf16.msra.mxu0 %v5404
        %5446 = vmatprep.subr.bf16.mxu0 0
        %5447 = vmatpush1.bf16.msra.mxu0 %v5405
        %5448 = vmatprep.subr.bf16.mxu0 0
        %5449 = vmatpush1.bf16.msra.mxu0 0
        %5450 = vmatprep.subr.bf16.mxu0 0
        %5451 = vmatpush1.bf16.msra.mxu0 0
        %5452 = vmatprep.subr.bf16.mxu0 0
        %5453 = vmatpush1.bf16.msra.mxu0 0
        %5454 = vmatprep.subr.bf16.mxu0 0
        %5455 = vmatpush1.bf16.msra.mxu0 0
        %5456 = vmatprep.subr.bf16.mxu0 0
        %5457 = vmatpush1.bf16.msra.mxu0 0
        %5458 = vmatprep.subr.bf16.mxu0 0
        %5459 = vmatpush1.bf16.msra.mxu0 0
        %5460 = vmatprep.subr.bf16.mxu0 0
        %5461 = vmatpush1.bf16.msra.mxu0 0
        %5462 = vmatprep.subr.bf16.mxu0 0
        %5463 = vmatpush1.bf16.msra.mxu0 0
        %5464 = vmatprep.subr.bf16.mxu0 0
        %5465 = vmatpush1.bf16.msra.mxu0 0
        %5466 = vmatprep.subr.bf16.mxu0 0
        %5467 = vmatpush1.bf16.msra.mxu0 0
        %5468 = vmatprep.subr.bf16.mxu0 0
        %5469 = vmatpush1.bf16.msra.mxu0 0
        %5470 = vmatprep.subr.bf16.mxu0 0
        %5471 = vmatpush1.bf16.msra.mxu0 0
        %5472 = vmatprep.subr.bf16.mxu0 0
        %5473 = vmatpush1.bf16.msra.mxu0 0
        %5474 = vmatprep.subr.bf16.mxu0 0
        %5475 = vmatpush1.bf16.msra.mxu0 0
        %5476 = vmatprep.mubr.bf16.mxu0 0
        %5477 = vmatmul.mubr.bf16.gmra.mrb[0].mxu0 %v5409
        %v5478 = vpop.f32.mrb[0].mxu0
        %v5479 = vadd.f32 0.0, %v5478
        %v5480 = vpop.f32.mrb[0].mxu0
        %v5481 = vpop.f32.mrb[0].mxu0
        %v5482 = vadd.f32 0.0, %v5481
        %v5483 = vpop.f32.mrb[0].mxu0
        %5484 = vmatprep.mubr.bf16.mxu0 0
        %5485 = vmatmul.mubr.bf16.gmra.mrb[0].mxu0 %v5412
        %v5486 = vpop.f32.mrb[0].mxu0
        %v5487 = vadd.f32 0.0, %v5486
        %v5488 = vpop.f32.mrb[0].mxu0
        %v5489 = vpop.f32.mrb[0].mxu0
        %v5490 = vadd.f32 0.0, %v5489
        %v5491 = vpop.f32.mrb[0].mxu0
        %5492 = vmatprep.mubr.bf16.mxu0 0
        %5493 = vmatmul.mubr.bf16.gmra.mrb[0].mxu0 %v5415
        %v5494 = vpop.f32.mrb[0].mxu0
        %v5495 = vadd.f32 0.0, %v5494
        %v5496 = vpop.f32.mrb[0].mxu0
        %v5497 = vpop.f32.mrb[0].mxu0
        %v5498 = vadd.f32 0.0, %v5497
        %v5499 = vpop.f32.mrb[0].mxu0
        %5500 = vmatprep.mubr.bf16.mxu0 0
        %5501 = vmatmul.mubr.bf16.gmra.mrb[0].mxu0 %v5418
        %v5502 = vpop.f32.mrb[0].mxu0
        %v5503 = vadd.f32 0.0, %v5502
        %v5504 = vpop.f32.mrb[0].mxu0
        %v5505 = vpop.f32.mrb[0].mxu0
        %v5506 = vadd.f32 0.0, %v5505
        %v5507 = vpop.f32.mrb[0].mxu0
        %5508 = vmatprep.mubr.bf16.mxu0 0
        %5509 = vmatmul.mubr.bf16.gmra.mrb[0].mxu0 %v5421
        %v5510 = vpop.f32.mrb[0].mxu0
        %v5511 = vadd.f32 0.0, %v5510
        %v5512 = vpop.f32.mrb[0].mxu0
        %v5513 = vpop.f32.mrb[0].mxu0
        %v5514 = vadd.f32 0.0, %v5513
        %v5515 = vpop.f32.mrb[0].mxu0
        %5516 = vmatprep.mubr.bf16.mxu0 0
        %5517 = vmatmul.mubr.bf16.gmra.mrb[0].mxu0 %v5424
        %v5518 = vpop.f32.mrb[0].mxu0
        %v5519 = vadd.f32 0.0, %v5518
        %v5520 = vpop.f32.mrb[0].mxu0
        %v5521 = vpop.f32.mrb[0].mxu0
        %v5522 = vadd.f32 0.0, %v5521
        %v5523 = vpop.f32.mrb[0].mxu0
        %5524 = vmatprep.mubr.bf16.mxu0 0
        %5525 = vmatmul.mubr.bf16.gmra.mrb[0].mxu0 %v5427
        %v5526 = vpop.f32.mrb[0].mxu0
        %v5527 = vadd.f32 0.0, %v5526
        %v5528 = vpop.f32.mrb[0].mxu0
        %v5529 = vpop.f32.mrb[0].mxu0
        %v5530 = vadd.f32 0.0, %v5529
        %v5531 = vpop.f32.mrb[0].mxu0
        %5532 = vmatprep.mubr.bf16.mxu0 0
        %5533 = vmatmul.mubr.bf16.gmra.mrb[0].mxu0 %v5430
        %v5534 = vpop.f32.mrb[0].mxu0
        %v5535 = vadd.f32 0.0, %v5534
        %v5536 = vpop.f32.mrb[0].mxu0
        %v5537 = vpop.f32.mrb[0].mxu0
        %v5538 = vadd.f32 0.0, %v5537
        %v5539 = vpop.f32.mrb[0].mxu0
        %5540 = vmatprep.mubr.bf16.mxu0 0
        %5541 = vmatmul.mubr.bf16.gmra.mrb[0].mxu0 %v5433
        %v5542 = vpop.f32.mrb[0].mxu0
        %v5543 = vadd.f32 0.0, %v5542
        %v5544 = vpop.f32.mrb[0].mxu0
        %v5545 = vpop.f32.mrb[0].mxu0
        %v5546 = vadd.f32 0.0, %v5545
        %v5547 = vpop.f32.mrb[0].mxu0
        %5548 = vmatprep.mubr.bf16.mxu0 0
        %5549 = vmatmul.mubr.bf16.gmra.mrb[0].mxu0 %v5436
        %v5550 = vpop.f32.mrb[0].mxu0
        %v5551 = vadd.f32 0.0, %v5550
        %v5552 = vpop.f32.mrb[0].mxu0
        %v5553 = vpop.f32.mrb[0].mxu0
        %v5554 = vadd.f32 0.0, %v5553
        %v5555 = vpop.f32.mrb[0].mxu0
        %5556 = vmatprep.mubr.bf16.mxu0 0
        %5557 = vmatmul.mubr.bf16.gmra.mrb[0].mxu0 %v5439
        %v5558 = vpop.f32.mrb[0].mxu0
        %v5559 = vadd.f32 0.0, %v5558
        %v5560 = vpop.f32.mrb[0].mxu0
        %v5561 = vpop.f32.mrb[0].mxu0
        %v5562 = vadd.f32 0.0, %v5561
        %v5563 = vpop.f32.mrb[0].mxu0
        %5564 = vmatprep.mubr.bf16.mxu0 0
        %5565 = vmatmul.mubr.bf16.gmra.mrb[0].mxu0 %v5442
        %v5566 = vpop.f32.mrb[0].mxu0
        %v5567 = vadd.f32 0.0, %v5566
        %v5568 = vpop.f32.mrb[0].mxu0
        %v5569 = vpop.f32.mrb[0].mxu0
        %v5570 = vadd.f32 0.0, %v5569
        %v5571 = vpop.f32.mrb[0].mxu0
        %5572 = vdwg.mxu0
        %v5573 = vadd.f32 %v5261, %v5479
        %v5574 = vadd.f32 %v5264, %v5482
        %v5575 = vadd.f32 %v5269, %v5487
        %v5576 = vadd.f32 %v5272, %v5490
        %v5577 = vadd.f32 %v5277, %v5495
        %v5578 = vadd.f32 %v5280, %v5498
        %v5579 = vadd.f32 %v5285, %v5503
        %v5580 = vadd.f32 %v5288, %v5506
        %v5581 = vadd.f32 %v5293, %v5511
        %v5582 = vadd.f32 %v5296, %v5514
        %v5583 = vadd.f32 %v5301, %v5519
        %v5584 = vadd.f32 %v5304, %v5522
        %v5585 = vadd.f32 %v5309, %v5527
        %v5586 = vadd.f32 %v5312, %v5530
        %v5587 = vadd.f32 %v5317, %v5535
        %v5588 = vadd.f32 %v5320, %v5538
        %v5589 = vadd.f32 %v5325, %v5543
        %v5590 = vadd.f32 %v5328, %v5546
        %v5591 = vadd.f32 %v5333, %v5551
        %v5592 = vadd.f32 %v5336, %v5554
        %v5593 = vadd.f32 %v5341, %v5559
        %v5594 = vadd.f32 %v5344, %v5562
        %v5595 = vadd.f32 %v5349, %v5567
        %v5596 = vadd.f32 %v5352, %v5570
        %v5597 = vld [vmem:[%s6] sm:$0x1]
        %v5599 = vlaneseq
        %v5600 = vshrl.u32 %v5599, 7
        %v5601 = vsub.s32 0, %v5600
        %v5602 = vrot.slane %v5597, %v5601
        %v5604 = vadd.f32 %v5573, %v5602
        %v5605 = vadd.f32 %v5574, %v5602
        %v5606 = vadd.f32 %v5575, %v5602
        %v5607 = vadd.f32 %v5576, %v5602
        %v5608 = vadd.f32 %v5577, %v5602
        %v5609 = vadd.f32 %v5578, %v5602
        %v5610 = vadd.f32 %v5579, %v5602
        %v5611 = vadd.f32 %v5580, %v5602
        %v5612 = vadd.f32 %v5581, %v5602
        %v5613 = vadd.f32 %v5582, %v5602
        %v5614 = vadd.f32 %v5583, %v5602
        %v5615 = vadd.f32 %v5584, %v5602
        %v5616 = vadd.f32 %v5585, %v5602
        %v5617 = vadd.f32 %v5586, %v5602
        %v5618 = vadd.f32 %v5587, %v5602
        %v5619 = vadd.f32 %v5588, %v5602
        %v5620 = vadd.f32 %v5589, %v5602
        %v5621 = vadd.f32 %v5590, %v5602
        %v5622 = vadd.f32 %v5591, %v5602
        %v5623 = vadd.f32 %v5592, %v5602
        %v5624 = vadd.f32 %v5593, %v5602
        %v5625 = vadd.f32 %v5594, %v5602
        %v5626 = vadd.f32 %v5595, %v5602
        %v5627 = vadd.f32 %v5596, %v5602
        %vm5628 = vcmask 523264
        %5629 = vst.msk [vmem:[#allocation6] sm:$0xff] %vm5628, %v5604
        %5630 = vst.msk [vmem:[#allocation6 + $0x8] sm:$0xff] %vm5628, %v5605
        %5631 = vst.msk [vmem:[#allocation6 + $0x10] sm:$0xff] %vm5628, %v5606
        %5632 = vst.msk [vmem:[#allocation6 + $0x18] sm:$0xff] %vm5628, %v5607
        %5633 = vst.msk [vmem:[#allocation6 + $0x20] sm:$0xff] %vm5628, %v5608
        %5634 = vst.msk [vmem:[#allocation6 + $0x28] sm:$0xff] %vm5628, %v5609
        %5635 = vst.msk [vmem:[#allocation6 + $0x30] sm:$0xff] %vm5628, %v5610
        %5636 = vst.msk [vmem:[#allocation6 + $0x38] sm:$0xff] %vm5628, %v5611
        %5637 = vst.msk [vmem:[#allocation6 + $0x40] sm:$0xff] %vm5628, %v5612
        %5638 = vst.msk [vmem:[#allocation6 + $0x48] sm:$0xff] %vm5628, %v5613
        %5639 = vst.msk [vmem:[#allocation6 + $0x50] sm:$0xff] %vm5628, %v5614
        %5640 = vst.msk [vmem:[#allocation6 + $0x58] sm:$0xff] %vm5628, %v5615
        %5641 = vst.msk [vmem:[#allocation6 + $0x60] sm:$0xff] %vm5628, %v5616
        %5642 = vst.msk [vmem:[#allocation6 + $0x68] sm:$0xff] %vm5628, %v5617
        %5643 = vst.msk [vmem:[#allocation6 + $0x70] sm:$0xff] %vm5628, %v5618
        %5644 = vst.msk [vmem:[#allocation6 + $0x78] sm:$0xff] %vm5628, %v5619
        %5645 = vst.msk [vmem:[#allocation6 + $0x80] sm:$0xff] %vm5628, %v5620
        %5646 = vst.msk [vmem:[#allocation6 + $0x88] sm:$0xff] %vm5628, %v5621
        %5647 = vst.msk [vmem:[#allocation6 + $0x90] sm:$0xff] %vm5628, %v5622
        %5648 = vst.msk [vmem:[#allocation6 + $0x98] sm:$0xff] %vm5628, %v5623
        %5649 = vst.msk [vmem:[#allocation6 + $0xa0] sm:$0xff] %vm5628, %v5624
        %5650 = vst.msk [vmem:[#allocation6 + $0xa8] sm:$0xff] %vm5628, %v5625
        %5651 = vst.msk [vmem:[#allocation6 + $0xb0] sm:$0xff] %vm5628, %v5626
        %vm5652 = vcmask 521216
        %5653 = vst.msk [vmem:[#allocation6 + $0xb8] sm:$0x3f] %vm5652, %v5627
        %v5654 = vld [vmem:[%s7] sm:$0xf]
        %v5655 = vld [vmem:[%s7 + $0x4] sm:$0xf]
        %v5656 = vld [vmem:[%s7 + $0x8] sm:$0xf]
        %v5657 = vld [vmem:[%s7 + $0xc] sm:$0xf]
        %v5658 = vld [vmem:[%s7 + $0x10] sm:$0xf]
        %v5659 = vld [vmem:[%s7 + $0x14] sm:$0xf]
        %v5660 = vld [vmem:[%s7 + $0x18] sm:$0xf]
        %v5661 = vld [vmem:[%s7 + $0x1c] sm:$0xf]
        %v5662 = vld [vmem:[#allocation6] sm:$0xff]
        %v5663 = vld [vmem:[#allocation6 + $0x8] sm:$0xff]
        %v5664 = vld [vmem:[#allocation6 + $0x10] sm:$0xff]
        %v5665 = vld [vmem:[#allocation6 + $0x18] sm:$0xff]
        %v5666 = vld [vmem:[#allocation6 + $0x20] sm:$0xff]
        %v5667 = vld [vmem:[#allocation6 + $0x28] sm:$0xff]
        %v5668 = vld [vmem:[#allocation6 + $0x30] sm:$0xff]
        %v5669 = vld [vmem:[#allocation6 + $0x38] sm:$0xff]
        %v5670 = vld [vmem:[#allocation6 + $0x40] sm:$0xff]
        %v5671 = vld [vmem:[#allocation6 + $0x48] sm:$0xff]
        %v5672 = vld [vmem:[#allocation6 + $0x50] sm:$0xff]
        %v5673 = vld [vmem:[#allocation6 + $0x58] sm:$0xff]
        %v5674 = vld [vmem:[#allocation6 + $0x60] sm:$0xff]
        %v5675 = vld [vmem:[#allocation6 + $0x68] sm:$0xff]
        %v5676 = vld [vmem:[#allocation6 + $0x70] sm:$0xff]
        %v5677 = vld [vmem:[#allocation6 + $0x78] sm:$0xff]
        %v5678 = vld [vmem:[#allocation6 + $0x80] sm:$0xff]
        %v5679 = vld [vmem:[#allocation6 + $0x88] sm:$0xff]
        %v5680 = vld [vmem:[#allocation6 + $0x90] sm:$0xff]
        %v5681 = vld [vmem:[#allocation6 + $0x98] sm:$0xff]
        %v5682 = vld [vmem:[#allocation6 + $0xa0] sm:$0xff]
        %v5683 = vld [vmem:[#allocation6 + $0xa8] sm:$0xff]
        %v5684 = vld [vmem:[#allocation6 + $0xb0] sm:$0xff]
        %v5685 = vld [vmem:[#allocation6 + $0xb8] sm:$0x3f]
        %v5686 = vpack.c.bf16 %v5663, %v5662
        %v5687 = vpack.c.bf16 %v5665, %v5664
        %v5688 = vpack.c.bf16 %v5667, %v5666
        %v5689 = vpack.c.bf16 %v5669, %v5668
        %v5690 = vpack.c.bf16 %v5671, %v5670
        %v5691 = vpack.c.bf16 %v5673, %v5672
        %v5692 = vpack.c.bf16 %v5675, %v5674
        %v5693 = vpack.c.bf16 %v5677, %v5676
        %v5694 = vpack.c.bf16 %v5679, %v5678
        %v5695 = vpack.c.bf16 %v5681, %v5680
        %v5696 = vpack.c.bf16 %v5683, %v5682
        %v5697 = vpack.c.bf16 %v5685, %v5684
        %s5698 = scalar_lea.vmem %s7, 32
        %v5699 = vld [vmem:[%s5698] sm:$0xf]
        %v5700 = vld [vmem:[%s5698 + $0x4] sm:$0xf]
        %v5701 = vld [vmem:[%s5698 + $0x8] sm:$0xf]
        %v5702 = vld [vmem:[%s5698 + $0xc] sm:$0xf]
        %v5703 = vld [vmem:[%s5698 + $0x10] sm:$0xf]
        %v5704 = vld [vmem:[%s5698 + $0x14] sm:$0xf]
        %v5705 = vld [vmem:[%s5698 + $0x18] sm:$0xf]
        %v5706 = vld [vmem:[%s5698 + $0x1c] sm:$0xf]
        %v5707 = vld [vmem:[#allocation6 + $0x1] sm:$0xff]
        %v5708 = vld [vmem:[#allocation6 + $0x9] sm:$0xff]
        %v5709 = vld [vmem:[#allocation6 + $0x11] sm:$0xff]
        %v5710 = vld [vmem:[#allocation6 + $0x19] sm:$0xff]
        %v5711 = vld [vmem:[#allocation6 + $0x21] sm:$0xff]
        %v5712 = vld [vmem:[#allocation6 + $0x29] sm:$0xff]
        %v5713 = vld [vmem:[#allocation6 + $0x31] sm:$0xff]
        %v5714 = vld [vmem:[#allocation6 + $0x39] sm:$0xff]
        %v5715 = vld [vmem:[#allocation6 + $0x41] sm:$0xff]
        %v5716 = vld [vmem:[#allocation6 + $0x49] sm:$0xff]
        %v5717 = vld [vmem:[#allocation6 + $0x51] sm:$0xff]
        %v5718 = vld [vmem:[#allocation6 + $0x59] sm:$0xff]
        %v5719 = vld [vmem:[#allocation6 + $0x61] sm:$0xff]
        %v5720 = vld [vmem:[#allocation6 + $0x69] sm:$0xff]
        %v5721 = vld [vmem:[#allocation6 + $0x71] sm:$0xff]
        %v5722 = vld [vmem:[#allocation6 + $0x79] sm:$0xff]
        %v5723 = vld [vmem:[#allocation6 + $0x81] sm:$0xff]
        %v5724 = vld [vmem:[#allocation6 + $0x89] sm:$0xff]
        %v5725 = vld [vmem:[#allocation6 + $0x91] sm:$0xff]
        %v5726 = vld [vmem:[#allocation6 + $0x99] sm:$0xff]
        %v5727 = vld [vmem:[#allocation6 + $0xa1] sm:$0xff]
        %v5728 = vld [vmem:[#allocation6 + $0xa9] sm:$0xff]
        %v5729 = vld [vmem:[#allocation6 + $0xb1] sm:$0xff]
        %v5730 = vld [vmem:[#allocation6 + $0xb9] sm:$0x3f]
        %v5731 = vpack.c.bf16 %v5708, %v5707
        %v5732 = vpack.c.bf16 %v5710, %v5709
        %v5733 = vpack.c.bf16 %v5712, %v5711
        %v5734 = vpack.c.bf16 %v5714, %v5713
        %v5735 = vpack.c.bf16 %v5716, %v5715
        %v5736 = vpack.c.bf16 %v5718, %v5717
        %v5737 = vpack.c.bf16 %v5720, %v5719
        %v5738 = vpack.c.bf16 %v5722, %v5721
        %v5739 = vpack.c.bf16 %v5724, %v5723
        %v5740 = vpack.c.bf16 %v5726, %v5725
        %v5741 = vpack.c.bf16 %v5728, %v5727
        %v5742 = vpack.c.bf16 %v5730, %v5729
        %v5751 = vunpack.c.l.b16 %v5699
        %v5752 = vunpack.c.l.b16 %v5700
        %v5753 = vunpack.c.l.b16 %v5701
        %v5754 = vunpack.c.l.b16 %v5702
        %v5755 = vunpack.c.l.b16 %v5703
        %v5756 = vunpack.c.l.b16 %v5704
        %v5757 = vunpack.c.l.b16 %v5705
        %v5758 = vunpack.c.l.b16 %v5706
        %v5759 = vpack.c.b16 %v5752, %v5751
        %v5760 = vpack.c.b16 %v5754, %v5753
        %v5761 = vpack.c.b16 %v5756, %v5755
        %v5762 = vpack.c.b16 %v5758, %v5757
        %v5768 = vsel %vm5628, %v5731, 0
        %v5771 = vsel %vm5628, %v5732, 0
        %v5774 = vsel %vm5628, %v5733, 0
        %v5777 = vsel %vm5628, %v5734, 0
        %v5780 = vsel %vm5628, %v5735, 0
        %v5783 = vsel %vm5628, %v5736, 0
        %v5786 = vsel %vm5628, %v5737, 0
        %v5789 = vsel %vm5628, %v5738, 0
        %v5792 = vsel %vm5628, %v5739, 0
        %v5795 = vsel %vm5628, %v5740, 0
        %v5798 = vsel %vm5628, %v5741, 0
        %v5801 = vsel %vm5628, %v5742, 0
        %5803 = vmatprep.subr.bf16.mxu0 0
        %5804 = vmatpush1.bf16.msra.mxu0 %v5759
        %5805 = vmatprep.subr.bf16.mxu0 0
        %5806 = vmatpush1.bf16.msra.mxu0 %v5760
        %5807 = vmatprep.subr.bf16.mxu0 0
        %5808 = vmatpush1.bf16.msra.mxu0 %v5761
        %5809 = vmatprep.subr.bf16.mxu0 0
        %5810 = vmatpush1.bf16.msra.mxu0 %v5762
        %5811 = vmatprep.subr.bf16.mxu0 0
        %5812 = vmatpush1.bf16.msra.mxu0 0
        %5813 = vmatprep.subr.bf16.mxu0 0
        %5814 = vmatpush1.bf16.msra.mxu0 0
        %5815 = vmatprep.subr.bf16.mxu0 0
        %5816 = vmatpush1.bf16.msra.mxu0 0
        %5817 = vmatprep.subr.bf16.mxu0 0
        %5818 = vmatpush1.bf16.msra.mxu0 0
        %5819 = vmatprep.subr.bf16.mxu0 0
        %5820 = vmatpush1.bf16.msra.mxu0 0
        %5821 = vmatprep.subr.bf16.mxu0 0
        %5822 = vmatpush1.bf16.msra.mxu0 0
        %5823 = vmatprep.subr.bf16.mxu0 0
        %5824 = vmatpush1.bf16.msra.mxu0 0
        %5825 = vmatprep.subr.bf16.mxu0 0
        %5826 = vmatpush1.bf16.msra.mxu0 0
        %5827 = vmatprep.subr.bf16.mxu0 0
        %5828 = vmatpush1.bf16.msra.mxu0 0
        %5829 = vmatprep.subr.bf16.mxu0 0
        %5830 = vmatpush1.bf16.msra.mxu0 0
        %5831 = vmatprep.subr.bf16.mxu0 0
        %5832 = vmatpush1.bf16.msra.mxu0 0
        %5833 = vmatprep.subr.bf16.mxu0 0
        %5834 = vmatpush1.bf16.msra.mxu0 0
        %5835 = vmatprep.mubr.bf16.mxu0 0
        %5836 = vmatmul.mubr.bf16.gmra.mrb[0].mxu0 %v5768
        %v5837 = vpop.f32.mrb[0].mxu0
        %v5838 = vadd.f32 0.0, %v5837
        %v5839 = vpop.f32.mrb[0].mxu0
        %v5840 = vpop.f32.mrb[0].mxu0
        %v5841 = vadd.f32 0.0, %v5840
        %v5842 = vpop.f32.mrb[0].mxu0
        %5843 = vmatprep.mubr.bf16.mxu0 0
        %5844 = vmatmul.mubr.bf16.gmra.mrb[0].mxu0 %v5771
        %v5845 = vpop.f32.mrb[0].mxu0
        %v5846 = vadd.f32 0.0, %v5845
        %v5847 = vpop.f32.mrb[0].mxu0
        %v5848 = vpop.f32.mrb[0].mxu0
        %v5849 = vadd.f32 0.0, %v5848
        %v5850 = vpop.f32.mrb[0].mxu0
        %5851 = vmatprep.mubr.bf16.mxu0 0
        %5852 = vmatmul.mubr.bf16.gmra.mrb[0].mxu0 %v5774
        %v5853 = vpop.f32.mrb[0].mxu0
        %v5854 = vadd.f32 0.0, %v5853
        %v5855 = vpop.f32.mrb[0].mxu0
        %v5856 = vpop.f32.mrb[0].mxu0
        %v5857 = vadd.f32 0.0, %v5856
        %v5858 = vpop.f32.mrb[0].mxu0
        %5859 = vmatprep.mubr.bf16.mxu0 0
        %5860 = vmatmul.mubr.bf16.gmra.mrb[0].mxu0 %v5777
        %v5861 = vpop.f32.mrb[0].mxu0
        %v5862 = vadd.f32 0.0, %v5861
        %v5863 = vpop.f32.mrb[0].mxu0
        %v5864 = vpop.f32.mrb[0].mxu0
        %v5865 = vadd.f32 0.0, %v5864
        %v5866 = vpop.f32.mrb[0].mxu0
        %5867 = vmatprep.mubr.bf16.mxu0 0
        %5868 = vmatmul.mubr.bf16.gmra.mrb[0].mxu0 %v5780
        %v5869 = vpop.f32.mrb[0].mxu0
        %v5870 = vadd.f32 0.0, %v5869
        %v5871 = vpop.f32.mrb[0].mxu0
        %v5872 = vpop.f32.mrb[0].mxu0
        %v5873 = vadd.f32 0.0, %v5872
        %v5874 = vpop.f32.mrb[0].mxu0
        %5875 = vmatprep.mubr.bf16.mxu0 0
        %5876 = vmatmul.mubr.bf16.gmra.mrb[0].mxu0 %v5783
        %v5877 = vpop.f32.mrb[0].mxu0
        %v5878 = vadd.f32 0.0, %v5877
        %v5879 = vpop.f32.mrb[0].mxu0
        %v5880 = vpop.f32.mrb[0].mxu0
        %v5881 = vadd.f32 0.0, %v5880
        %v5882 = vpop.f32.mrb[0].mxu0
        %5883 = vmatprep.mubr.bf16.mxu0 0
        %5884 = vmatmul.mubr.bf16.gmra.mrb[0].mxu0 %v5786
        %v5885 = vpop.f32.mrb[0].mxu0
        %v5886 = vadd.f32 0.0, %v5885
        %v5887 = vpop.f32.mrb[0].mxu0
        %v5888 = vpop.f32.mrb[0].mxu0
        %v5889 = vadd.f32 0.0, %v5888
        %v5890 = vpop.f32.mrb[0].mxu0
        %5891 = vmatprep.mubr.bf16.mxu0 0
        %5892 = vmatmul.mubr.bf16.gmra.mrb[0].mxu0 %v5789
        %v5893 = vpop.f32.mrb[0].mxu0
        %v5894 = vadd.f32 0.0, %v5893
        %v5895 = vpop.f32.mrb[0].mxu0
        %v5896 = vpop.f32.mrb[0].mxu0
        %v5897 = vadd.f32 0.0, %v5896
        %v5898 = vpop.f32.mrb[0].mxu0
        %5899 = vmatprep.mubr.bf16.mxu0 0
        %5900 = vmatmul.mubr.bf16.gmra.mrb[0].mxu0 %v5792
        %v5901 = vpop.f32.mrb[0].mxu0
        %v5902 = vadd.f32 0.0, %v5901
        %v5903 = vpop.f32.mrb[0].mxu0
        %v5904 = vpop.f32.mrb[0].mxu0
        %v5905 = vadd.f32 0.0, %v5904
        %v5906 = vpop.f32.mrb[0].mxu0
        %5907 = vmatprep.mubr.bf16.mxu0 0
        %5908 = vmatmul.mubr.bf16.gmra.mrb[0].mxu0 %v5795
        %v5909 = vpop.f32.mrb[0].mxu0
        %v5910 = vadd.f32 0.0, %v5909
        %v5911 = vpop.f32.mrb[0].mxu0
        %v5912 = vpop.f32.mrb[0].mxu0
        %v5913 = vadd.f32 0.0, %v5912
        %v5914 = vpop.f32.mrb[0].mxu0
        %5915 = vmatprep.mubr.bf16.mxu0 0
        %5916 = vmatmul.mubr.bf16.gmra.mrb[0].mxu0 %v5798
        %v5917 = vpop.f32.mrb[0].mxu0
        %v5918 = vadd.f32 0.0, %v5917
        %v5919 = vpop.f32.mrb[0].mxu0
        %v5920 = vpop.f32.mrb[0].mxu0
        %v5921 = vadd.f32 0.0, %v5920
        %v5922 = vpop.f32.mrb[0].mxu0
        %5923 = vmatprep.mubr.bf16.mxu0 0
        %5924 = vmatmul.mubr.bf16.gmra.mrb[0].mxu0 %v5801
        %v5925 = vpop.f32.mrb[0].mxu0
        %v5926 = vadd.f32 0.0, %v5925
        %v5927 = vpop.f32.mrb[0].mxu0
        %v5928 = vpop.f32.mrb[0].mxu0
        %v5929 = vadd.f32 0.0, %v5928
        %v5930 = vpop.f32.mrb[0].mxu0
        %5931 = vdwg.mxu0
        %v5940 = vunpack.c.l.b16 %v5654
        %v5941 = vunpack.c.l.b16 %v5655
        %v5942 = vunpack.c.l.b16 %v5656
        %v5943 = vunpack.c.l.b16 %v5657
        %v5944 = vunpack.c.l.b16 %v5658
        %v5945 = vunpack.c.l.b16 %v5659
        %v5946 = vunpack.c.l.b16 %v5660
        %v5947 = vunpack.c.l.b16 %v5661
        %v5948 = vpack.c.b16 %v5941, %v5940
        %v5949 = vpack.c.b16 %v5943, %v5942
        %v5950 = vpack.c.b16 %v5945, %v5944
        %v5951 = vpack.c.b16 %v5947, %v5946
        %v5957 = vsel %vm5628, %v5686, 0
        %v5960 = vsel %vm5628, %v5687, 0
        %v5963 = vsel %vm5628, %v5688, 0
        %v5966 = vsel %vm5628, %v5689, 0
        %v5969 = vsel %vm5628, %v5690, 0
        %v5972 = vsel %vm5628, %v5691, 0
        %v5975 = vsel %vm5628, %v5692, 0
        %v5978 = vsel %vm5628, %v5693, 0
        %v5981 = vsel %vm5628, %v5694, 0
        %v5984 = vsel %vm5628, %v5695, 0
        %v5987 = vsel %vm5628, %v5696, 0
        %v5990 = vsel %vm5628, %v5697, 0
        %5992 = vmatprep.subr.bf16.mxu0 0
        %5993 = vmatpush1.bf16.msra.mxu0 %v5948
        %5994 = vmatprep.subr.bf16.mxu0 0
        %5995 = vmatpush1.bf16.msra.mxu0 %v5949
        %5996 = vmatprep.subr.bf16.mxu0 0
        %5997 = vmatpush1.bf16.msra.mxu0 %v5950
        %5998 = vmatprep.subr.bf16.mxu0 0
        %5999 = vmatpush1.bf16.msra.mxu0 %v5951
        %6000 = vmatprep.subr.bf16.mxu0 0
        %6001 = vmatpush1.bf16.msra.mxu0 0
        %6002 = vmatprep.subr.bf16.mxu0 0
        %6003 = vmatpush1.bf16.msra.mxu0 0
        %6004 = vmatprep.subr.bf16.mxu0 0
        %6005 = vmatpush1.bf16.msra.mxu0 0
        %6006 = vmatprep.subr.bf16.mxu0 0
        %6007 = vmatpush1.bf16.msra.mxu0 0
        %6008 = vmatprep.subr.bf16.mxu0 0
        %6009 = vmatpush1.bf16.msra.mxu0 0
        %6010 = vmatprep.subr.bf16.mxu0 0
        %6011 = vmatpush1.bf16.msra.mxu0 0
        %6012 = vmatprep.subr.bf16.mxu0 0
        %6013 = vmatpush1.bf16.msra.mxu0 0
        %6014 = vmatprep.subr.bf16.mxu0 0
        %6015 = vmatpush1.bf16.msra.mxu0 0
        %6016 = vmatprep.subr.bf16.mxu0 0
        %6017 = vmatpush1.bf16.msra.mxu0 0
        %6018 = vmatprep.subr.bf16.mxu0 0
        %6019 = vmatpush1.bf16.msra.mxu0 0
        %6020 = vmatprep.subr.bf16.mxu0 0
        %6021 = vmatpush1.bf16.msra.mxu0 0
        %6022 = vmatprep.subr.bf16.mxu0 0
        %6023 = vmatpush1.bf16.msra.mxu0 0
        %6024 = vmatprep.mubr.bf16.mxu0 0
        %6025 = vmatmul.mubr.bf16.gmra.mrb[0].mxu0 %v5957
        %v6026 = vpop.f32.mrb[0].mxu0
        %v6027 = vadd.f32 %v5838, %v6026
        %v6028 = vpop.f32.mrb[0].mxu0
        %v6029 = vpop.f32.mrb[0].mxu0
        %v6030 = vadd.f32 %v5841, %v6029
        %v6031 = vpop.f32.mrb[0].mxu0
        %6032 = vmatprep.mubr.bf16.mxu0 0
        %6033 = vmatmul.mubr.bf16.gmra.mrb[0].mxu0 %v5960
        %v6034 = vpop.f32.mrb[0].mxu0
        %v6035 = vadd.f32 %v5846, %v6034
        %v6036 = vpop.f32.mrb[0].mxu0
        %v6037 = vpop.f32.mrb[0].mxu0
        %v6038 = vadd.f32 %v5849, %v6037
        %v6039 = vpop.f32.mrb[0].mxu0
        %6040 = vmatprep.mubr.bf16.mxu0 0
        %6041 = vmatmul.mubr.bf16.gmra.mrb[0].mxu0 %v5963
        %v6042 = vpop.f32.mrb[0].mxu0
        %v6043 = vadd.f32 %v5854, %v6042
        %v6044 = vpop.f32.mrb[0].mxu0
        %v6045 = vpop.f32.mrb[0].mxu0
        %v6046 = vadd.f32 %v5857, %v6045
        %v6047 = vpop.f32.mrb[0].mxu0
        %6048 = vmatprep.mubr.bf16.mxu0 0
        %6049 = vmatmul.mubr.bf16.gmra.mrb[0].mxu0 %v5966
        %v6050 = vpop.f32.mrb[0].mxu0
        %v6051 = vadd.f32 %v5862, %v6050
        %v6052 = vpop.f32.mrb[0].mxu0
        %v6053 = vpop.f32.mrb[0].mxu0
        %v6054 = vadd.f32 %v5865, %v6053
        %v6055 = vpop.f32.mrb[0].mxu0
        %6056 = vmatprep.mubr.bf16.mxu0 0
        %6057 = vmatmul.mubr.bf16.gmra.mrb[0].mxu0 %v5969
        %v6058 = vpop.f32.mrb[0].mxu0
        %v6059 = vadd.f32 %v5870, %v6058
        %v6060 = vpop.f32.mrb[0].mxu0
        %v6061 = vpop.f32.mrb[0].mxu0
        %v6062 = vadd.f32 %v5873, %v6061
        %v6063 = vpop.f32.mrb[0].mxu0
        %6064 = vmatprep.mubr.bf16.mxu0 0
        %6065 = vmatmul.mubr.bf16.gmra.mrb[0].mxu0 %v5972
        %v6066 = vpop.f32.mrb[0].mxu0
        %v6067 = vadd.f32 %v5878, %v6066
        %v6068 = vpop.f32.mrb[0].mxu0
        %v6069 = vpop.f32.mrb[0].mxu0
        %v6070 = vadd.f32 %v5881, %v6069
        %v6071 = vpop.f32.mrb[0].mxu0
        %6072 = vmatprep.mubr.bf16.mxu0 0
        %6073 = vmatmul.mubr.bf16.gmra.mrb[0].mxu0 %v5975
        %v6074 = vpop.f32.mrb[0].mxu0
        %v6075 = vadd.f32 %v5886, %v6074
        %v6076 = vpop.f32.mrb[0].mxu0
        %v6077 = vpop.f32.mrb[0].mxu0
        %v6078 = vadd.f32 %v5889, %v6077
        %v6079 = vpop.f32.mrb[0].mxu0
        %6080 = vmatprep.mubr.bf16.mxu0 0
        %6081 = vmatmul.mubr.bf16.gmra.mrb[0].mxu0 %v5978
        %v6082 = vpop.f32.mrb[0].mxu0
        %v6083 = vadd.f32 %v5894, %v6082
        %v6084 = vpop.f32.mrb[0].mxu0
        %v6085 = vpop.f32.mrb[0].mxu0
        %v6086 = vadd.f32 %v5897, %v6085
        %v6087 = vpop.f32.mrb[0].mxu0
        %6088 = vmatprep.mubr.bf16.mxu0 0
        %6089 = vmatmul.mubr.bf16.gmra.mrb[0].mxu0 %v5981
        %v6090 = vpop.f32.mrb[0].mxu0
        %v6091 = vadd.f32 %v5902, %v6090
        %v6092 = vpop.f32.mrb[0].mxu0
        %v6093 = vpop.f32.mrb[0].mxu0
        %v6094 = vadd.f32 %v5905, %v6093
        %v6095 = vpop.f32.mrb[0].mxu0
        %6096 = vmatprep.mubr.bf16.mxu0 0
        %6097 = vmatmul.mubr.bf16.gmra.mrb[0].mxu0 %v5984
        %v6098 = vpop.f32.mrb[0].mxu0
        %v6099 = vadd.f32 %v5910, %v6098
        %v6100 = vpop.f32.mrb[0].mxu0
        %v6101 = vpop.f32.mrb[0].mxu0
        %v6102 = vadd.f32 %v5913, %v6101
        %v6103 = vpop.f32.mrb[0].mxu0
        %6104 = vmatprep.mubr.bf16.mxu0 0
        %6105 = vmatmul.mubr.bf16.gmra.mrb[0].mxu0 %v5987
        %v6106 = vpop.f32.mrb[0].mxu0
        %v6107 = vadd.f32 %v5918, %v6106
        %v6108 = vpop.f32.mrb[0].mxu0
        %v6109 = vpop.f32.mrb[0].mxu0
        %v6110 = vadd.f32 %v5921, %v6109
        %v6111 = vpop.f32.mrb[0].mxu0
        %6112 = vmatprep.mubr.bf16.mxu0 0
        %6113 = vmatmul.mubr.bf16.gmra.mrb[0].mxu0 %v5990
        %v6114 = vpop.f32.mrb[0].mxu0
        %v6115 = vadd.f32 %v5926, %v6114
        %v6116 = vpop.f32.mrb[0].mxu0
        %v6117 = vpop.f32.mrb[0].mxu0
        %v6118 = vadd.f32 %v5929, %v6117
        %v6119 = vpop.f32.mrb[0].mxu0
        %6120 = vdwg.mxu0
        %s6121 = scalar_lea.vmem %s7, 64
        %v6122 = vld [vmem:[%s6121] sm:$0xf]
        %v6123 = vld [vmem:[%s6121 + $0x4] sm:$0xf]
        %v6124 = vld [vmem:[%s6121 + $0x8] sm:$0xf]
        %v6125 = vld [vmem:[%s6121 + $0xc] sm:$0xf]
        %v6126 = vld [vmem:[%s6121 + $0x10] sm:$0xf]
        %v6127 = vld [vmem:[%s6121 + $0x14] sm:$0xf]
        %v6128 = vld [vmem:[%s6121 + $0x18] sm:$0xf]
        %v6129 = vld [vmem:[%s6121 + $0x1c] sm:$0xf]
        %v6130 = vld [vmem:[#allocation6 + $0x2] sm:$0xff]
        %v6131 = vld [vmem:[#allocation6 + $0xa] sm:$0xff]
        %v6132 = vld [vmem:[#allocation6 + $0x12] sm:$0xff]
        %v6133 = vld [vmem:[#allocation6 + $0x1a] sm:$0xff]
        %v6134 = vld [vmem:[#allocation6 + $0x22] sm:$0xff]
        %v6135 = vld [vmem:[#allocation6 + $0x2a] sm:$0xff]
        %v6136 = vld [vmem:[#allocation6 + $0x32] sm:$0xff]
        %v6137 = vld [vmem:[#allocation6 + $0x3a] sm:$0xff]
        %v6138 = vld [vmem:[#allocation6 + $0x42] sm:$0xff]
        %v6139 = vld [vmem:[#allocation6 + $0x4a] sm:$0xff]
        %v6140 = vld [vmem:[#allocation6 + $0x52] sm:$0xff]
        %v6141 = vld [vmem:[#allocation6 + $0x5a] sm:$0xff]
        %v6142 = vld [vmem:[#allocation6 + $0x62] sm:$0xff]
        %v6143 = vld [vmem:[#allocation6 + $0x6a] sm:$0xff]
        %v6144 = vld [vmem:[#allocation6 + $0x72] sm:$0xff]
        %v6145 = vld [vmem:[#allocation6 + $0x7a] sm:$0xff]
        %v6146 = vld [vmem:[#allocation6 + $0x82] sm:$0xff]
        %v6147 = vld [vmem:[#allocation6 + $0x8a] sm:$0xff]
        %v6148 = vld [vmem:[#allocation6 + $0x92] sm:$0xff]
        %v6149 = vld [vmem:[#allocation6 + $0x9a] sm:$0xff]
        %v6150 = vld [vmem:[#allocation6 + $0xa2] sm:$0xff]
        %v6151 = vld [vmem:[#allocation6 + $0xaa] sm:$0xff]
        %v6152 = vld [vmem:[#allocation6 + $0xb2] sm:$0xff]
        %v6153 = vld [vmem:[#allocation6 + $0xba] sm:$0x3f]
        %v6154 = vpack.c.bf16 %v6131, %v6130
        %v6155 = vpack.c.bf16 %v6133, %v6132
        %v6156 = vpack.c.bf16 %v6135, %v6134
        %v6157 = vpack.c.bf16 %v6137, %v6136
        %v6158 = vpack.c.bf16 %v6139, %v6138
        %v6159 = vpack.c.bf16 %v6141, %v6140
        %v6160 = vpack.c.bf16 %v6143, %v6142
        %v6161 = vpack.c.bf16 %v6145, %v6144
        %v6162 = vpack.c.bf16 %v6147, %v6146
        %v6163 = vpack.c.bf16 %v6149, %v6148
        %v6164 = vpack.c.bf16 %v6151, %v6150
        %v6165 = vpack.c.bf16 %v6153, %v6152
        %v6174 = vunpack.c.l.b16 %v6122
        %v6175 = vunpack.c.l.b16 %v6123
        %v6176 = vunpack.c.l.b16 %v6124
        %v6177 = vunpack.c.l.b16 %v6125
        %v6178 = vunpack.c.l.b16 %v6126
        %v6179 = vunpack.c.l.b16 %v6127
        %v6180 = vunpack.c.l.b16 %v6128
        %v6181 = vunpack.c.l.b16 %v6129
        %v6182 = vpack.c.b16 %v6175, %v6174
        %v6183 = vpack.c.b16 %v6177, %v6176
        %v6184 = vpack.c.b16 %v6179, %v6178
        %v6185 = vpack.c.b16 %v6181, %v6180
        %v6191 = vsel %vm5628, %v6154, 0
        %v6194 = vsel %vm5628, %v6155, 0
        %v6197 = vsel %vm5628, %v6156, 0
        %v6200 = vsel %vm5628, %v6157, 0
        %v6203 = vsel %vm5628, %v6158, 0
        %v6206 = vsel %vm5628, %v6159, 0
        %v6209 = vsel %vm5628, %v6160, 0
        %v6212 = vsel %vm5628, %v6161, 0
        %v6215 = vsel %vm5628, %v6162, 0
        %v6218 = vsel %vm5628, %v6163, 0
        %v6221 = vsel %vm5628, %v6164, 0
        %v6224 = vsel %vm5628, %v6165, 0
        %6226 = vmatprep.subr.bf16.mxu0 0
        %6227 = vmatpush1.bf16.msra.mxu0 %v6182
        %6228 = vmatprep.subr.bf16.mxu0 0
        %6229 = vmatpush1.bf16.msra.mxu0 %v6183
        %6230 = vmatprep.subr.bf16.mxu0 0
        %6231 = vmatpush1.bf16.msra.mxu0 %v6184
        %6232 = vmatprep.subr.bf16.mxu0 0
        %6233 = vmatpush1.bf16.msra.mxu0 %v6185
        %6234 = vmatprep.subr.bf16.mxu0 0
        %6235 = vmatpush1.bf16.msra.mxu0 0
        %6236 = vmatprep.subr.bf16.mxu0 0
        %6237 = vmatpush1.bf16.msra.mxu0 0
        %6238 = vmatprep.subr.bf16.mxu0 0
        %6239 = vmatpush1.bf16.msra.mxu0 0
        %6240 = vmatprep.subr.bf16.mxu0 0
        %6241 = vmatpush1.bf16.msra.mxu0 0
        %6242 = vmatprep.subr.bf16.mxu0 0
        %6243 = vmatpush1.bf16.msra.mxu0 0
        %6244 = vmatprep.subr.bf16.mxu0 0
        %6245 = vmatpush1.bf16.msra.mxu0 0
        %6246 = vmatprep.subr.bf16.mxu0 0
        %6247 = vmatpush1.bf16.msra.mxu0 0
        %6248 = vmatprep.subr.bf16.mxu0 0
        %6249 = vmatpush1.bf16.msra.mxu0 0
        %6250 = vmatprep.subr.bf16.mxu0 0
        %6251 = vmatpush1.bf16.msra.mxu0 0
        %6252 = vmatprep.subr.bf16.mxu0 0
        %6253 = vmatpush1.bf16.msra.mxu0 0
        %6254 = vmatprep.subr.bf16.mxu0 0
        %6255 = vmatpush1.bf16.msra.mxu0 0
        %6256 = vmatprep.subr.bf16.mxu0 0
        %6257 = vmatpush1.bf16.msra.mxu0 0
        %6258 = vmatprep.mubr.bf16.mxu0 0
        %6259 = vmatmul.mubr.bf16.gmra.mrb[0].mxu0 %v6191
        %v6260 = vpop.f32.mrb[0].mxu0
        %v6261 = vadd.f32 0.0, %v6260
        %v6262 = vpop.f32.mrb[0].mxu0
        %v6263 = vpop.f32.mrb[0].mxu0
        %v6264 = vadd.f32 0.0, %v6263
        %v6265 = vpop.f32.mrb[0].mxu0
        %6266 = vmatprep.mubr.bf16.mxu0 0
        %6267 = vmatmul.mubr.bf16.gmra.mrb[0].mxu0 %v6194
        %v6268 = vpop.f32.mrb[0].mxu0
        %v6269 = vadd.f32 0.0, %v6268
        %v6270 = vpop.f32.mrb[0].mxu0
        %v6271 = vpop.f32.mrb[0].mxu0
        %v6272 = vadd.f32 0.0, %v6271
        %v6273 = vpop.f32.mrb[0].mxu0
        %6274 = vmatprep.mubr.bf16.mxu0 0
        %6275 = vmatmul.mubr.bf16.gmra.mrb[0].mxu0 %v6197
        %v6276 = vpop.f32.mrb[0].mxu0
        %v6277 = vadd.f32 0.0, %v6276
        %v6278 = vpop.f32.mrb[0].mxu0
        %v6279 = vpop.f32.mrb[0].mxu0
        %v6280 = vadd.f32 0.0, %v6279
        %v6281 = vpop.f32.mrb[0].mxu0
        %6282 = vmatprep.mubr.bf16.mxu0 0
        %6283 = vmatmul.mubr.bf16.gmra.mrb[0].mxu0 %v6200
        %v6284 = vpop.f32.mrb[0].mxu0
        %v6285 = vadd.f32 0.0, %v6284
        %v6286 = vpop.f32.mrb[0].mxu0
        %v6287 = vpop.f32.mrb[0].mxu0
        %v6288 = vadd.f32 0.0, %v6287
        %v6289 = vpop.f32.mrb[0].mxu0
        %6290 = vmatprep.mubr.bf16.mxu0 0
        %6291 = vmatmul.mubr.bf16.gmra.mrb[0].mxu0 %v6203
        %v6292 = vpop.f32.mrb[0].mxu0
        %v6293 = vadd.f32 0.0, %v6292
        %v6294 = vpop.f32.mrb[0].mxu0
        %v6295 = vpop.f32.mrb[0].mxu0
        %v6296 = vadd.f32 0.0, %v6295
        %v6297 = vpop.f32.mrb[0].mxu0
        %6298 = vmatprep.mubr.bf16.mxu0 0
        %6299 = vmatmul.mubr.bf16.gmra.mrb[0].mxu0 %v6206
        %v6300 = vpop.f32.mrb[0].mxu0
        %v6301 = vadd.f32 0.0, %v6300
        %v6302 = vpop.f32.mrb[0].mxu0
        %v6303 = vpop.f32.mrb[0].mxu0
        %v6304 = vadd.f32 0.0, %v6303
        %v6305 = vpop.f32.mrb[0].mxu0
        %6306 = vmatprep.mubr.bf16.mxu0 0
        %6307 = vmatmul.mubr.bf16.gmra.mrb[0].mxu0 %v6209
        %v6308 = vpop.f32.mrb[0].mxu0
        %v6309 = vadd.f32 0.0, %v6308
        %v6310 = vpop.f32.mrb[0].mxu0
        %v6311 = vpop.f32.mrb[0].mxu0
        %v6312 = vadd.f32 0.0, %v6311
        %v6313 = vpop.f32.mrb[0].mxu0
        %6314 = vmatprep.mubr.bf16.mxu0 0
        %6315 = vmatmul.mubr.bf16.gmra.mrb[0].mxu0 %v6212
        %v6316 = vpop.f32.mrb[0].mxu0
        %v6317 = vadd.f32 0.0, %v6316
        %v6318 = vpop.f32.mrb[0].mxu0
        %v6319 = vpop.f32.mrb[0].mxu0
        %v6320 = vadd.f32 0.0, %v6319
        %v6321 = vpop.f32.mrb[0].mxu0
        %6322 = vmatprep.mubr.bf16.mxu0 0
        %6323 = vmatmul.mubr.bf16.gmra.mrb[0].mxu0 %v6215
        %v6324 = vpop.f32.mrb[0].mxu0
        %v6325 = vadd.f32 0.0, %v6324
        %v6326 = vpop.f32.mrb[0].mxu0
        %v6327 = vpop.f32.mrb[0].mxu0
        %v6328 = vadd.f32 0.0, %v6327
        %v6329 = vpop.f32.mrb[0].mxu0
        %6330 = vmatprep.mubr.bf16.mxu0 0
        %6331 = vmatmul.mubr.bf16.gmra.mrb[0].mxu0 %v6218
        %v6332 = vpop.f32.mrb[0].mxu0
        %v6333 = vadd.f32 0.0, %v6332
        %v6334 = vpop.f32.mrb[0].mxu0
        %v6335 = vpop.f32.mrb[0].mxu0
        %v6336 = vadd.f32 0.0, %v6335
        %v6337 = vpop.f32.mrb[0].mxu0
        %6338 = vmatprep.mubr.bf16.mxu0 0
        %6339 = vmatmul.mubr.bf16.gmra.mrb[0].mxu0 %v6221
        %v6340 = vpop.f32.mrb[0].mxu0
        %v6341 = vadd.f32 0.0, %v6340
        %v6342 = vpop.f32.mrb[0].mxu0
        %v6343 = vpop.f32.mrb[0].mxu0
        %v6344 = vadd.f32 0.0, %v6343
        %v6345 = vpop.f32.mrb[0].mxu0
        %6346 = vmatprep.mubr.bf16.mxu0 0
        %6347 = vmatmul.mubr.bf16.gmra.mrb[0].mxu0 %v6224
        %v6348 = vpop.f32.mrb[0].mxu0
        %v6349 = vadd.f32 0.0, %v6348
        %v6350 = vpop.f32.mrb[0].mxu0
        %v6351 = vpop.f32.mrb[0].mxu0
        %v6352 = vadd.f32 0.0, %v6351
        %v6353 = vpop.f32.mrb[0].mxu0
        %6354 = vdwg.mxu0
        %v6355 = vadd.f32 %v6027, %v6261
        %v6356 = vadd.f32 %v6030, %v6264
        %v6357 = vadd.f32 %v6035, %v6269
        %v6358 = vadd.f32 %v6038, %v6272
        %v6359 = vadd.f32 %v6043, %v6277
        %v6360 = vadd.f32 %v6046, %v6280
        %v6361 = vadd.f32 %v6051, %v6285
        %v6362 = vadd.f32 %v6054, %v6288
        %v6363 = vadd.f32 %v6059, %v6293
        %v6364 = vadd.f32 %v6062, %v6296
        %v6365 = vadd.f32 %v6067, %v6301
        %v6366 = vadd.f32 %v6070, %v6304
        %v6367 = vadd.f32 %v6075, %v6309
        %v6368 = vadd.f32 %v6078, %v6312
        %v6369 = vadd.f32 %v6083, %v6317
        %v6370 = vadd.f32 %v6086, %v6320
        %v6371 = vadd.f32 %v6091, %v6325
        %v6372 = vadd.f32 %v6094, %v6328
        %v6373 = vadd.f32 %v6099, %v6333
        %v6374 = vadd.f32 %v6102, %v6336
        %v6375 = vadd.f32 %v6107, %v6341
        %v6376 = vadd.f32 %v6110, %v6344
        %v6377 = vadd.f32 %v6115, %v6349
        %v6378 = vadd.f32 %v6118, %v6352
        %v6379 = vld [vmem:[%s8] sm:$0x1]
        %v6381 = vlaneseq
        %v6382 = vshrl.u32 %v6381, 7
        %v6383 = vsub.s32 0, %v6382
        %v6384 = vrot.slane %v6379, %v6383
        %v6386 = vadd.f32 %v6355, %v6384
        %v6387 = vadd.f32 %v6356, %v6384
        %v6388 = vadd.f32 %v6357, %v6384
        %v6389 = vadd.f32 %v6358, %v6384
        %v6390 = vadd.f32 %v6359, %v6384
        %v6391 = vadd.f32 %v6360, %v6384
        %v6392 = vadd.f32 %v6361, %v6384
        %v6393 = vadd.f32 %v6362, %v6384
        %v6394 = vadd.f32 %v6363, %v6384
        %v6395 = vadd.f32 %v6364, %v6384
        %v6396 = vadd.f32 %v6365, %v6384
        %v6397 = vadd.f32 %v6366, %v6384
        %v6398 = vadd.f32 %v6367, %v6384
        %v6399 = vadd.f32 %v6368, %v6384
        %v6400 = vadd.f32 %v6369, %v6384
        %v6401 = vadd.f32 %v6370, %v6384
        %v6402 = vadd.f32 %v6371, %v6384
        %v6403 = vadd.f32 %v6372, %v6384
        %v6404 = vadd.f32 %v6373, %v6384
        %v6405 = vadd.f32 %v6374, %v6384
        %v6406 = vadd.f32 %v6375, %v6384
        %v6407 = vadd.f32 %v6376, %v6384
        %v6408 = vadd.f32 %v6377, %v6384
        %v6409 = vadd.f32 %v6378, %v6384
        %6410 = vst.msk [vmem:[#allocation7] sm:$0xff] %vm5628, %v6386
        %6411 = vst.msk [vmem:[#allocation7 + $0x8] sm:$0xff] %vm5628, %v6387
        %6412 = vst.msk [vmem:[#allocation7 + $0x10] sm:$0xff] %vm5628, %v6388
        %6413 = vst.msk [vmem:[#allocation7 + $0x18] sm:$0xff] %vm5628, %v6389
        %6414 = vst.msk [vmem:[#allocation7 + $0x20] sm:$0xff] %vm5628, %v6390
        %6415 = vst.msk [vmem:[#allocation7 + $0x28] sm:$0xff] %vm5628, %v6391
        %6416 = vst.msk [vmem:[#allocation7 + $0x30] sm:$0xff] %vm5628, %v6392
        %6417 = vst.msk [vmem:[#allocation7 + $0x38] sm:$0xff] %vm5628, %v6393
        %6418 = vst.msk [vmem:[#allocation7 + $0x40] sm:$0xff] %vm5628, %v6394
        %6419 = vst.msk [vmem:[#allocation7 + $0x48] sm:$0xff] %vm5628, %v6395
        %6420 = vst.msk [vmem:[#allocation7 + $0x50] sm:$0xff] %vm5628, %v6396
        %6421 = vst.msk [vmem:[#allocation7 + $0x58] sm:$0xff] %vm5628, %v6397
        %6422 = vst.msk [vmem:[#allocation7 + $0x60] sm:$0xff] %vm5628, %v6398
        %6423 = vst.msk [vmem:[#allocation7 + $0x68] sm:$0xff] %vm5628, %v6399
        %6424 = vst.msk [vmem:[#allocation7 + $0x70] sm:$0xff] %vm5628, %v6400
        %6425 = vst.msk [vmem:[#allocation7 + $0x78] sm:$0xff] %vm5628, %v6401
        %6426 = vst.msk [vmem:[#allocation7 + $0x80] sm:$0xff] %vm5628, %v6402
        %6427 = vst.msk [vmem:[#allocation7 + $0x88] sm:$0xff] %vm5628, %v6403
        %6428 = vst.msk [vmem:[#allocation7 + $0x90] sm:$0xff] %vm5628, %v6404
        %6429 = vst.msk [vmem:[#allocation7 + $0x98] sm:$0xff] %vm5628, %v6405
        %6430 = vst.msk [vmem:[#allocation7 + $0xa0] sm:$0xff] %vm5628, %v6406
        %6431 = vst.msk [vmem:[#allocation7 + $0xa8] sm:$0xff] %vm5628, %v6407
        %6432 = vst.msk [vmem:[#allocation7 + $0xb0] sm:$0xff] %vm5628, %v6408
        %6433 = vst.msk [vmem:[#allocation7 + $0xb8] sm:$0x3f] %vm5652, %v6409
        %v6434 = vld [vmem:[#allocation7] ss:$2 sm:$0xff]
        %s6435 = scalar_lea.vmem [#allocation7], 16
        %v6436 = vld [vmem:[%s6435] ss:$2 sm:$0xff]
        %s6437 = scalar_lea.vmem [#allocation7], 32
        %v6438 = vld [vmem:[%s6437] ss:$2 sm:$0xff]
        %s6439 = scalar_lea.vmem [#allocation7], 48
        %v6440 = vld [vmem:[%s6439] ss:$2 sm:$0xff]
        %s6441 = scalar_lea.vmem [#allocation7], 64
        %v6442 = vld [vmem:[%s6441] ss:$2 sm:$0xff]
        %s6443 = scalar_lea.vmem [#allocation7], 80
        %v6444 = vld [vmem:[%s6443] ss:$2 sm:$0xff]
        %s6445 = scalar_lea.vmem [#allocation7], 96
        %v6446 = vld [vmem:[%s6445] ss:$2 sm:$0xff]
        %s6447 = scalar_lea.vmem [#allocation7], 112
        %v6448 = vld [vmem:[%s6447] ss:$2 sm:$0xff]
        %s6449 = scalar_lea.vmem [#allocation7], 128
        %v6450 = vld [vmem:[%s6449] ss:$2 sm:$0xff]
        %s6451 = scalar_lea.vmem [#allocation7], 144
        %v6452 = vld [vmem:[%s6451] ss:$2 sm:$0xff]
        %s6453 = scalar_lea.vmem [#allocation7], 160
        %v6454 = vld [vmem:[%s6453] ss:$2 sm:$0xff]
        %s6455 = scalar_lea.vmem [#allocation7], 176
        %v6456 = vld [vmem:[%s6455] ss:$2 sm:$0xff]
        %s6457 = scalar_lea.vmem [#allocation7], 1
        %v6458 = vld [vmem:[%s6457] ss:$2 sm:$0xff]
        %s6459 = scalar_lea.vmem [#allocation7], 17
        %v6460 = vld [vmem:[%s6459] ss:$2 sm:$0xff]
        %s6461 = scalar_lea.vmem [#allocation7], 33
        %v6462 = vld [vmem:[%s6461] ss:$2 sm:$0xff]
        %s6463 = scalar_lea.vmem [#allocation7], 49
        %v6464 = vld [vmem:[%s6463] ss:$2 sm:$0xff]
        %s6465 = scalar_lea.vmem [#allocation7], 65
        %v6466 = vld [vmem:[%s6465] ss:$2 sm:$0xff]
        %s6467 = scalar_lea.vmem [#allocation7], 81
        %v6468 = vld [vmem:[%s6467] ss:$2 sm:$0xff]
        %s6469 = scalar_lea.vmem [#allocation7], 97
        %v6470 = vld [vmem:[%s6469] ss:$2 sm:$0xff]
        %s6471 = scalar_lea.vmem [#allocation7], 113
        %v6472 = vld [vmem:[%s6471] ss:$2 sm:$0xff]
        %s6473 = scalar_lea.vmem [#allocation7], 129
        %v6474 = vld [vmem:[%s6473] ss:$2 sm:$0xff]
        %s6475 = scalar_lea.vmem [#allocation7], 145
        %v6476 = vld [vmem:[%s6475] ss:$2 sm:$0xff]
        %s6477 = scalar_lea.vmem [#allocation7], 161
        %v6478 = vld [vmem:[%s6477] ss:$2 sm:$0xff]
        %s6479 = scalar_lea.vmem [#allocation7], 177
        %v6480 = vld [vmem:[%s6479] ss:$2 sm:$0xff]
        %v6481 = vmax.f32 %v6434, %v6458
        %v6482 = vmax.f32 %v6436, %v6460
        %v6483 = vmax.f32 %v6438, %v6462
        %v6484 = vmax.f32 %v6440, %v6464
        %v6485 = vmax.f32 %v6442, %v6466
        %v6486 = vmax.f32 %v6444, %v6468
        %v6487 = vmax.f32 %v6446, %v6470
        %v6488 = vmax.f32 %v6448, %v6472
        %v6489 = vmax.f32 %v6450, %v6474
        %v6490 = vmax.f32 %v6452, %v6476
        %v6491 = vmax.f32 %v6454, %v6478
        %v6492 = vmax.f32 %v6456, %v6480
        %v6493 = vmax.f32 %v6481, 0.0
        %v6494 = vmax.f32 %v6482, 0.0
        %v6495 = vmax.f32 %v6483, 0.0
        %v6496 = vmax.f32 %v6484, 0.0
        %v6497 = vmax.f32 %v6485, 0.0
        %v6498 = vmax.f32 %v6486, 0.0
        %v6499 = vmax.f32 %v6487, 0.0
        %v6500 = vmax.f32 %v6488, 0.0
        %v6501 = vmax.f32 %v6489, 0.0
        %v6502 = vmax.f32 %v6490, 0.0
        %v6503 = vmax.f32 %v6491, 0.0
        %v6504 = vmax.f32 %v6492, 0.0
        %6505 = vst.msk [vmem:[#allocation8] sm:$0xff] %vm5628, %v6493
        %6506 = vst.msk [vmem:[#allocation8 + $0x8] sm:$0xff] %vm5628, %v6494
        %6507 = vst.msk [vmem:[#allocation8 + $0x10] sm:$0xff] %vm5628, %v6495
        %6508 = vst.msk [vmem:[#allocation8 + $0x18] sm:$0xff] %vm5628, %v6496
        %6509 = vst.msk [vmem:[#allocation8 + $0x20] sm:$0xff] %vm5628, %v6497
        %6510 = vst.msk [vmem:[#allocation8 + $0x28] sm:$0xff] %vm5628, %v6498
        %6511 = vst.msk [vmem:[#allocation8 + $0x30] sm:$0xff] %vm5628, %v6499
        %6512 = vst.msk [vmem:[#allocation8 + $0x38] sm:$0xff] %vm5628, %v6500
        %6513 = vst.msk [vmem:[#allocation8 + $0x40] sm:$0xff] %vm5628, %v6501
        %6514 = vst.msk [vmem:[#allocation8 + $0x48] sm:$0xff] %vm5628, %v6502
        %6515 = vst.msk [vmem:[#allocation8 + $0x50] sm:$0xff] %vm5628, %v6503
        %6516 = vst.msk [vmem:[#allocation8 + $0x58] sm:$0xff] %vm5628, %v6504
        %v6517 = vld [vmem:[#allocation16] sm:$0xf]
        %v6518 = vld [vmem:[#allocation16 + $0x4] sm:$0xf]
        %v6519 = vld [vmem:[#allocation16 + $0x8] sm:$0xf]
        %v6520 = vld [vmem:[#allocation16 + $0xc] sm:$0xf]
        %v6521 = vld [vmem:[#allocation16 + $0x10] sm:$0xf]
        %v6522 = vld [vmem:[#allocation16 + $0x14] sm:$0xf]
        %v6523 = vld [vmem:[#allocation16 + $0x18] sm:$0xf]
        %v6524 = vld [vmem:[#allocation16 + $0x1c] sm:$0xf]
        %v6525 = vld [vmem:[#allocation8] sm:$0xff]
        %v6526 = vld [vmem:[#allocation8 + $0x8] sm:$0xff]
        %v6527 = vld [vmem:[#allocation8 + $0x10] sm:$0xff]
        %v6528 = vld [vmem:[#allocation8 + $0x18] sm:$0xff]
        %v6529 = vld [vmem:[#allocation8 + $0x20] sm:$0xff]
        %v6530 = vld [vmem:[#allocation8 + $0x28] sm:$0xff]
        %v6531 = vld [vmem:[#allocation8 + $0x30] sm:$0xff]
        %v6532 = vld [vmem:[#allocation8 + $0x38] sm:$0xff]
        %v6533 = vld [vmem:[#allocation8 + $0x40] sm:$0xff]
        %v6534 = vld [vmem:[#allocation8 + $0x48] sm:$0xff]
        %v6535 = vld [vmem:[#allocation8 + $0x50] sm:$0xff]
        %v6536 = vld [vmem:[#allocation8 + $0x58] sm:$0x3f]
        %v6537 = vpack.c.bf16 %v6526, %v6525
        %v6538 = vpack.c.bf16 %v6528, %v6527
        %v6539 = vpack.c.bf16 %v6530, %v6529
        %v6540 = vpack.c.bf16 %v6532, %v6531
        %v6541 = vpack.c.bf16 %v6534, %v6533
        %v6542 = vpack.c.bf16 %v6536, %v6535
        %s6543 = scalar_lea.vmem [#allocation16], 32
        %v6544 = vld [vmem:[%s6543] sm:$0xf]
        %v6545 = vld [vmem:[%s6543 + $0x4] sm:$0xf]
        %v6546 = vld [vmem:[%s6543 + $0x8] sm:$0xf]
        %v6547 = vld [vmem:[%s6543 + $0xc] sm:$0xf]
        %v6548 = vld [vmem:[%s6543 + $0x10] sm:$0xf]
        %v6549 = vld [vmem:[%s6543 + $0x14] sm:$0xf]
        %v6550 = vld [vmem:[%s6543 + $0x18] sm:$0xf]
        %v6551 = vld [vmem:[%s6543 + $0x1c] sm:$0xf]
        %v6552 = vld [vmem:[#allocation8 + $0x1] sm:$0xff]
        %v6553 = vld [vmem:[#allocation8 + $0x9] sm:$0xff]
        %v6554 = vld [vmem:[#allocation8 + $0x11] sm:$0xff]
        %v6555 = vld [vmem:[#allocation8 + $0x19] sm:$0xff]
        %v6556 = vld [vmem:[#allocation8 + $0x21] sm:$0xff]
        %v6557 = vld [vmem:[#allocation8 + $0x29] sm:$0xff]
        %v6558 = vld [vmem:[#allocation8 + $0x31] sm:$0xff]
        %v6559 = vld [vmem:[#allocation8 + $0x39] sm:$0xff]
        %v6560 = vld [vmem:[#allocation8 + $0x41] sm:$0xff]
        %v6561 = vld [vmem:[#allocation8 + $0x49] sm:$0xff]
        %v6562 = vld [vmem:[#allocation8 + $0x51] sm:$0xff]
        %v6563 = vld [vmem:[#allocation8 + $0x59] sm:$0x3f]
        %v6564 = vpack.c.bf16 %v6553, %v6552
        %v6565 = vpack.c.bf16 %v6555, %v6554
        %v6566 = vpack.c.bf16 %v6557, %v6556
        %v6567 = vpack.c.bf16 %v6559, %v6558
        %v6568 = vpack.c.bf16 %v6561, %v6560
        %v6569 = vpack.c.bf16 %v6563, %v6562
        %v6578 = vunpack.c.l.b16 %v6544
        %v6579 = vunpack.c.l.b16 %v6545
        %v6580 = vunpack.c.l.b16 %v6546
        %v6581 = vunpack.c.l.b16 %v6547
        %v6582 = vunpack.c.l.b16 %v6548
        %v6583 = vunpack.c.l.b16 %v6549
        %v6584 = vunpack.c.l.b16 %v6550
        %v6585 = vunpack.c.l.b16 %v6551
        %v6586 = vpack.c.b16 %v6579, %v6578
        %v6587 = vpack.c.b16 %v6581, %v6580
        %v6588 = vpack.c.b16 %v6583, %v6582
        %v6589 = vpack.c.b16 %v6585, %v6584
        %v6595 = vsel %vm5628, %v6564, 0
        %v6598 = vsel %vm5628, %v6565, 0
        %v6601 = vsel %vm5628, %v6566, 0
        %v6604 = vsel %vm5628, %v6567, 0
        %v6607 = vsel %vm5628, %v6568, 0
        %v6610 = vsel %vm5628, %v6569, 0
        %6612 = vmatprep.subr.bf16.mxu0 0
        %6613 = vmatpush1.bf16.msra.mxu0 %v6586
        %6614 = vmatprep.subr.bf16.mxu0 0
        %6615 = vmatpush1.bf16.msra.mxu0 %v6587
        %6616 = vmatprep.subr.bf16.mxu0 0
        %6617 = vmatpush1.bf16.msra.mxu0 %v6588
        %6618 = vmatprep.subr.bf16.mxu0 0
        %6619 = vmatpush1.bf16.msra.mxu0 %v6589
        %6620 = vmatprep.subr.bf16.mxu0 0
        %6621 = vmatpush1.bf16.msra.mxu0 0
        %6622 = vmatprep.subr.bf16.mxu0 0
        %6623 = vmatpush1.bf16.msra.mxu0 0
        %6624 = vmatprep.subr.bf16.mxu0 0
        %6625 = vmatpush1.bf16.msra.mxu0 0
        %6626 = vmatprep.subr.bf16.mxu0 0
        %6627 = vmatpush1.bf16.msra.mxu0 0
        %6628 = vmatprep.subr.bf16.mxu0 0
        %6629 = vmatpush1.bf16.msra.mxu0 0
        %6630 = vmatprep.subr.bf16.mxu0 0
        %6631 = vmatpush1.bf16.msra.mxu0 0
        %6632 = vmatprep.subr.bf16.mxu0 0
        %6633 = vmatpush1.bf16.msra.mxu0 0
        %6634 = vmatprep.subr.bf16.mxu0 0
        %6635 = vmatpush1.bf16.msra.mxu0 0
        %6636 = vmatprep.subr.bf16.mxu0 0
        %6637 = vmatpush1.bf16.msra.mxu0 0
        %6638 = vmatprep.subr.bf16.mxu0 0
        %6639 = vmatpush1.bf16.msra.mxu0 0
        %6640 = vmatprep.subr.bf16.mxu0 0
        %6641 = vmatpush1.bf16.msra.mxu0 0
        %6642 = vmatprep.subr.bf16.mxu0 0
        %6643 = vmatpush1.bf16.msra.mxu0 0
        %6644 = vmatprep.mubr.bf16.mxu0 0
        %6645 = vmatmul.mubr.bf16.gmra.mrb[0].mxu0 %v6595
        %v6646 = vpop.f32.mrb[0].mxu0
        %v6647 = vadd.f32 0.0, %v6646
        %v6648 = vpop.f32.mrb[0].mxu0
        %v6649 = vpop.f32.mrb[0].mxu0
        %v6650 = vadd.f32 0.0, %v6649
        %v6651 = vpop.f32.mrb[0].mxu0
        %6652 = vmatprep.mubr.bf16.mxu0 0
        %6653 = vmatmul.mubr.bf16.gmra.mrb[0].mxu0 %v6598
        %v6654 = vpop.f32.mrb[0].mxu0
        %v6655 = vadd.f32 0.0, %v6654
        %v6656 = vpop.f32.mrb[0].mxu0
        %v6657 = vpop.f32.mrb[0].mxu0
        %v6658 = vadd.f32 0.0, %v6657
        %v6659 = vpop.f32.mrb[0].mxu0
        %6660 = vmatprep.mubr.bf16.mxu0 0
        %6661 = vmatmul.mubr.bf16.gmra.mrb[0].mxu0 %v6601
        %v6662 = vpop.f32.mrb[0].mxu0
        %v6663 = vadd.f32 0.0, %v6662
        %v6664 = vpop.f32.mrb[0].mxu0
        %v6665 = vpop.f32.mrb[0].mxu0
        %v6666 = vadd.f32 0.0, %v6665
        %v6667 = vpop.f32.mrb[0].mxu0
        %6668 = vmatprep.mubr.bf16.mxu0 0
        %6669 = vmatmul.mubr.bf16.gmra.mrb[0].mxu0 %v6604
        %v6670 = vpop.f32.mrb[0].mxu0
        %v6671 = vadd.f32 0.0, %v6670
        %v6672 = vpop.f32.mrb[0].mxu0
        %v6673 = vpop.f32.mrb[0].mxu0
        %v6674 = vadd.f32 0.0, %v6673
        %v6675 = vpop.f32.mrb[0].mxu0
        %6676 = vmatprep.mubr.bf16.mxu0 0
        %6677 = vmatmul.mubr.bf16.gmra.mrb[0].mxu0 %v6607
        %v6678 = vpop.f32.mrb[0].mxu0
        %v6679 = vadd.f32 0.0, %v6678
        %v6680 = vpop.f32.mrb[0].mxu0
        %v6681 = vpop.f32.mrb[0].mxu0
        %v6682 = vadd.f32 0.0, %v6681
        %v6683 = vpop.f32.mrb[0].mxu0
        %6684 = vmatprep.mubr.bf16.mxu0 0
        %6685 = vmatmul.mubr.bf16.gmra.mrb[0].mxu0 %v6610
        %v6686 = vpop.f32.mrb[0].mxu0
        %v6687 = vadd.f32 0.0, %v6686
        %v6688 = vpop.f32.mrb[0].mxu0
        %v6689 = vpop.f32.mrb[0].mxu0
        %v6690 = vadd.f32 0.0, %v6689
        %v6691 = vpop.f32.mrb[0].mxu0
        %6692 = vdwg.mxu0
        %v6701 = vunpack.c.l.b16 %v6517
        %v6702 = vunpack.c.l.b16 %v6518
        %v6703 = vunpack.c.l.b16 %v6519
        %v6704 = vunpack.c.l.b16 %v6520
        %v6705 = vunpack.c.l.b16 %v6521
        %v6706 = vunpack.c.l.b16 %v6522
        %v6707 = vunpack.c.l.b16 %v6523
        %v6708 = vunpack.c.l.b16 %v6524
        %v6709 = vpack.c.b16 %v6702, %v6701
        %v6710 = vpack.c.b16 %v6704, %v6703
        %v6711 = vpack.c.b16 %v6706, %v6705
        %v6712 = vpack.c.b16 %v6708, %v6707
        %v6718 = vsel %vm5628, %v6537, 0
        %v6721 = vsel %vm5628, %v6538, 0
        %v6724 = vsel %vm5628, %v6539, 0
        %v6727 = vsel %vm5628, %v6540, 0
        %v6730 = vsel %vm5628, %v6541, 0
        %v6733 = vsel %vm5628, %v6542, 0
        %6735 = vmatprep.subr.bf16.mxu0 0
        %6736 = vmatpush1.bf16.msra.mxu0 %v6709
        %6737 = vmatprep.subr.bf16.mxu0 0
        %6738 = vmatpush1.bf16.msra.mxu0 %v6710
        %6739 = vmatprep.subr.bf16.mxu0 0
        %6740 = vmatpush1.bf16.msra.mxu0 %v6711
        %6741 = vmatprep.subr.bf16.mxu0 0
        %6742 = vmatpush1.bf16.msra.mxu0 %v6712
        %6743 = vmatprep.subr.bf16.mxu0 0
        %6744 = vmatpush1.bf16.msra.mxu0 0
        %6745 = vmatprep.subr.bf16.mxu0 0
        %6746 = vmatpush1.bf16.msra.mxu0 0
        %6747 = vmatprep.subr.bf16.mxu0 0
        %6748 = vmatpush1.bf16.msra.mxu0 0
        %6749 = vmatprep.subr.bf16.mxu0 0
        %6750 = vmatpush1.bf16.msra.mxu0 0
        %6751 = vmatprep.subr.bf16.mxu0 0
        %6752 = vmatpush1.bf16.msra.mxu0 0
        %6753 = vmatprep.subr.bf16.mxu0 0
        %6754 = vmatpush1.bf16.msra.mxu0 0
        %6755 = vmatprep.subr.bf16.mxu0 0
        %6756 = vmatpush1.bf16.msra.mxu0 0
        %6757 = vmatprep.subr.bf16.mxu0 0
        %6758 = vmatpush1.bf16.msra.mxu0 0
        %6759 = vmatprep.subr.bf16.mxu0 0
        %6760 = vmatpush1.bf16.msra.mxu0 0
        %6761 = vmatprep.subr.bf16.mxu0 0
        %6762 = vmatpush1.bf16.msra.mxu0 0
        %6763 = vmatprep.subr.bf16.mxu0 0
        %6764 = vmatpush1.bf16.msra.mxu0 0
        %6765 = vmatprep.subr.bf16.mxu0 0
        %6766 = vmatpush1.bf16.msra.mxu0 0
        %6767 = vmatprep.mubr.bf16.mxu0 0
        %6768 = vmatmul.mubr.bf16.gmra.mrb[0].mxu0 %v6718
        %v6769 = vpop.f32.mrb[0].mxu0
        %v6770 = vadd.f32 %v6647, %v6769
        %v6771 = vpop.f32.mrb[0].mxu0
        %v6772 = vpop.f32.mrb[0].mxu0
        %v6773 = vadd.f32 %v6650, %v6772
        %v6774 = vpop.f32.mrb[0].mxu0
        %6775 = vmatprep.mubr.bf16.mxu0 0
        %6776 = vmatmul.mubr.bf16.gmra.mrb[0].mxu0 %v6721
        %v6777 = vpop.f32.mrb[0].mxu0
        %v6778 = vadd.f32 %v6655, %v6777
        %v6779 = vpop.f32.mrb[0].mxu0
        %v6780 = vpop.f32.mrb[0].mxu0
        %v6781 = vadd.f32 %v6658, %v6780
        %v6782 = vpop.f32.mrb[0].mxu0
        %6783 = vmatprep.mubr.bf16.mxu0 0
        %6784 = vmatmul.mubr.bf16.gmra.mrb[0].mxu0 %v6724
        %v6785 = vpop.f32.mrb[0].mxu0
        %v6786 = vadd.f32 %v6663, %v6785
        %v6787 = vpop.f32.mrb[0].mxu0
        %v6788 = vpop.f32.mrb[0].mxu0
        %v6789 = vadd.f32 %v6666, %v6788
        %v6790 = vpop.f32.mrb[0].mxu0
        %6791 = vmatprep.mubr.bf16.mxu0 0
        %6792 = vmatmul.mubr.bf16.gmra.mrb[0].mxu0 %v6727
        %v6793 = vpop.f32.mrb[0].mxu0
        %v6794 = vadd.f32 %v6671, %v6793
        %v6795 = vpop.f32.mrb[0].mxu0
        %v6796 = vpop.f32.mrb[0].mxu0
        %v6797 = vadd.f32 %v6674, %v6796
        %v6798 = vpop.f32.mrb[0].mxu0
        %6799 = vmatprep.mubr.bf16.mxu0 0
        %6800 = vmatmul.mubr.bf16.gmra.mrb[0].mxu0 %v6730
        %v6801 = vpop.f32.mrb[0].mxu0
        %v6802 = vadd.f32 %v6679, %v6801
        %v6803 = vpop.f32.mrb[0].mxu0
        %v6804 = vpop.f32.mrb[0].mxu0
        %v6805 = vadd.f32 %v6682, %v6804
        %v6806 = vpop.f32.mrb[0].mxu0
        %6807 = vmatprep.mubr.bf16.mxu0 0
        %6808 = vmatmul.mubr.bf16.gmra.mrb[0].mxu0 %v6733
        %v6809 = vpop.f32.mrb[0].mxu0
        %v6810 = vadd.f32 %v6687, %v6809
        %v6811 = vpop.f32.mrb[0].mxu0
        %v6812 = vpop.f32.mrb[0].mxu0
        %v6813 = vadd.f32 %v6690, %v6812
        %v6814 = vpop.f32.mrb[0].mxu0
        %6815 = vdwg.mxu0
        %s6816 = scalar_lea.vmem [#allocation16], 64
        %v6817 = vld [vmem:[%s6816] sm:$0xf]
        %v6818 = vld [vmem:[%s6816 + $0x4] sm:$0xf]
        %v6819 = vld [vmem:[%s6816 + $0x8] sm:$0xf]
        %v6820 = vld [vmem:[%s6816 + $0xc] sm:$0xf]
        %v6821 = vld [vmem:[%s6816 + $0x10] sm:$0xf]
        %v6822 = vld [vmem:[%s6816 + $0x14] sm:$0xf]
        %v6823 = vld [vmem:[%s6816 + $0x18] sm:$0xf]
        %v6824 = vld [vmem:[%s6816 + $0x1c] sm:$0xf]
        %v6825 = vld [vmem:[#allocation8 + $0x2] sm:$0xff]
        %v6826 = vld [vmem:[#allocation8 + $0xa] sm:$0xff]
        %v6827 = vld [vmem:[#allocation8 + $0x12] sm:$0xff]
        %v6828 = vld [vmem:[#allocation8 + $0x1a] sm:$0xff]
        %v6829 = vld [vmem:[#allocation8 + $0x22] sm:$0xff]
        %v6830 = vld [vmem:[#allocation8 + $0x2a] sm:$0xff]
        %v6831 = vld [vmem:[#allocation8 + $0x32] sm:$0xff]
        %v6832 = vld [vmem:[#allocation8 + $0x3a] sm:$0xff]
        %v6833 = vld [vmem:[#allocation8 + $0x42] sm:$0xff]
        %v6834 = vld [vmem:[#allocation8 + $0x4a] sm:$0xff]
        %v6835 = vld [vmem:[#allocation8 + $0x52] sm:$0xff]
        %v6836 = vld [vmem:[#allocation8 + $0x5a] sm:$0x3f]
        %v6837 = vpack.c.bf16 %v6826, %v6825
        %v6838 = vpack.c.bf16 %v6828, %v6827
        %v6839 = vpack.c.bf16 %v6830, %v6829
        %v6840 = vpack.c.bf16 %v6832, %v6831
        %v6841 = vpack.c.bf16 %v6834, %v6833
        %v6842 = vpack.c.bf16 %v6836, %v6835
        %v6851 = vunpack.c.l.b16 %v6817
        %v6852 = vunpack.c.l.b16 %v6818
        %v6853 = vunpack.c.l.b16 %v6819
        %v6854 = vunpack.c.l.b16 %v6820
        %v6855 = vunpack.c.l.b16 %v6821
        %v6856 = vunpack.c.l.b16 %v6822
        %v6857 = vunpack.c.l.b16 %v6823
        %v6858 = vunpack.c.l.b16 %v6824
        %v6859 = vpack.c.b16 %v6852, %v6851
        %v6860 = vpack.c.b16 %v6854, %v6853
        %v6861 = vpack.c.b16 %v6856, %v6855
        %v6862 = vpack.c.b16 %v6858, %v6857
        %v6868 = vsel %vm5628, %v6837, 0
        %v6871 = vsel %vm5628, %v6838, 0
        %v6874 = vsel %vm5628, %v6839, 0
        %v6877 = vsel %vm5628, %v6840, 0
        %v6880 = vsel %vm5628, %v6841, 0
        %v6883 = vsel %vm5628, %v6842, 0
        %6885 = vmatprep.subr.bf16.mxu0 0
        %6886 = vmatpush1.bf16.msra.mxu0 %v6859
        %6887 = vmatprep.subr.bf16.mxu0 0
        %6888 = vmatpush1.bf16.msra.mxu0 %v6860
        %6889 = vmatprep.subr.bf16.mxu0 0
        %6890 = vmatpush1.bf16.msra.mxu0 %v6861
        %6891 = vmatprep.subr.bf16.mxu0 0
        %6892 = vmatpush1.bf16.msra.mxu0 %v6862
        %6893 = vmatprep.subr.bf16.mxu0 0
        %6894 = vmatpush1.bf16.msra.mxu0 0
        %6895 = vmatprep.subr.bf16.mxu0 0
        %6896 = vmatpush1.bf16.msra.mxu0 0
        %6897 = vmatprep.subr.bf16.mxu0 0
        %6898 = vmatpush1.bf16.msra.mxu0 0
        %6899 = vmatprep.subr.bf16.mxu0 0
        %6900 = vmatpush1.bf16.msra.mxu0 0
        %6901 = vmatprep.subr.bf16.mxu0 0
        %6902 = vmatpush1.bf16.msra.mxu0 0
        %6903 = vmatprep.subr.bf16.mxu0 0
        %6904 = vmatpush1.bf16.msra.mxu0 0
        %6905 = vmatprep.subr.bf16.mxu0 0
        %6906 = vmatpush1.bf16.msra.mxu0 0
        %6907 = vmatprep.subr.bf16.mxu0 0
        %6908 = vmatpush1.bf16.msra.mxu0 0
        %6909 = vmatprep.subr.bf16.mxu0 0
        %6910 = vmatpush1.bf16.msra.mxu0 0
        %6911 = vmatprep.subr.bf16.mxu0 0
        %6912 = vmatpush1.bf16.msra.mxu0 0
        %6913 = vmatprep.subr.bf16.mxu0 0
        %6914 = vmatpush1.bf16.msra.mxu0 0
        %6915 = vmatprep.subr.bf16.mxu0 0
        %6916 = vmatpush1.bf16.msra.mxu0 0
        %6917 = vmatprep.mubr.bf16.mxu0 0
        %6918 = vmatmul.mubr.bf16.gmra.mrb[0].mxu0 %v6868
        %v6919 = vpop.f32.mrb[0].mxu0
        %v6920 = vadd.f32 0.0, %v6919
        %v6921 = vpop.f32.mrb[0].mxu0
        %v6922 = vpop.f32.mrb[0].mxu0
        %v6923 = vadd.f32 0.0, %v6922
        %v6924 = vpop.f32.mrb[0].mxu0
        %6925 = vmatprep.mubr.bf16.mxu0 0
        %6926 = vmatmul.mubr.bf16.gmra.mrb[0].mxu0 %v6871
        %v6927 = vpop.f32.mrb[0].mxu0
        %v6928 = vadd.f32 0.0, %v6927
        %v6929 = vpop.f32.mrb[0].mxu0
        %v6930 = vpop.f32.mrb[0].mxu0
        %v6931 = vadd.f32 0.0, %v6930
        %v6932 = vpop.f32.mrb[0].mxu0
        %6933 = vmatprep.mubr.bf16.mxu0 0
        %6934 = vmatmul.mubr.bf16.gmra.mrb[0].mxu0 %v6874
        %v6935 = vpop.f32.mrb[0].mxu0
        %v6936 = vadd.f32 0.0, %v6935
        %v6937 = vpop.f32.mrb[0].mxu0
        %v6938 = vpop.f32.mrb[0].mxu0
        %v6939 = vadd.f32 0.0, %v6938
        %v6940 = vpop.f32.mrb[0].mxu0
        %6941 = vmatprep.mubr.bf16.mxu0 0
        %6942 = vmatmul.mubr.bf16.gmra.mrb[0].mxu0 %v6877
        %v6943 = vpop.f32.mrb[0].mxu0
        %v6944 = vadd.f32 0.0, %v6943
        %v6945 = vpop.f32.mrb[0].mxu0
        %v6946 = vpop.f32.mrb[0].mxu0
        %v6947 = vadd.f32 0.0, %v6946
        %v6948 = vpop.f32.mrb[0].mxu0
        %6949 = vmatprep.mubr.bf16.mxu0 0
        %6950 = vmatmul.mubr.bf16.gmra.mrb[0].mxu0 %v6880
        %v6951 = vpop.f32.mrb[0].mxu0
        %v6952 = vadd.f32 0.0, %v6951
        %v6953 = vpop.f32.mrb[0].mxu0
        %v6954 = vpop.f32.mrb[0].mxu0
        %v6955 = vadd.f32 0.0, %v6954
        %v6956 = vpop.f32.mrb[0].mxu0
        %6957 = vmatprep.mubr.bf16.mxu0 0
        %6958 = vmatmul.mubr.bf16.gmra.mrb[0].mxu0 %v6883
        %v6959 = vpop.f32.mrb[0].mxu0
        %v6960 = vadd.f32 0.0, %v6959
        %v6961 = vpop.f32.mrb[0].mxu0
        %v6962 = vpop.f32.mrb[0].mxu0
        %v6963 = vadd.f32 0.0, %v6962
        %v6964 = vpop.f32.mrb[0].mxu0
        %6965 = vdwg.mxu0
        %v6966 = vadd.f32 %v6770, %v6920
        %v6967 = vadd.f32 %v6773, %v6923
        %v6968 = vadd.f32 %v6778, %v6928
        %v6969 = vadd.f32 %v6781, %v6931
        %v6970 = vadd.f32 %v6786, %v6936
        %v6971 = vadd.f32 %v6789, %v6939
        %v6972 = vadd.f32 %v6794, %v6944
        %v6973 = vadd.f32 %v6797, %v6947
        %v6974 = vadd.f32 %v6802, %v6952
        %v6975 = vadd.f32 %v6805, %v6955
        %v6976 = vadd.f32 %v6810, %v6960
        %v6977 = vadd.f32 %v6813, %v6963
        %v6978 = vld [vmem:[%s10] sm:$0x1]
        %v6980 = vlaneseq
        %v6981 = vshrl.u32 %v6980, 7
        %v6982 = vsub.s32 0, %v6981
        %v6983 = vrot.slane %v6978, %v6982
        %v6985 = vadd.f32 %v6966, %v6983
        %v6986 = vadd.f32 %v6967, %v6983
        %v6987 = vadd.f32 %v6968, %v6983
        %v6988 = vadd.f32 %v6969, %v6983
        %v6989 = vadd.f32 %v6970, %v6983
        %v6990 = vadd.f32 %v6971, %v6983
        %v6991 = vadd.f32 %v6972, %v6983
        %v6992 = vadd.f32 %v6973, %v6983
        %v6993 = vadd.f32 %v6974, %v6983
        %v6994 = vadd.f32 %v6975, %v6983
        %v6995 = vadd.f32 %v6976, %v6983
        %v6996 = vadd.f32 %v6977, %v6983
        %6997 = vst [vmem:[#allocation9] sm:$0xff] %v6985
        %6998 = vst [vmem:[#allocation9 + $0x8] sm:$0xff] %v6986
        %6999 = vst [vmem:[#allocation9 + $0x10] sm:$0xff] %v6987
        %7000 = vst [vmem:[#allocation9 + $0x18] sm:$0xff] %v6988
        %7001 = vst [vmem:[#allocation9 + $0x20] sm:$0xff] %v6989
        %7002 = vst [vmem:[#allocation9 + $0x28] sm:$0xff] %v6990
        %7003 = vst [vmem:[#allocation9 + $0x30] sm:$0xff] %v6991
        %7004 = vst [vmem:[#allocation9 + $0x38] sm:$0xff] %v6992
        %7005 = vst [vmem:[#allocation9 + $0x40] sm:$0xff] %v6993
        %7006 = vst [vmem:[#allocation9 + $0x48] sm:$0xff] %v6994
        %7007 = vst [vmem:[#allocation9 + $0x50] sm:$0xff] %v6995
        %7008 = vst [vmem:[#allocation9 + $0x58] sm:$0x3f] %v6996
        %v7009 = vld [vmem:[#allocation17] sm:$0xf]
        %v7010 = vld [vmem:[#allocation17 + $0x4] sm:$0xf]
        %v7011 = vld [vmem:[#allocation17 + $0x8] sm:$0xf]
        %v7012 = vld [vmem:[#allocation17 + $0xc] sm:$0xf]
        %v7013 = vld [vmem:[#allocation17 + $0x10] sm:$0xf]
        %v7014 = vld [vmem:[#allocation17 + $0x14] sm:$0xf]
        %v7015 = vld [vmem:[#allocation17 + $0x18] sm:$0xf]
        %v7016 = vld [vmem:[#allocation17 + $0x1c] sm:$0xf]
        %v7017 = vld [vmem:[#allocation17 + $0x20] sm:$0xf]
        %v7018 = vld [vmem:[#allocation17 + $0x24] sm:$0xf]
        %v7019 = vld [vmem:[#allocation17 + $0x28] sm:$0xf]
        %v7020 = vld [vmem:[#allocation17 + $0x2c] sm:$0xf]
        %v7021 = vld [vmem:[#allocation17 + $0x30] sm:$0xf]
        %v7022 = vld [vmem:[#allocation17 + $0x34] sm:$0xf]
        %v7023 = vld [vmem:[#allocation17 + $0x38] sm:$0xf]
        %v7024 = vld [vmem:[#allocation17 + $0x3c] sm:$0xf]
        %v7025 = vld [vmem:[#allocation9] sm:$0xff]
        %v7026 = vld [vmem:[#allocation9 + $0x8] sm:$0xff]
        %v7027 = vld [vmem:[#allocation9 + $0x10] sm:$0xff]
        %v7028 = vld [vmem:[#allocation9 + $0x18] sm:$0xff]
        %v7029 = vld [vmem:[#allocation9 + $0x20] sm:$0xff]
        %v7030 = vld [vmem:[#allocation9 + $0x28] sm:$0xff]
        %v7031 = vld [vmem:[#allocation9 + $0x30] sm:$0xff]
        %v7032 = vld [vmem:[#allocation9 + $0x38] sm:$0xff]
        %v7033 = vld [vmem:[#allocation9 + $0x40] sm:$0xff]
        %v7034 = vld [vmem:[#allocation9 + $0x48] sm:$0xff]
        %v7035 = vld [vmem:[#allocation9 + $0x50] sm:$0xff]
        %v7036 = vld [vmem:[#allocation9 + $0x58] sm:$0x3f]
        %v7037 = vpack.c.bf16 %v7026, %v7025
        %v7038 = vpack.c.bf16 %v7028, %v7027
        %v7039 = vpack.c.bf16 %v7030, %v7029
        %v7040 = vpack.c.bf16 %v7032, %v7031
        %v7041 = vpack.c.bf16 %v7034, %v7033
        %v7042 = vpack.c.bf16 %v7036, %v7035
        %s7043 = scalar_lea.vmem [#allocation17], 64
        %v7044 = vld [vmem:[%s7043] sm:$0xf]
        %v7045 = vld [vmem:[%s7043 + $0x4] sm:$0xf]
        %v7046 = vld [vmem:[%s7043 + $0x8] sm:$0xf]
        %v7047 = vld [vmem:[%s7043 + $0xc] sm:$0xf]
        %v7048 = vld [vmem:[%s7043 + $0x10] sm:$0xf]
        %v7049 = vld [vmem:[%s7043 + $0x14] sm:$0xf]
        %v7050 = vld [vmem:[%s7043 + $0x18] sm:$0xf]
        %v7051 = vld [vmem:[%s7043 + $0x1c] sm:$0xf]
        %v7052 = vld [vmem:[%s7043 + $0x20] sm:$0xf]
        %v7053 = vld [vmem:[%s7043 + $0x24] sm:$0xf]
        %v7054 = vld [vmem:[%s7043 + $0x28] sm:$0xf]
        %v7055 = vld [vmem:[%s7043 + $0x2c] sm:$0xf]
        %v7056 = vld [vmem:[%s7043 + $0x30] sm:$0xf]
        %v7057 = vld [vmem:[%s7043 + $0x34] sm:$0xf]
        %v7058 = vld [vmem:[%s7043 + $0x38] sm:$0xf]
        %v7059 = vld [vmem:[%s7043 + $0x3c] sm:$0xf]
        %v7060 = vld [vmem:[#allocation9 + $0x1] sm:$0xff]
        %v7061 = vld [vmem:[#allocation9 + $0x9] sm:$0xff]
        %v7062 = vld [vmem:[#allocation9 + $0x11] sm:$0xff]
        %v7063 = vld [vmem:[#allocation9 + $0x19] sm:$0xff]
        %v7064 = vld [vmem:[#allocation9 + $0x21] sm:$0xff]
        %v7065 = vld [vmem:[#allocation9 + $0x29] sm:$0xff]
        %v7066 = vld [vmem:[#allocation9 + $0x31] sm:$0xff]
        %v7067 = vld [vmem:[#allocation9 + $0x39] sm:$0xff]
        %v7068 = vld [vmem:[#allocation9 + $0x41] sm:$0xff]
        %v7069 = vld [vmem:[#allocation9 + $0x49] sm:$0xff]
        %v7070 = vld [vmem:[#allocation9 + $0x51] sm:$0xff]
        %v7071 = vld [vmem:[#allocation9 + $0x59] sm:$0x3f]
        %v7072 = vpack.c.bf16 %v7061, %v7060
        %v7073 = vpack.c.bf16 %v7063, %v7062
        %v7074 = vpack.c.bf16 %v7065, %v7064
        %v7075 = vpack.c.bf16 %v7067, %v7066
        %v7076 = vpack.c.bf16 %v7069, %v7068
        %v7077 = vpack.c.bf16 %v7071, %v7070
        %v7094 = vunpack.c.l.b16 %v7044
        %v7095 = vunpack.c.l.b16 %v7045
        %v7096 = vunpack.c.l.b16 %v7046
        %v7097 = vunpack.c.l.b16 %v7047
        %v7098 = vunpack.c.l.b16 %v7048
        %v7099 = vunpack.c.l.b16 %v7049
        %v7100 = vunpack.c.l.b16 %v7050
        %v7101 = vunpack.c.l.b16 %v7051
        %v7102 = vunpack.c.l.b16 %v7052
        %v7103 = vunpack.c.l.b16 %v7053
        %v7104 = vunpack.c.l.b16 %v7054
        %v7105 = vunpack.c.l.b16 %v7055
        %v7106 = vunpack.c.l.b16 %v7056
        %v7107 = vunpack.c.l.b16 %v7057
        %v7108 = vunpack.c.l.b16 %v7058
        %v7109 = vunpack.c.l.b16 %v7059
        %v7110 = vpack.c.b16 %v7095, %v7094
        %v7111 = vpack.c.b16 %v7097, %v7096
        %v7112 = vpack.c.b16 %v7099, %v7098
        %v7113 = vpack.c.b16 %v7101, %v7100
        %v7114 = vpack.c.b16 %v7103, %v7102
        %v7115 = vpack.c.b16 %v7105, %v7104
        %v7116 = vpack.c.b16 %v7107, %v7106
        %v7117 = vpack.c.b16 %v7109, %v7108
        %7126 = vmatprep.subr.bf16.mxu0 0
        %7127 = vmatpush1.bf16.msra.mxu0 %v7110
        %7128 = vmatprep.subr.bf16.mxu0 0
        %7129 = vmatpush1.bf16.msra.mxu0 %v7111
        %7130 = vmatprep.subr.bf16.mxu0 0
        %7131 = vmatpush1.bf16.msra.mxu0 %v7112
        %7132 = vmatprep.subr.bf16.mxu0 0
        %7133 = vmatpush1.bf16.msra.mxu0 %v7113
        %7134 = vmatprep.subr.bf16.mxu0 0
        %7135 = vmatpush1.bf16.msra.mxu0 %v7114
        %7136 = vmatprep.subr.bf16.mxu0 0
        %7137 = vmatpush1.bf16.msra.mxu0 %v7115
        %7138 = vmatprep.subr.bf16.mxu0 0
        %7139 = vmatpush1.bf16.msra.mxu0 %v7116
        %7140 = vmatprep.subr.bf16.mxu0 0
        %7141 = vmatpush1.bf16.msra.mxu0 %v7117
        %7142 = vmatprep.subr.bf16.mxu0 0
        %7143 = vmatpush1.bf16.msra.mxu0 0
        %7144 = vmatprep.subr.bf16.mxu0 0
        %7145 = vmatpush1.bf16.msra.mxu0 0
        %7146 = vmatprep.subr.bf16.mxu0 0
        %7147 = vmatpush1.bf16.msra.mxu0 0
        %7148 = vmatprep.subr.bf16.mxu0 0
        %7149 = vmatpush1.bf16.msra.mxu0 0
        %7150 = vmatprep.subr.bf16.mxu0 0
        %7151 = vmatpush1.bf16.msra.mxu0 0
        %7152 = vmatprep.subr.bf16.mxu0 0
        %7153 = vmatpush1.bf16.msra.mxu0 0
        %7154 = vmatprep.subr.bf16.mxu0 0
        %7155 = vmatpush1.bf16.msra.mxu0 0
        %7156 = vmatprep.subr.bf16.mxu0 0
        %7157 = vmatpush1.bf16.msra.mxu0 0
        %7158 = vmatprep.mubr.bf16.mxu0 0
        %7159 = vmatmul.mubr.bf16.gmra.mrb[0].mxu0 %v7072
        %v7160 = vpop.f32.mrb[0].mxu0
        %v7161 = vadd.f32 0.0, %v7160
        %v7162 = vpop.f32.mrb[0].mxu0
        %v7163 = vpop.f32.mrb[0].mxu0
        %v7164 = vadd.f32 0.0, %v7163
        %v7165 = vpop.f32.mrb[0].mxu0
        %7166 = vmatprep.mubr.bf16.mxu0 0
        %7167 = vmatmul.mubr.bf16.gmra.mrb[0].mxu0 %v7073
        %v7168 = vpop.f32.mrb[0].mxu0
        %v7169 = vadd.f32 0.0, %v7168
        %v7170 = vpop.f32.mrb[0].mxu0
        %v7171 = vpop.f32.mrb[0].mxu0
        %v7172 = vadd.f32 0.0, %v7171
        %v7173 = vpop.f32.mrb[0].mxu0
        %7174 = vmatprep.mubr.bf16.mxu0 0
        %7175 = vmatmul.mubr.bf16.gmra.mrb[0].mxu0 %v7074
        %v7176 = vpop.f32.mrb[0].mxu0
        %v7177 = vadd.f32 0.0, %v7176
        %v7178 = vpop.f32.mrb[0].mxu0
        %v7179 = vpop.f32.mrb[0].mxu0
        %v7180 = vadd.f32 0.0, %v7179
        %v7181 = vpop.f32.mrb[0].mxu0
        %7182 = vmatprep.mubr.bf16.mxu0 0
        %7183 = vmatmul.mubr.bf16.gmra.mrb[0].mxu0 %v7075
        %v7184 = vpop.f32.mrb[0].mxu0
        %v7185 = vadd.f32 0.0, %v7184
        %v7186 = vpop.f32.mrb[0].mxu0
        %v7187 = vpop.f32.mrb[0].mxu0
        %v7188 = vadd.f32 0.0, %v7187
        %v7189 = vpop.f32.mrb[0].mxu0
        %7190 = vmatprep.mubr.bf16.mxu0 0
        %7191 = vmatmul.mubr.bf16.gmra.mrb[0].mxu0 %v7076
        %v7192 = vpop.f32.mrb[0].mxu0
        %v7193 = vadd.f32 0.0, %v7192
        %v7194 = vpop.f32.mrb[0].mxu0
        %v7195 = vpop.f32.mrb[0].mxu0
        %v7196 = vadd.f32 0.0, %v7195
        %v7197 = vpop.f32.mrb[0].mxu0
        %7198 = vmatprep.mubr.bf16.mxu0 0
        %7199 = vmatmul.mubr.bf16.gmra.mrb[0].mxu0 %v7077
        %v7200 = vpop.f32.mrb[0].mxu0
        %v7201 = vadd.f32 0.0, %v7200
        %v7202 = vpop.f32.mrb[0].mxu0
        %v7203 = vpop.f32.mrb[0].mxu0
        %v7204 = vadd.f32 0.0, %v7203
        %v7205 = vpop.f32.mrb[0].mxu0
        %7206 = vdwg.mxu0
        %v7223 = vunpack.c.l.b16 %v7009
        %v7224 = vunpack.c.l.b16 %v7010
        %v7225 = vunpack.c.l.b16 %v7011
        %v7226 = vunpack.c.l.b16 %v7012
        %v7227 = vunpack.c.l.b16 %v7013
        %v7228 = vunpack.c.l.b16 %v7014
        %v7229 = vunpack.c.l.b16 %v7015
        %v7230 = vunpack.c.l.b16 %v7016
        %v7231 = vunpack.c.l.b16 %v7017
        %v7232 = vunpack.c.l.b16 %v7018
        %v7233 = vunpack.c.l.b16 %v7019
        %v7234 = vunpack.c.l.b16 %v7020
        %v7235 = vunpack.c.l.b16 %v7021
        %v7236 = vunpack.c.l.b16 %v7022
        %v7237 = vunpack.c.l.b16 %v7023
        %v7238 = vunpack.c.l.b16 %v7024
        %v7239 = vpack.c.b16 %v7224, %v7223
        %v7240 = vpack.c.b16 %v7226, %v7225
        %v7241 = vpack.c.b16 %v7228, %v7227
        %v7242 = vpack.c.b16 %v7230, %v7229
        %v7243 = vpack.c.b16 %v7232, %v7231
        %v7244 = vpack.c.b16 %v7234, %v7233
        %v7245 = vpack.c.b16 %v7236, %v7235
        %v7246 = vpack.c.b16 %v7238, %v7237
        %7255 = vmatprep.subr.bf16.mxu0 0
        %7256 = vmatpush1.bf16.msra.mxu0 %v7239
        %7257 = vmatprep.subr.bf16.mxu0 0
        %7258 = vmatpush1.bf16.msra.mxu0 %v7240
        %7259 = vmatprep.subr.bf16.mxu0 0
        %7260 = vmatpush1.bf16.msra.mxu0 %v7241
        %7261 = vmatprep.subr.bf16.mxu0 0
        %7262 = vmatpush1.bf16.msra.mxu0 %v7242
        %7263 = vmatprep.subr.bf16.mxu0 0
        %7264 = vmatpush1.bf16.msra.mxu0 %v7243
        %7265 = vmatprep.subr.bf16.mxu0 0
        %7266 = vmatpush1.bf16.msra.mxu0 %v7244
        %7267 = vmatprep.subr.bf16.mxu0 0
        %7268 = vmatpush1.bf16.msra.mxu0 %v7245
        %7269 = vmatprep.subr.bf16.mxu0 0
        %7270 = vmatpush1.bf16.msra.mxu0 %v7246
        %7271 = vmatprep.subr.bf16.mxu0 0
        %7272 = vmatpush1.bf16.msra.mxu0 0
        %7273 = vmatprep.subr.bf16.mxu0 0
        %7274 = vmatpush1.bf16.msra.mxu0 0
        %7275 = vmatprep.subr.bf16.mxu0 0
        %7276 = vmatpush1.bf16.msra.mxu0 0
        %7277 = vmatprep.subr.bf16.mxu0 0
        %7278 = vmatpush1.bf16.msra.mxu0 0
        %7279 = vmatprep.subr.bf16.mxu0 0
        %7280 = vmatpush1.bf16.msra.mxu0 0
        %7281 = vmatprep.subr.bf16.mxu0 0
        %7282 = vmatpush1.bf16.msra.mxu0 0
        %7283 = vmatprep.subr.bf16.mxu0 0
        %7284 = vmatpush1.bf16.msra.mxu0 0
        %7285 = vmatprep.subr.bf16.mxu0 0
        %7286 = vmatpush1.bf16.msra.mxu0 0
        %7287 = vmatprep.mubr.bf16.mxu0 0
        %7288 = vmatmul.mubr.bf16.gmra.mrb[0].mxu0 %v7037
        %v7289 = vpop.f32.mrb[0].mxu0
        %v7290 = vadd.f32 %v7161, %v7289
        %v7291 = vpop.f32.mrb[0].mxu0
        %v7292 = vpop.f32.mrb[0].mxu0
        %v7293 = vadd.f32 %v7164, %v7292
        %v7294 = vpop.f32.mrb[0].mxu0
        %7295 = vmatprep.mubr.bf16.mxu0 0
        %7296 = vmatmul.mubr.bf16.gmra.mrb[0].mxu0 %v7038
        %v7297 = vpop.f32.mrb[0].mxu0
        %v7298 = vadd.f32 %v7169, %v7297
        %v7299 = vpop.f32.mrb[0].mxu0
        %v7300 = vpop.f32.mrb[0].mxu0
        %v7301 = vadd.f32 %v7172, %v7300
        %v7302 = vpop.f32.mrb[0].mxu0
        %7303 = vmatprep.mubr.bf16.mxu0 0
        %7304 = vmatmul.mubr.bf16.gmra.mrb[0].mxu0 %v7039
        %v7305 = vpop.f32.mrb[0].mxu0
        %v7306 = vadd.f32 %v7177, %v7305
        %v7307 = vpop.f32.mrb[0].mxu0
        %v7308 = vpop.f32.mrb[0].mxu0
        %v7309 = vadd.f32 %v7180, %v7308
        %v7310 = vpop.f32.mrb[0].mxu0
        %7311 = vmatprep.mubr.bf16.mxu0 0
        %7312 = vmatmul.mubr.bf16.gmra.mrb[0].mxu0 %v7040
        %v7313 = vpop.f32.mrb[0].mxu0
        %v7314 = vadd.f32 %v7185, %v7313
        %v7315 = vpop.f32.mrb[0].mxu0
        %v7316 = vpop.f32.mrb[0].mxu0
        %v7317 = vadd.f32 %v7188, %v7316
        %v7318 = vpop.f32.mrb[0].mxu0
        %7319 = vmatprep.mubr.bf16.mxu0 0
        %7320 = vmatmul.mubr.bf16.gmra.mrb[0].mxu0 %v7041
        %v7321 = vpop.f32.mrb[0].mxu0
        %v7322 = vadd.f32 %v7193, %v7321
        %v7323 = vpop.f32.mrb[0].mxu0
        %v7324 = vpop.f32.mrb[0].mxu0
        %v7325 = vadd.f32 %v7196, %v7324
        %v7326 = vpop.f32.mrb[0].mxu0
        %7327 = vmatprep.mubr.bf16.mxu0 0
        %7328 = vmatmul.mubr.bf16.gmra.mrb[0].mxu0 %v7042
        %v7329 = vpop.f32.mrb[0].mxu0
        %v7330 = vadd.f32 %v7201, %v7329
        %v7331 = vpop.f32.mrb[0].mxu0
        %v7332 = vpop.f32.mrb[0].mxu0
        %v7333 = vadd.f32 %v7204, %v7332
        %v7334 = vpop.f32.mrb[0].mxu0
        %7335 = vdwg.mxu0
        %s7336 = scalar_lea.vmem [#allocation17], 128
        %v7337 = vld [vmem:[%s7336] sm:$0xf]
        %v7338 = vld [vmem:[%s7336 + $0x4] sm:$0xf]
        %v7339 = vld [vmem:[%s7336 + $0x8] sm:$0xf]
        %v7340 = vld [vmem:[%s7336 + $0xc] sm:$0xf]
        %v7341 = vld [vmem:[%s7336 + $0x10] sm:$0xf]
        %v7342 = vld [vmem:[%s7336 + $0x14] sm:$0xf]
        %v7343 = vld [vmem:[%s7336 + $0x18] sm:$0xf]
        %v7344 = vld [vmem:[%s7336 + $0x1c] sm:$0xf]
        %v7345 = vld [vmem:[%s7336 + $0x20] sm:$0xf]
        %v7346 = vld [vmem:[%s7336 + $0x24] sm:$0xf]
        %v7347 = vld [vmem:[%s7336 + $0x28] sm:$0xf]
        %v7348 = vld [vmem:[%s7336 + $0x2c] sm:$0xf]
        %v7349 = vld [vmem:[%s7336 + $0x30] sm:$0xf]
        %v7350 = vld [vmem:[%s7336 + $0x34] sm:$0xf]
        %v7351 = vld [vmem:[%s7336 + $0x38] sm:$0xf]
        %v7352 = vld [vmem:[%s7336 + $0x3c] sm:$0xf]
        %v7353 = vld [vmem:[#allocation9 + $0x2] sm:$0xff]
        %v7354 = vld [vmem:[#allocation9 + $0xa] sm:$0xff]
        %v7355 = vld [vmem:[#allocation9 + $0x12] sm:$0xff]
        %v7356 = vld [vmem:[#allocation9 + $0x1a] sm:$0xff]
        %v7357 = vld [vmem:[#allocation9 + $0x22] sm:$0xff]
        %v7358 = vld [vmem:[#allocation9 + $0x2a] sm:$0xff]
        %v7359 = vld [vmem:[#allocation9 + $0x32] sm:$0xff]
        %v7360 = vld [vmem:[#allocation9 + $0x3a] sm:$0xff]
        %v7361 = vld [vmem:[#allocation9 + $0x42] sm:$0xff]
        %v7362 = vld [vmem:[#allocation9 + $0x4a] sm:$0xff]
        %v7363 = vld [vmem:[#allocation9 + $0x52] sm:$0xff]
        %v7364 = vld [vmem:[#allocation9 + $0x5a] sm:$0x3f]
        %v7365 = vpack.c.bf16 %v7354, %v7353
        %v7366 = vpack.c.bf16 %v7356, %v7355
        %v7367 = vpack.c.bf16 %v7358, %v7357
        %v7368 = vpack.c.bf16 %v7360, %v7359
        %v7369 = vpack.c.bf16 %v7362, %v7361
        %v7370 = vpack.c.bf16 %v7364, %v7363
        %v7387 = vunpack.c.l.b16 %v7337
        %v7388 = vunpack.c.l.b16 %v7338
        %v7389 = vunpack.c.l.b16 %v7339
        %v7390 = vunpack.c.l.b16 %v7340
        %v7391 = vunpack.c.l.b16 %v7341
        %v7392 = vunpack.c.l.b16 %v7342
        %v7393 = vunpack.c.l.b16 %v7343
        %v7394 = vunpack.c.l.b16 %v7344
        %v7395 = vunpack.c.l.b16 %v7345
        %v7396 = vunpack.c.l.b16 %v7346
        %v7397 = vunpack.c.l.b16 %v7347
        %v7398 = vunpack.c.l.b16 %v7348
        %v7399 = vunpack.c.l.b16 %v7349
        %v7400 = vunpack.c.l.b16 %v7350
        %v7401 = vunpack.c.l.b16 %v7351
        %v7402 = vunpack.c.l.b16 %v7352
        %v7403 = vpack.c.b16 %v7388, %v7387
        %v7404 = vpack.c.b16 %v7390, %v7389
        %v7405 = vpack.c.b16 %v7392, %v7391
        %v7406 = vpack.c.b16 %v7394, %v7393
        %v7407 = vpack.c.b16 %v7396, %v7395
        %v7408 = vpack.c.b16 %v7398, %v7397
        %v7409 = vpack.c.b16 %v7400, %v7399
        %v7410 = vpack.c.b16 %v7402, %v7401
        %7419 = vmatprep.subr.bf16.mxu0 0
        %7420 = vmatpush1.bf16.msra.mxu0 %v7403
        %7421 = vmatprep.subr.bf16.mxu0 0
        %7422 = vmatpush1.bf16.msra.mxu0 %v7404
        %7423 = vmatprep.subr.bf16.mxu0 0
        %7424 = vmatpush1.bf16.msra.mxu0 %v7405
        %7425 = vmatprep.subr.bf16.mxu0 0
        %7426 = vmatpush1.bf16.msra.mxu0 %v7406
        %7427 = vmatprep.subr.bf16.mxu0 0
        %7428 = vmatpush1.bf16.msra.mxu0 %v7407
        %7429 = vmatprep.subr.bf16.mxu0 0
        %7430 = vmatpush1.bf16.msra.mxu0 %v7408
        %7431 = vmatprep.subr.bf16.mxu0 0
        %7432 = vmatpush1.bf16.msra.mxu0 %v7409
        %7433 = vmatprep.subr.bf16.mxu0 0
        %7434 = vmatpush1.bf16.msra.mxu0 %v7410
        %7435 = vmatprep.subr.bf16.mxu0 0
        %7436 = vmatpush1.bf16.msra.mxu0 0
        %7437 = vmatprep.subr.bf16.mxu0 0
        %7438 = vmatpush1.bf16.msra.mxu0 0
        %7439 = vmatprep.subr.bf16.mxu0 0
        %7440 = vmatpush1.bf16.msra.mxu0 0
        %7441 = vmatprep.subr.bf16.mxu0 0
        %7442 = vmatpush1.bf16.msra.mxu0 0
        %7443 = vmatprep.subr.bf16.mxu0 0
        %7444 = vmatpush1.bf16.msra.mxu0 0
        %7445 = vmatprep.subr.bf16.mxu0 0
        %7446 = vmatpush1.bf16.msra.mxu0 0
        %7447 = vmatprep.subr.bf16.mxu0 0
        %7448 = vmatpush1.bf16.msra.mxu0 0
        %7449 = vmatprep.subr.bf16.mxu0 0
        %7450 = vmatpush1.bf16.msra.mxu0 0
        %7451 = vmatprep.mubr.bf16.mxu0 0
        %7452 = vmatmul.mubr.bf16.gmra.mrb[0].mxu0 %v7365
        %v7453 = vpop.f32.mrb[0].mxu0
        %v7454 = vadd.f32 0.0, %v7453
        %v7455 = vpop.f32.mrb[0].mxu0
        %v7456 = vpop.f32.mrb[0].mxu0
        %v7457 = vadd.f32 0.0, %v7456
        %v7458 = vpop.f32.mrb[0].mxu0
        %7459 = vmatprep.mubr.bf16.mxu0 0
        %7460 = vmatmul.mubr.bf16.gmra.mrb[0].mxu0 %v7366
        %v7461 = vpop.f32.mrb[0].mxu0
        %v7462 = vadd.f32 0.0, %v7461
        %v7463 = vpop.f32.mrb[0].mxu0
        %v7464 = vpop.f32.mrb[0].mxu0
        %v7465 = vadd.f32 0.0, %v7464
        %v7466 = vpop.f32.mrb[0].mxu0
        %7467 = vmatprep.mubr.bf16.mxu0 0
        %7468 = vmatmul.mubr.bf16.gmra.mrb[0].mxu0 %v7367
        %v7469 = vpop.f32.mrb[0].mxu0
        %v7470 = vadd.f32 0.0, %v7469
        %v7471 = vpop.f32.mrb[0].mxu0
        %v7472 = vpop.f32.mrb[0].mxu0
        %v7473 = vadd.f32 0.0, %v7472
        %v7474 = vpop.f32.mrb[0].mxu0
        %7475 = vmatprep.mubr.bf16.mxu0 0
        %7476 = vmatmul.mubr.bf16.gmra.mrb[0].mxu0 %v7368
        %v7477 = vpop.f32.mrb[0].mxu0
        %v7478 = vadd.f32 0.0, %v7477
        %v7479 = vpop.f32.mrb[0].mxu0
        %v7480 = vpop.f32.mrb[0].mxu0
        %v7481 = vadd.f32 0.0, %v7480
        %v7482 = vpop.f32.mrb[0].mxu0
        %7483 = vmatprep.mubr.bf16.mxu0 0
        %7484 = vmatmul.mubr.bf16.gmra.mrb[0].mxu0 %v7369
        %v7485 = vpop.f32.mrb[0].mxu0
        %v7486 = vadd.f32 0.0, %v7485
        %v7487 = vpop.f32.mrb[0].mxu0
        %v7488 = vpop.f32.mrb[0].mxu0
        %v7489 = vadd.f32 0.0, %v7488
        %v7490 = vpop.f32.mrb[0].mxu0
        %7491 = vmatprep.mubr.bf16.mxu0 0
        %7492 = vmatmul.mubr.bf16.gmra.mrb[0].mxu0 %v7370
        %v7493 = vpop.f32.mrb[0].mxu0
        %v7494 = vadd.f32 0.0, %v7493
        %v7495 = vpop.f32.mrb[0].mxu0
        %v7496 = vpop.f32.mrb[0].mxu0
        %v7497 = vadd.f32 0.0, %v7496
        %v7498 = vpop.f32.mrb[0].mxu0
        %7499 = vdwg.mxu0
        %v7500 = vadd.f32 %v7290, %v7454
        %v7501 = vadd.f32 %v7293, %v7457
        %v7502 = vadd.f32 %v7298, %v7462
        %v7503 = vadd.f32 %v7301, %v7465
        %v7504 = vadd.f32 %v7306, %v7470
        %v7505 = vadd.f32 %v7309, %v7473
        %v7506 = vadd.f32 %v7314, %v7478
        %v7507 = vadd.f32 %v7317, %v7481
        %v7508 = vadd.f32 %v7322, %v7486
        %v7509 = vadd.f32 %v7325, %v7489
        %v7510 = vadd.f32 %v7330, %v7494
        %v7511 = vadd.f32 %v7333, %v7497
        %v7512 = vld [vmem:[#allocation19] sm:$0x1]
        %v7514 = vlaneseq
        %v7515 = vshrl.u32 %v7514, 7
        %v7516 = vsub.s32 0, %v7515
        %v7517 = vrot.slane %v7512, %v7516
        %v7519 = vadd.f32 %v7500, %v7517
        %v7520 = vadd.f32 %v7501, %v7517
        %v7521 = vadd.f32 %v7502, %v7517
        %v7522 = vadd.f32 %v7503, %v7517
        %v7523 = vadd.f32 %v7504, %v7517
        %v7524 = vadd.f32 %v7505, %v7517
        %v7525 = vadd.f32 %v7506, %v7517
        %v7526 = vadd.f32 %v7507, %v7517
        %v7527 = vadd.f32 %v7508, %v7517
        %v7528 = vadd.f32 %v7509, %v7517
        %v7529 = vadd.f32 %v7510, %v7517
        %v7530 = vadd.f32 %v7511, %v7517
        %7531 = vst [vmem:[#allocation10] sm:$0xff] %v7519
        %7532 = vst [vmem:[#allocation10 + $0x8] sm:$0xff] %v7520
        %7533 = vst [vmem:[#allocation10 + $0x10] sm:$0xff] %v7521
        %7534 = vst [vmem:[#allocation10 + $0x18] sm:$0xff] %v7522
        %7535 = vst [vmem:[#allocation10 + $0x20] sm:$0xff] %v7523
        %7536 = vst [vmem:[#allocation10 + $0x28] sm:$0xff] %v7524
        %7537 = vst [vmem:[#allocation10 + $0x30] sm:$0xff] %v7525
        %7538 = vst [vmem:[#allocation10 + $0x38] sm:$0xff] %v7526
        %7539 = vst [vmem:[#allocation10 + $0x40] sm:$0xff] %v7527
        %7540 = vst [vmem:[#allocation10 + $0x48] sm:$0xff] %v7528
        %7541 = vst [vmem:[#allocation10 + $0x50] sm:$0xff] %v7529
        %7542 = vst [vmem:[#allocation10 + $0x58] sm:$0x3f] %v7530
        %v7543 = vld [vmem:[#allocation10] ss:$2 sm:$0xff]
        %s7544 = scalar_lea.vmem [#allocation10], 16
        %v7545 = vld [vmem:[%s7544] ss:$2 sm:$0xff]
        %s7546 = scalar_lea.vmem [#allocation10], 32
        %v7547 = vld [vmem:[%s7546] ss:$2 sm:$0xff]
        %s7548 = scalar_lea.vmem [#allocation10], 48
        %v7549 = vld [vmem:[%s7548] ss:$2 sm:$0xff]
        %s7550 = scalar_lea.vmem [#allocation10], 64
        %v7551 = vld [vmem:[%s7550] ss:$2 sm:$0xff]
        %s7552 = scalar_lea.vmem [#allocation10], 80
        %v7553 = vld [vmem:[%s7552] ss:$2 sm:$0xff]
        %s7554 = scalar_lea.vmem [#allocation10], 1
        %v7555 = vld [vmem:[%s7554] ss:$2 sm:$0xff]
        %s7556 = scalar_lea.vmem [#allocation10], 17
        %v7557 = vld [vmem:[%s7556] ss:$2 sm:$0xff]
        %s7558 = scalar_lea.vmem [#allocation10], 33
        %v7559 = vld [vmem:[%s7558] ss:$2 sm:$0xff]
        %s7560 = scalar_lea.vmem [#allocation10], 49
        %v7561 = vld [vmem:[%s7560] ss:$2 sm:$0xff]
        %s7562 = scalar_lea.vmem [#allocation10], 65
        %v7563 = vld [vmem:[%s7562] ss:$2 sm:$0xff]
        %s7564 = scalar_lea.vmem [#allocation10], 81
        %v7565 = vld [vmem:[%s7564] ss:$2 sm:$0xff]
        %v7566 = vmax.f32 %v7543, %v7555
        %v7567 = vmax.f32 %v7545, %v7557
        %v7568 = vmax.f32 %v7547, %v7559
        %v7569 = vmax.f32 %v7549, %v7561
        %v7570 = vmax.f32 %v7551, %v7563
        %v7571 = vmax.f32 %v7553, %v7565
        %v7572 = vmax.f32 %v7566, 0.0
        %v7573 = vmax.f32 %v7567, 0.0
        %v7574 = vmax.f32 %v7568, 0.0
        %v7575 = vmax.f32 %v7569, 0.0
        %v7576 = vmax.f32 %v7570, 0.0
        %v7577 = vmax.f32 %v7571, 0.0
        %7578 = vst [vmem:[#allocation11] sm:$0xff] %v7572
        %7579 = vst [vmem:[#allocation11 + $0x8] sm:$0xff] %v7573
        %7580 = vst [vmem:[#allocation11 + $0x10] sm:$0xff] %v7574
        %7581 = vst [vmem:[#allocation11 + $0x18] sm:$0xff] %v7575
        %7582 = vst [vmem:[#allocation11 + $0x20] sm:$0xff] %v7576
        %7583 = vst [vmem:[#allocation11 + $0x28] sm:$0xff] %v7577
        %v7584 = vld [vmem:[#allocation11] ss:$12 sm:$0xf]
        %s7585 = scalar_lea.vmem [#allocation11], 1
        %v7586 = vld [vmem:[%s7585] ss:$12 sm:$0xf]
        %s7587 = scalar_lea.vmem [#allocation11], 2
        %v7588 = vld [vmem:[%s7587] ss:$12 sm:$0xf]
        %s7589 = scalar_lea.vmem [#allocation11], 3
        %v7590 = vld [vmem:[%s7589] ss:$12 sm:$0xf]
        %s7591 = scalar_lea.vmem [#allocation11], 4
        %v7592 = vld [vmem:[%s7591] ss:$12 sm:$0xf]
        %s7593 = scalar_lea.vmem [#allocation11], 5
        %v7594 = vld [vmem:[%s7593] ss:$12 sm:$0xf]
        %s7595 = scalar_lea.vmem [#allocation11], 6
        %v7596 = vld [vmem:[%s7595] ss:$12 sm:$0xf]
        %s7597 = scalar_lea.vmem [#allocation11], 7
        %v7598 = vld [vmem:[%s7597] ss:$12 sm:$0xf]
        %v7599 = vld [vmem:[%s13] sm:$0xff]
        %v7600 = vld [vmem:[%s13 + $0x8] sm:$0xff]
        %v7601 = vld [vmem:[%s13 + $0x10] sm:$0xff]
        %v7602 = vld [vmem:[%s13 + $0x18] sm:$0xff]
        %v7603 = vld [vmem:[%s13 + $0x20] sm:$0xff]
        %v7604 = vld [vmem:[%s13 + $0x28] sm:$0xff]
        %v7605 = vld [vmem:[%s13 + $0x30] sm:$0xff]
        %v7606 = vld [vmem:[%s13 + $0x38] sm:$0xff]
        %v7607 = vld [vmem:[%s13 + $0x40] sm:$0xff]
        %v7608 = vld [vmem:[%s13 + $0x48] sm:$0xff]
        %v7609 = vld [vmem:[%s13 + $0x50] sm:$0xff]
        %v7610 = vld [vmem:[%s13 + $0x58] sm:$0xff]
        %v7611 = vld [vmem:[%s13 + $0x60] sm:$0xff]
        %v7612 = vld [vmem:[%s13 + $0x68] sm:$0xff]
        %v7613 = vld [vmem:[%s13 + $0x70] sm:$0xff]
        %v7614 = vld [vmem:[%s13 + $0x78] sm:$0xff]
        %v7615 = vld [vmem:[%s13 + $0x80] sm:$0xff]
        %v7616 = vld [vmem:[%s13 + $0x88] sm:$0xff]
        %v7617 = vld [vmem:[%s13 + $0x90] sm:$0xff]
        %v7618 = vld [vmem:[%s13 + $0x98] sm:$0xff]
        %v7619 = vld [vmem:[%s13 + $0xa0] sm:$0xff]
        %v7620 = vld [vmem:[%s13 + $0xa8] sm:$0xff]
        %v7621 = vld [vmem:[%s13 + $0xb0] sm:$0xff]
        %v7622 = vld [vmem:[%s13 + $0xb8] sm:$0xff]
        %v7623 = vld [vmem:[%s13 + $0xc0] sm:$0xff]
        %v7624 = vld [vmem:[%s13 + $0xc8] sm:$0xff]
        %v7625 = vld [vmem:[%s13 + $0xd0] sm:$0xff]
        %v7626 = vld [vmem:[%s13 + $0xd8] sm:$0xff]
        %v7627 = vld [vmem:[%s13 + $0xe0] sm:$0xff]
        %v7628 = vld [vmem:[%s13 + $0xe8] sm:$0xff]
        %v7629 = vld [vmem:[%s13 + $0xf0] sm:$0xff]
        %v7630 = vld [vmem:[%s13 + $0xf8] sm:$0xff]
        %v7631 = vld [vmem:[%s13 + $0x100] sm:$0xff]
        %v7632 = vld [vmem:[%s13 + $0x108] sm:$0xff]
        %v7633 = vld [vmem:[%s13 + $0x110] sm:$0xff]
        %v7634 = vld [vmem:[%s13 + $0x118] sm:$0xff]
        %v7635 = vld [vmem:[%s13 + $0x120] sm:$0xff]
        %v7636 = vld [vmem:[%s13 + $0x128] sm:$0xff]
        %v7637 = vld [vmem:[%s13 + $0x130] sm:$0xff]
        %v7638 = vld [vmem:[%s13 + $0x138] sm:$0xff]
        %v7639 = vld [vmem:[%s13 + $0x140] sm:$0xff]
        %v7640 = vld [vmem:[%s13 + $0x148] sm:$0xff]
        %v7641 = vld [vmem:[%s13 + $0x150] sm:$0xff]
        %v7642 = vld [vmem:[%s13 + $0x158] sm:$0xff]
        %v7643 = vld [vmem:[%s13 + $0x160] sm:$0xff]
        %v7644 = vld [vmem:[%s13 + $0x168] sm:$0xff]
        %v7645 = vld [vmem:[%s13 + $0x170] sm:$0xff]
        %v7646 = vld [vmem:[%s13 + $0x178] sm:$0xff]
        %v7647 = vld [vmem:[%s13 + $0x180] sm:$0xff]
        %v7648 = vld [vmem:[%s13 + $0x188] sm:$0xff]
        %v7649 = vld [vmem:[%s13 + $0x190] sm:$0xff]
        %v7650 = vld [vmem:[%s13 + $0x198] sm:$0xff]
        %v7651 = vld [vmem:[%s13 + $0x1a0] sm:$0xff]
        %v7652 = vld [vmem:[%s13 + $0x1a8] sm:$0xff]
        %v7653 = vld [vmem:[%s13 + $0x1b0] sm:$0xff]
        %v7654 = vld [vmem:[%s13 + $0x1b8] sm:$0xff]
        %v7655 = vld [vmem:[%s13 + $0x1c0] sm:$0xff]
        %v7656 = vld [vmem:[%s13 + $0x1c8] sm:$0xff]
        %v7657 = vld [vmem:[%s13 + $0x1d0] sm:$0xff]
        %v7658 = vld [vmem:[%s13 + $0x1d8] sm:$0xff]
        %v7659 = vld [vmem:[%s13 + $0x1e0] sm:$0xff]
        %v7660 = vld [vmem:[%s13 + $0x1e8] sm:$0xff]
        %v7661 = vld [vmem:[%s13 + $0x1f0] sm:$0xff]
        %v7662 = vld [vmem:[%s13 + $0x1f8] sm:$0xff]
        %v7663 = vld [vmem:[%s13 + $0x200] sm:$0xff]
        %v7664 = vld [vmem:[%s13 + $0x208] sm:$0xff]
        %v7665 = vld [vmem:[%s13 + $0x210] sm:$0xff]
        %v7666 = vld [vmem:[%s13 + $0x218] sm:$0xff]
        %v7667 = vld [vmem:[%s13 + $0x220] sm:$0xff]
        %v7668 = vld [vmem:[%s13 + $0x228] sm:$0xff]
        %v7669 = vld [vmem:[%s13 + $0x230] sm:$0xff]
        %v7670 = vld [vmem:[%s13 + $0x238] sm:$0xff]
        %v7671 = vld [vmem:[%s13 + $0x240] sm:$0xff]
        %v7672 = vld [vmem:[%s13 + $0x248] sm:$0xff]
        %v7673 = vld [vmem:[%s13 + $0x250] sm:$0xff]
        %v7674 = vld [vmem:[%s13 + $0x258] sm:$0xff]
        %v7675 = vld [vmem:[%s13 + $0x260] sm:$0xff]
        %v7676 = vld [vmem:[%s13 + $0x268] sm:$0xff]
        %v7677 = vld [vmem:[%s13 + $0x270] sm:$0xff]
        %v7678 = vld [vmem:[%s13 + $0x278] sm:$0xff]
        %v7679 = vld [vmem:[%s13 + $0x280] sm:$0xff]
        %v7680 = vld [vmem:[%s13 + $0x288] sm:$0xff]
        %v7681 = vld [vmem:[%s13 + $0x290] sm:$0xff]
        %v7682 = vld [vmem:[%s13 + $0x298] sm:$0xff]
        %v7683 = vld [vmem:[%s13 + $0x2a0] sm:$0xff]
        %v7684 = vld [vmem:[%s13 + $0x2a8] sm:$0xff]
        %v7685 = vld [vmem:[%s13 + $0x2b0] sm:$0xff]
        %v7686 = vld [vmem:[%s13 + $0x2b8] sm:$0xff]
        %v7687 = vld [vmem:[%s13 + $0x2c0] sm:$0xff]
        %v7688 = vld [vmem:[%s13 + $0x2c8] sm:$0xff]
        %v7689 = vld [vmem:[%s13 + $0x2d0] sm:$0xff]
        %v7690 = vld [vmem:[%s13 + $0x2d8] sm:$0xff]
        %v7691 = vld [vmem:[%s13 + $0x2e0] sm:$0xff]
        %v7692 = vld [vmem:[%s13 + $0x2e8] sm:$0xff]
        %v7693 = vld [vmem:[%s13 + $0x2f0] sm:$0xff]
        %v7694 = vld [vmem:[%s13 + $0x2f8] sm:$0xff]
        %v7695 = vld [vmem:[%s13 + $0x300] sm:$0xff]
        %v7696 = vld [vmem:[%s13 + $0x308] sm:$0xff]
        %v7697 = vld [vmem:[%s13 + $0x310] sm:$0xff]
        %v7698 = vld [vmem:[%s13 + $0x318] sm:$0xff]
        %v7699 = vld [vmem:[%s13 + $0x320] sm:$0xff]
        %v7700 = vld [vmem:[%s13 + $0x328] sm:$0xff]
        %v7701 = vld [vmem:[%s13 + $0x330] sm:$0xff]
        %v7702 = vld [vmem:[%s13 + $0x338] sm:$0xff]
        %v7703 = vld [vmem:[%s13 + $0x340] sm:$0xff]
        %v7704 = vld [vmem:[%s13 + $0x348] sm:$0xff]
        %v7705 = vld [vmem:[%s13 + $0x350] sm:$0xff]
        %v7706 = vld [vmem:[%s13 + $0x358] sm:$0xff]
        %v7707 = vld [vmem:[%s13 + $0x360] sm:$0xff]
        %v7708 = vld [vmem:[%s13 + $0x368] sm:$0xff]
        %v7709 = vld [vmem:[%s13 + $0x370] sm:$0xff]
        %v7710 = vld [vmem:[%s13 + $0x378] sm:$0xff]
        %v7711 = vld [vmem:[%s13 + $0x380] sm:$0xff]
        %v7712 = vld [vmem:[%s13 + $0x388] sm:$0xff]
        %v7713 = vld [vmem:[%s13 + $0x390] sm:$0xff]
        %v7714 = vld [vmem:[%s13 + $0x398] sm:$0xff]
        %v7715 = vld [vmem:[%s13 + $0x3a0] sm:$0xff]
        %v7716 = vld [vmem:[%s13 + $0x3a8] sm:$0xff]
        %v7717 = vld [vmem:[%s13 + $0x3b0] sm:$0xff]
        %v7718 = vld [vmem:[%s13 + $0x3b8] sm:$0xff]
        %v7719 = vld [vmem:[%s13 + $0x3c0] sm:$0xff]
        %v7720 = vld [vmem:[%s13 + $0x3c8] sm:$0xff]
        %v7721 = vld [vmem:[%s13 + $0x3d0] sm:$0xff]
        %v7722 = vld [vmem:[%s13 + $0x3d8] sm:$0xff]
        %v7723 = vld [vmem:[%s13 + $0x3e0] sm:$0xff]
        %v7724 = vld [vmem:[%s13 + $0x3e8] sm:$0xff]
        %v7725 = vld [vmem:[%s13 + $0x3f0] sm:$0xff]
        %v7726 = vld [vmem:[%s13 + $0x3f8] sm:$0xff]
        %v7727 = vld [vmem:[%s13 + $0x400] sm:$0xff]
        %v7728 = vld [vmem:[%s13 + $0x408] sm:$0xff]
        %v7729 = vld [vmem:[%s13 + $0x410] sm:$0xff]
        %v7730 = vld [vmem:[%s13 + $0x418] sm:$0xff]
        %v7731 = vld [vmem:[%s13 + $0x420] sm:$0xff]
        %v7732 = vld [vmem:[%s13 + $0x428] sm:$0xff]
        %v7733 = vld [vmem:[%s13 + $0x430] sm:$0xff]
        %v7734 = vld [vmem:[%s13 + $0x438] sm:$0xff]
        %v7735 = vld [vmem:[%s13 + $0x440] sm:$0xff]
        %v7736 = vld [vmem:[%s13 + $0x448] sm:$0xff]
        %v7737 = vld [vmem:[%s13 + $0x450] sm:$0xff]
        %v7738 = vld [vmem:[%s13 + $0x458] sm:$0xff]
        %v7739 = vld [vmem:[%s13 + $0x460] sm:$0xff]
        %v7740 = vld [vmem:[%s13 + $0x468] sm:$0xff]
        %v7741 = vld [vmem:[%s13 + $0x470] sm:$0xff]
        %v7742 = vld [vmem:[%s13 + $0x478] sm:$0xff]
        %v7743 = vld [vmem:[%s13 + $0x480] sm:$0xff]
        %v7744 = vld [vmem:[%s13 + $0x488] sm:$0xff]
        %v7745 = vld [vmem:[%s13 + $0x490] sm:$0xff]
        %v7746 = vld [vmem:[%s13 + $0x498] sm:$0xff]
        %v7747 = vld [vmem:[%s13 + $0x4a0] sm:$0xff]
        %v7748 = vld [vmem:[%s13 + $0x4a8] sm:$0xff]
        %v7749 = vld [vmem:[%s13 + $0x4b0] sm:$0xff]
        %v7750 = vld [vmem:[%s13 + $0x4b8] sm:$0xff]
        %v7751 = vld [vmem:[%s13 + $0x4c0] sm:$0xff]
        %v7752 = vld [vmem:[%s13 + $0x4c8] sm:$0xff]
        %v7753 = vld [vmem:[%s13 + $0x4d0] sm:$0xff]
        %v7754 = vld [vmem:[%s13 + $0x4d8] sm:$0xff]
        %v7755 = vld [vmem:[%s13 + $0x4e0] sm:$0xff]
        %v7756 = vld [vmem:[%s13 + $0x4e8] sm:$0xff]
        %v7757 = vld [vmem:[%s13 + $0x4f0] sm:$0xff]
        %v7758 = vld [vmem:[%s13 + $0x4f8] sm:$0xff]
        %v7759 = vld [vmem:[%s13 + $0x500] sm:$0xff]
        %v7760 = vld [vmem:[%s13 + $0x508] sm:$0xff]
        %v7761 = vld [vmem:[%s13 + $0x510] sm:$0xff]
        %v7762 = vld [vmem:[%s13 + $0x518] sm:$0xff]
        %v7763 = vld [vmem:[%s13 + $0x520] sm:$0xff]
        %v7764 = vld [vmem:[%s13 + $0x528] sm:$0xff]
        %v7765 = vld [vmem:[%s13 + $0x530] sm:$0xff]
        %v7766 = vld [vmem:[%s13 + $0x538] sm:$0xff]
        %v7767 = vld [vmem:[%s13 + $0x540] sm:$0xff]
        %v7768 = vld [vmem:[%s13 + $0x548] sm:$0xff]
        %v7769 = vld [vmem:[%s13 + $0x550] sm:$0xff]
        %v7770 = vld [vmem:[%s13 + $0x558] sm:$0xff]
        %v7771 = vld [vmem:[%s13 + $0x560] sm:$0xff]
        %v7772 = vld [vmem:[%s13 + $0x568] sm:$0xff]
        %v7773 = vld [vmem:[%s13 + $0x570] sm:$0xff]
        %v7774 = vld [vmem:[%s13 + $0x578] sm:$0xff]
        %v7775 = vld [vmem:[%s13 + $0x580] sm:$0xff]
        %v7776 = vld [vmem:[%s13 + $0x588] sm:$0xff]
        %v7777 = vld [vmem:[%s13 + $0x590] sm:$0xff]
        %v7778 = vld [vmem:[%s13 + $0x598] sm:$0xff]
        %v7779 = vld [vmem:[%s13 + $0x5a0] sm:$0xff]
        %v7780 = vld [vmem:[%s13 + $0x5a8] sm:$0xff]
        %v7781 = vld [vmem:[%s13 + $0x5b0] sm:$0xff]
        %v7782 = vld [vmem:[%s13 + $0x5b8] sm:$0xff]
        %v7783 = vld [vmem:[%s13 + $0x5c0] sm:$0xff]
        %v7784 = vld [vmem:[%s13 + $0x5c8] sm:$0xff]
        %v7785 = vld [vmem:[%s13 + $0x5d0] sm:$0xff]
        %v7786 = vld [vmem:[%s13 + $0x5d8] sm:$0xff]
        %v7787 = vld [vmem:[%s13 + $0x5e0] sm:$0xff]
        %v7788 = vld [vmem:[%s13 + $0x5e8] sm:$0xff]
        %v7789 = vld [vmem:[%s13 + $0x5f0] sm:$0xff]
        %v7790 = vld [vmem:[%s13 + $0x5f8] sm:$0xff]
        %v7791 = vld [vmem:[%s13 + $0x600] sm:$0xff]
        %v7792 = vld [vmem:[%s13 + $0x608] sm:$0xff]
        %v7793 = vld [vmem:[%s13 + $0x610] sm:$0xff]
        %v7794 = vld [vmem:[%s13 + $0x618] sm:$0xff]
        %v7795 = vld [vmem:[%s13 + $0x620] sm:$0xff]
        %v7796 = vld [vmem:[%s13 + $0x628] sm:$0xff]
        %v7797 = vld [vmem:[%s13 + $0x630] sm:$0xff]
        %v7798 = vld [vmem:[%s13 + $0x638] sm:$0xff]
        %v7799 = vld [vmem:[%s13 + $0x640] sm:$0xff]
        %v7800 = vld [vmem:[%s13 + $0x648] sm:$0xff]
        %v7801 = vld [vmem:[%s13 + $0x650] sm:$0xff]
        %v7802 = vld [vmem:[%s13 + $0x658] sm:$0xff]
        %v7803 = vld [vmem:[%s13 + $0x660] sm:$0xff]
        %v7804 = vld [vmem:[%s13 + $0x668] sm:$0xff]
        %v7805 = vld [vmem:[%s13 + $0x670] sm:$0xff]
        %v7806 = vld [vmem:[%s13 + $0x678] sm:$0xff]
        %v7807 = vld [vmem:[%s13 + $0x680] sm:$0xff]
        %v7808 = vld [vmem:[%s13 + $0x688] sm:$0xff]
        %v7809 = vld [vmem:[%s13 + $0x690] sm:$0xff]
        %v7810 = vld [vmem:[%s13 + $0x698] sm:$0xff]
        %v7811 = vld [vmem:[%s13 + $0x6a0] sm:$0xff]
        %v7812 = vld [vmem:[%s13 + $0x6a8] sm:$0xff]
        %v7813 = vld [vmem:[%s13 + $0x6b0] sm:$0xff]
        %v7814 = vld [vmem:[%s13 + $0x6b8] sm:$0xff]
        %v7815 = vld [vmem:[%s13 + $0x6c0] sm:$0xff]
        %v7816 = vld [vmem:[%s13 + $0x6c8] sm:$0xff]
        %v7817 = vld [vmem:[%s13 + $0x6d0] sm:$0xff]
        %v7818 = vld [vmem:[%s13 + $0x6d8] sm:$0xff]
        %v7819 = vld [vmem:[%s13 + $0x6e0] sm:$0xff]
        %v7820 = vld [vmem:[%s13 + $0x6e8] sm:$0xff]
        %v7821 = vld [vmem:[%s13 + $0x6f0] sm:$0xff]
        %v7822 = vld [vmem:[%s13 + $0x6f8] sm:$0xff]
        %v7823 = vld [vmem:[%s13 + $0x700] sm:$0xff]
        %v7824 = vld [vmem:[%s13 + $0x708] sm:$0xff]
        %v7825 = vld [vmem:[%s13 + $0x710] sm:$0xff]
        %v7826 = vld [vmem:[%s13 + $0x718] sm:$0xff]
        %v7827 = vld [vmem:[%s13 + $0x720] sm:$0xff]
        %v7828 = vld [vmem:[%s13 + $0x728] sm:$0xff]
        %v7829 = vld [vmem:[%s13 + $0x730] sm:$0xff]
        %v7830 = vld [vmem:[%s13 + $0x738] sm:$0xff]
        %v7831 = vld [vmem:[%s13 + $0x740] sm:$0xff]
        %v7832 = vld [vmem:[%s13 + $0x748] sm:$0xff]
        %v7833 = vld [vmem:[%s13 + $0x750] sm:$0xff]
        %v7834 = vld [vmem:[%s13 + $0x758] sm:$0xff]
        %v7835 = vld [vmem:[%s13 + $0x760] sm:$0xff]
        %v7836 = vld [vmem:[%s13 + $0x768] sm:$0xff]
        %v7837 = vld [vmem:[%s13 + $0x770] sm:$0xff]
        %v7838 = vld [vmem:[%s13 + $0x778] sm:$0xff]
        %v7839 = vld [vmem:[%s13 + $0x780] sm:$0xff]
        %v7840 = vld [vmem:[%s13 + $0x788] sm:$0xff]
        %v7841 = vld [vmem:[%s13 + $0x790] sm:$0xff]
        %v7842 = vld [vmem:[%s13 + $0x798] sm:$0xff]
        %v7843 = vld [vmem:[%s13 + $0x7a0] sm:$0xff]
        %v7844 = vld [vmem:[%s13 + $0x7a8] sm:$0xff]
        %v7845 = vld [vmem:[%s13 + $0x7b0] sm:$0xff]
        %v7846 = vld [vmem:[%s13 + $0x7b8] sm:$0xff]
        %v7847 = vld [vmem:[%s13 + $0x7c0] sm:$0xff]
        %v7848 = vld [vmem:[%s13 + $0x7c8] sm:$0xff]
        %v7849 = vld [vmem:[%s13 + $0x7d0] sm:$0xff]
        %v7850 = vld [vmem:[%s13 + $0x7d8] sm:$0xff]
        %v7851 = vld [vmem:[%s13 + $0x7e0] sm:$0xff]
        %v7852 = vld [vmem:[%s13 + $0x7e8] sm:$0xff]
        %v7853 = vld [vmem:[%s13 + $0x7f0] sm:$0xff]
        %v7854 = vld [vmem:[%s13 + $0x7f8] sm:$0xff]
        %v7855 = vpack.c.bf16 %v7584, %v7584
        %v7856 = vpack.c.bf16 %v7586, %v7586
        %v7857 = vpack.c.bf16 %v7588, %v7588
        %v7858 = vpack.c.bf16 %v7590, %v7590
        %v7859 = vpack.c.bf16 %v7592, %v7592
        %v7860 = vpack.c.bf16 %v7594, %v7594
        %v7861 = vpack.c.bf16 %v7596, %v7596
        %v7862 = vpack.c.bf16 %v7598, %v7598
        %v7863 = vld [vmem:[%s14] sm:$0xf]
        %v7865 = vlaneseq
        %v7866 = vshrl.u32 %v7865, 7
        %v7867 = vsub.s32 0, %v7866
        %v7868 = vrot.slane %v7863, %v7867
        %v7869 = vlaneseq
        %v7870 = vshrl.u32 %v7869, 7
        %v7871 = vsub.s32 1, %v7870
        %v7872 = vrot.slane %v7863, %v7871
        %v7873 = vlaneseq
        %v7874 = vshrl.u32 %v7873, 7
        %v7875 = vsub.s32 2, %v7874
        %v7876 = vrot.slane %v7863, %v7875
        %v7877 = vlaneseq
        %v7878 = vshrl.u32 %v7877, 7
        %v7879 = vsub.s32 3, %v7878
        %v7880 = vrot.slane %v7863, %v7879
        %v8141 = vunpack.c.l.b16 %v7599
        %v8142 = vunpack.c.h.b16 %v7599
        %v8143 = vunpack.c.l.b16 %v7600
        %v8144 = vunpack.c.h.b16 %v7600
        %v8145 = vunpack.c.l.b16 %v7601
        %v8146 = vunpack.c.h.b16 %v7601
        %v8147 = vunpack.c.l.b16 %v7602
        %v8148 = vunpack.c.h.b16 %v7602
        %v8149 = vunpack.c.l.b16 %v7603
        %v8150 = vunpack.c.h.b16 %v7603
        %v8151 = vunpack.c.l.b16 %v7604
        %v8152 = vunpack.c.h.b16 %v7604
        %v8153 = vunpack.c.l.b16 %v7605
        %v8154 = vunpack.c.h.b16 %v7605
        %v8155 = vunpack.c.l.b16 %v7606
        %v8156 = vunpack.c.h.b16 %v7606
        %v8157 = vunpack.c.l.b16 %v7607
        %v8158 = vunpack.c.h.b16 %v7607
        %v8159 = vunpack.c.l.b16 %v7608
        %v8160 = vunpack.c.h.b16 %v7608
        %v8161 = vunpack.c.l.b16 %v7609
        %v8162 = vunpack.c.h.b16 %v7609
        %v8163 = vunpack.c.l.b16 %v7610
        %v8164 = vunpack.c.h.b16 %v7610
        %v8165 = vunpack.c.l.b16 %v7611
        %v8166 = vunpack.c.h.b16 %v7611
        %v8167 = vunpack.c.l.b16 %v7612
        %v8168 = vunpack.c.h.b16 %v7612
        %v8169 = vunpack.c.l.b16 %v7613
        %v8170 = vunpack.c.h.b16 %v7613
        %v8171 = vunpack.c.l.b16 %v7614
        %v8172 = vunpack.c.h.b16 %v7614
        %v8173 = vunpack.c.l.b16 %v7615
        %v8174 = vunpack.c.h.b16 %v7615
        %v8175 = vunpack.c.l.b16 %v7616
        %v8176 = vunpack.c.h.b16 %v7616
        %v8177 = vunpack.c.l.b16 %v7617
        %v8178 = vunpack.c.h.b16 %v7617
        %v8179 = vunpack.c.l.b16 %v7618
        %v8180 = vunpack.c.h.b16 %v7618
        %v8181 = vunpack.c.l.b16 %v7619
        %v8182 = vunpack.c.h.b16 %v7619
        %v8183 = vunpack.c.l.b16 %v7620
        %v8184 = vunpack.c.h.b16 %v7620
        %v8185 = vunpack.c.l.b16 %v7621
        %v8186 = vunpack.c.h.b16 %v7621
        %v8187 = vunpack.c.l.b16 %v7622
        %v8188 = vunpack.c.h.b16 %v7622
        %v8189 = vunpack.c.l.b16 %v7623
        %v8190 = vunpack.c.h.b16 %v7623
        %v8191 = vunpack.c.l.b16 %v7624
        %v8192 = vunpack.c.h.b16 %v7624
        %v8193 = vunpack.c.l.b16 %v7625
        %v8194 = vunpack.c.h.b16 %v7625
        %v8195 = vunpack.c.l.b16 %v7626
        %v8196 = vunpack.c.h.b16 %v7626
        %v8197 = vunpack.c.l.b16 %v7627
        %v8198 = vunpack.c.h.b16 %v7627
        %v8199 = vunpack.c.l.b16 %v7628
        %v8200 = vunpack.c.h.b16 %v7628
        %v8201 = vunpack.c.l.b16 %v7629
        %v8202 = vunpack.c.h.b16 %v7629
        %v8203 = vunpack.c.l.b16 %v7630
        %v8204 = vunpack.c.h.b16 %v7630
        %v8205 = vunpack.c.l.b16 %v7631
        %v8206 = vunpack.c.h.b16 %v7631
        %v8207 = vunpack.c.l.b16 %v7632
        %v8208 = vunpack.c.h.b16 %v7632
        %v8209 = vunpack.c.l.b16 %v7633
        %v8210 = vunpack.c.h.b16 %v7633
        %v8211 = vunpack.c.l.b16 %v7634
        %v8212 = vunpack.c.h.b16 %v7634
        %v8213 = vunpack.c.l.b16 %v7635
        %v8214 = vunpack.c.h.b16 %v7635
        %v8215 = vunpack.c.l.b16 %v7636
        %v8216 = vunpack.c.h.b16 %v7636
        %v8217 = vunpack.c.l.b16 %v7637
        %v8218 = vunpack.c.h.b16 %v7637
        %v8219 = vunpack.c.l.b16 %v7638
        %v8220 = vunpack.c.h.b16 %v7638
        %v8221 = vunpack.c.l.b16 %v7639
        %v8222 = vunpack.c.h.b16 %v7639
        %v8223 = vunpack.c.l.b16 %v7640
        %v8224 = vunpack.c.h.b16 %v7640
        %v8225 = vunpack.c.l.b16 %v7641
        %v8226 = vunpack.c.h.b16 %v7641
        %v8227 = vunpack.c.l.b16 %v7642
        %v8228 = vunpack.c.h.b16 %v7642
        %v8229 = vunpack.c.l.b16 %v7643
        %v8230 = vunpack.c.h.b16 %v7643
        %v8231 = vunpack.c.l.b16 %v7644
        %v8232 = vunpack.c.h.b16 %v7644
        %v8233 = vunpack.c.l.b16 %v7645
        %v8234 = vunpack.c.h.b16 %v7645
        %v8235 = vunpack.c.l.b16 %v7646
        %v8236 = vunpack.c.h.b16 %v7646
        %v8237 = vunpack.c.l.b16 %v7647
        %v8238 = vunpack.c.h.b16 %v7647
        %v8239 = vunpack.c.l.b16 %v7648
        %v8240 = vunpack.c.h.b16 %v7648
        %v8241 = vunpack.c.l.b16 %v7649
        %v8242 = vunpack.c.h.b16 %v7649
        %v8243 = vunpack.c.l.b16 %v7650
        %v8244 = vunpack.c.h.b16 %v7650
        %v8245 = vunpack.c.l.b16 %v7651
        %v8246 = vunpack.c.h.b16 %v7651
        %v8247 = vunpack.c.l.b16 %v7652
        %v8248 = vunpack.c.h.b16 %v7652
        %v8249 = vunpack.c.l.b16 %v7653
        %v8250 = vunpack.c.h.b16 %v7653
        %v8251 = vunpack.c.l.b16 %v7654
        %v8252 = vunpack.c.h.b16 %v7654
        %v8253 = vunpack.c.l.b16 %v7655
        %v8254 = vunpack.c.h.b16 %v7655
        %v8255 = vunpack.c.l.b16 %v7656
        %v8256 = vunpack.c.h.b16 %v7656
        %v8257 = vunpack.c.l.b16 %v7657
        %v8258 = vunpack.c.h.b16 %v7657
        %v8259 = vunpack.c.l.b16 %v7658
        %v8260 = vunpack.c.h.b16 %v7658
        %v8261 = vunpack.c.l.b16 %v7659
        %v8262 = vunpack.c.h.b16 %v7659
        %v8263 = vunpack.c.l.b16 %v7660
        %v8264 = vunpack.c.h.b16 %v7660
        %v8265 = vunpack.c.l.b16 %v7661
        %v8266 = vunpack.c.h.b16 %v7661
        %v8267 = vunpack.c.l.b16 %v7662
        %v8268 = vunpack.c.h.b16 %v7662
        %v8269 = vunpack.c.l.b16 %v7663
        %v8270 = vunpack.c.h.b16 %v7663
        %v8271 = vunpack.c.l.b16 %v7664
        %v8272 = vunpack.c.h.b16 %v7664
        %v8273 = vunpack.c.l.b16 %v7665
        %v8274 = vunpack.c.h.b16 %v7665
        %v8275 = vunpack.c.l.b16 %v7666
        %v8276 = vunpack.c.h.b16 %v7666
        %v8277 = vunpack.c.l.b16 %v7667
        %v8278 = vunpack.c.h.b16 %v7667
        %v8279 = vunpack.c.l.b16 %v7668
        %v8280 = vunpack.c.h.b16 %v7668
        %v8281 = vunpack.c.l.b16 %v7669
        %v8282 = vunpack.c.h.b16 %v7669
        %v8283 = vunpack.c.l.b16 %v7670
        %v8284 = vunpack.c.h.b16 %v7670
        %v8285 = vunpack.c.l.b16 %v7671
        %v8286 = vunpack.c.h.b16 %v7671
        %v8287 = vunpack.c.l.b16 %v7672
        %v8288 = vunpack.c.h.b16 %v7672
        %v8289 = vunpack.c.l.b16 %v7673
        %v8290 = vunpack.c.h.b16 %v7673
        %v8291 = vunpack.c.l.b16 %v7674
        %v8292 = vunpack.c.h.b16 %v7674
        %v8293 = vunpack.c.l.b16 %v7675
        %v8294 = vunpack.c.h.b16 %v7675
        %v8295 = vunpack.c.l.b16 %v7676
        %v8296 = vunpack.c.h.b16 %v7676
        %v8297 = vunpack.c.l.b16 %v7677
        %v8298 = vunpack.c.h.b16 %v7677
        %v8299 = vunpack.c.l.b16 %v7678
        %v8300 = vunpack.c.h.b16 %v7678
        %v8301 = vunpack.c.l.b16 %v7679
        %v8302 = vunpack.c.h.b16 %v7679
        %v8303 = vunpack.c.l.b16 %v7680
        %v8304 = vunpack.c.h.b16 %v7680
        %v8305 = vunpack.c.l.b16 %v7681
        %v8306 = vunpack.c.h.b16 %v7681
        %v8307 = vunpack.c.l.b16 %v7682
        %v8308 = vunpack.c.h.b16 %v7682
        %v8309 = vunpack.c.l.b16 %v7683
        %v8310 = vunpack.c.h.b16 %v7683
        %v8311 = vunpack.c.l.b16 %v7684
        %v8312 = vunpack.c.h.b16 %v7684
        %v8313 = vunpack.c.l.b16 %v7685
        %v8314 = vunpack.c.h.b16 %v7685
        %v8315 = vunpack.c.l.b16 %v7686
        %v8316 = vunpack.c.h.b16 %v7686
        %v8317 = vunpack.c.l.b16 %v7687
        %v8318 = vunpack.c.h.b16 %v7687
        %v8319 = vunpack.c.l.b16 %v7688
        %v8320 = vunpack.c.h.b16 %v7688
        %v8321 = vunpack.c.l.b16 %v7689
        %v8322 = vunpack.c.h.b16 %v7689
        %v8323 = vunpack.c.l.b16 %v7690
        %v8324 = vunpack.c.h.b16 %v7690
        %v8325 = vunpack.c.l.b16 %v7691
        %v8326 = vunpack.c.h.b16 %v7691
        %v8327 = vunpack.c.l.b16 %v7692
        %v8328 = vunpack.c.h.b16 %v7692
        %v8329 = vunpack.c.l.b16 %v7693
        %v8330 = vunpack.c.h.b16 %v7693
        %v8331 = vunpack.c.l.b16 %v7694
        %v8332 = vunpack.c.h.b16 %v7694
        %v8333 = vunpack.c.l.b16 %v7695
        %v8334 = vunpack.c.h.b16 %v7695
        %v8335 = vunpack.c.l.b16 %v7696
        %v8336 = vunpack.c.h.b16 %v7696
        %v8337 = vunpack.c.l.b16 %v7697
        %v8338 = vunpack.c.h.b16 %v7697
        %v8339 = vunpack.c.l.b16 %v7698
        %v8340 = vunpack.c.h.b16 %v7698
        %v8341 = vunpack.c.l.b16 %v7699
        %v8342 = vunpack.c.h.b16 %v7699
        %v8343 = vunpack.c.l.b16 %v7700
        %v8344 = vunpack.c.h.b16 %v7700
        %v8345 = vunpack.c.l.b16 %v7701
        %v8346 = vunpack.c.h.b16 %v7701
        %v8347 = vunpack.c.l.b16 %v7702
        %v8348 = vunpack.c.h.b16 %v7702
        %v8349 = vunpack.c.l.b16 %v7703
        %v8350 = vunpack.c.h.b16 %v7703
        %v8351 = vunpack.c.l.b16 %v7704
        %v8352 = vunpack.c.h.b16 %v7704
        %v8353 = vunpack.c.l.b16 %v7705
        %v8354 = vunpack.c.h.b16 %v7705
        %v8355 = vunpack.c.l.b16 %v7706
        %v8356 = vunpack.c.h.b16 %v7706
        %v8357 = vunpack.c.l.b16 %v7707
        %v8358 = vunpack.c.h.b16 %v7707
        %v8359 = vunpack.c.l.b16 %v7708
        %v8360 = vunpack.c.h.b16 %v7708
        %v8361 = vunpack.c.l.b16 %v7709
        %v8362 = vunpack.c.h.b16 %v7709
        %v8363 = vunpack.c.l.b16 %v7710
        %v8364 = vunpack.c.h.b16 %v7710
        %v8365 = vunpack.c.l.b16 %v7711
        %v8366 = vunpack.c.h.b16 %v7711
        %v8367 = vunpack.c.l.b16 %v7712
        %v8368 = vunpack.c.h.b16 %v7712
        %v8369 = vunpack.c.l.b16 %v7713
        %v8370 = vunpack.c.h.b16 %v7713
        %v8371 = vunpack.c.l.b16 %v7714
        %v8372 = vunpack.c.h.b16 %v7714
        %v8373 = vunpack.c.l.b16 %v7715
        %v8374 = vunpack.c.h.b16 %v7715
        %v8375 = vunpack.c.l.b16 %v7716
        %v8376 = vunpack.c.h.b16 %v7716
        %v8377 = vunpack.c.l.b16 %v7717
        %v8378 = vunpack.c.h.b16 %v7717
        %v8379 = vunpack.c.l.b16 %v7718
        %v8380 = vunpack.c.h.b16 %v7718
        %v8381 = vunpack.c.l.b16 %v7719
        %v8382 = vunpack.c.h.b16 %v7719
        %v8383 = vunpack.c.l.b16 %v7720
        %v8384 = vunpack.c.h.b16 %v7720
        %v8385 = vunpack.c.l.b16 %v7721
        %v8386 = vunpack.c.h.b16 %v7721
        %v8387 = vunpack.c.l.b16 %v7722
        %v8388 = vunpack.c.h.b16 %v7722
        %v8389 = vunpack.c.l.b16 %v7723
        %v8390 = vunpack.c.h.b16 %v7723
        %v8391 = vunpack.c.l.b16 %v7724
        %v8392 = vunpack.c.h.b16 %v7724
        %v8393 = vunpack.c.l.b16 %v7725
        %v8394 = vunpack.c.h.b16 %v7725
        %v8395 = vunpack.c.l.b16 %v7726
        %v8396 = vunpack.c.h.b16 %v7726
        %v8397 = vunpack.c.l.b16 %v7727
        %v8398 = vunpack.c.h.b16 %v7727
        %v8399 = vunpack.c.l.b16 %v7728
        %v8400 = vunpack.c.h.b16 %v7728
        %v8401 = vunpack.c.l.b16 %v7729
        %v8402 = vunpack.c.h.b16 %v7729
        %v8403 = vunpack.c.l.b16 %v7730
        %v8404 = vunpack.c.h.b16 %v7730
        %v8405 = vunpack.c.l.b16 %v7731
        %v8406 = vunpack.c.h.b16 %v7731
        %v8407 = vunpack.c.l.b16 %v7732
        %v8408 = vunpack.c.h.b16 %v7732
        %v8409 = vunpack.c.l.b16 %v7733
        %v8410 = vunpack.c.h.b16 %v7733
        %v8411 = vunpack.c.l.b16 %v7734
        %v8412 = vunpack.c.h.b16 %v7734
        %v8413 = vunpack.c.l.b16 %v7735
        %v8414 = vunpack.c.h.b16 %v7735
        %v8415 = vunpack.c.l.b16 %v7736
        %v8416 = vunpack.c.h.b16 %v7736
        %v8417 = vunpack.c.l.b16 %v7737
        %v8418 = vunpack.c.h.b16 %v7737
        %v8419 = vunpack.c.l.b16 %v7738
        %v8420 = vunpack.c.h.b16 %v7738
        %v8421 = vunpack.c.l.b16 %v7739
        %v8422 = vunpack.c.h.b16 %v7739
        %v8423 = vunpack.c.l.b16 %v7740
        %v8424 = vunpack.c.h.b16 %v7740
        %v8425 = vunpack.c.l.b16 %v7741
        %v8426 = vunpack.c.h.b16 %v7741
        %v8427 = vunpack.c.l.b16 %v7742
        %v8428 = vunpack.c.h.b16 %v7742
        %v8429 = vunpack.c.l.b16 %v7743
        %v8430 = vunpack.c.h.b16 %v7743
        %v8431 = vunpack.c.l.b16 %v7744
        %v8432 = vunpack.c.h.b16 %v7744
        %v8433 = vunpack.c.l.b16 %v7745
        %v8434 = vunpack.c.h.b16 %v7745
        %v8435 = vunpack.c.l.b16 %v7746
        %v8436 = vunpack.c.h.b16 %v7746
        %v8437 = vunpack.c.l.b16 %v7747
        %v8438 = vunpack.c.h.b16 %v7747
        %v8439 = vunpack.c.l.b16 %v7748
        %v8440 = vunpack.c.h.b16 %v7748
        %v8441 = vunpack.c.l.b16 %v7749
        %v8442 = vunpack.c.h.b16 %v7749
        %v8443 = vunpack.c.l.b16 %v7750
        %v8444 = vunpack.c.h.b16 %v7750
        %v8445 = vunpack.c.l.b16 %v7751
        %v8446 = vunpack.c.h.b16 %v7751
        %v8447 = vunpack.c.l.b16 %v7752
        %v8448 = vunpack.c.h.b16 %v7752
        %v8449 = vunpack.c.l.b16 %v7753
        %v8450 = vunpack.c.h.b16 %v7753
        %v8451 = vunpack.c.l.b16 %v7754
        %v8452 = vunpack.c.h.b16 %v7754
        %v8453 = vunpack.c.l.b16 %v7755
        %v8454 = vunpack.c.h.b16 %v7755
        %v8455 = vunpack.c.l.b16 %v7756
        %v8456 = vunpack.c.h.b16 %v7756
        %v8457 = vunpack.c.l.b16 %v7757
        %v8458 = vunpack.c.h.b16 %v7757
        %v8459 = vunpack.c.l.b16 %v7758
        %v8460 = vunpack.c.h.b16 %v7758
        %v8461 = vunpack.c.l.b16 %v7759
        %v8462 = vunpack.c.h.b16 %v7759
        %v8463 = vunpack.c.l.b16 %v7760
        %v8464 = vunpack.c.h.b16 %v7760
        %v8465 = vunpack.c.l.b16 %v7761
        %v8466 = vunpack.c.h.b16 %v7761
        %v8467 = vunpack.c.l.b16 %v7762
        %v8468 = vunpack.c.h.b16 %v7762
        %v8469 = vunpack.c.l.b16 %v7763
        %v8470 = vunpack.c.h.b16 %v7763
        %v8471 = vunpack.c.l.b16 %v7764
        %v8472 = vunpack.c.h.b16 %v7764
        %v8473 = vunpack.c.l.b16 %v7765
        %v8474 = vunpack.c.h.b16 %v7765
        %v8475 = vunpack.c.l.b16 %v7766
        %v8476 = vunpack.c.h.b16 %v7766
        %v8477 = vunpack.c.l.b16 %v7767
        %v8478 = vunpack.c.h.b16 %v7767
        %v8479 = vunpack.c.l.b16 %v7768
        %v8480 = vunpack.c.h.b16 %v7768
        %v8481 = vunpack.c.l.b16 %v7769
        %v8482 = vunpack.c.h.b16 %v7769
        %v8483 = vunpack.c.l.b16 %v7770
        %v8484 = vunpack.c.h.b16 %v7770
        %v8485 = vunpack.c.l.b16 %v7771
        %v8486 = vunpack.c.h.b16 %v7771
        %v8487 = vunpack.c.l.b16 %v7772
        %v8488 = vunpack.c.h.b16 %v7772
        %v8489 = vunpack.c.l.b16 %v7773
        %v8490 = vunpack.c.h.b16 %v7773
        %v8491 = vunpack.c.l.b16 %v7774
        %v8492 = vunpack.c.h.b16 %v7774
        %v8493 = vunpack.c.l.b16 %v7775
        %v8494 = vunpack.c.h.b16 %v7775
        %v8495 = vunpack.c.l.b16 %v7776
        %v8496 = vunpack.c.h.b16 %v7776
        %v8497 = vunpack.c.l.b16 %v7777
        %v8498 = vunpack.c.h.b16 %v7777
        %v8499 = vunpack.c.l.b16 %v7778
        %v8500 = vunpack.c.h.b16 %v7778
        %v8501 = vunpack.c.l.b16 %v7779
        %v8502 = vunpack.c.h.b16 %v7779
        %v8503 = vunpack.c.l.b16 %v7780
        %v8504 = vunpack.c.h.b16 %v7780
        %v8505 = vunpack.c.l.b16 %v7781
        %v8506 = vunpack.c.h.b16 %v7781
        %v8507 = vunpack.c.l.b16 %v7782
        %v8508 = vunpack.c.h.b16 %v7782
        %v8509 = vunpack.c.l.b16 %v7783
        %v8510 = vunpack.c.h.b16 %v7783
        %v8511 = vunpack.c.l.b16 %v7784
        %v8512 = vunpack.c.h.b16 %v7784
        %v8513 = vunpack.c.l.b16 %v7785
        %v8514 = vunpack.c.h.b16 %v7785
        %v8515 = vunpack.c.l.b16 %v7786
        %v8516 = vunpack.c.h.b16 %v7786
        %v8517 = vunpack.c.l.b16 %v7787
        %v8518 = vunpack.c.h.b16 %v7787
        %v8519 = vunpack.c.l.b16 %v7788
        %v8520 = vunpack.c.h.b16 %v7788
        %v8521 = vunpack.c.l.b16 %v7789
        %v8522 = vunpack.c.h.b16 %v7789
        %v8523 = vunpack.c.l.b16 %v7790
        %v8524 = vunpack.c.h.b16 %v7790
        %v8525 = vunpack.c.l.b16 %v7791
        %v8526 = vunpack.c.h.b16 %v7791
        %v8527 = vunpack.c.l.b16 %v7792
        %v8528 = vunpack.c.h.b16 %v7792
        %v8529 = vunpack.c.l.b16 %v7793
        %v8530 = vunpack.c.h.b16 %v7793
        %v8531 = vunpack.c.l.b16 %v7794
        %v8532 = vunpack.c.h.b16 %v7794
        %v8533 = vunpack.c.l.b16 %v7795
        %v8534 = vunpack.c.h.b16 %v7795
        %v8535 = vunpack.c.l.b16 %v7796
        %v8536 = vunpack.c.h.b16 %v7796
        %v8537 = vunpack.c.l.b16 %v7797
        %v8538 = vunpack.c.h.b16 %v7797
        %v8539 = vunpack.c.l.b16 %v7798
        %v8540 = vunpack.c.h.b16 %v7798
        %v8541 = vunpack.c.l.b16 %v7799
        %v8542 = vunpack.c.h.b16 %v7799
        %v8543 = vunpack.c.l.b16 %v7800
        %v8544 = vunpack.c.h.b16 %v7800
        %v8545 = vunpack.c.l.b16 %v7801
        %v8546 = vunpack.c.h.b16 %v7801
        %v8547 = vunpack.c.l.b16 %v7802
        %v8548 = vunpack.c.h.b16 %v7802
        %v8549 = vunpack.c.l.b16 %v7803
        %v8550 = vunpack.c.h.b16 %v7803
        %v8551 = vunpack.c.l.b16 %v7804
        %v8552 = vunpack.c.h.b16 %v7804
        %v8553 = vunpack.c.l.b16 %v7805
        %v8554 = vunpack.c.h.b16 %v7805
        %v8555 = vunpack.c.l.b16 %v7806
        %v8556 = vunpack.c.h.b16 %v7806
        %v8557 = vunpack.c.l.b16 %v7807
        %v8558 = vunpack.c.h.b16 %v7807
        %v8559 = vunpack.c.l.b16 %v7808
        %v8560 = vunpack.c.h.b16 %v7808
        %v8561 = vunpack.c.l.b16 %v7809
        %v8562 = vunpack.c.h.b16 %v7809
        %v8563 = vunpack.c.l.b16 %v7810
        %v8564 = vunpack.c.h.b16 %v7810
        %v8565 = vunpack.c.l.b16 %v7811
        %v8566 = vunpack.c.h.b16 %v7811
        %v8567 = vunpack.c.l.b16 %v7812
        %v8568 = vunpack.c.h.b16 %v7812
        %v8569 = vunpack.c.l.b16 %v7813
        %v8570 = vunpack.c.h.b16 %v7813
        %v8571 = vunpack.c.l.b16 %v7814
        %v8572 = vunpack.c.h.b16 %v7814
        %v8573 = vunpack.c.l.b16 %v7815
        %v8574 = vunpack.c.h.b16 %v7815
        %v8575 = vunpack.c.l.b16 %v7816
        %v8576 = vunpack.c.h.b16 %v7816
        %v8577 = vunpack.c.l.b16 %v7817
        %v8578 = vunpack.c.h.b16 %v7817
        %v8579 = vunpack.c.l.b16 %v7818
        %v8580 = vunpack.c.h.b16 %v7818
        %v8581 = vunpack.c.l.b16 %v7819
        %v8582 = vunpack.c.h.b16 %v7819
        %v8583 = vunpack.c.l.b16 %v7820
        %v8584 = vunpack.c.h.b16 %v7820
        %v8585 = vunpack.c.l.b16 %v7821
        %v8586 = vunpack.c.h.b16 %v7821
        %v8587 = vunpack.c.l.b16 %v7822
        %v8588 = vunpack.c.h.b16 %v7822
        %v8589 = vunpack.c.l.b16 %v7823
        %v8590 = vunpack.c.h.b16 %v7823
        %v8591 = vunpack.c.l.b16 %v7824
        %v8592 = vunpack.c.h.b16 %v7824
        %v8593 = vunpack.c.l.b16 %v7825
        %v8594 = vunpack.c.h.b16 %v7825
        %v8595 = vunpack.c.l.b16 %v7826
        %v8596 = vunpack.c.h.b16 %v7826
        %v8597 = vunpack.c.l.b16 %v7827
        %v8598 = vunpack.c.h.b16 %v7827
        %v8599 = vunpack.c.l.b16 %v7828
        %v8600 = vunpack.c.h.b16 %v7828
        %v8601 = vunpack.c.l.b16 %v7829
        %v8602 = vunpack.c.h.b16 %v7829
        %v8603 = vunpack.c.l.b16 %v7830
        %v8604 = vunpack.c.h.b16 %v7830
        %v8605 = vunpack.c.l.b16 %v7831
        %v8606 = vunpack.c.h.b16 %v7831
        %v8607 = vunpack.c.l.b16 %v7832
        %v8608 = vunpack.c.h.b16 %v7832
        %v8609 = vunpack.c.l.b16 %v7833
        %v8610 = vunpack.c.h.b16 %v7833
        %v8611 = vunpack.c.l.b16 %v7834
        %v8612 = vunpack.c.h.b16 %v7834
        %v8613 = vunpack.c.l.b16 %v7835
        %v8614 = vunpack.c.h.b16 %v7835
        %v8615 = vunpack.c.l.b16 %v7836
        %v8616 = vunpack.c.h.b16 %v7836
        %v8617 = vunpack.c.l.b16 %v7837
        %v8618 = vunpack.c.h.b16 %v7837
        %v8619 = vunpack.c.l.b16 %v7838
        %v8620 = vunpack.c.h.b16 %v7838
        %v8621 = vunpack.c.l.b16 %v7839
        %v8622 = vunpack.c.h.b16 %v7839
        %v8623 = vunpack.c.l.b16 %v7840
        %v8624 = vunpack.c.h.b16 %v7840
        %v8625 = vunpack.c.l.b16 %v7841
        %v8626 = vunpack.c.h.b16 %v7841
        %v8627 = vunpack.c.l.b16 %v7842
        %v8628 = vunpack.c.h.b16 %v7842
        %v8629 = vunpack.c.l.b16 %v7843
        %v8630 = vunpack.c.h.b16 %v7843
        %v8631 = vunpack.c.l.b16 %v7844
        %v8632 = vunpack.c.h.b16 %v7844
        %v8633 = vunpack.c.l.b16 %v7845
        %v8634 = vunpack.c.h.b16 %v7845
        %v8635 = vunpack.c.l.b16 %v7846
        %v8636 = vunpack.c.h.b16 %v7846
        %v8637 = vunpack.c.l.b16 %v7847
        %v8638 = vunpack.c.h.b16 %v7847
        %v8639 = vunpack.c.l.b16 %v7848
        %v8640 = vunpack.c.h.b16 %v7848
        %v8641 = vunpack.c.l.b16 %v7849
        %v8642 = vunpack.c.h.b16 %v7849
        %v8643 = vunpack.c.l.b16 %v7850
        %v8644 = vunpack.c.h.b16 %v7850
        %v8645 = vunpack.c.l.b16 %v7851
        %v8646 = vunpack.c.h.b16 %v7851
        %v8647 = vunpack.c.l.b16 %v7852
        %v8648 = vunpack.c.h.b16 %v7852
        %v8649 = vunpack.c.l.b16 %v7853
        %v8650 = vunpack.c.h.b16 %v7853
        %v8651 = vunpack.c.l.b16 %v7854
        %v8652 = vunpack.c.h.b16 %v7854
        %v8653 = vpack.c.b16 %v8145, %v8141
        %v8654 = vpack.c.b16 %v8146, %v8142
        %v8655 = vpack.c.b16 %v8147, %v8143
        %v8656 = vpack.c.b16 %v8148, %v8144
        %v8657 = vpack.c.b16 %v8153, %v8149
        %v8658 = vpack.c.b16 %v8154, %v8150
        %v8659 = vpack.c.b16 %v8155, %v8151
        %v8660 = vpack.c.b16 %v8156, %v8152
        %v8661 = vpack.c.b16 %v8161, %v8157
        %v8662 = vpack.c.b16 %v8162, %v8158
        %v8663 = vpack.c.b16 %v8163, %v8159
        %v8664 = vpack.c.b16 %v8164, %v8160
        %v8665 = vpack.c.b16 %v8169, %v8165
        %v8666 = vpack.c.b16 %v8170, %v8166
        %v8667 = vpack.c.b16 %v8171, %v8167
        %v8668 = vpack.c.b16 %v8172, %v8168
        %v8669 = vpack.c.b16 %v8177, %v8173
        %v8670 = vpack.c.b16 %v8178, %v8174
        %v8671 = vpack.c.b16 %v8179, %v8175
        %v8672 = vpack.c.b16 %v8180, %v8176
        %v8673 = vpack.c.b16 %v8185, %v8181
        %v8674 = vpack.c.b16 %v8186, %v8182
        %v8675 = vpack.c.b16 %v8187, %v8183
        %v8676 = vpack.c.b16 %v8188, %v8184
        %v8677 = vpack.c.b16 %v8193, %v8189
        %v8678 = vpack.c.b16 %v8194, %v8190
        %v8679 = vpack.c.b16 %v8195, %v8191
        %v8680 = vpack.c.b16 %v8196, %v8192
        %v8681 = vpack.c.b16 %v8201, %v8197
        %v8682 = vpack.c.b16 %v8202, %v8198
        %v8683 = vpack.c.b16 %v8203, %v8199
        %v8684 = vpack.c.b16 %v8204, %v8200
        %v8685 = vpack.c.b16 %v8209, %v8205
        %v8686 = vpack.c.b16 %v8210, %v8206
        %v8687 = vpack.c.b16 %v8211, %v8207
        %v8688 = vpack.c.b16 %v8212, %v8208
        %v8689 = vpack.c.b16 %v8217, %v8213
        %v8690 = vpack.c.b16 %v8218, %v8214
        %v8691 = vpack.c.b16 %v8219, %v8215
        %v8692 = vpack.c.b16 %v8220, %v8216
        %v8693 = vpack.c.b16 %v8225, %v8221
        %v8694 = vpack.c.b16 %v8226, %v8222
        %v8695 = vpack.c.b16 %v8227, %v8223
        %v8696 = vpack.c.b16 %v8228, %v8224
        %v8697 = vpack.c.b16 %v8233, %v8229
        %v8698 = vpack.c.b16 %v8234, %v8230
        %v8699 = vpack.c.b16 %v8235, %v8231
        %v8700 = vpack.c.b16 %v8236, %v8232
        %v8701 = vpack.c.b16 %v8241, %v8237
        %v8702 = vpack.c.b16 %v8242, %v8238
        %v8703 = vpack.c.b16 %v8243, %v8239
        %v8704 = vpack.c.b16 %v8244, %v8240
        %v8705 = vpack.c.b16 %v8249, %v8245
        %v8706 = vpack.c.b16 %v8250, %v8246
        %v8707 = vpack.c.b16 %v8251, %v8247
        %v8708 = vpack.c.b16 %v8252, %v8248
        %v8709 = vpack.c.b16 %v8257, %v8253
        %v8710 = vpack.c.b16 %v8258, %v8254
        %v8711 = vpack.c.b16 %v8259, %v8255
        %v8712 = vpack.c.b16 %v8260, %v8256
        %v8713 = vpack.c.b16 %v8265, %v8261
        %v8714 = vpack.c.b16 %v8266, %v8262
        %v8715 = vpack.c.b16 %v8267, %v8263
        %v8716 = vpack.c.b16 %v8268, %v8264
        %v8717 = vpack.c.b16 %v8273, %v8269
        %v8718 = vpack.c.b16 %v8274, %v8270
        %v8719 = vpack.c.b16 %v8275, %v8271
        %v8720 = vpack.c.b16 %v8276, %v8272
        %v8721 = vpack.c.b16 %v8281, %v8277
        %v8722 = vpack.c.b16 %v8282, %v8278
        %v8723 = vpack.c.b16 %v8283, %v8279
        %v8724 = vpack.c.b16 %v8284, %v8280
        %v8725 = vpack.c.b16 %v8289, %v8285
        %v8726 = vpack.c.b16 %v8290, %v8286
        %v8727 = vpack.c.b16 %v8291, %v8287
        %v8728 = vpack.c.b16 %v8292, %v8288
        %v8729 = vpack.c.b16 %v8297, %v8293
        %v8730 = vpack.c.b16 %v8298, %v8294
        %v8731 = vpack.c.b16 %v8299, %v8295
        %v8732 = vpack.c.b16 %v8300, %v8296
        %v8733 = vpack.c.b16 %v8305, %v8301
        %v8734 = vpack.c.b16 %v8306, %v8302
        %v8735 = vpack.c.b16 %v8307, %v8303
        %v8736 = vpack.c.b16 %v8308, %v8304
        %v8737 = vpack.c.b16 %v8313, %v8309
        %v8738 = vpack.c.b16 %v8314, %v8310
        %v8739 = vpack.c.b16 %v8315, %v8311
        %v8740 = vpack.c.b16 %v8316, %v8312
        %v8741 = vpack.c.b16 %v8321, %v8317
        %v8742 = vpack.c.b16 %v8322, %v8318
        %v8743 = vpack.c.b16 %v8323, %v8319
        %v8744 = vpack.c.b16 %v8324, %v8320
        %v8745 = vpack.c.b16 %v8329, %v8325
        %v8746 = vpack.c.b16 %v8330, %v8326
        %v8747 = vpack.c.b16 %v8331, %v8327
        %v8748 = vpack.c.b16 %v8332, %v8328
        %v8749 = vpack.c.b16 %v8337, %v8333
        %v8750 = vpack.c.b16 %v8338, %v8334
        %v8751 = vpack.c.b16 %v8339, %v8335
        %v8752 = vpack.c.b16 %v8340, %v8336
        %v8753 = vpack.c.b16 %v8345, %v8341
        %v8754 = vpack.c.b16 %v8346, %v8342
        %v8755 = vpack.c.b16 %v8347, %v8343
        %v8756 = vpack.c.b16 %v8348, %v8344
        %v8757 = vpack.c.b16 %v8353, %v8349
        %v8758 = vpack.c.b16 %v8354, %v8350
        %v8759 = vpack.c.b16 %v8355, %v8351
        %v8760 = vpack.c.b16 %v8356, %v8352
        %v8761 = vpack.c.b16 %v8361, %v8357
        %v8762 = vpack.c.b16 %v8362, %v8358
        %v8763 = vpack.c.b16 %v8363, %v8359
        %v8764 = vpack.c.b16 %v8364, %v8360
        %v8765 = vpack.c.b16 %v8369, %v8365
        %v8766 = vpack.c.b16 %v8370, %v8366
        %v8767 = vpack.c.b16 %v8371, %v8367
        %v8768 = vpack.c.b16 %v8372, %v8368
        %v8769 = vpack.c.b16 %v8377, %v8373
        %v8770 = vpack.c.b16 %v8378, %v8374
        %v8771 = vpack.c.b16 %v8379, %v8375
        %v8772 = vpack.c.b16 %v8380, %v8376
        %v8773 = vpack.c.b16 %v8385, %v8381
        %v8774 = vpack.c.b16 %v8386, %v8382
        %v8775 = vpack.c.b16 %v8387, %v8383
        %v8776 = vpack.c.b16 %v8388, %v8384
        %v8777 = vpack.c.b16 %v8393, %v8389
        %v8778 = vpack.c.b16 %v8394, %v8390
        %v8779 = vpack.c.b16 %v8395, %v8391
        %v8780 = vpack.c.b16 %v8396, %v8392
        %v8781 = vpack.c.b16 %v8401, %v8397
        %v8782 = vpack.c.b16 %v8402, %v8398
        %v8783 = vpack.c.b16 %v8403, %v8399
        %v8784 = vpack.c.b16 %v8404, %v8400
        %v8785 = vpack.c.b16 %v8409, %v8405
        %v8786 = vpack.c.b16 %v8410, %v8406
        %v8787 = vpack.c.b16 %v8411, %v8407
        %v8788 = vpack.c.b16 %v8412, %v8408
        %v8789 = vpack.c.b16 %v8417, %v8413
        %v8790 = vpack.c.b16 %v8418, %v8414
        %v8791 = vpack.c.b16 %v8419, %v8415
        %v8792 = vpack.c.b16 %v8420, %v8416
        %v8793 = vpack.c.b16 %v8425, %v8421
        %v8794 = vpack.c.b16 %v8426, %v8422
        %v8795 = vpack.c.b16 %v8427, %v8423
        %v8796 = vpack.c.b16 %v8428, %v8424
        %v8797 = vpack.c.b16 %v8433, %v8429
        %v8798 = vpack.c.b16 %v8434, %v8430
        %v8799 = vpack.c.b16 %v8435, %v8431
        %v8800 = vpack.c.b16 %v8436, %v8432
        %v8801 = vpack.c.b16 %v8441, %v8437
        %v8802 = vpack.c.b16 %v8442, %v8438
        %v8803 = vpack.c.b16 %v8443, %v8439
        %v8804 = vpack.c.b16 %v8444, %v8440
        %v8805 = vpack.c.b16 %v8449, %v8445
        %v8806 = vpack.c.b16 %v8450, %v8446
        %v8807 = vpack.c.b16 %v8451, %v8447
        %v8808 = vpack.c.b16 %v8452, %v8448
        %v8809 = vpack.c.b16 %v8457, %v8453
        %v8810 = vpack.c.b16 %v8458, %v8454
        %v8811 = vpack.c.b16 %v8459, %v8455
        %v8812 = vpack.c.b16 %v8460, %v8456
        %v8813 = vpack.c.b16 %v8465, %v8461
        %v8814 = vpack.c.b16 %v8466, %v8462
        %v8815 = vpack.c.b16 %v8467, %v8463
        %v8816 = vpack.c.b16 %v8468, %v8464
        %v8817 = vpack.c.b16 %v8473, %v8469
        %v8818 = vpack.c.b16 %v8474, %v8470
        %v8819 = vpack.c.b16 %v8475, %v8471
        %v8820 = vpack.c.b16 %v8476, %v8472
        %v8821 = vpack.c.b16 %v8481, %v8477
        %v8822 = vpack.c.b16 %v8482, %v8478
        %v8823 = vpack.c.b16 %v8483, %v8479
        %v8824 = vpack.c.b16 %v8484, %v8480
        %v8825 = vpack.c.b16 %v8489, %v8485
        %v8826 = vpack.c.b16 %v8490, %v8486
        %v8827 = vpack.c.b16 %v8491, %v8487
        %v8828 = vpack.c.b16 %v8492, %v8488
        %v8829 = vpack.c.b16 %v8497, %v8493
        %v8830 = vpack.c.b16 %v8498, %v8494
        %v8831 = vpack.c.b16 %v8499, %v8495
        %v8832 = vpack.c.b16 %v8500, %v8496
        %v8833 = vpack.c.b16 %v8505, %v8501
        %v8834 = vpack.c.b16 %v8506, %v8502
        %v8835 = vpack.c.b16 %v8507, %v8503
        %v8836 = vpack.c.b16 %v8508, %v8504
        %v8837 = vpack.c.b16 %v8513, %v8509
        %v8838 = vpack.c.b16 %v8514, %v8510
        %v8839 = vpack.c.b16 %v8515, %v8511
        %v8840 = vpack.c.b16 %v8516, %v8512
        %v8841 = vpack.c.b16 %v8521, %v8517
        %v8842 = vpack.c.b16 %v8522, %v8518
        %v8843 = vpack.c.b16 %v8523, %v8519
        %v8844 = vpack.c.b16 %v8524, %v8520
        %v8845 = vpack.c.b16 %v8529, %v8525
        %v8846 = vpack.c.b16 %v8530, %v8526
        %v8847 = vpack.c.b16 %v8531, %v8527
        %v8848 = vpack.c.b16 %v8532, %v8528
        %v8849 = vpack.c.b16 %v8537, %v8533
        %v8850 = vpack.c.b16 %v8538, %v8534
        %v8851 = vpack.c.b16 %v8539, %v8535
        %v8852 = vpack.c.b16 %v8540, %v8536
        %v8853 = vpack.c.b16 %v8545, %v8541
        %v8854 = vpack.c.b16 %v8546, %v8542
        %v8855 = vpack.c.b16 %v8547, %v8543
        %v8856 = vpack.c.b16 %v8548, %v8544
        %v8857 = vpack.c.b16 %v8553, %v8549
        %v8858 = vpack.c.b16 %v8554, %v8550
        %v8859 = vpack.c.b16 %v8555, %v8551
        %v8860 = vpack.c.b16 %v8556, %v8552
        %v8861 = vpack.c.b16 %v8561, %v8557
        %v8862 = vpack.c.b16 %v8562, %v8558
        %v8863 = vpack.c.b16 %v8563, %v8559
        %v8864 = vpack.c.b16 %v8564, %v8560
        %v8865 = vpack.c.b16 %v8569, %v8565
        %v8866 = vpack.c.b16 %v8570, %v8566
        %v8867 = vpack.c.b16 %v8571, %v8567
        %v8868 = vpack.c.b16 %v8572, %v8568
        %v8869 = vpack.c.b16 %v8577, %v8573
        %v8870 = vpack.c.b16 %v8578, %v8574
        %v8871 = vpack.c.b16 %v8579, %v8575
        %v8872 = vpack.c.b16 %v8580, %v8576
        %v8873 = vpack.c.b16 %v8585, %v8581
        %v8874 = vpack.c.b16 %v8586, %v8582
        %v8875 = vpack.c.b16 %v8587, %v8583
        %v8876 = vpack.c.b16 %v8588, %v8584
        %v8877 = vpack.c.b16 %v8593, %v8589
        %v8878 = vpack.c.b16 %v8594, %v8590
        %v8879 = vpack.c.b16 %v8595, %v8591
        %v8880 = vpack.c.b16 %v8596, %v8592
        %v8881 = vpack.c.b16 %v8601, %v8597
        %v8882 = vpack.c.b16 %v8602, %v8598
        %v8883 = vpack.c.b16 %v8603, %v8599
        %v8884 = vpack.c.b16 %v8604, %v8600
        %v8885 = vpack.c.b16 %v8609, %v8605
        %v8886 = vpack.c.b16 %v8610, %v8606
        %v8887 = vpack.c.b16 %v8611, %v8607
        %v8888 = vpack.c.b16 %v8612, %v8608
        %v8889 = vpack.c.b16 %v8617, %v8613
        %v8890 = vpack.c.b16 %v8618, %v8614
        %v8891 = vpack.c.b16 %v8619, %v8615
        %v8892 = vpack.c.b16 %v8620, %v8616
        %v8893 = vpack.c.b16 %v8625, %v8621
        %v8894 = vpack.c.b16 %v8626, %v8622
        %v8895 = vpack.c.b16 %v8627, %v8623
        %v8896 = vpack.c.b16 %v8628, %v8624
        %v8897 = vpack.c.b16 %v8633, %v8629
        %v8898 = vpack.c.b16 %v8634, %v8630
        %v8899 = vpack.c.b16 %v8635, %v8631
        %v8900 = vpack.c.b16 %v8636, %v8632
        %v8901 = vpack.c.b16 %v8641, %v8637
        %v8902 = vpack.c.b16 %v8642, %v8638
        %v8903 = vpack.c.b16 %v8643, %v8639
        %v8904 = vpack.c.b16 %v8644, %v8640
        %v8905 = vpack.c.b16 %v8649, %v8645
        %v8906 = vpack.c.b16 %v8650, %v8646
        %v8907 = vpack.c.b16 %v8651, %v8647
        %v8908 = vpack.c.b16 %v8652, %v8648
        %9165 = vmatprep.subr.bf16.mxu0 %v8654
        %9166 = vmatpush1.bf16.msra.mxu0 %v8653
        %9167 = vmatprep.subr.bf16.mxu0 %v8658
        %9168 = vmatpush1.bf16.msra.mxu0 %v8657
        %9169 = vmatprep.subr.bf16.mxu0 %v8662
        %9170 = vmatpush1.bf16.msra.mxu0 %v8661
        %9171 = vmatprep.subr.bf16.mxu0 %v8666
        %9172 = vmatpush1.bf16.msra.mxu0 %v8665
        %9173 = vmatprep.subr.bf16.mxu0 %v8670
        %9174 = vmatpush1.bf16.msra.mxu0 %v8669
        %9175 = vmatprep.subr.bf16.mxu0 %v8674
        %9176 = vmatpush1.bf16.msra.mxu0 %v8673
        %9177 = vmatprep.subr.bf16.mxu0 %v8678
        %9178 = vmatpush1.bf16.msra.mxu0 %v8677
        %9179 = vmatprep.subr.bf16.mxu0 %v8682
        %9180 = vmatpush1.bf16.msra.mxu0 %v8681
        %9181 = vmatprep.subr.bf16.mxu0 %v8686
        %9182 = vmatpush1.bf16.msra.mxu0 %v8685
        %9183 = vmatprep.subr.bf16.mxu0 %v8690
        %9184 = vmatpush1.bf16.msra.mxu0 %v8689
        %9185 = vmatprep.subr.bf16.mxu0 %v8694
        %9186 = vmatpush1.bf16.msra.mxu0 %v8693
        %9187 = vmatprep.subr.bf16.mxu0 %v8698
        %9188 = vmatpush1.bf16.msra.mxu0 %v8697
        %9189 = vmatprep.subr.bf16.mxu0 %v8702
        %9190 = vmatpush1.bf16.msra.mxu0 %v8701
        %9191 = vmatprep.subr.bf16.mxu0 %v8706
        %9192 = vmatpush1.bf16.msra.mxu0 %v8705
        %9193 = vmatprep.subr.bf16.mxu0 %v8710
        %9194 = vmatpush1.bf16.msra.mxu0 %v8709
        %9195 = vmatprep.subr.bf16.mxu0 %v8714
        %9196 = vmatpush1.bf16.msra.mxu0 %v8713
        %9197 = vmatprep.mubr.bf16.mxu0 %v7856
        %9198 = vmatmul.mubr.bf16.gmra.mrb[0].mxu0 %v7855
        %v9199 = vpop.f32.mrb[0].mxu0
        %v9200 = vadd.f32 %v7868, %v9199
        %v9201 = vpop.f32.mrb[0].mxu0
        %v9202 = vadd.f32 %v7872, %v9201
        %v9203 = vpop.f32.mrb[0].mxu0
        %v9204 = vpop.f32.mrb[0].mxu0
        %9205 = vdwg.mxu0
        %9206 = vmatprep.subr.bf16.mxu0 %v8718
        %9207 = vmatpush1.bf16.msra.mxu0 %v8717
        %9208 = vmatprep.subr.bf16.mxu0 %v8722
        %9209 = vmatpush1.bf16.msra.mxu0 %v8721
        %9210 = vmatprep.subr.bf16.mxu0 %v8726
        %9211 = vmatpush1.bf16.msra.mxu0 %v8725
        %9212 = vmatprep.subr.bf16.mxu0 %v8730
        %9213 = vmatpush1.bf16.msra.mxu0 %v8729
        %9214 = vmatprep.subr.bf16.mxu0 %v8734
        %9215 = vmatpush1.bf16.msra.mxu0 %v8733
        %9216 = vmatprep.subr.bf16.mxu0 %v8738
        %9217 = vmatpush1.bf16.msra.mxu0 %v8737
        %9218 = vmatprep.subr.bf16.mxu0 %v8742
        %9219 = vmatpush1.bf16.msra.mxu0 %v8741
        %9220 = vmatprep.subr.bf16.mxu0 %v8746
        %9221 = vmatpush1.bf16.msra.mxu0 %v8745
        %9222 = vmatprep.subr.bf16.mxu0 %v8750
        %9223 = vmatpush1.bf16.msra.mxu0 %v8749
        %9224 = vmatprep.subr.bf16.mxu0 %v8754
        %9225 = vmatpush1.bf16.msra.mxu0 %v8753
        %9226 = vmatprep.subr.bf16.mxu0 %v8758
        %9227 = vmatpush1.bf16.msra.mxu0 %v8757
        %9228 = vmatprep.subr.bf16.mxu0 %v8762
        %9229 = vmatpush1.bf16.msra.mxu0 %v8761
        %9230 = vmatprep.subr.bf16.mxu0 %v8766
        %9231 = vmatpush1.bf16.msra.mxu0 %v8765
        %9232 = vmatprep.subr.bf16.mxu0 %v8770
        %9233 = vmatpush1.bf16.msra.mxu0 %v8769
        %9234 = vmatprep.subr.bf16.mxu0 %v8774
        %9235 = vmatpush1.bf16.msra.mxu0 %v8773
        %9236 = vmatprep.subr.bf16.mxu0 %v8778
        %9237 = vmatpush1.bf16.msra.mxu0 %v8777
        %9238 = vmatprep.mubr.bf16.mxu0 %v7858
        %9239 = vmatmul.mubr.bf16.gmra.mrb[0].mxu0 %v7857
        %v9240 = vpop.f32.mrb[0].mxu0
        %v9241 = vadd.f32 %v9200, %v9240
        %v9242 = vpop.f32.mrb[0].mxu0
        %v9243 = vadd.f32 %v9202, %v9242
        %v9244 = vpop.f32.mrb[0].mxu0
        %v9245 = vpop.f32.mrb[0].mxu0
        %9246 = vdwg.mxu0
        %9247 = vmatprep.subr.bf16.mxu0 %v8782
        %9248 = vmatpush1.bf16.msra.mxu0 %v8781
        %9249 = vmatprep.subr.bf16.mxu0 %v8786
        %9250 = vmatpush1.bf16.msra.mxu0 %v8785
        %9251 = vmatprep.subr.bf16.mxu0 %v8790
        %9252 = vmatpush1.bf16.msra.mxu0 %v8789
        %9253 = vmatprep.subr.bf16.mxu0 %v8794
        %9254 = vmatpush1.bf16.msra.mxu0 %v8793
        %9255 = vmatprep.subr.bf16.mxu0 %v8798
        %9256 = vmatpush1.bf16.msra.mxu0 %v8797
        %9257 = vmatprep.subr.bf16.mxu0 %v8802
        %9258 = vmatpush1.bf16.msra.mxu0 %v8801
        %9259 = vmatprep.subr.bf16.mxu0 %v8806
        %9260 = vmatpush1.bf16.msra.mxu0 %v8805
        %9261 = vmatprep.subr.bf16.mxu0 %v8810
        %9262 = vmatpush1.bf16.msra.mxu0 %v8809
        %9263 = vmatprep.subr.bf16.mxu0 %v8814
        %9264 = vmatpush1.bf16.msra.mxu0 %v8813
        %9265 = vmatprep.subr.bf16.mxu0 %v8818
        %9266 = vmatpush1.bf16.msra.mxu0 %v8817
        %9267 = vmatprep.subr.bf16.mxu0 %v8822
        %9268 = vmatpush1.bf16.msra.mxu0 %v8821
        %9269 = vmatprep.subr.bf16.mxu0 %v8826
        %9270 = vmatpush1.bf16.msra.mxu0 %v8825
        %9271 = vmatprep.subr.bf16.mxu0 %v8830
        %9272 = vmatpush1.bf16.msra.mxu0 %v8829
        %9273 = vmatprep.subr.bf16.mxu0 %v8834
        %9274 = vmatpush1.bf16.msra.mxu0 %v8833
        %9275 = vmatprep.subr.bf16.mxu0 %v8838
        %9276 = vmatpush1.bf16.msra.mxu0 %v8837
        %9277 = vmatprep.subr.bf16.mxu0 %v8842
        %9278 = vmatpush1.bf16.msra.mxu0 %v8841
        %9279 = vmatprep.mubr.bf16.mxu0 %v7860
        %9280 = vmatmul.mubr.bf16.gmra.mrb[0].mxu0 %v7859
        %v9281 = vpop.f32.mrb[0].mxu0
        %v9282 = vadd.f32 %v9241, %v9281
        %v9283 = vpop.f32.mrb[0].mxu0
        %v9284 = vadd.f32 %v9243, %v9283
        %v9285 = vpop.f32.mrb[0].mxu0
        %v9286 = vpop.f32.mrb[0].mxu0
        %9287 = vdwg.mxu0
        %9288 = vmatprep.subr.bf16.mxu0 %v8846
        %9289 = vmatpush1.bf16.msra.mxu0 %v8845
        %9290 = vmatprep.subr.bf16.mxu0 %v8850
        %9291 = vmatpush1.bf16.msra.mxu0 %v8849
        %9292 = vmatprep.subr.bf16.mxu0 %v8854
        %9293 = vmatpush1.bf16.msra.mxu0 %v8853
        %9294 = vmatprep.subr.bf16.mxu0 %v8858
        %9295 = vmatpush1.bf16.msra.mxu0 %v8857
        %9296 = vmatprep.subr.bf16.mxu0 %v8862
        %9297 = vmatpush1.bf16.msra.mxu0 %v8861
        %9298 = vmatprep.subr.bf16.mxu0 %v8866
        %9299 = vmatpush1.bf16.msra.mxu0 %v8865
        %9300 = vmatprep.subr.bf16.mxu0 %v8870
        %9301 = vmatpush1.bf16.msra.mxu0 %v8869
        %9302 = vmatprep.subr.bf16.mxu0 %v8874
        %9303 = vmatpush1.bf16.msra.mxu0 %v8873
        %9304 = vmatprep.subr.bf16.mxu0 %v8878
        %9305 = vmatpush1.bf16.msra.mxu0 %v8877
        %9306 = vmatprep.subr.bf16.mxu0 %v8882
        %9307 = vmatpush1.bf16.msra.mxu0 %v8881
        %9308 = vmatprep.subr.bf16.mxu0 %v8886
        %9309 = vmatpush1.bf16.msra.mxu0 %v8885
        %9310 = vmatprep.subr.bf16.mxu0 %v8890
        %9311 = vmatpush1.bf16.msra.mxu0 %v8889
        %9312 = vmatprep.subr.bf16.mxu0 %v8894
        %9313 = vmatpush1.bf16.msra.mxu0 %v8893
        %9314 = vmatprep.subr.bf16.mxu0 %v8898
        %9315 = vmatpush1.bf16.msra.mxu0 %v8897
        %9316 = vmatprep.subr.bf16.mxu0 %v8902
        %9317 = vmatpush1.bf16.msra.mxu0 %v8901
        %9318 = vmatprep.subr.bf16.mxu0 %v8906
        %9319 = vmatpush1.bf16.msra.mxu0 %v8905
        %9320 = vmatprep.mubr.bf16.mxu0 %v7862
        %9321 = vmatmul.mubr.bf16.gmra.mrb[0].mxu0 %v7861
        %v9322 = vpop.f32.mrb[0].mxu0
        %v9323 = vadd.f32 %v9282, %v9322
        %v9324 = vpop.f32.mrb[0].mxu0
        %v9325 = vadd.f32 %v9284, %v9324
        %v9326 = vpop.f32.mrb[0].mxu0
        %v9327 = vpop.f32.mrb[0].mxu0
        %9328 = vdwg.mxu0
        %9329 = vmatprep.subr.bf16.mxu0 %v8656
        %9330 = vmatpush1.bf16.msra.mxu0 %v8655
        %9331 = vmatprep.subr.bf16.mxu0 %v8660
        %9332 = vmatpush1.bf16.msra.mxu0 %v8659
        %9333 = vmatprep.subr.bf16.mxu0 %v8664
        %9334 = vmatpush1.bf16.msra.mxu0 %v8663
        %9335 = vmatprep.subr.bf16.mxu0 %v8668
        %9336 = vmatpush1.bf16.msra.mxu0 %v8667
        %9337 = vmatprep.subr.bf16.mxu0 %v8672
        %9338 = vmatpush1.bf16.msra.mxu0 %v8671
        %9339 = vmatprep.subr.bf16.mxu0 %v8676
        %9340 = vmatpush1.bf16.msra.mxu0 %v8675
        %9341 = vmatprep.subr.bf16.mxu0 %v8680
        %9342 = vmatpush1.bf16.msra.mxu0 %v8679
        %9343 = vmatprep.subr.bf16.mxu0 %v8684
        %9344 = vmatpush1.bf16.msra.mxu0 %v8683
        %9345 = vmatprep.subr.bf16.mxu0 %v8688
        %9346 = vmatpush1.bf16.msra.mxu0 %v8687
        %9347 = vmatprep.subr.bf16.mxu0 %v8692
        %9348 = vmatpush1.bf16.msra.mxu0 %v8691
        %9349 = vmatprep.subr.bf16.mxu0 %v8696
        %9350 = vmatpush1.bf16.msra.mxu0 %v8695
        %9351 = vmatprep.subr.bf16.mxu0 %v8700
        %9352 = vmatpush1.bf16.msra.mxu0 %v8699
        %9353 = vmatprep.subr.bf16.mxu0 %v8704
        %9354 = vmatpush1.bf16.msra.mxu0 %v8703
        %9355 = vmatprep.subr.bf16.mxu0 %v8708
        %9356 = vmatpush1.bf16.msra.mxu0 %v8707
        %9357 = vmatprep.subr.bf16.mxu0 %v8712
        %9358 = vmatpush1.bf16.msra.mxu0 %v8711
        %9359 = vmatprep.subr.bf16.mxu0 %v8716
        %9360 = vmatpush1.bf16.msra.mxu0 %v8715
        %9361 = vmatprep.mubr.bf16.mxu0 %v7856
        %9362 = vmatmul.mubr.bf16.gmra.mrb[0].mxu0 %v7855
        %v9363 = vpop.f32.mrb[0].mxu0
        %v9364 = vadd.f32 %v7876, %v9363
        %v9365 = vpop.f32.mrb[0].mxu0
        %v9366 = vadd.f32 %v7880, %v9365
        %v9367 = vpop.f32.mrb[0].mxu0
        %v9368 = vpop.f32.mrb[0].mxu0
        %9369 = vdwg.mxu0
        %9370 = vmatprep.subr.bf16.mxu0 %v8720
        %9371 = vmatpush1.bf16.msra.mxu0 %v8719
        %9372 = vmatprep.subr.bf16.mxu0 %v8724
        %9373 = vmatpush1.bf16.msra.mxu0 %v8723
        %9374 = vmatprep.subr.bf16.mxu0 %v8728
        %9375 = vmatpush1.bf16.msra.mxu0 %v8727
        %9376 = vmatprep.subr.bf16.mxu0 %v8732
        %9377 = vmatpush1.bf16.msra.mxu0 %v8731
        %9378 = vmatprep.subr.bf16.mxu0 %v8736
        %9379 = vmatpush1.bf16.msra.mxu0 %v8735
        %9380 = vmatprep.subr.bf16.mxu0 %v8740
        %9381 = vmatpush1.bf16.msra.mxu0 %v8739
        %9382 = vmatprep.subr.bf16.mxu0 %v8744
        %9383 = vmatpush1.bf16.msra.mxu0 %v8743
        %9384 = vmatprep.subr.bf16.mxu0 %v8748
        %9385 = vmatpush1.bf16.msra.mxu0 %v8747
        %9386 = vmatprep.subr.bf16.mxu0 %v8752
        %9387 = vmatpush1.bf16.msra.mxu0 %v8751
        %9388 = vmatprep.subr.bf16.mxu0 %v8756
        %9389 = vmatpush1.bf16.msra.mxu0 %v8755
        %9390 = vmatprep.subr.bf16.mxu0 %v8760
        %9391 = vmatpush1.bf16.msra.mxu0 %v8759
        %9392 = vmatprep.subr.bf16.mxu0 %v8764
        %9393 = vmatpush1.bf16.msra.mxu0 %v8763
        %9394 = vmatprep.subr.bf16.mxu0 %v8768
        %9395 = vmatpush1.bf16.msra.mxu0 %v8767
        %9396 = vmatprep.subr.bf16.mxu0 %v8772
        %9397 = vmatpush1.bf16.msra.mxu0 %v8771
        %9398 = vmatprep.subr.bf16.mxu0 %v8776
        %9399 = vmatpush1.bf16.msra.mxu0 %v8775
        %9400 = vmatprep.subr.bf16.mxu0 %v8780
        %9401 = vmatpush1.bf16.msra.mxu0 %v8779
        %9402 = vmatprep.mubr.bf16.mxu0 %v7858
        %9403 = vmatmul.mubr.bf16.gmra.mrb[0].mxu0 %v7857
        %v9404 = vpop.f32.mrb[0].mxu0
        %v9405 = vadd.f32 %v9364, %v9404
        %v9406 = vpop.f32.mrb[0].mxu0
        %v9407 = vadd.f32 %v9366, %v9406
        %v9408 = vpop.f32.mrb[0].mxu0
        %v9409 = vpop.f32.mrb[0].mxu0
        %9410 = vdwg.mxu0
        %9411 = vmatprep.subr.bf16.mxu0 %v8784
        %9412 = vmatpush1.bf16.msra.mxu0 %v8783
        %9413 = vmatprep.subr.bf16.mxu0 %v8788
        %9414 = vmatpush1.bf16.msra.mxu0 %v8787
        %9415 = vmatprep.subr.bf16.mxu0 %v8792
        %9416 = vmatpush1.bf16.msra.mxu0 %v8791
        %9417 = vmatprep.subr.bf16.mxu0 %v8796
        %9418 = vmatpush1.bf16.msra.mxu0 %v8795
        %9419 = vmatprep.subr.bf16.mxu0 %v8800
        %9420 = vmatpush1.bf16.msra.mxu0 %v8799
        %9421 = vmatprep.subr.bf16.mxu0 %v8804
        %9422 = vmatpush1.bf16.msra.mxu0 %v8803
        %9423 = vmatprep.subr.bf16.mxu0 %v8808
        %9424 = vmatpush1.bf16.msra.mxu0 %v8807
        %9425 = vmatprep.subr.bf16.mxu0 %v8812
        %9426 = vmatpush1.bf16.msra.mxu0 %v8811
        %9427 = vmatprep.subr.bf16.mxu0 %v8816
        %9428 = vmatpush1.bf16.msra.mxu0 %v8815
        %9429 = vmatprep.subr.bf16.mxu0 %v8820
        %9430 = vmatpush1.bf16.msra.mxu0 %v8819
        %9431 = vmatprep.subr.bf16.mxu0 %v8824
        %9432 = vmatpush1.bf16.msra.mxu0 %v8823
        %9433 = vmatprep.subr.bf16.mxu0 %v8828
        %9434 = vmatpush1.bf16.msra.mxu0 %v8827
        %9435 = vmatprep.subr.bf16.mxu0 %v8832
        %9436 = vmatpush1.bf16.msra.mxu0 %v8831
        %9437 = vmatprep.subr.bf16.mxu0 %v8836
        %9438 = vmatpush1.bf16.msra.mxu0 %v8835
        %9439 = vmatprep.subr.bf16.mxu0 %v8840
        %9440 = vmatpush1.bf16.msra.mxu0 %v8839
        %9441 = vmatprep.subr.bf16.mxu0 %v8844
        %9442 = vmatpush1.bf16.msra.mxu0 %v8843
        %9443 = vmatprep.mubr.bf16.mxu0 %v7860
        %9444 = vmatmul.mubr.bf16.gmra.mrb[0].mxu0 %v7859
        %v9445 = vpop.f32.mrb[0].mxu0
        %v9446 = vadd.f32 %v9405, %v9445
        %v9447 = vpop.f32.mrb[0].mxu0
        %v9448 = vadd.f32 %v9407, %v9447
        %v9449 = vpop.f32.mrb[0].mxu0
        %v9450 = vpop.f32.mrb[0].mxu0
        %9451 = vdwg.mxu0
        %9452 = vmatprep.subr.bf16.mxu0 %v8848
        %9453 = vmatpush1.bf16.msra.mxu0 %v8847
        %9454 = vmatprep.subr.bf16.mxu0 %v8852
        %9455 = vmatpush1.bf16.msra.mxu0 %v8851
        %9456 = vmatprep.subr.bf16.mxu0 %v8856
        %9457 = vmatpush1.bf16.msra.mxu0 %v8855
        %9458 = vmatprep.subr.bf16.mxu0 %v8860
        %9459 = vmatpush1.bf16.msra.mxu0 %v8859
        %9460 = vmatprep.subr.bf16.mxu0 %v8864
        %9461 = vmatpush1.bf16.msra.mxu0 %v8863
        %9462 = vmatprep.subr.bf16.mxu0 %v8868
        %9463 = vmatpush1.bf16.msra.mxu0 %v8867
        %9464 = vmatprep.subr.bf16.mxu0 %v8872
        %9465 = vmatpush1.bf16.msra.mxu0 %v8871
        %9466 = vmatprep.subr.bf16.mxu0 %v8876
        %9467 = vmatpush1.bf16.msra.mxu0 %v8875
        %9468 = vmatprep.subr.bf16.mxu0 %v8880
        %9469 = vmatpush1.bf16.msra.mxu0 %v8879
        %9470 = vmatprep.subr.bf16.mxu0 %v8884
        %9471 = vmatpush1.bf16.msra.mxu0 %v8883
        %9472 = vmatprep.subr.bf16.mxu0 %v8888
        %9473 = vmatpush1.bf16.msra.mxu0 %v8887
        %9474 = vmatprep.subr.bf16.mxu0 %v8892
        %9475 = vmatpush1.bf16.msra.mxu0 %v8891
        %9476 = vmatprep.subr.bf16.mxu0 %v8896
        %9477 = vmatpush1.bf16.msra.mxu0 %v8895
        %9478 = vmatprep.subr.bf16.mxu0 %v8900
        %9479 = vmatpush1.bf16.msra.mxu0 %v8899
        %9480 = vmatprep.subr.bf16.mxu0 %v8904
        %9481 = vmatpush1.bf16.msra.mxu0 %v8903
        %9482 = vmatprep.subr.bf16.mxu0 %v8908
        %9483 = vmatpush1.bf16.msra.mxu0 %v8907
        %9484 = vmatprep.mubr.bf16.mxu0 %v7862
        %9485 = vmatmul.mubr.bf16.gmra.mrb[0].mxu0 %v7861
        %v9486 = vpop.f32.mrb[0].mxu0
        %v9487 = vadd.f32 %v9446, %v9486
        %v9488 = vpop.f32.mrb[0].mxu0
        %v9489 = vadd.f32 %v9448, %v9488
        %v9490 = vpop.f32.mrb[0].mxu0
        %v9491 = vpop.f32.mrb[0].mxu0
        %9492 = vdwg.mxu0
        %v9493 = vmax.f32 %v9323, 0.0
        %v9494 = vmax.f32 %v9325, 0.0
        %v9495 = vmax.f32 %v9487, 0.0
        %v9496 = vmax.f32 %v9489, 0.0
        %v9497 = vld [vmem:[%s15] sm:$0xf]
        %v9498 = vld [vmem:[%s15 + $0x4] sm:$0xf]
        %v9499 = vld [vmem:[%s15 + $0x8] sm:$0xf]
        %v9500 = vld [vmem:[%s15 + $0xc] sm:$0xf]
        %v9501 = vld [vmem:[%s15 + $0x10] sm:$0xf]
        %v9502 = vld [vmem:[%s15 + $0x14] sm:$0xf]
        %v9503 = vld [vmem:[%s15 + $0x18] sm:$0xf]
        %v9504 = vld [vmem:[%s15 + $0x1c] sm:$0xf]
        %v9505 = vld [vmem:[%s15 + $0x20] sm:$0xf]
        %v9506 = vld [vmem:[%s15 + $0x24] sm:$0xf]
        %v9507 = vld [vmem:[%s15 + $0x28] sm:$0xf]
        %v9508 = vld [vmem:[%s15 + $0x2c] sm:$0xf]
        %v9509 = vld [vmem:[%s15 + $0x30] sm:$0xf]
        %v9510 = vld [vmem:[%s15 + $0x34] sm:$0xf]
        %v9511 = vld [vmem:[%s15 + $0x38] sm:$0xf]
        %v9512 = vld [vmem:[%s15 + $0x3c] sm:$0xf]
        %v9513 = vld [vmem:[%s15 + $0x40] sm:$0xf]
        %v9514 = vld [vmem:[%s15 + $0x44] sm:$0xf]
        %v9515 = vld [vmem:[%s15 + $0x48] sm:$0xf]
        %v9516 = vld [vmem:[%s15 + $0x4c] sm:$0xf]
        %v9517 = vld [vmem:[%s15 + $0x50] sm:$0xf]
        %v9518 = vld [vmem:[%s15 + $0x54] sm:$0xf]
        %v9519 = vld [vmem:[%s15 + $0x58] sm:$0xf]
        %v9520 = vld [vmem:[%s15 + $0x5c] sm:$0xf]
        %v9521 = vld [vmem:[%s15 + $0x60] sm:$0xf]
        %v9522 = vld [vmem:[%s15 + $0x64] sm:$0xf]
        %v9523 = vld [vmem:[%s15 + $0x68] sm:$0xf]
        %v9524 = vld [vmem:[%s15 + $0x6c] sm:$0xf]
        %v9525 = vld [vmem:[%s15 + $0x70] sm:$0xf]
        %v9526 = vld [vmem:[%s15 + $0x74] sm:$0xf]
        %v9527 = vld [vmem:[%s15 + $0x78] sm:$0xf]
        %v9528 = vld [vmem:[%s15 + $0x7c] sm:$0xf]
        %v9529 = vld [vmem:[%s15 + $0x80] sm:$0xf]
        %v9530 = vld [vmem:[%s15 + $0x84] sm:$0xf]
        %v9531 = vld [vmem:[%s15 + $0x88] sm:$0xf]
        %v9532 = vld [vmem:[%s15 + $0x8c] sm:$0xf]
        %v9533 = vld [vmem:[%s15 + $0x90] sm:$0xf]
        %v9534 = vld [vmem:[%s15 + $0x94] sm:$0xf]
        %v9535 = vld [vmem:[%s15 + $0x98] sm:$0xf]
        %v9536 = vld [vmem:[%s15 + $0x9c] sm:$0xf]
        %v9537 = vld [vmem:[%s15 + $0xa0] sm:$0xf]
        %v9538 = vld [vmem:[%s15 + $0xa4] sm:$0xf]
        %v9539 = vld [vmem:[%s15 + $0xa8] sm:$0xf]
        %v9540 = vld [vmem:[%s15 + $0xac] sm:$0xf]
        %v9541 = vld [vmem:[%s15 + $0xb0] sm:$0xf]
        %v9542 = vld [vmem:[%s15 + $0xb4] sm:$0xf]
        %v9543 = vld [vmem:[%s15 + $0xb8] sm:$0xf]
        %v9544 = vld [vmem:[%s15 + $0xbc] sm:$0xf]
        %v9545 = vld [vmem:[%s15 + $0xc0] sm:$0xf]
        %v9546 = vld [vmem:[%s15 + $0xc4] sm:$0xf]
        %v9547 = vld [vmem:[%s15 + $0xc8] sm:$0xf]
        %v9548 = vld [vmem:[%s15 + $0xcc] sm:$0xf]
        %v9549 = vld [vmem:[%s15 + $0xd0] sm:$0xf]
        %v9550 = vld [vmem:[%s15 + $0xd4] sm:$0xf]
        %v9551 = vld [vmem:[%s15 + $0xd8] sm:$0xf]
        %v9552 = vld [vmem:[%s15 + $0xdc] sm:$0xf]
        %v9553 = vld [vmem:[%s15 + $0xe0] sm:$0xf]
        %v9554 = vld [vmem:[%s15 + $0xe4] sm:$0xf]
        %v9555 = vld [vmem:[%s15 + $0xe8] sm:$0xf]
        %v9556 = vld [vmem:[%s15 + $0xec] sm:$0xf]
        %v9557 = vld [vmem:[%s15 + $0xf0] sm:$0xf]
        %v9558 = vld [vmem:[%s15 + $0xf4] sm:$0xf]
        %v9559 = vld [vmem:[%s15 + $0xf8] sm:$0xf]
        %v9560 = vld [vmem:[%s15 + $0xfc] sm:$0xf]
        %v9561 = vpack.c.bf16 %v9493, %v9493
        %v9562 = vpack.c.bf16 %v9494, %v9494
        %v9563 = vpack.c.bf16 %v9495, %v9495
        %v9564 = vpack.c.bf16 %v9496, %v9496
        %v9565 = vld [vmem:[#allocation20] sm:$0x1]
        %v9567 = vlaneseq
        %v9568 = vshrl.u32 %v9567, 7
        %v9569 = vsub.s32 0, %v9568
        %v9570 = vrot.slane %v9565, %v9569
        %v9636 = vunpack.c.l.b16 %v9497
        %v9637 = vunpack.c.l.b16 %v9498
        %v9638 = vunpack.c.l.b16 %v9499
        %v9639 = vunpack.c.l.b16 %v9500
        %v9640 = vunpack.c.l.b16 %v9501
        %v9641 = vunpack.c.l.b16 %v9502
        %v9642 = vunpack.c.l.b16 %v9503
        %v9643 = vunpack.c.l.b16 %v9504
        %v9644 = vunpack.c.l.b16 %v9505
        %v9645 = vunpack.c.l.b16 %v9506
        %v9646 = vunpack.c.l.b16 %v9507
        %v9647 = vunpack.c.l.b16 %v9508
        %v9648 = vunpack.c.l.b16 %v9509
        %v9649 = vunpack.c.l.b16 %v9510
        %v9650 = vunpack.c.l.b16 %v9511
        %v9651 = vunpack.c.l.b16 %v9512
        %v9652 = vunpack.c.l.b16 %v9513
        %v9653 = vunpack.c.l.b16 %v9514
        %v9654 = vunpack.c.l.b16 %v9515
        %v9655 = vunpack.c.l.b16 %v9516
        %v9656 = vunpack.c.l.b16 %v9517
        %v9657 = vunpack.c.l.b16 %v9518
        %v9658 = vunpack.c.l.b16 %v9519
        %v9659 = vunpack.c.l.b16 %v9520
        %v9660 = vunpack.c.l.b16 %v9521
        %v9661 = vunpack.c.l.b16 %v9522
        %v9662 = vunpack.c.l.b16 %v9523
        %v9663 = vunpack.c.l.b16 %v9524
        %v9664 = vunpack.c.l.b16 %v9525
        %v9665 = vunpack.c.l.b16 %v9526
        %v9666 = vunpack.c.l.b16 %v9527
        %v9667 = vunpack.c.l.b16 %v9528
        %v9668 = vunpack.c.l.b16 %v9529
        %v9669 = vunpack.c.l.b16 %v9530
        %v9670 = vunpack.c.l.b16 %v9531
        %v9671 = vunpack.c.l.b16 %v9532
        %v9672 = vunpack.c.l.b16 %v9533
        %v9673 = vunpack.c.l.b16 %v9534
        %v9674 = vunpack.c.l.b16 %v9535
        %v9675 = vunpack.c.l.b16 %v9536
        %v9676 = vunpack.c.l.b16 %v9537
        %v9677 = vunpack.c.l.b16 %v9538
        %v9678 = vunpack.c.l.b16 %v9539
        %v9679 = vunpack.c.l.b16 %v9540
        %v9680 = vunpack.c.l.b16 %v9541
        %v9681 = vunpack.c.l.b16 %v9542
        %v9682 = vunpack.c.l.b16 %v9543
        %v9683 = vunpack.c.l.b16 %v9544
        %v9684 = vunpack.c.l.b16 %v9545
        %v9685 = vunpack.c.l.b16 %v9546
        %v9686 = vunpack.c.l.b16 %v9547
        %v9687 = vunpack.c.l.b16 %v9548
        %v9688 = vunpack.c.l.b16 %v9549
        %v9689 = vunpack.c.l.b16 %v9550
        %v9690 = vunpack.c.l.b16 %v9551
        %v9691 = vunpack.c.l.b16 %v9552
        %v9692 = vunpack.c.l.b16 %v9553
        %v9693 = vunpack.c.l.b16 %v9554
        %v9694 = vunpack.c.l.b16 %v9555
        %v9695 = vunpack.c.l.b16 %v9556
        %v9696 = vunpack.c.l.b16 %v9557
        %v9697 = vunpack.c.l.b16 %v9558
        %v9698 = vunpack.c.l.b16 %v9559
        %v9699 = vunpack.c.l.b16 %v9560
        %v9700 = vpack.c.b16 %v9637, %v9636
        %v9701 = vpack.c.b16 %v9639, %v9638
        %v9702 = vpack.c.b16 %v9641, %v9640
        %v9703 = vpack.c.b16 %v9643, %v9642
        %v9704 = vpack.c.b16 %v9645, %v9644
        %v9705 = vpack.c.b16 %v9647, %v9646
        %v9706 = vpack.c.b16 %v9649, %v9648
        %v9707 = vpack.c.b16 %v9651, %v9650
        %v9708 = vpack.c.b16 %v9653, %v9652
        %v9709 = vpack.c.b16 %v9655, %v9654
        %v9710 = vpack.c.b16 %v9657, %v9656
        %v9711 = vpack.c.b16 %v9659, %v9658
        %v9712 = vpack.c.b16 %v9661, %v9660
        %v9713 = vpack.c.b16 %v9663, %v9662
        %v9714 = vpack.c.b16 %v9665, %v9664
        %v9715 = vpack.c.b16 %v9667, %v9666
        %v9716 = vpack.c.b16 %v9669, %v9668
        %v9717 = vpack.c.b16 %v9671, %v9670
        %v9718 = vpack.c.b16 %v9673, %v9672
        %v9719 = vpack.c.b16 %v9675, %v9674
        %v9720 = vpack.c.b16 %v9677, %v9676
        %v9721 = vpack.c.b16 %v9679, %v9678
        %v9722 = vpack.c.b16 %v9681, %v9680
        %v9723 = vpack.c.b16 %v9683, %v9682
        %v9724 = vpack.c.b16 %v9685, %v9684
        %v9725 = vpack.c.b16 %v9687, %v9686
        %v9726 = vpack.c.b16 %v9689, %v9688
        %v9727 = vpack.c.b16 %v9691, %v9690
        %v9728 = vpack.c.b16 %v9693, %v9692
        %v9729 = vpack.c.b16 %v9695, %v9694
        %v9730 = vpack.c.b16 %v9697, %v9696
        %v9731 = vpack.c.b16 %v9699, %v9698
        %9764 = vmatprep.subr.bf16.mxu0 0
        %9765 = vmatpush1.bf16.msra.mxu0 %v9700
        %9766 = vmatprep.subr.bf16.mxu0 0
        %9767 = vmatpush1.bf16.msra.mxu0 %v9701
        %9768 = vmatprep.subr.bf16.mxu0 0
        %9769 = vmatpush1.bf16.msra.mxu0 %v9702
        %9770 = vmatprep.subr.bf16.mxu0 0
        %9771 = vmatpush1.bf16.msra.mxu0 %v9703
        %9772 = vmatprep.subr.bf16.mxu0 0
        %9773 = vmatpush1.bf16.msra.mxu0 %v9704
        %9774 = vmatprep.subr.bf16.mxu0 0
        %9775 = vmatpush1.bf16.msra.mxu0 %v9705
        %9776 = vmatprep.subr.bf16.mxu0 0
        %9777 = vmatpush1.bf16.msra.mxu0 %v9706
        %9778 = vmatprep.subr.bf16.mxu0 0
        %9779 = vmatpush1.bf16.msra.mxu0 %v9707
        %9780 = vmatprep.subr.bf16.mxu0 0
        %9781 = vmatpush1.bf16.msra.mxu0 %v9708
        %9782 = vmatprep.subr.bf16.mxu0 0
        %9783 = vmatpush1.bf16.msra.mxu0 %v9709
        %9784 = vmatprep.subr.bf16.mxu0 0
        %9785 = vmatpush1.bf16.msra.mxu0 %v9710
        %9786 = vmatprep.subr.bf16.mxu0 0
        %9787 = vmatpush1.bf16.msra.mxu0 %v9711
        %9788 = vmatprep.subr.bf16.mxu0 0
        %9789 = vmatpush1.bf16.msra.mxu0 %v9712
        %9790 = vmatprep.subr.bf16.mxu0 0
        %9791 = vmatpush1.bf16.msra.mxu0 %v9713
        %9792 = vmatprep.subr.bf16.mxu0 0
        %9793 = vmatpush1.bf16.msra.mxu0 %v9714
        %9794 = vmatprep.subr.bf16.mxu0 0
        %9795 = vmatpush1.bf16.msra.mxu0 %v9715
        %9796 = vmatprep.mubr.bf16.mxu0 %v9562
        %9797 = vmatmul.mubr.bf16.gmra.mrb[0].mxu0 %v9561
        %v9798 = vpop.f32.mrb[0].mxu0
        %v9799 = vadd.f32 %v9570, %v9798
        %v9800 = vpop.f32.mrb[0].mxu0
        %v9801 = vpop.f32.mrb[0].mxu0
        %v9802 = vpop.f32.mrb[0].mxu0
        %9803 = vdwg.mxu0
        %9804 = vmatprep.subr.bf16.mxu0 0
        %9805 = vmatpush1.bf16.msra.mxu0 %v9716
        %9806 = vmatprep.subr.bf16.mxu0 0
        %9807 = vmatpush1.bf16.msra.mxu0 %v9717
        %9808 = vmatprep.subr.bf16.mxu0 0
        %9809 = vmatpush1.bf16.msra.mxu0 %v9718
        %9810 = vmatprep.subr.bf16.mxu0 0
        %9811 = vmatpush1.bf16.msra.mxu0 %v9719
        %9812 = vmatprep.subr.bf16.mxu0 0
        %9813 = vmatpush1.bf16.msra.mxu0 %v9720
        %9814 = vmatprep.subr.bf16.mxu0 0
        %9815 = vmatpush1.bf16.msra.mxu0 %v9721
        %9816 = vmatprep.subr.bf16.mxu0 0
        %9817 = vmatpush1.bf16.msra.mxu0 %v9722
        %9818 = vmatprep.subr.bf16.mxu0 0
        %9819 = vmatpush1.bf16.msra.mxu0 %v9723
        %9820 = vmatprep.subr.bf16.mxu0 0
        %9821 = vmatpush1.bf16.msra.mxu0 %v9724
        %9822 = vmatprep.subr.bf16.mxu0 0
        %9823 = vmatpush1.bf16.msra.mxu0 %v9725
        %9824 = vmatprep.subr.bf16.mxu0 0
        %9825 = vmatpush1.bf16.msra.mxu0 %v9726
        %9826 = vmatprep.subr.bf16.mxu0 0
        %9827 = vmatpush1.bf16.msra.mxu0 %v9727
        %9828 = vmatprep.subr.bf16.mxu0 0
        %9829 = vmatpush1.bf16.msra.mxu0 %v9728
        %9830 = vmatprep.subr.bf16.mxu0 0
        %9831 = vmatpush1.bf16.msra.mxu0 %v9729
        %9832 = vmatprep.subr.bf16.mxu0 0
        %9833 = vmatpush1.bf16.msra.mxu0 %v9730
        %9834 = vmatprep.subr.bf16.mxu0 0
        %9835 = vmatpush1.bf16.msra.mxu0 %v9731
        %9836 = vmatprep.mubr.bf16.mxu0 %v9564
        %9837 = vmatmul.mubr.bf16.gmra.mrb[0].mxu0 %v9563
        %v9838 = vpop.f32.mrb[0].mxu0
        %v9839 = vadd.f32 %v9799, %v9838
        %v9840 = vpop.f32.mrb[0].mxu0
        %v9841 = vpop.f32.mrb[0].mxu0
        %v9842 = vpop.f32.mrb[0].mxu0
        %9843 = vdwg.mxu0
        %v9844 = vmax.f32 %v9839, 0.0
        %v9845 = vld [vmem:[%s17] sm:$0xff]
        %v9846 = vld [vmem:[%s17 + $0x8] sm:$0xff]
        %v9847 = vld [vmem:[%s17 + $0x10] sm:$0xff]
        %v9848 = vld [vmem:[%s17 + $0x18] sm:$0xff]
        %v9849 = vld [vmem:[%s17 + $0x20] sm:$0xff]
        %v9850 = vld [vmem:[%s17 + $0x28] sm:$0xff]
        %v9851 = vld [vmem:[%s17 + $0x30] sm:$0xff]
        %v9852 = vld [vmem:[%s17 + $0x38] sm:$0xff]
        %v9853 = vld [vmem:[%s17 + $0x40] sm:$0xff]
        %v9854 = vld [vmem:[%s17 + $0x48] sm:$0xff]
        %v9855 = vld [vmem:[%s17 + $0x50] sm:$0xff]
        %v9856 = vld [vmem:[%s17 + $0x58] sm:$0xff]
        %v9857 = vld [vmem:[%s17 + $0x60] sm:$0xf]
        %v9858 = vld [vmem:[#allocation22] sm:$0x1]
        %v9860 = vlaneseq
        %v9861 = vshrl.u32 %v9860, 7
        %v9862 = vsub.s32 0, %v9861
        %v9863 = vrot.slane %v9858, %v9862
        %vm9865 = vcmask 818176
        %v9867 = vsel %vm9865, %v9844, 0
        %vm9869 = vcmask 1043456
        %v9871 = vsel %vm9869, %v9857, 0
        %9873 = vmatprep.subr.mxu0 0.0
        %9874 = vmatpush1.msra.mxu0 %v9845
        %9875 = vmatprep.subr.mxu0 0.0
        %9876 = vmatpush1.msra.mxu0 %v9846
        %9877 = vmatprep.subr.mxu0 0.0
        %9878 = vmatpush1.msra.mxu0 %v9847
        %9879 = vmatprep.subr.mxu0 0.0
        %9880 = vmatpush1.msra.mxu0 %v9848
        %9881 = vmatprep.subr.mxu0 0.0
        %9882 = vmatpush1.msra.mxu0 %v9849
        %9883 = vmatprep.subr.mxu0 0.0
        %9884 = vmatpush1.msra.mxu0 %v9850
        %9885 = vmatprep.subr.mxu0 0.0
        %9886 = vmatpush1.msra.mxu0 %v9851
        %9887 = vmatprep.subr.mxu0 0.0
        %9888 = vmatpush1.msra.mxu0 %v9852
        %9889 = vmatprep.subr.mxu0 0.0
        %9890 = vmatpush1.msra.mxu0 %v9853
        %9891 = vmatprep.subr.mxu0 0.0
        %9892 = vmatpush1.msra.mxu0 %v9854
        %9893 = vmatprep.subr.mxu0 0.0
        %9894 = vmatpush1.msra.mxu0 %v9855
        %9895 = vmatprep.subr.mxu0 0.0
        %9896 = vmatpush1.msra.mxu0 %v9856
        %9897 = vmatprep.subr.mxu0 0.0
        %9898 = vmatpush1.msra.mxu0 %v9871
        %9899 = vmatprep.subr.mxu0 0.0
        %9900 = vmatpush1.msra.mxu0 0.0
        %9901 = vmatprep.subr.mxu0 0.0
        %9902 = vmatpush1.msra.mxu0 0.0
        %9903 = vmatprep.subr.mxu0 0.0
        %9904 = vmatpush1.msra.mxu0 0.0
        %9905 = vmatprep.subr.mxu0 0.0
        %9906 = vmatpush1.msra.mxu0 0.0
        %9907 = vmatprep.subr.mxu0 0.0
        %9908 = vmatpush1.msra.mxu0 0.0
        %9909 = vmatprep.subr.mxu0 0.0
        %9910 = vmatpush1.msra.mxu0 0.0
        %9911 = vmatprep.subr.mxu0 0.0
        %9912 = vmatpush1.msra.mxu0 0.0
        %9913 = vmatprep.subr.mxu0 0.0
        %9914 = vmatpush1.msra.mxu0 0.0
        %9915 = vmatprep.subr.mxu0 0.0
        %9916 = vmatpush1.msra.mxu0 0.0
        %9917 = vmatprep.subr.mxu0 0.0
        %9918 = vmatpush1.msra.mxu0 0.0
        %9919 = vmatprep.subr.mxu0 0.0
        %9920 = vmatpush1.msra.mxu0 0.0
        %9921 = vmatprep.subr.mxu0 0.0
        %9922 = vmatpush1.msra.mxu0 0.0
        %9923 = vmatprep.subr.mxu0 0.0
        %9924 = vmatpush1.msra.mxu0 0.0
        %9925 = vmatprep.subr.mxu0 0.0
        %9926 = vmatpush1.msra.mxu0 0.0
        %9927 = vmatprep.subr.mxu0 0.0
        %9928 = vmatpush1.msra.mxu0 0.0
        %9929 = vmatprep.subr.mxu0 0.0
        %9930 = vmatpush1.msra.mxu0 0.0
        %9931 = vmatprep.subr.mxu0 0.0
        %9932 = vmatpush1.msra.mxu0 0.0
        %9933 = vmatprep.subr.mxu0 0.0
        %9934 = vmatpush1.msra.mxu0 0.0
        %9935 = vmatprep.subr.mxu0 0.0
        %9936 = vmatpush1.msra.mxu0 0.0
        %9937 = vmatprep.mubr.f32.mxu0 0.0
        %9938 = vmatmul.mubr.f32.gmra.mrb[0].mxu0 %v9867
        %v9939 = vpop.f32.mrb[0].mxu0
        %v9940 = vadd.f32 %v9863, %v9939
        %v9941 = vpop.f32.mrb[0].mxu0
        %9942 = vdwg.mxu0
        %vm9943 = vcmask 19456
        %9944 = vst.msk [vmem:[%s698] sm:$0xf] %vm9943, %v9940
        %p9945 = scmp.lt.s32.totalorder %s34, 1
        %s9946 = scalar_select %p9945, %s34, 1
        %s9947 = smul.addr %s9946, 4
        %s9948 = scalar_lea.vmem %s19, %s9947
        // Predicated region
        $region125: #{model_cnn_ppg_forward.1} parent=95 // pred_check
          %p9949 = pneg %p456
        $region126: #{model_cnn_ppg_forward.1} parent=95 // pred_check_branch
          %9951 = sbr.rel (%p9949) target = $region128
        $region127: #{model_cnn_ppg_forward.1} parent=95 // pred_region
          _
        $region128: #{model_cnn_ppg_forward.1} parent=95 // pred_fallthru
          _
      $region96: #{model_cnn_ppg_forward.1} parent=5 // pred_fallthru
        _
      %p9952 = scmp.le.s32.totalorder 2, %s29
      // Predicated region
      $region129: #{model_cnn_ppg_forward.1} parent=5 // pred_check
        %p9953 = pneg %p9952
      $region130: #{model_cnn_ppg_forward.1} parent=5 // pred_check_branch
        %9955 = sbr.rel (%p9953) target = $region132
      $region131: #{model_cnn_ppg_forward.1} parent=5 // pred_region
        %s9956 = ssub.s32 %s29, 2
        // Predicated region
        $region133: #{model_cnn_ppg_forward.1} parent=131 // pred_check
          %p9957 = pneg %p462
        $region134: #{model_cnn_ppg_forward.1} parent=131 // pred_check_branch
          %9959 = sbr.rel (%p9957) target = $region136
        $region135: #{model_cnn_ppg_forward.1} parent=131 // pred_region
          %p9960 = scmp.lt.s32.totalorder %s35, 1
          %s9961 = scalar_select %p9960, %s35, 1
          %s9962 = smul.addr %s9961, 4
          %s9963 = scalar_lea.vmem %s19, %s9962
        $region136: #{model_cnn_ppg_forward.1} parent=131 // pred_fallthru
          _
      $region132: #{model_cnn_ppg_forward.1} parent=5 // pred_fallthru
        _
    $region6: #{model_cnn_ppg_forward.1} parent=1 // loop_footer
      %s33 = sadd.s32 1, %s29
    $region7: #{model_cnn_ppg_forward.1} parent=1 // loop_footer_branch
      %28 = sbr.rel target = $region3
    $region8: #{model_cnn_ppg_forward.1} parent=1 // loop_exit
      _
    %9964 = vsyncpa [#allocation13], 1
    %s9965 = scalar_lea.sflag [#allocation13], 1
    %9966 = vsyncpa %s9965, 1
    %9967 = vsyncpa [#allocation15], 1
    %9968 = vsyncpa [#allocation18], 1
    %9969 = vsyncpa [#allocation21], 1

</llo_original>
